<compile_context>
chip_gen: v6e
topology: v6e:2x2x1
jax: 0.10.0
libtpu: 0.0.40
codegen_flags: <defaults>
</compile_context>

<pallas_src>
import math
from functools import partial

import numpy as np
import jax
import jax.numpy as jnp
from jax.experimental import pallas as pl
from jax.experimental.pallas import tpu as pltpu

# ----------------------------- model config ---------------------------------
PATCH_SIZE = 4
NUM_CLASSES = 2 * PATCH_SIZE ** 2          # assert num_classes == 2 * patch_size**2
EMBED_DIM = 32
DEPTH = 2
NUM_HEADS = 4
HEAD_DIM = EMBED_DIM // NUM_HEADS
MLP_RATIO = 4.0
DEPTH_MLP = 2
LN_EPS = 1e-5
GRID = 4                                   # 4x4 patch grid -> Lx = 16 image tokens


# ------------------------------ kernel helpers -------------------------------
def _layernorm(x, g, b, eps=LN_EPS):
    mu = jnp.mean(x, axis=-1, keepdims=True)
    var = jnp.mean(jnp.square(x - mu), axis=-1, keepdims=True)
    return (x - mu) * jax.lax.rsqrt(var + eps) * g + b


def _gelu(x):
    # TODO(synk): torch nn.GELU defaults to exact erf GELU; tanh approximation
    # is used for Mosaic lowering compatibility (numerics differ ~1e-3).
    return jax.nn.gelu(x, approximate=True)


# ------------------------------ fused kernel ---------------------------------
def _fused_forward_kernel(
        poc_ref, tte_ref,
        ln1g_ref, ln1b_ref, wqkv_ref, wproj_ref, bproj_ref,
        ln2g_ref, ln2b_ref, w1_ref, b1_ref, w2_ref, b2_ref,
        mw1_ref, mb1_ref, mw2_ref, mb2_ref,
        ng_ref, nb_ref,
        sstack_ref, hk_ref, cconst_ref, bw_ref, bb_ref,
        p_out_ref, occm_out_ref,
        *, B, S, Lx, Lo):
    f32 = jnp.float32
    D = EMBED_DIM
    H = NUM_HEADS
    hd = HEAD_DIM

    # ---- token-type embedding add (slab pre-tiled over batch on the host) ----
    poc = poc_ref[...] + tte_ref[...]                            # (B*S, D)

    # ---- DEPTH Block_poc layers (statically unrolled, weights stacked) ----
    for l in range(DEPTH):
        # attention branch: x = x + proj(MHSA(LN1(x)))
        hx = _layernorm(poc, ln1g_ref[l], ln1b_ref[l])           # (B*S, D)
        # one fused QKV dot; softmax scale pre-folded into the Q columns
        qkv = jnp.dot(hx, wqkv_ref[l], preferred_element_type=f32)   # (B*S, 3D)
        ctx_heads = []
        for hh in range(H):
            q = qkv[:, hh * hd:(hh + 1) * hd].reshape(B, S, hd)
            k = qkv[:, D + hh * hd:D + (hh + 1) * hd].reshape(B, S, hd)
            v = qkv[:, 2 * D + hh * hd:2 * D + (hh + 1) * hd].reshape(B, S, hd)
            att = jnp.einsum('bqd,bkd->bqk', q, k,
                             preferred_element_type=f32)         # (B, S, S)
            att = att - jnp.max(att, axis=-1, keepdims=True)
            e = jnp.exp(att)
            probs = e * pl.reciprocal(jnp.sum(e, axis=-1, keepdims=True),
                                      approx=True)
            ctx = jnp.einsum('bqk,bkd->bqd', probs, v,
                             preferred_element_type=f32)         # (B, S, hd)
            ctx_heads.append(ctx.reshape(B * S, hd))
        ctx_all = jnp.concatenate(ctx_heads, axis=-1)            # (B*S, D)
        poc = poc + jnp.dot(ctx_all, wproj_ref[l],
                            preferred_element_type=f32) + bproj_ref[l]

        # MLP branch: x = x + fc2(GELU(fc1(LN2(x))))
        h2 = _layernorm(poc, ln2g_ref[l], ln2b_ref[l])
        h2 = _gelu(jnp.dot(h2, w1_ref[l], preferred_element_type=f32) + b1_ref[l])
        poc = poc + jnp.dot(h2, w2_ref[l], preferred_element_type=f32) + b2_ref[l]

    # ---- slices (match the reference exactly: p = poc[:, :Lx], o = c = poc[:, :Lo]) ----
    poc3 = poc.reshape(B, S, D)                                  # free leading split
    p = poc3[:, :Lx, :].reshape(B * Lx, D)                       # (B*Lx, D)
    o3 = poc3[:, :Lo, :]                                         # (B, Lo, D)

    # ---- DEPTH_MLP Mlp layers on p (timm Mlp: no residual) ----
    for l in range(DEPTH_MLP):
        hm = _gelu(jnp.dot(p, mw1_ref[l], preferred_element_type=f32) + mb1_ref[l])
        p = jnp.dot(hm, mw2_ref[l], preferred_element_type=f32) + mb2_ref[l]

    # ---- norm -> head -> 3x3 conv, collapsed to 2 MXU ops ----
    # out = sum_s Shift_s @ (LN(p) @ Wh + bh) @ K_s
    #     = sum_s (ShiftBD_s @ LN(p)) @ (Wh @ K_s)  +  const          (host-folded)
    pn = _layernorm(p, ng_ref[...], nb_ref[...])                 # (B*Lx, D)
    z = jnp.dot(sstack_ref[...], pn, preferred_element_type=f32) # (9*B*Lx, D)
    tmp = jnp.einsum('sid,sdc->sic', z.reshape(9, B * Lx, D), hk_ref[...],
                     preferred_element_type=f32)                 # (9, B*Lx, NC)
    p_out_ref[...] = jnp.sum(tmp, axis=0) + cconst_ref[...]      # (B*Lx, NC)

    # ---- biaffine: affine = [o, 1] @ W^T ; occm_pred[b,j,i] = <c[b,j], affine[b,i]> ----
    aff = jnp.dot(o3.reshape(B * Lo, D), bw_ref[...],
                  preferred_element_type=f32) + bb_ref[...]      # (B*Lo, D)
    aff3 = aff.reshape(B, Lo, D)
    occm_out_ref[...] = jax.lax.dot_general(                     # already transposed
        o3, aff3, (((2,), (2,)), ((0,), (0,))), preferred_element_type=f32)


# --------------------------------- wrapper -----------------------------------
def forward(x, obj, col, pk):
    B, Lx, D = x.shape
    Lo, Lc = obj.shape[1], col.shape[1]
    S = Lx + Lo + Lc
    assert Lx == GRID * GRID and D == EMBED_DIM

    # single host-side concat -> the kernel sees one (B*S, D) slab
    poc_in = jnp.concatenate([x, obj, col], axis=1).reshape(B * S, D)

    args = (poc_in, pk["tte"],
            pk["ln1_g"], pk["ln1_b"], pk["wqkv"], pk["wproj"], pk["bproj"],
            pk["ln2_g"], pk["ln2_b"], pk["w1"], pk["b1"], pk["w2"], pk["b2"],
            pk["mw1"], pk["mb1"], pk["mw2"], pk["mb2"],
            pk["norm_g"], pk["norm_b"],
            pk["sstack"], pk["hk"], pk["conv_const"],
            pk["bw"], pk["bb"])

    vmem = pl.BlockSpec(memory_space=pltpu.MemorySpace.VMEM)
    kernel = partial(_fused_forward_kernel, B=B, S=S, Lx=Lx, Lo=Lo)
    p_slab, occm_t = pl.pallas_call(
        kernel,
        out_shape=(jax.ShapeDtypeStruct((B * Lx, NUM_CLASSES), jnp.float32),
                   jax.ShapeDtypeStruct((B, Lo, Lo), jnp.float32)),
        in_specs=[vmem] * len(args),
        out_specs=(vmem, vmem),
    )(*args)

    # pure-layout rearrange of the (already convolved) patch-space slab to NCHW:
    # 'b (h w) (p1 p2 c) -> b c (h p1) (w p2)'   (one cheap XLA op on 4 KiB)
    ps = PATCH_SIZE
    p_img = p_slab.reshape(B, GRID, GRID, ps, ps, 2)
    p_img = jnp.transpose(p_img, (0, 5, 1, 3, 2, 4)).reshape(B, 2, GRID * ps, GRID * ps)

    # occm was computed pre-transposed in the kernel: just add the trailing dim.
    return p_img, occm_t[..., None]


# --------------------- conv -> (shift, class-mix) matrices --------------------
def build_conv_mats(conv_w, grid, ps, ch):
    """Reformulate Conv2d(ch, ch, 3, padding=1, bias=False) applied to the
    rearranged image as:  out_patch = sum_s Shift_s @ P @ K_s  in patch space,
    where P rows are tokens (h, w) and columns are classes (p1, p2, c)."""
    conv_w = np.asarray(conv_w, dtype=np.float32)              # (cout, cin, 3, 3)
    nc = ch * ps * ps
    kmats = np.zeros((9, nc, nc), np.float32)
    for p1o in range(ps):
        for p2o in range(ps):
            for co in range(ch):
                cls_out = (p1o * ps + p2o) * ch + co
                for kh in range(3):
                    for kw in range(3):
                        a = p1o + kh - 1
                        b = p2o + kw - 1
                        dh, p1i = a // ps, a % ps
                        dw, p2i = b // ps, b % ps
                        s = (dh + 1) * 3 + (dw + 1)
                        for ci in range(ch):
                            cls_in = (p1i * ps + p2i) * ch + ci
                            kmats[s, cls_in, cls_out] += conv_w[co, ci, kh, kw]
    shifts = np.zeros((9, grid * grid, grid * grid), np.float32)
    for s in range(9):
        dh, dw = s // 3 - 1, s % 3 - 1
        for ho in range(grid):
            for wo in range(grid):
                hi, wi = ho + dh, wo + dw
                if 0 <= hi < grid and 0 <= wi < grid:
                    shifts[s, ho * grid + wo, hi * grid + wi] = 1.0
    return kmats, shifts


# ------------------------------ parameter init --------------------------------
def init_params(key):
    """Raw (torch-layout-ish) parameters; right-multiplier convention for
    all Linear weights (x @ W)."""
    D = EMBED_DIM
    hidden = int(D * MLP_RATIO)
    NC = NUM_CLASSES
    keys = iter(jax.random.split(key, 64))

    def xavier(shape):
        limit = math.sqrt(6.0 / (shape[-2] + shape[-1]))
        return jax.random.uniform(next(keys), shape, jnp.float32, -limit, limit)

    p = {"tte": jax.random.normal(next(keys), (3, D), jnp.float32)}  # nn.Embedding(3, D)

    p["ln1_g"] = jnp.ones((DEPTH, D), jnp.float32)
    p["ln1_b"] = jnp.zeros((DEPTH, D), jnp.float32)
    p["ln2_g"] = jnp.ones((DEPTH, D), jnp.float32)
    p["ln2_b"] = jnp.zeros((DEPTH, D), jnp.float32)
    p["wq"] = jnp.stack([xavier((D, D)) for _ in range(DEPTH)])      # qkv_bias=False
    p["wk"] = jnp.stack([xavier((D, D)) for _ in range(DEPTH)])
    p["wv"] = jnp.stack([xavier((D, D)) for _ in range(DEPTH)])
    p["wproj"] = jnp.stack([xavier((D, D)) for _ in range(DEPTH)])
    p["bproj"] = jnp.zeros((DEPTH, D), jnp.float32)
    p["w1"] = jnp.stack([xavier((D, hidden)) for _ in range(DEPTH)])
    p["b1"] = jnp.zeros((DEPTH, hidden), jnp.float32)
    p["w2"] = jnp.stack([xavier((hidden, D)) for _ in range(DEPTH)])
    p["b2"] = jnp.zeros((DEPTH, D), jnp.float32)

    p["mw1"] = jnp.stack([xavier((D, D)) for _ in range(DEPTH_MLP)])  # Mlp(D): hidden=D
    p["mb1"] = jnp.zeros((DEPTH_MLP, D), jnp.float32)
    p["mw2"] = jnp.stack([xavier((D, D)) for _ in range(DEPTH_MLP)])
    p["mb2"] = jnp.zeros((DEPTH_MLP, D), jnp.float32)

    p["norm_g"] = jnp.ones((D,), jnp.float32)
    p["norm_b"] = jnp.zeros((D,), jnp.float32)
    p["head_w"] = xavier((D, NC))
    p["head_b"] = jnp.zeros((NC,), jnp.float32)

    # Conv2d(2, 2, 3, padding=1, bias=False) with orthogonal init (as in the ref).
    a = np.asarray(jax.random.normal(next(keys), (2 * 3 * 3, 2), jnp.float32),
                   dtype=np.float64)
    qm, rm = np.linalg.qr(a)
    qm = qm * np.where(np.diag(rm) >= 0.0, 1.0, -1.0)[None, :]
    p["conv_w"] = np.ascontiguousarray(qm.T).reshape(2, 2, 3, 3).astype(np.float32)

    # Biaffine(D, D, 1, bias=(True, False)): torch Linear weight (out=D, in=D+1).
    p["biaffine_w"] = xavier((D, D + 1))
    return p


def pack_params(raw, batch, l_obj, l_col):
    """Host-side (one-off) folding/packing for the fused kernel."""
    D, hd = EMBED_DIM, HEAD_DIM
    NC = NUM_CLASSES
    Lx = GRID * GRID
    scale = float(hd) ** -0.5
    pk = {}

    # token-type slab: concat per-segment rows, tile over batch -> one VPU add
    tte = raw["tte"]
    slab = jnp.concatenate([jnp.broadcast_to(tte[0], (Lx, D)),
                            jnp.broadcast_to(tte[1], (l_obj, D)),
                            jnp.broadcast_to(tte[2], (l_col, D))], axis=0)
    pk["tte"] = jnp.tile(slab, (batch, 1))                       # (B*S, D)

    # transformer blocks: fused QKV with softmax scale folded into Q columns
    pk["ln1_g"] = raw["ln1_g"][:, None, :]; pk["ln1_b"] = raw["ln1_b"][:, None, :]
    pk["ln2_g"] = raw["ln2_g"][:, None, :]; pk["ln2_b"] = raw["ln2_b"][:, None, :]
    pk["wqkv"] = jnp.concatenate([raw["wq"] * scale, raw["wk"], raw["wv"]], axis=-1)
    pk["wproj"] = raw["wproj"]
    pk["bproj"] = raw["bproj"][:, None, :]
    pk["w1"] = raw["w1"]; pk["b1"] = raw["b1"][:, None, :]
    pk["w2"] = raw["w2"]; pk["b2"] = raw["b2"][:, None, :]
    pk["mw1"] = raw["mw1"]; pk["mb1"] = raw["mb1"][:, None, :]
    pk["mw2"] = raw["mw2"]; pk["mb2"] = raw["mb2"][:, None, :]
    pk["norm_g"] = raw["norm_g"][None, :]; pk["norm_b"] = raw["norm_b"][None, :]

    # norm->head->conv fold: HK_s = head_w @ K_s ; block-diag shift stack over batch;
    # constant term carries the head bias through shift+class-mix.
    kmats, shifts = build_conv_mats(raw["conv_w"], GRID, PATCH_SIZE, 2)
    head_w = np.asarray(raw["head_w"], np.float32)               # (D, NC)
    head_b = np.asarray(raw["head_b"], np.float32)               # (NC,)
    hk = np.einsum("dk,skn->sdn", head_w, kmats)                 # (9, D, NC)
    hbk = np.einsum("k,skn->sn", head_b, kmats)                  # (9, NC)
    rowsum = shifts.sum(axis=2)                                  # (9, Lx)
    const = np.einsum("sj,sn->jn", rowsum, hbk)                  # (Lx, NC)
    pk["hk"] = jnp.asarray(hk)
    pk["conv_const"] = jnp.asarray(np.tile(const, (batch, 1)))   # (B*Lx, NC)

    sstack = np.zeros((9 * batch * Lx, batch * Lx), np.float32)  # (288, 32) at B=2
    for s in range(9):
        for b in range(batch):
            r0 = s * batch * Lx + b * Lx
            sstack[r0:r0 + Lx, b * Lx:(b + 1) * Lx] = shifts[s]
    pk["sstack"] = jnp.asarray(sstack)

    # Biaffine: affine = o @ W[:, :D]^T + 1 * W[:, D]^T
    wb = raw["biaffine_w"]
    pk["bw"] = wb[:, :D].T                                       # (D, D)
    pk["bb"] = wb[:, D:].T                                       # (1, D)
    return pk


# ----------------------------------- main -------------------------------------
if __name__ == "__main__":
    key = jax.random.PRNGKey(0)
    kx, kobj, kcol, kp = jax.random.split(key, 4)

    B, Lx, Lobj, Lcol = 2, GRID * GRID, 8, 8       # Lx = 16 (4x4 patch grid)
    x = jax.random.normal(kx, (B, Lx, EMBED_DIM), jnp.float32)
    obj = jax.random.normal(kobj, (B, Lobj, EMBED_DIM), jnp.float32)
    col = jax.random.normal(kcol, (B, Lcol, EMBED_DIM), jnp.float32)

    raw = init_params(kp)
    packed = pack_params(raw, B, Lobj, Lcol)

    fwd = jax.jit(forward)
    p_img, occm_pred = fwd(x, obj, col, packed)
    jax.block_until_ready((p_img, occm_pred))

    assert p_img.shape == (B, 2, PATCH_SIZE * GRID, PATCH_SIZE * GRID), p_img.shape
    assert occm_pred.shape == (B, Lobj, Lobj, 1), occm_pred.shape
    assert bool(jnp.all(jnp.isfinite(p_img))) and bool(jnp.all(jnp.isfinite(occm_pred)))
    print("KERNEL_OK")
</pallas_src>

<mosaic_0001>
module attributes {stable_mosaic.version = 11 : i64} {
  func.func @_fused_forward_kernel(%arg0: memref<64x32xf32, #tpu.memory_space<vmem>>, %arg1: memref<64x32xf32, #tpu.memory_space<vmem>>, %arg2: memref<2x1x32xf32, #tpu.memory_space<vmem>>, %arg3: memref<2x1x32xf32, #tpu.memory_space<vmem>>, %arg4: memref<2x32x96xf32, #tpu.memory_space<vmem>>, %arg5: memref<2x32x32xf32, #tpu.memory_space<vmem>>, %arg6: memref<2x1x32xf32, #tpu.memory_space<vmem>>, %arg7: memref<2x1x32xf32, #tpu.memory_space<vmem>>, %arg8: memref<2x1x32xf32, #tpu.memory_space<vmem>>, %arg9: memref<2x32x128xf32, #tpu.memory_space<vmem>>, %arg10: memref<2x1x128xf32, #tpu.memory_space<vmem>>, %arg11: memref<2x128x32xf32, #tpu.memory_space<vmem>>, %arg12: memref<2x1x32xf32, #tpu.memory_space<vmem>>, %arg13: memref<2x32x32xf32, #tpu.memory_space<vmem>>, %arg14: memref<2x1x32xf32, #tpu.memory_space<vmem>>, %arg15: memref<2x32x32xf32, #tpu.memory_space<vmem>>, %arg16: memref<2x1x32xf32, #tpu.memory_space<vmem>>, %arg17: memref<1x32xf32, #tpu.memory_space<vmem>>, %arg18: memref<1x32xf32, #tpu.memory_space<vmem>>, %arg19: memref<288x32xf32, #tpu.memory_space<vmem>>, %arg20: memref<9x32x32xf32, #tpu.memory_space<vmem>>, %arg21: memref<32x32xf32, #tpu.memory_space<vmem>>, %arg22: memref<32x32xf32, #tpu.memory_space<vmem>>, %arg23: memref<1x32xf32, #tpu.memory_space<vmem>>, %arg24: memref<32x32xf32, #tpu.memory_space<vmem>>, %arg25: memref<2x8x8xf32, #tpu.memory_space<vmem>>) attributes {dimension_semantics = [], scalar_prefetch = 0 : i64, scratch_operands = 0 : i64, tpu.core_type = #tpu.core_type<tc>} {
    %c0 = arith.constant 0 : index
    %c0_0 = arith.constant 0 : index
    %0 = vector.load %arg0[%c0, %c0_0] : memref<64x32xf32, #tpu.memory_space<vmem>>, vector<64x32xf32>
    %c0_1 = arith.constant 0 : index
    %c0_2 = arith.constant 0 : index
    %1 = vector.load %arg1[%c0_1, %c0_2] : memref<64x32xf32, #tpu.memory_space<vmem>>, vector<64x32xf32>
    %2 = arith.addf %0, %1 : vector<64x32xf32>
    %c0_3 = arith.constant 0 : index
    %c0_4 = arith.constant 0 : index
    %c0_5 = arith.constant 0 : index
    %3 = vector.load %arg2[%c0_3, %c0_4, %c0_5] : memref<2x1x32xf32, #tpu.memory_space<vmem>>, vector<1x1x32xf32>
    %4 = vector.shape_cast %3 : vector<1x1x32xf32> to vector<1x32xf32>
    %c0_6 = arith.constant 0 : index
    %c0_7 = arith.constant 0 : index
    %c0_8 = arith.constant 0 : index
    %5 = vector.load %arg3[%c0_6, %c0_7, %c0_8] : memref<2x1x32xf32, #tpu.memory_space<vmem>>, vector<1x1x32xf32>
    %6 = vector.shape_cast %5 : vector<1x1x32xf32> to vector<1x32xf32>
    %cst = arith.constant dense<0.000000e+00> : vector<64xf32>
    %7 = vector.multi_reduction <add>, %2, %cst [1] : vector<64x32xf32> to vector<64xf32>
    %8 = vector.shape_cast %7 : vector<64xf32> to vector<64x1xf32>
    %cst_9 = arith.constant 3.200000e+01 : f32
    %9 = vector.broadcast %cst_9 : f32 to vector<64x1xf32>
    %10 = arith.divf %8, %9 : vector<64x1xf32>
    %11 = vector.broadcast %10 : vector<64x1xf32> to vector<64x32xf32>
    %12 = arith.subf %2, %11 : vector<64x32xf32>
    %13 = arith.mulf %12, %12 : vector<64x32xf32>
    %cst_10 = arith.constant dense<0.000000e+00> : vector<64xf32>
    %14 = vector.multi_reduction <add>, %13, %cst_10 [1] : vector<64x32xf32> to vector<64xf32>
    %15 = vector.shape_cast %14 : vector<64xf32> to vector<64x1xf32>
    %cst_11 = arith.constant 3.200000e+01 : f32
    %16 = vector.broadcast %cst_11 : f32 to vector<64x1xf32>
    %17 = arith.divf %15, %16 : vector<64x1xf32>
    %18 = vector.broadcast %10 : vector<64x1xf32> to vector<64x32xf32>
    %19 = arith.subf %2, %18 : vector<64x32xf32>
    %cst_12 = arith.constant 9.99999974E-6 : f32
    %20 = vector.broadcast %cst_12 : f32 to vector<64x1xf32>
    %21 = arith.addf %17, %20 : vector<64x1xf32>
    %22 = math.rsqrt %21 : vector<64x1xf32>
    %23 = vector.broadcast %22 : vector<64x1xf32> to vector<64x32xf32>
    %24 = arith.mulf %19, %23 : vector<64x32xf32>
    %25 = vector.broadcast %4 : vector<1x32xf32> to vector<64x32xf32>
    %26 = arith.mulf %24, %25 : vector<64x32xf32>
    %27 = vector.broadcast %6 : vector<1x32xf32> to vector<64x32xf32>
    %28 = arith.addf %26, %27 : vector<64x32xf32>
    %c0_13 = arith.constant 0 : index
    %c0_14 = arith.constant 0 : index
    %c0_15 = arith.constant 0 : index
    %29 = vector.load %arg4[%c0_13, %c0_14, %c0_15] : memref<2x32x96xf32, #tpu.memory_space<vmem>>, vector<1x32x96xf32>
    %30 = vector.shape_cast %29 : vector<1x32x96xf32> to vector<32x96xf32>
    %cst_16 = arith.constant dense<0.000000e+00> : vector<64x96xf32>
    %31 = tpu.matmul %28, %30, %cst_16 {dimension_numbers = #tpu.dot_dimension_numbers<[1], [0], [0], [1], [0, 0, 1, 1], [], []>} : vector<64x32xf32>, vector<32x96xf32>, vector<64x96xf32> -> vector<64x96xf32>
    %32 = vector.extract_strided_slice %31 {offsets = [0, 0], sizes = [64, 8], strides = [1, 1]} : vector<64x96xf32> to vector<64x8xf32>
    %33 = vector.shape_cast %32 : vector<64x8xf32> to vector<2x32x8xf32>
    %34 = vector.extract_strided_slice %31 {offsets = [0, 32], sizes = [64, 8], strides = [1, 1]} : vector<64x96xf32> to vector<64x8xf32>
    %35 = vector.shape_cast %34 : vector<64x8xf32> to vector<2x32x8xf32>
    %36 = vector.extract_strided_slice %31 {offsets = [0, 64], sizes = [64, 8], strides = [1, 1]} : vector<64x96xf32> to vector<64x8xf32>
    %37 = vector.shape_cast %36 : vector<64x8xf32> to vector<2x32x8xf32>
    "tpu.trace_start"() <{level = 10 : i32, message = "bqd,bkd->bqk"}> : () -> ()
    %cst_17 = arith.constant dense<0.000000e+00> : vector<2x32x32xf32>
    %38 = tpu.matmul %33, %35, %cst_17 {dimension_numbers = #tpu.dot_dimension_numbers<[2], [2], [1], [1], [0, 0, 0, 1, 1, 1], [0], [0]>} : vector<2x32x8xf32>, vector<2x32x8xf32>, vector<2x32x32xf32> -> vector<2x32x32xf32>
    "tpu.trace_stop"() : () -> ()
    %cst_18 = arith.constant dense<0xFF800000> : vector<2x32xf32>
    %39 = vector.multi_reduction <maximumf>, %38, %cst_18 [2] : vector<2x32x32xf32> to vector<2x32xf32>
    %40 = vector.shape_cast %39 : vector<2x32xf32> to vector<2x32x1xf32>
    %41 = vector.broadcast %40 : vector<2x32x1xf32> to vector<2x32x32xf32>
    %42 = arith.subf %38, %41 : vector<2x32x32xf32>
    %43 = math.exp %42 : vector<2x32x32xf32>
    %cst_19 = arith.constant dense<0.000000e+00> : vector<2x32xf32>
    %44 = vector.multi_reduction <add>, %43, %cst_19 [2] : vector<2x32x32xf32> to vector<2x32xf32>
    %45 = vector.shape_cast %44 : vector<2x32xf32> to vector<2x32x1xf32>
    %46 = tpu.reciprocal %45 {approx = true} : vector<2x32x1xf32> -> vector<2x32x1xf32>
    %47 = vector.broadcast %46 : vector<2x32x1xf32> to vector<2x32x32xf32>
    %48 = arith.mulf %43, %47 : vector<2x32x32xf32>
    "tpu.trace_start"() <{level = 10 : i32, message = "bqk,bkd->bqd"}> : () -> ()
    %cst_20 = arith.constant dense<0.000000e+00> : vector<2x32x8xf32>
    %49 = tpu.matmul %48, %37, %cst_20 {dimension_numbers = #tpu.dot_dimension_numbers<[2], [1], [1], [2], [0, 0, 0, 1, 1, 2], [0], [0]>} : vector<2x32x32xf32>, vector<2x32x8xf32>, vector<2x32x8xf32> -> vector<2x32x8xf32>
    "tpu.trace_stop"() : () -> ()
    %50 = vector.shape_cast %49 : vector<2x32x8xf32> to vector<64x8xf32>
    %51 = vector.extract_strided_slice %31 {offsets = [0, 8], sizes = [64, 8], strides = [1, 1]} : vector<64x96xf32> to vector<64x8xf32>
    %52 = vector.shape_cast %51 : vector<64x8xf32> to vector<2x32x8xf32>
    %53 = vector.extract_strided_slice %31 {offsets = [0, 40], sizes = [64, 8], strides = [1, 1]} : vector<64x96xf32> to vector<64x8xf32>
    %54 = vector.shape_cast %53 : vector<64x8xf32> to vector<2x32x8xf32>
    %55 = vector.extract_strided_slice %31 {offsets = [0, 72], sizes = [64, 8], strides = [1, 1]} : vector<64x96xf32> to vector<64x8xf32>
    %56 = vector.shape_cast %55 : vector<64x8xf32> to vector<2x32x8xf32>
    "tpu.trace_start"() <{level = 10 : i32, message = "bqd,bkd->bqk"}> : () -> ()
    %cst_21 = arith.constant dense<0.000000e+00> : vector<2x32x32xf32>
    %57 = tpu.matmul %52, %54, %cst_21 {dimension_numbers = #tpu.dot_dimension_numbers<[2], [2], [1], [1], [0, 0, 0, 1, 1, 1], [0], [0]>} : vector<2x32x8xf32>, vector<2x32x8xf32>, vector<2x32x32xf32> -> vector<2x32x32xf32>
    "tpu.trace_stop"() : () -> ()
    %cst_22 = arith.constant dense<0xFF800000> : vector<2x32xf32>
    %58 = vector.multi_reduction <maximumf>, %57, %cst_22 [2] : vector<2x32x32xf32> to vector<2x32xf32>
    %59 = vector.shape_cast %58 : vector<2x32xf32> to vector<2x32x1xf32>
    %60 = vector.broadcast %59 : vector<2x32x1xf32> to vector<2x32x32xf32>
    %61 = arith.subf %57, %60 : vector<2x32x32xf32>
    %62 = math.exp %61 : vector<2x32x32xf32>
    %cst_23 = arith.constant dense<0.000000e+00> : vector<2x32xf32>
    %63 = vector.multi_reduction <add>, %62, %cst_23 [2] : vector<2x32x32xf32> to vector<2x32xf32>
    %64 = vector.shape_cast %63 : vector<2x32xf32> to vector<2x32x1xf32>
    %65 = tpu.reciprocal %64 {approx = true} : vector<2x32x1xf32> -> vector<2x32x1xf32>
    %66 = vector.broadcast %65 : vector<2x32x1xf32> to vector<2x32x32xf32>
    %67 = arith.mulf %62, %66 : vector<2x32x32xf32>
    "tpu.trace_start"() <{level = 10 : i32, message = "bqk,bkd->bqd"}> : () -> ()
    %cst_24 = arith.constant dense<0.000000e+00> : vector<2x32x8xf32>
    %68 = tpu.matmul %67, %56, %cst_24 {dimension_numbers = #tpu.dot_dimension_numbers<[2], [1], [1], [2], [0, 0, 0, 1, 1, 2], [0], [0]>} : vector<2x32x32xf32>, vector<2x32x8xf32>, vector<2x32x8xf32> -> vector<2x32x8xf32>
    "tpu.trace_stop"() : () -> ()
    %69 = vector.shape_cast %68 : vector<2x32x8xf32> to vector<64x8xf32>
    %70 = vector.extract_strided_slice %31 {offsets = [0, 16], sizes = [64, 8], strides = [1, 1]} : vector<64x96xf32> to vector<64x8xf32>
    %71 = vector.shape_cast %70 : vector<64x8xf32> to vector<2x32x8xf32>
    %72 = vector.extract_strided_slice %31 {offsets = [0, 48], sizes = [64, 8], strides = [1, 1]} : vector<64x96xf32> to vector<64x8xf32>
    %73 = vector.shape_cast %72 : vector<64x8xf32> to vector<2x32x8xf32>
    %74 = vector.extract_strided_slice %31 {offsets = [0, 80], sizes = [64, 8], strides = [1, 1]} : vector<64x96xf32> to vector<64x8xf32>
    %75 = vector.shape_cast %74 : vector<64x8xf32> to vector<2x32x8xf32>
    "tpu.trace_start"() <{level = 10 : i32, message = "bqd,bkd->bqk"}> : () -> ()
    %cst_25 = arith.constant dense<0.000000e+00> : vector<2x32x32xf32>
    %76 = tpu.matmul %71, %73, %cst_25 {dimension_numbers = #tpu.dot_dimension_numbers<[2], [2], [1], [1], [0, 0, 0, 1, 1, 1], [0], [0]>} : vector<2x32x8xf32>, vector<2x32x8xf32>, vector<2x32x32xf32> -> vector<2x32x32xf32>
    "tpu.trace_stop"() : () -> ()
    %cst_26 = arith.constant dense<0xFF800000> : vector<2x32xf32>
    %77 = vector.multi_reduction <maximumf>, %76, %cst_26 [2] : vector<2x32x32xf32> to vector<2x32xf32>
    %78 = vector.shape_cast %77 : vector<2x32xf32> to vector<2x32x1xf32>
    %79 = vector.broadcast %78 : vector<2x32x1xf32> to vector<2x32x32xf32>
    %80 = arith.subf %76, %79 : vector<2x32x32xf32>
    %81 = math.exp %80 : vector<2x32x32xf32>
    %cst_27 = arith.constant dense<0.000000e+00> : vector<2x32xf32>
    %82 = vector.multi_reduction <add>, %81, %cst_27 [2] : vector<2x32x32xf32> to vector<2x32xf32>
    %83 = vector.shape_cast %82 : vector<2x32xf32> to vector<2x32x1xf32>
    %84 = tpu.reciprocal %83 {approx = true} : vector<2x32x1xf32> -> vector<2x32x1xf32>
    %85 = vector.broadcast %84 : vector<2x32x1xf32> to vector<2x32x32xf32>
    %86 = arith.mulf %81, %85 : vector<2x32x32xf32>
    "tpu.trace_start"() <{level = 10 : i32, message = "bqk,bkd->bqd"}> : () -> ()
    %cst_28 = arith.constant dense<0.000000e+00> : vector<2x32x8xf32>
    %87 = tpu.matmul %86, %75, %cst_28 {dimension_numbers = #tpu.dot_dimension_numbers<[2], [1], [1], [2], [0, 0, 0, 1, 1, 2], [0], [0]>} : vector<2x32x32xf32>, vector<2x32x8xf32>, vector<2x32x8xf32> -> vector<2x32x8xf32>
    "tpu.trace_stop"() : () -> ()
    %88 = vector.shape_cast %87 : vector<2x32x8xf32> to vector<64x8xf32>
    %89 = vector.extract_strided_slice %31 {offsets = [0, 24], sizes = [64, 8], strides = [1, 1]} : vector<64x96xf32> to vector<64x8xf32>
    %90 = vector.shape_cast %89 : vector<64x8xf32> to vector<2x32x8xf32>
    %91 = vector.extract_strided_slice %31 {offsets = [0, 56], sizes = [64, 8], strides = [1, 1]} : vector<64x96xf32> to vector<64x8xf32>
    %92 = vector.shape_cast %91 : vector<64x8xf32> to vector<2x32x8xf32>
    %93 = vector.extract_strided_slice %31 {offsets = [0, 88], sizes = [64, 8], strides = [1, 1]} : vector<64x96xf32> to vector<64x8xf32>
    %94 = vector.shape_cast %93 : vector<64x8xf32> to vector<2x32x8xf32>
    "tpu.trace_start"() <{level = 10 : i32, message = "bqd,bkd->bqk"}> : () -> ()
    %cst_29 = arith.constant dense<0.000000e+00> : vector<2x32x32xf32>
    %95 = tpu.matmul %90, %92, %cst_29 {dimension_numbers = #tpu.dot_dimension_numbers<[2], [2], [1], [1], [0, 0, 0, 1, 1, 1], [0], [0]>} : vector<2x32x8xf32>, vector<2x32x8xf32>, vector<2x32x32xf32> -> vector<2x32x32xf32>
    "tpu.trace_stop"() : () -> ()
    %cst_30 = arith.constant dense<0xFF800000> : vector<2x32xf32>
    %96 = vector.multi_reduction <maximumf>, %95, %cst_30 [2] : vector<2x32x32xf32> to vector<2x32xf32>
    %97 = vector.shape_cast %96 : vector<2x32xf32> to vector<2x32x1xf32>
    %98 = vector.broadcast %97 : vector<2x32x1xf32> to vector<2x32x32xf32>
    %99 = arith.subf %95, %98 : vector<2x32x32xf32>
    %100 = math.exp %99 : vector<2x32x32xf32>
    %cst_31 = arith.constant dense<0.000000e+00> : vector<2x32xf32>
    %101 = vector.multi_reduction <add>, %100, %cst_31 [2] : vector<2x32x32xf32> to vector<2x32xf32>
    %102 = vector.shape_cast %101 : vector<2x32xf32> to vector<2x32x1xf32>
    %103 = tpu.reciprocal %102 {approx = true} : vector<2x32x1xf32> -> vector<2x32x1xf32>
    %104 = vector.broadcast %103 : vector<2x32x1xf32> to vector<2x32x32xf32>
    %105 = arith.mulf %100, %104 : vector<2x32x32xf32>
    "tpu.trace_start"() <{level = 10 : i32, message = "bqk,bkd->bqd"}> : () -> ()
    %cst_32 = arith.constant dense<0.000000e+00> : vector<2x32x8xf32>
    %106 = tpu.matmul %105, %94, %cst_32 {dimension_numbers = #tpu.dot_dimension_numbers<[2], [1], [1], [2], [0, 0, 0, 1, 1, 2], [0], [0]>} : vector<2x32x32xf32>, vector<2x32x8xf32>, vector<2x32x8xf32> -> vector<2x32x8xf32>
    "tpu.trace_stop"() : () -> ()
    %107 = vector.shape_cast %106 : vector<2x32x8xf32> to vector<64x8xf32>
    %108 = tpu.concatenate %50, %69, %88, %107 in 1 : vector<64x8xf32>, vector<64x8xf32>, vector<64x8xf32>, vector<64x8xf32> -> vector<64x32xf32>
    %c0_33 = arith.constant 0 : index
    %c0_34 = arith.constant 0 : index
    %c0_35 = arith.constant 0 : index
    %109 = vector.load %arg5[%c0_33, %c0_34, %c0_35] : memref<2x32x32xf32, #tpu.memory_space<vmem>>, vector<1x32x32xf32>
    %110 = vector.shape_cast %109 : vector<1x32x32xf32> to vector<32x32xf32>
    %cst_36 = arith.constant dense<0.000000e+00> : vector<64x32xf32>
    %111 = tpu.matmul %108, %110, %cst_36 {dimension_numbers = #tpu.dot_dimension_numbers<[1], [0], [0], [1], [0, 0, 1, 1], [], []>} : vector<64x32xf32>, vector<32x32xf32>, vector<64x32xf32> -> vector<64x32xf32>
    %112 = arith.addf %2, %111 : vector<64x32xf32>
    %c0_37 = arith.constant 0 : index
    %c0_38 = arith.constant 0 : index
    %c0_39 = arith.constant 0 : index
    %113 = vector.load %arg6[%c0_37, %c0_38, %c0_39] : memref<2x1x32xf32, #tpu.memory_space<vmem>>, vector<1x1x32xf32>
    %114 = vector.shape_cast %113 : vector<1x1x32xf32> to vector<1x32xf32>
    %115 = vector.broadcast %114 : vector<1x32xf32> to vector<64x32xf32>
    %116 = arith.addf %112, %115 : vector<64x32xf32>
    %c0_40 = arith.constant 0 : index
    %c0_41 = arith.constant 0 : index
    %c0_42 = arith.constant 0 : index
    %117 = vector.load %arg7[%c0_40, %c0_41, %c0_42] : memref<2x1x32xf32, #tpu.memory_space<vmem>>, vector<1x1x32xf32>
    %118 = vector.shape_cast %117 : vector<1x1x32xf32> to vector<1x32xf32>
    %c0_43 = arith.constant 0 : index
    %c0_44 = arith.constant 0 : index
    %c0_45 = arith.constant 0 : index
    %119 = vector.load %arg8[%c0_43, %c0_44, %c0_45] : memref<2x1x32xf32, #tpu.memory_space<vmem>>, vector<1x1x32xf32>
    %120 = vector.shape_cast %119 : vector<1x1x32xf32> to vector<1x32xf32>
    %cst_46 = arith.constant dense<0.000000e+00> : vector<64xf32>
    %121 = vector.multi_reduction <add>, %116, %cst_46 [1] : vector<64x32xf32> to vector<64xf32>
    %122 = vector.shape_cast %121 : vector<64xf32> to vector<64x1xf32>
    %cst_47 = arith.constant 3.200000e+01 : f32
    %123 = vector.broadcast %cst_47 : f32 to vector<64x1xf32>
    %124 = arith.divf %122, %123 : vector<64x1xf32>
    %125 = vector.broadcast %124 : vector<64x1xf32> to vector<64x32xf32>
    %126 = arith.subf %116, %125 : vector<64x32xf32>
    %127 = arith.mulf %126, %126 : vector<64x32xf32>
    %cst_48 = arith.constant dense<0.000000e+00> : vector<64xf32>
    %128 = vector.multi_reduction <add>, %127, %cst_48 [1] : vector<64x32xf32> to vector<64xf32>
    %129 = vector.shape_cast %128 : vector<64xf32> to vector<64x1xf32>
    %cst_49 = arith.constant 3.200000e+01 : f32
    %130 = vector.broadcast %cst_49 : f32 to vector<64x1xf32>
    %131 = arith.divf %129, %130 : vector<64x1xf32>
    %132 = vector.broadcast %124 : vector<64x1xf32> to vector<64x32xf32>
    %133 = arith.subf %116, %132 : vector<64x32xf32>
    %cst_50 = arith.constant 9.99999974E-6 : f32
    %134 = vector.broadcast %cst_50 : f32 to vector<64x1xf32>
    %135 = arith.addf %131, %134 : vector<64x1xf32>
    %136 = math.rsqrt %135 : vector<64x1xf32>
    %137 = vector.broadcast %136 : vector<64x1xf32> to vector<64x32xf32>
    %138 = arith.mulf %133, %137 : vector<64x32xf32>
    %139 = vector.broadcast %118 : vector<1x32xf32> to vector<64x32xf32>
    %140 = arith.mulf %138, %139 : vector<64x32xf32>
    %141 = vector.broadcast %120 : vector<1x32xf32> to vector<64x32xf32>
    %142 = arith.addf %140, %141 : vector<64x32xf32>
    %c0_51 = arith.constant 0 : index
    %c0_52 = arith.constant 0 : index
    %c0_53 = arith.constant 0 : index
    %143 = vector.load %arg9[%c0_51, %c0_52, %c0_53] : memref<2x32x128xf32, #tpu.memory_space<vmem>>, vector<1x32x128xf32>
    %144 = vector.shape_cast %143 : vector<1x32x128xf32> to vector<32x128xf32>
    %cst_54 = arith.constant dense<0.000000e+00> : vector<64x128xf32>
    %145 = tpu.matmul %142, %144, %cst_54 {dimension_numbers = #tpu.dot_dimension_numbers<[1], [0], [0], [1], [0, 0, 1, 1], [], []>} : vector<64x32xf32>, vector<32x128xf32>, vector<64x128xf32> -> vector<64x128xf32>
    %c0_55 = arith.constant 0 : index
    %c0_56 = arith.constant 0 : index
    %c0_57 = arith.constant 0 : index
    %146 = vector.load %arg10[%c0_55, %c0_56, %c0_57] : memref<2x1x128xf32, #tpu.memory_space<vmem>>, vector<1x1x128xf32>
    %147 = vector.shape_cast %146 : vector<1x1x128xf32> to vector<1x128xf32>
    %148 = vector.broadcast %147 : vector<1x128xf32> to vector<64x128xf32>
    %149 = arith.addf %145, %148 : vector<64x128xf32>
    %150 = arith.mulf %149, %149 : vector<64x128xf32>
    %151 = arith.mulf %149, %150 : vector<64x128xf32>
    %cst_58 = arith.constant 4.471500e-02 : f32
    %152 = vector.broadcast %cst_58 : f32 to vector<64x128xf32>
    %153 = arith.mulf %152, %151 : vector<64x128xf32>
    %154 = arith.addf %149, %153 : vector<64x128xf32>
    %cst_59 = arith.constant 0.797884583 : f32
    %155 = vector.broadcast %cst_59 : f32 to vector<64x128xf32>
    %156 = arith.mulf %155, %154 : vector<64x128xf32>
    %157 = math.tanh %156 : vector<64x128xf32>
    %cst_60 = arith.constant 1.000000e+00 : f32
    %158 = vector.broadcast %cst_60 : f32 to vector<64x128xf32>
    %159 = arith.addf %158, %157 : vector<64x128xf32>
    %cst_61 = arith.constant 5.000000e-01 : f32
    %160 = vector.broadcast %cst_61 : f32 to vector<64x128xf32>
    %161 = arith.mulf %160, %159 : vector<64x128xf32>
    %162 = arith.mulf %149, %161 : vector<64x128xf32>
    %c0_62 = arith.constant 0 : index
    %c0_63 = arith.constant 0 : index
    %c0_64 = arith.constant 0 : index
    %163 = vector.load %arg11[%c0_62, %c0_63, %c0_64] : memref<2x128x32xf32, #tpu.memory_space<vmem>>, vector<1x128x32xf32>
    %164 = vector.shape_cast %163 : vector<1x128x32xf32> to vector<128x32xf32>
    %cst_65 = arith.constant dense<0.000000e+00> : vector<64x32xf32>
    %165 = tpu.matmul %162, %164, %cst_65 {dimension_numbers = #tpu.dot_dimension_numbers<[1], [0], [0], [1], [0, 0, 1, 1], [], []>} : vector<64x128xf32>, vector<128x32xf32>, vector<64x32xf32> -> vector<64x32xf32>
    %166 = arith.addf %116, %165 : vector<64x32xf32>
    %c0_66 = arith.constant 0 : index
    %c0_67 = arith.constant 0 : index
    %c0_68 = arith.constant 0 : index
    %167 = vector.load %arg12[%c0_66, %c0_67, %c0_68] : memref<2x1x32xf32, #tpu.memory_space<vmem>>, vector<1x1x32xf32>
    %168 = vector.shape_cast %167 : vector<1x1x32xf32> to vector<1x32xf32>
    %169 = vector.broadcast %168 : vector<1x32xf32> to vector<64x32xf32>
    %170 = arith.addf %166, %169 : vector<64x32xf32>
    %c1 = arith.constant 1 : index
    %c0_69 = arith.constant 0 : index
    %c0_70 = arith.constant 0 : index
    %171 = vector.load %arg2[%c1, %c0_69, %c0_70] : memref<2x1x32xf32, #tpu.memory_space<vmem>>, vector<1x1x32xf32>
    %172 = vector.shape_cast %171 : vector<1x1x32xf32> to vector<1x32xf32>
    %c1_71 = arith.constant 1 : index
    %c0_72 = arith.constant 0 : index
    %c0_73 = arith.constant 0 : index
    %173 = vector.load %arg3[%c1_71, %c0_72, %c0_73] : memref<2x1x32xf32, #tpu.memory_space<vmem>>, vector<1x1x32xf32>
    %174 = vector.shape_cast %173 : vector<1x1x32xf32> to vector<1x32xf32>
    %cst_74 = arith.constant dense<0.000000e+00> : vector<64xf32>
    %175 = vector.multi_reduction <add>, %170, %cst_74 [1] : vector<64x32xf32> to vector<64xf32>
    %176 = vector.shape_cast %175 : vector<64xf32> to vector<64x1xf32>
    %cst_75 = arith.constant 3.200000e+01 : f32
    %177 = vector.broadcast %cst_75 : f32 to vector<64x1xf32>
    %178 = arith.divf %176, %177 : vector<64x1xf32>
    %179 = vector.broadcast %178 : vector<64x1xf32> to vector<64x32xf32>
    %180 = arith.subf %170, %179 : vector<64x32xf32>
    %181 = arith.mulf %180, %180 : vector<64x32xf32>
    %cst_76 = arith.constant dense<0.000000e+00> : vector<64xf32>
    %182 = vector.multi_reduction <add>, %181, %cst_76 [1] : vector<64x32xf32> to vector<64xf32>
    %183 = vector.shape_cast %182 : vector<64xf32> to vector<64x1xf32>
    %cst_77 = arith.constant 3.200000e+01 : f32
    %184 = vector.broadcast %cst_77 : f32 to vector<64x1xf32>
    %185 = arith.divf %183, %184 : vector<64x1xf32>
    %186 = vector.broadcast %178 : vector<64x1xf32> to vector<64x32xf32>
    %187 = arith.subf %170, %186 : vector<64x32xf32>
    %cst_78 = arith.constant 9.99999974E-6 : f32
    %188 = vector.broadcast %cst_78 : f32 to vector<64x1xf32>
    %189 = arith.addf %185, %188 : vector<64x1xf32>
    %190 = math.rsqrt %189 : vector<64x1xf32>
    %191 = vector.broadcast %190 : vector<64x1xf32> to vector<64x32xf32>
    %192 = arith.mulf %187, %191 : vector<64x32xf32>
    %193 = vector.broadcast %172 : vector<1x32xf32> to vector<64x32xf32>
    %194 = arith.mulf %192, %193 : vector<64x32xf32>
    %195 = vector.broadcast %174 : vector<1x32xf32> to vector<64x32xf32>
    %196 = arith.addf %194, %195 : vector<64x32xf32>
    %c1_79 = arith.constant 1 : index
    %c0_80 = arith.constant 0 : index
    %c0_81 = arith.constant 0 : index
    %197 = vector.load %arg4[%c1_79, %c0_80, %c0_81] : memref<2x32x96xf32, #tpu.memory_space<vmem>>, vector<1x32x96xf32>
    %198 = vector.shape_cast %197 : vector<1x32x96xf32> to vector<32x96xf32>
    %cst_82 = arith.constant dense<0.000000e+00> : vector<64x96xf32>
    %199 = tpu.matmul %196, %198, %cst_82 {dimension_numbers = #tpu.dot_dimension_numbers<[1], [0], [0], [1], [0, 0, 1, 1], [], []>} : vector<64x32xf32>, vector<32x96xf32>, vector<64x96xf32> -> vector<64x96xf32>
    %200 = vector.extract_strided_slice %199 {offsets = [0, 0], sizes = [64, 8], strides = [1, 1]} : vector<64x96xf32> to vector<64x8xf32>
    %201 = vector.shape_cast %200 : vector<64x8xf32> to vector<2x32x8xf32>
    %202 = vector.extract_strided_slice %199 {offsets = [0, 32], sizes = [64, 8], strides = [1, 1]} : vector<64x96xf32> to vector<64x8xf32>
    %203 = vector.shape_cast %202 : vector<64x8xf32> to vector<2x32x8xf32>
    %204 = vector.extract_strided_slice %199 {offsets = [0, 64], sizes = [64, 8], strides = [1, 1]} : vector<64x96xf32> to vector<64x8xf32>
    %205 = vector.shape_cast %204 : vector<64x8xf32> to vector<2x32x8xf32>
    "tpu.trace_start"() <{level = 10 : i32, message = "bqd,bkd->bqk"}> : () -> ()
    %cst_83 = arith.constant dense<0.000000e+00> : vector<2x32x32xf32>
    %206 = tpu.matmul %201, %203, %cst_83 {dimension_numbers = #tpu.dot_dimension_numbers<[2], [2], [1], [1], [0, 0, 0, 1, 1, 1], [0], [0]>} : vector<2x32x8xf32>, vector<2x32x8xf32>, vector<2x32x32xf32> -> vector<2x32x32xf32>
    "tpu.trace_stop"() : () -> ()
    %cst_84 = arith.constant dense<0xFF800000> : vector<2x32xf32>
    %207 = vector.multi_reduction <maximumf>, %206, %cst_84 [2] : vector<2x32x32xf32> to vector<2x32xf32>
    %208 = vector.shape_cast %207 : vector<2x32xf32> to vector<2x32x1xf32>
    %209 = vector.broadcast %208 : vector<2x32x1xf32> to vector<2x32x32xf32>
    %210 = arith.subf %206, %209 : vector<2x32x32xf32>
    %211 = math.exp %210 : vector<2x32x32xf32>
    %cst_85 = arith.constant dense<0.000000e+00> : vector<2x32xf32>
    %212 = vector.multi_reduction <add>, %211, %cst_85 [2] : vector<2x32x32xf32> to vector<2x32xf32>
    %213 = vector.shape_cast %212 : vector<2x32xf32> to vector<2x32x1xf32>
    %214 = tpu.reciprocal %213 {approx = true} : vector<2x32x1xf32> -> vector<2x32x1xf32>
    %215 = vector.broadcast %214 : vector<2x32x1xf32> to vector<2x32x32xf32>
    %216 = arith.mulf %211, %215 : vector<2x32x32xf32>
    "tpu.trace_start"() <{level = 10 : i32, message = "bqk,bkd->bqd"}> : () -> ()
    %cst_86 = arith.constant dense<0.000000e+00> : vector<2x32x8xf32>
    %217 = tpu.matmul %216, %205, %cst_86 {dimension_numbers = #tpu.dot_dimension_numbers<[2], [1], [1], [2], [0, 0, 0, 1, 1, 2], [0], [0]>} : vector<2x32x32xf32>, vector<2x32x8xf32>, vector<2x32x8xf32> -> vector<2x32x8xf32>
    "tpu.trace_stop"() : () -> ()
    %218 = vector.shape_cast %217 : vector<2x32x8xf32> to vector<64x8xf32>
    %219 = vector.extract_strided_slice %199 {offsets = [0, 8], sizes = [64, 8], strides = [1, 1]} : vector<64x96xf32> to vector<64x8xf32>
    %220 = vector.shape_cast %219 : vector<64x8xf32> to vector<2x32x8xf32>
    %221 = vector.extract_strided_slice %199 {offsets = [0, 40], sizes = [64, 8], strides = [1, 1]} : vector<64x96xf32> to vector<64x8xf32>
    %222 = vector.shape_cast %221 : vector<64x8xf32> to vector<2x32x8xf32>
    %223 = vector.extract_strided_slice %199 {offsets = [0, 72], sizes = [64, 8], strides = [1, 1]} : vector<64x96xf32> to vector<64x8xf32>
    %224 = vector.shape_cast %223 : vector<64x8xf32> to vector<2x32x8xf32>
    "tpu.trace_start"() <{level = 10 : i32, message = "bqd,bkd->bqk"}> : () -> ()
    %cst_87 = arith.constant dense<0.000000e+00> : vector<2x32x32xf32>
    %225 = tpu.matmul %220, %222, %cst_87 {dimension_numbers = #tpu.dot_dimension_numbers<[2], [2], [1], [1], [0, 0, 0, 1, 1, 1], [0], [0]>} : vector<2x32x8xf32>, vector<2x32x8xf32>, vector<2x32x32xf32> -> vector<2x32x32xf32>
    "tpu.trace_stop"() : () -> ()
    %cst_88 = arith.constant dense<0xFF800000> : vector<2x32xf32>
    %226 = vector.multi_reduction <maximumf>, %225, %cst_88 [2] : vector<2x32x32xf32> to vector<2x32xf32>
    %227 = vector.shape_cast %226 : vector<2x32xf32> to vector<2x32x1xf32>
    %228 = vector.broadcast %227 : vector<2x32x1xf32> to vector<2x32x32xf32>
    %229 = arith.subf %225, %228 : vector<2x32x32xf32>
    %230 = math.exp %229 : vector<2x32x32xf32>
    %cst_89 = arith.constant dense<0.000000e+00> : vector<2x32xf32>
    %231 = vector.multi_reduction <add>, %230, %cst_89 [2] : vector<2x32x32xf32> to vector<2x32xf32>
    %232 = vector.shape_cast %231 : vector<2x32xf32> to vector<2x32x1xf32>
    %233 = tpu.reciprocal %232 {approx = true} : vector<2x32x1xf32> -> vector<2x32x1xf32>
    %234 = vector.broadcast %233 : vector<2x32x1xf32> to vector<2x32x32xf32>
    %235 = arith.mulf %230, %234 : vector<2x32x32xf32>
    "tpu.trace_start"() <{level = 10 : i32, message = "bqk,bkd->bqd"}> : () -> ()
    %cst_90 = arith.constant dense<0.000000e+00> : vector<2x32x8xf32>
    %236 = tpu.matmul %235, %224, %cst_90 {dimension_numbers = #tpu.dot_dimension_numbers<[2], [1], [1], [2], [0, 0, 0, 1, 1, 2], [0], [0]>} : vector<2x32x32xf32>, vector<2x32x8xf32>, vector<2x32x8xf32> -> vector<2x32x8xf32>
    "tpu.trace_stop"() : () -> ()
    %237 = vector.shape_cast %236 : vector<2x32x8xf32> to vector<64x8xf32>
    %238 = vector.extract_strided_slice %199 {offsets = [0, 16], sizes = [64, 8], strides = [1, 1]} : vector<64x96xf32> to vector<64x8xf32>
    %239 = vector.shape_cast %238 : vector<64x8xf32> to vector<2x32x8xf32>
    %240 = vector.extract_strided_slice %199 {offsets = [0, 48], sizes = [64, 8], strides = [1, 1]} : vector<64x96xf32> to vector<64x8xf32>
    %241 = vector.shape_cast %240 : vector<64x8xf32> to vector<2x32x8xf32>
    %242 = vector.extract_strided_slice %199 {offsets = [0, 80], sizes = [64, 8], strides = [1, 1]} : vector<64x96xf32> to vector<64x8xf32>
    %243 = vector.shape_cast %242 : vector<64x8xf32> to vector<2x32x8xf32>
    "tpu.trace_start"() <{level = 10 : i32, message = "bqd,bkd->bqk"}> : () -> ()
    %cst_91 = arith.constant dense<0.000000e+00> : vector<2x32x32xf32>
    %244 = tpu.matmul %239, %241, %cst_91 {dimension_numbers = #tpu.dot_dimension_numbers<[2], [2], [1], [1], [0, 0, 0, 1, 1, 1], [0], [0]>} : vector<2x32x8xf32>, vector<2x32x8xf32>, vector<2x32x32xf32> -> vector<2x32x32xf32>
    "tpu.trace_stop"() : () -> ()
    %cst_92 = arith.constant dense<0xFF800000> : vector<2x32xf32>
    %245 = vector.multi_reduction <maximumf>, %244, %cst_92 [2] : vector<2x32x32xf32> to vector<2x32xf32>
    %246 = vector.shape_cast %245 : vector<2x32xf32> to vector<2x32x1xf32>
    %247 = vector.broadcast %246 : vector<2x32x1xf32> to vector<2x32x32xf32>
    %248 = arith.subf %244, %247 : vector<2x32x32xf32>
    %249 = math.exp %248 : vector<2x32x32xf32>
    %cst_93 = arith.constant dense<0.000000e+00> : vector<2x32xf32>
    %250 = vector.multi_reduction <add>, %249, %cst_93 [2] : vector<2x32x32xf32> to vector<2x32xf32>
    %251 = vector.shape_cast %250 : vector<2x32xf32> to vector<2x32x1xf32>
    %252 = tpu.reciprocal %251 {approx = true} : vector<2x32x1xf32> -> vector<2x32x1xf32>
    %253 = vector.broadcast %252 : vector<2x32x1xf32> to vector<2x32x32xf32>
    %254 = arith.mulf %249, %253 : vector<2x32x32xf32>
    "tpu.trace_start"() <{level = 10 : i32, message = "bqk,bkd->bqd"}> : () -> ()
    %cst_94 = arith.constant dense<0.000000e+00> : vector<2x32x8xf32>
    %255 = tpu.matmul %254, %243, %cst_94 {dimension_numbers = #tpu.dot_dimension_numbers<[2], [1], [1], [2], [0, 0, 0, 1, 1, 2], [0], [0]>} : vector<2x32x32xf32>, vector<2x32x8xf32>, vector<2x32x8xf32> -> vector<2x32x8xf32>
    "tpu.trace_stop"() : () -> ()
    %256 = vector.shape_cast %255 : vector<2x32x8xf32> to vector<64x8xf32>
    %257 = vector.extract_strided_slice %199 {offsets = [0, 24], sizes = [64, 8], strides = [1, 1]} : vector<64x96xf32> to vector<64x8xf32>
    %258 = vector.shape_cast %257 : vector<64x8xf32> to vector<2x32x8xf32>
    %259 = vector.extract_strided_slice %199 {offsets = [0, 56], sizes = [64, 8], strides = [1, 1]} : vector<64x96xf32> to vector<64x8xf32>
    %260 = vector.shape_cast %259 : vector<64x8xf32> to vector<2x32x8xf32>
    %261 = vector.extract_strided_slice %199 {offsets = [0, 88], sizes = [64, 8], strides = [1, 1]} : vector<64x96xf32> to vector<64x8xf32>
    %262 = vector.shape_cast %261 : vector<64x8xf32> to vector<2x32x8xf32>
    "tpu.trace_start"() <{level = 10 : i32, message = "bqd,bkd->bqk"}> : () -> ()
    %cst_95 = arith.constant dense<0.000000e+00> : vector<2x32x32xf32>
    %263 = tpu.matmul %258, %260, %cst_95 {dimension_numbers = #tpu.dot_dimension_numbers<[2], [2], [1], [1], [0, 0, 0, 1, 1, 1], [0], [0]>} : vector<2x32x8xf32>, vector<2x32x8xf32>, vector<2x32x32xf32> -> vector<2x32x32xf32>
    "tpu.trace_stop"() : () -> ()
    %cst_96 = arith.constant dense<0xFF800000> : vector<2x32xf32>
    %264 = vector.multi_reduction <maximumf>, %263, %cst_96 [2] : vector<2x32x32xf32> to vector<2x32xf32>
    %265 = vector.shape_cast %264 : vector<2x32xf32> to vector<2x32x1xf32>
    %266 = vector.broadcast %265 : vector<2x32x1xf32> to vector<2x32x32xf32>
    %267 = arith.subf %263, %266 : vector<2x32x32xf32>
    %268 = math.exp %267 : vector<2x32x32xf32>
    %cst_97 = arith.constant dense<0.000000e+00> : vector<2x32xf32>
    %269 = vector.multi_reduction <add>, %268, %cst_97 [2] : vector<2x32x32xf32> to vector<2x32xf32>
    %270 = vector.shape_cast %269 : vector<2x32xf32> to vector<2x32x1xf32>
    %271 = tpu.reciprocal %270 {approx = true} : vector<2x32x1xf32> -> vector<2x32x1xf32>
    %272 = vector.broadcast %271 : vector<2x32x1xf32> to vector<2x32x32xf32>
    %273 = arith.mulf %268, %272 : vector<2x32x32xf32>
    "tpu.trace_start"() <{level = 10 : i32, message = "bqk,bkd->bqd"}> : () -> ()
    %cst_98 = arith.constant dense<0.000000e+00> : vector<2x32x8xf32>
    %274 = tpu.matmul %273, %262, %cst_98 {dimension_numbers = #tpu.dot_dimension_numbers<[2], [1], [1], [2], [0, 0, 0, 1, 1, 2], [0], [0]>} : vector<2x32x32xf32>, vector<2x32x8xf32>, vector<2x32x8xf32> -> vector<2x32x8xf32>
    "tpu.trace_stop"() : () -> ()
    %275 = vector.shape_cast %274 : vector<2x32x8xf32> to vector<64x8xf32>
    %276 = tpu.concatenate %218, %237, %256, %275 in 1 : vector<64x8xf32>, vector<64x8xf32>, vector<64x8xf32>, vector<64x8xf32> -> vector<64x32xf32>
    %c1_99 = arith.constant 1 : index
    %c0_100 = arith.constant 0 : index
    %c0_101 = arith.constant 0 : index
    %277 = vector.load %arg5[%c1_99, %c0_100, %c0_101] : memref<2x32x32xf32, #tpu.memory_space<vmem>>, vector<1x32x32xf32>
    %278 = vector.shape_cast %277 : vector<1x32x32xf32> to vector<32x32xf32>
    %cst_102 = arith.constant dense<0.000000e+00> : vector<64x32xf32>
    %279 = tpu.matmul %276, %278, %cst_102 {dimension_numbers = #tpu.dot_dimension_numbers<[1], [0], [0], [1], [0, 0, 1, 1], [], []>} : vector<64x32xf32>, vector<32x32xf32>, vector<64x32xf32> -> vector<64x32xf32>
    %280 = arith.addf %170, %279 : vector<64x32xf32>
    %c1_103 = arith.constant 1 : index
    %c0_104 = arith.constant 0 : index
    %c0_105 = arith.constant 0 : index
    %281 = vector.load %arg6[%c1_103, %c0_104, %c0_105] : memref<2x1x32xf32, #tpu.memory_space<vmem>>, vector<1x1x32xf32>
    %282 = vector.shape_cast %281 : vector<1x1x32xf32> to vector<1x32xf32>
    %283 = vector.broadcast %282 : vector<1x32xf32> to vector<64x32xf32>
    %284 = arith.addf %280, %283 : vector<64x32xf32>
    %c1_106 = arith.constant 1 : index
    %c0_107 = arith.constant 0 : index
    %c0_108 = arith.constant 0 : index
    %285 = vector.load %arg7[%c1_106, %c0_107, %c0_108] : memref<2x1x32xf32, #tpu.memory_space<vmem>>, vector<1x1x32xf32>
    %286 = vector.shape_cast %285 : vector<1x1x32xf32> to vector<1x32xf32>
    %c1_109 = arith.constant 1 : index
    %c0_110 = arith.constant 0 : index
    %c0_111 = arith.constant 0 : index
    %287 = vector.load %arg8[%c1_109, %c0_110, %c0_111] : memref<2x1x32xf32, #tpu.memory_space<vmem>>, vector<1x1x32xf32>
    %288 = vector.shape_cast %287 : vector<1x1x32xf32> to vector<1x32xf32>
    %cst_112 = arith.constant dense<0.000000e+00> : vector<64xf32>
    %289 = vector.multi_reduction <add>, %284, %cst_112 [1] : vector<64x32xf32> to vector<64xf32>
    %290 = vector.shape_cast %289 : vector<64xf32> to vector<64x1xf32>
    %cst_113 = arith.constant 3.200000e+01 : f32
    %291 = vector.broadcast %cst_113 : f32 to vector<64x1xf32>
    %292 = arith.divf %290, %291 : vector<64x1xf32>
    %293 = vector.broadcast %292 : vector<64x1xf32> to vector<64x32xf32>
    %294 = arith.subf %284, %293 : vector<64x32xf32>
    %295 = arith.mulf %294, %294 : vector<64x32xf32>
    %cst_114 = arith.constant dense<0.000000e+00> : vector<64xf32>
    %296 = vector.multi_reduction <add>, %295, %cst_114 [1] : vector<64x32xf32> to vector<64xf32>
    %297 = vector.shape_cast %296 : vector<64xf32> to vector<64x1xf32>
    %cst_115 = arith.constant 3.200000e+01 : f32
    %298 = vector.broadcast %cst_115 : f32 to vector<64x1xf32>
    %299 = arith.divf %297, %298 : vector<64x1xf32>
    %300 = vector.broadcast %292 : vector<64x1xf32> to vector<64x32xf32>
    %301 = arith.subf %284, %300 : vector<64x32xf32>
    %cst_116 = arith.constant 9.99999974E-6 : f32
    %302 = vector.broadcast %cst_116 : f32 to vector<64x1xf32>
    %303 = arith.addf %299, %302 : vector<64x1xf32>
    %304 = math.rsqrt %303 : vector<64x1xf32>
    %305 = vector.broadcast %304 : vector<64x1xf32> to vector<64x32xf32>
    %306 = arith.mulf %301, %305 : vector<64x32xf32>
    %307 = vector.broadcast %286 : vector<1x32xf32> to vector<64x32xf32>
    %308 = arith.mulf %306, %307 : vector<64x32xf32>
    %309 = vector.broadcast %288 : vector<1x32xf32> to vector<64x32xf32>
    %310 = arith.addf %308, %309 : vector<64x32xf32>
    %c1_117 = arith.constant 1 : index
    %c0_118 = arith.constant 0 : index
    %c0_119 = arith.constant 0 : index
    %311 = vector.load %arg9[%c1_117, %c0_118, %c0_119] : memref<2x32x128xf32, #tpu.memory_space<vmem>>, vector<1x32x128xf32>
    %312 = vector.shape_cast %311 : vector<1x32x128xf32> to vector<32x128xf32>
    %cst_120 = arith.constant dense<0.000000e+00> : vector<64x128xf32>
    %313 = tpu.matmul %310, %312, %cst_120 {dimension_numbers = #tpu.dot_dimension_numbers<[1], [0], [0], [1], [0, 0, 1, 1], [], []>} : vector<64x32xf32>, vector<32x128xf32>, vector<64x128xf32> -> vector<64x128xf32>
    %c1_121 = arith.constant 1 : index
    %c0_122 = arith.constant 0 : index
    %c0_123 = arith.constant 0 : index
    %314 = vector.load %arg10[%c1_121, %c0_122, %c0_123] : memref<2x1x128xf32, #tpu.memory_space<vmem>>, vector<1x1x128xf32>
    %315 = vector.shape_cast %314 : vector<1x1x128xf32> to vector<1x128xf32>
    %316 = vector.broadcast %315 : vector<1x128xf32> to vector<64x128xf32>
    %317 = arith.addf %313, %316 : vector<64x128xf32>
    %318 = arith.mulf %317, %317 : vector<64x128xf32>
    %319 = arith.mulf %317, %318 : vector<64x128xf32>
    %cst_124 = arith.constant 4.471500e-02 : f32
    %320 = vector.broadcast %cst_124 : f32 to vector<64x128xf32>
    %321 = arith.mulf %320, %319 : vector<64x128xf32>
    %322 = arith.addf %317, %321 : vector<64x128xf32>
    %cst_125 = arith.constant 0.797884583 : f32
    %323 = vector.broadcast %cst_125 : f32 to vector<64x128xf32>
    %324 = arith.mulf %323, %322 : vector<64x128xf32>
    %325 = math.tanh %324 : vector<64x128xf32>
    %cst_126 = arith.constant 1.000000e+00 : f32
    %326 = vector.broadcast %cst_126 : f32 to vector<64x128xf32>
    %327 = arith.addf %326, %325 : vector<64x128xf32>
    %cst_127 = arith.constant 5.000000e-01 : f32
    %328 = vector.broadcast %cst_127 : f32 to vector<64x128xf32>
    %329 = arith.mulf %328, %327 : vector<64x128xf32>
    %330 = arith.mulf %317, %329 : vector<64x128xf32>
    %c1_128 = arith.constant 1 : index
    %c0_129 = arith.constant 0 : index
    %c0_130 = arith.constant 0 : index
    %331 = vector.load %arg11[%c1_128, %c0_129, %c0_130] : memref<2x128x32xf32, #tpu.memory_space<vmem>>, vector<1x128x32xf32>
    %332 = vector.shape_cast %331 : vector<1x128x32xf32> to vector<128x32xf32>
    %cst_131 = arith.constant dense<0.000000e+00> : vector<64x32xf32>
    %333 = tpu.matmul %330, %332, %cst_131 {dimension_numbers = #tpu.dot_dimension_numbers<[1], [0], [0], [1], [0, 0, 1, 1], [], []>} : vector<64x128xf32>, vector<128x32xf32>, vector<64x32xf32> -> vector<64x32xf32>
    %334 = arith.addf %284, %333 : vector<64x32xf32>
    %c1_132 = arith.constant 1 : index
    %c0_133 = arith.constant 0 : index
    %c0_134 = arith.constant 0 : index
    %335 = vector.load %arg12[%c1_132, %c0_133, %c0_134] : memref<2x1x32xf32, #tpu.memory_space<vmem>>, vector<1x1x32xf32>
    %336 = vector.shape_cast %335 : vector<1x1x32xf32> to vector<1x32xf32>
    %337 = vector.broadcast %336 : vector<1x32xf32> to vector<64x32xf32>
    %338 = arith.addf %334, %337 : vector<64x32xf32>
    %339 = vector.shape_cast %338 : vector<64x32xf32> to vector<2x32x32xf32>
    %340 = vector.extract_strided_slice %339 {offsets = [0, 0, 0], sizes = [2, 16, 32], strides = [1, 1, 1]} : vector<2x32x32xf32> to vector<2x16x32xf32>
    %341 = vector.shape_cast %340 : vector<2x16x32xf32> to vector<32x32xf32>
    %342 = vector.extract_strided_slice %339 {offsets = [0, 0, 0], sizes = [2, 8, 32], strides = [1, 1, 1]} : vector<2x32x32xf32> to vector<2x8x32xf32>
    %c0_135 = arith.constant 0 : index
    %c0_136 = arith.constant 0 : index
    %c0_137 = arith.constant 0 : index
    %343 = vector.load %arg13[%c0_135, %c0_136, %c0_137] : memref<2x32x32xf32, #tpu.memory_space<vmem>>, vector<1x32x32xf32>
    %344 = vector.shape_cast %343 : vector<1x32x32xf32> to vector<32x32xf32>
    %cst_138 = arith.constant dense<0.000000e+00> : vector<32x32xf32>
    %345 = tpu.matmul %341, %344, %cst_138 {dimension_numbers = #tpu.dot_dimension_numbers<[1], [0], [0], [1], [0, 0, 1, 1], [], []>} : vector<32x32xf32>, vector<32x32xf32>, vector<32x32xf32> -> vector<32x32xf32>
    %c0_139 = arith.constant 0 : index
    %c0_140 = arith.constant 0 : index
    %c0_141 = arith.constant 0 : index
    %346 = vector.load %arg14[%c0_139, %c0_140, %c0_141] : memref<2x1x32xf32, #tpu.memory_space<vmem>>, vector<1x1x32xf32>
    %347 = vector.shape_cast %346 : vector<1x1x32xf32> to vector<1x32xf32>
    %348 = vector.broadcast %347 : vector<1x32xf32> to vector<32x32xf32>
    %349 = arith.addf %345, %348 : vector<32x32xf32>
    %350 = arith.mulf %349, %349 : vector<32x32xf32>
    %351 = arith.mulf %349, %350 : vector<32x32xf32>
    %cst_142 = arith.constant 4.471500e-02 : f32
    %352 = vector.broadcast %cst_142 : f32 to vector<32x32xf32>
    %353 = arith.mulf %352, %351 : vector<32x32xf32>
    %354 = arith.addf %349, %353 : vector<32x32xf32>
    %cst_143 = arith.constant 0.797884583 : f32
    %355 = vector.broadcast %cst_143 : f32 to vector<32x32xf32>
    %356 = arith.mulf %355, %354 : vector<32x32xf32>
    %357 = math.tanh %356 : vector<32x32xf32>
    %cst_144 = arith.constant 1.000000e+00 : f32
    %358 = vector.broadcast %cst_144 : f32 to vector<32x32xf32>
    %359 = arith.addf %358, %357 : vector<32x32xf32>
    %cst_145 = arith.constant 5.000000e-01 : f32
    %360 = vector.broadcast %cst_145 : f32 to vector<32x32xf32>
    %361 = arith.mulf %360, %359 : vector<32x32xf32>
    %362 = arith.mulf %349, %361 : vector<32x32xf32>
    %c0_146 = arith.constant 0 : index
    %c0_147 = arith.constant 0 : index
    %c0_148 = arith.constant 0 : index
    %363 = vector.load %arg15[%c0_146, %c0_147, %c0_148] : memref<2x32x32xf32, #tpu.memory_space<vmem>>, vector<1x32x32xf32>
    %364 = vector.shape_cast %363 : vector<1x32x32xf32> to vector<32x32xf32>
    %cst_149 = arith.constant dense<0.000000e+00> : vector<32x32xf32>
    %365 = tpu.matmul %362, %364, %cst_149 {dimension_numbers = #tpu.dot_dimension_numbers<[1], [0], [0], [1], [0, 0, 1, 1], [], []>} : vector<32x32xf32>, vector<32x32xf32>, vector<32x32xf32> -> vector<32x32xf32>
    %c0_150 = arith.constant 0 : index
    %c0_151 = arith.constant 0 : index
    %c0_152 = arith.constant 0 : index
    %366 = vector.load %arg16[%c0_150, %c0_151, %c0_152] : memref<2x1x32xf32, #tpu.memory_space<vmem>>, vector<1x1x32xf32>
    %367 = vector.shape_cast %366 : vector<1x1x32xf32> to vector<1x32xf32>
    %368 = vector.broadcast %367 : vector<1x32xf32> to vector<32x32xf32>
    %369 = arith.addf %365, %368 : vector<32x32xf32>
    %c1_153 = arith.constant 1 : index
    %c0_154 = arith.constant 0 : index
    %c0_155 = arith.constant 0 : index
    %370 = vector.load %arg13[%c1_153, %c0_154, %c0_155] : memref<2x32x32xf32, #tpu.memory_space<vmem>>, vector<1x32x32xf32>
    %371 = vector.shape_cast %370 : vector<1x32x32xf32> to vector<32x32xf32>
    %cst_156 = arith.constant dense<0.000000e+00> : vector<32x32xf32>
    %372 = tpu.matmul %369, %371, %cst_156 {dimension_numbers = #tpu.dot_dimension_numbers<[1], [0], [0], [1], [0, 0, 1, 1], [], []>} : vector<32x32xf32>, vector<32x32xf32>, vector<32x32xf32> -> vector<32x32xf32>
    %c1_157 = arith.constant 1 : index
    %c0_158 = arith.constant 0 : index
    %c0_159 = arith.constant 0 : index
    %373 = vector.load %arg14[%c1_157, %c0_158, %c0_159] : memref<2x1x32xf32, #tpu.memory_space<vmem>>, vector<1x1x32xf32>
    %374 = vector.shape_cast %373 : vector<1x1x32xf32> to vector<1x32xf32>
    %375 = vector.broadcast %374 : vector<1x32xf32> to vector<32x32xf32>
    %376 = arith.addf %372, %375 : vector<32x32xf32>
    %377 = arith.mulf %376, %376 : vector<32x32xf32>
    %378 = arith.mulf %376, %377 : vector<32x32xf32>
    %cst_160 = arith.constant 4.471500e-02 : f32
    %379 = vector.broadcast %cst_160 : f32 to vector<32x32xf32>
    %380 = arith.mulf %379, %378 : vector<32x32xf32>
    %381 = arith.addf %376, %380 : vector<32x32xf32>
    %cst_161 = arith.constant 0.797884583 : f32
    %382 = vector.broadcast %cst_161 : f32 to vector<32x32xf32>
    %383 = arith.mulf %382, %381 : vector<32x32xf32>
    %384 = math.tanh %383 : vector<32x32xf32>
    %cst_162 = arith.constant 1.000000e+00 : f32
    %385 = vector.broadcast %cst_162 : f32 to vector<32x32xf32>
    %386 = arith.addf %385, %384 : vector<32x32xf32>
    %cst_163 = arith.constant 5.000000e-01 : f32
    %387 = vector.broadcast %cst_163 : f32 to vector<32x32xf32>
    %388 = arith.mulf %387, %386 : vector<32x32xf32>
    %389 = arith.mulf %376, %388 : vector<32x32xf32>
    %c1_164 = arith.constant 1 : index
    %c0_165 = arith.constant 0 : index
    %c0_166 = arith.constant 0 : index
    %390 = vector.load %arg15[%c1_164, %c0_165, %c0_166] : memref<2x32x32xf32, #tpu.memory_space<vmem>>, vector<1x32x32xf32>
    %391 = vector.shape_cast %390 : vector<1x32x32xf32> to vector<32x32xf32>
    %cst_167 = arith.constant dense<0.000000e+00> : vector<32x32xf32>
    %392 = tpu.matmul %389, %391, %cst_167 {dimension_numbers = #tpu.dot_dimension_numbers<[1], [0], [0], [1], [0, 0, 1, 1], [], []>} : vector<32x32xf32>, vector<32x32xf32>, vector<32x32xf32> -> vector<32x32xf32>
    %c1_168 = arith.constant 1 : index
    %c0_169 = arith.constant 0 : index
    %c0_170 = arith.constant 0 : index
    %393 = vector.load %arg16[%c1_168, %c0_169, %c0_170] : memref<2x1x32xf32, #tpu.memory_space<vmem>>, vector<1x1x32xf32>
    %394 = vector.shape_cast %393 : vector<1x1x32xf32> to vector<1x32xf32>
    %395 = vector.broadcast %394 : vector<1x32xf32> to vector<32x32xf32>
    %396 = arith.addf %392, %395 : vector<32x32xf32>
    %c0_171 = arith.constant 0 : index
    %c0_172 = arith.constant 0 : index
    %397 = vector.load %arg17[%c0_171, %c0_172] : memref<1x32xf32, #tpu.memory_space<vmem>>, vector<1x32xf32>
    %c0_173 = arith.constant 0 : index
    %c0_174 = arith.constant 0 : index
    %398 = vector.load %arg18[%c0_173, %c0_174] : memref<1x32xf32, #tpu.memory_space<vmem>>, vector<1x32xf32>
    %cst_175 = arith.constant dense<0.000000e+00> : vector<32xf32>
    %399 = vector.multi_reduction <add>, %396, %cst_175 [1] : vector<32x32xf32> to vector<32xf32>
    %400 = vector.shape_cast %399 : vector<32xf32> to vector<32x1xf32>
    %cst_176 = arith.constant 3.200000e+01 : f32
    %401 = vector.broadcast %cst_176 : f32 to vector<32x1xf32>
    %402 = arith.divf %400, %401 : vector<32x1xf32>
    %403 = vector.broadcast %402 : vector<32x1xf32> to vector<32x32xf32>
    %404 = arith.subf %396, %403 : vector<32x32xf32>
    %405 = arith.mulf %404, %404 : vector<32x32xf32>
    %cst_177 = arith.constant dense<0.000000e+00> : vector<32xf32>
    %406 = vector.multi_reduction <add>, %405, %cst_177 [1] : vector<32x32xf32> to vector<32xf32>
    %407 = vector.shape_cast %406 : vector<32xf32> to vector<32x1xf32>
    %cst_178 = arith.constant 3.200000e+01 : f32
    %408 = vector.broadcast %cst_178 : f32 to vector<32x1xf32>
    %409 = arith.divf %407, %408 : vector<32x1xf32>
    %410 = vector.broadcast %402 : vector<32x1xf32> to vector<32x32xf32>
    %411 = arith.subf %396, %410 : vector<32x32xf32>
    %cst_179 = arith.constant 9.99999974E-6 : f32
    %412 = vector.broadcast %cst_179 : f32 to vector<32x1xf32>
    %413 = arith.addf %409, %412 : vector<32x1xf32>
    %414 = math.rsqrt %413 : vector<32x1xf32>
    %415 = vector.broadcast %414 : vector<32x1xf32> to vector<32x32xf32>
    %416 = arith.mulf %411, %415 : vector<32x32xf32>
    %417 = vector.broadcast %397 : vector<1x32xf32> to vector<32x32xf32>
    %418 = arith.mulf %416, %417 : vector<32x32xf32>
    %419 = vector.broadcast %398 : vector<1x32xf32> to vector<32x32xf32>
    %420 = arith.addf %418, %419 : vector<32x32xf32>
    %c0_180 = arith.constant 0 : index
    %c0_181 = arith.constant 0 : index
    %421 = vector.load %arg19[%c0_180, %c0_181] : memref<288x32xf32, #tpu.memory_space<vmem>>, vector<288x32xf32>
    %cst_182 = arith.constant dense<0.000000e+00> : vector<288x32xf32>
    %422 = tpu.matmul %421, %420, %cst_182 {dimension_numbers = #tpu.dot_dimension_numbers<[1], [0], [0], [1], [0, 0, 1, 1], [], []>} : vector<288x32xf32>, vector<32x32xf32>, vector<288x32xf32> -> vector<288x32xf32>
    %423 = vector.shape_cast %422 : vector<288x32xf32> to vector<9x32x32xf32>
    %c0_183 = arith.constant 0 : index
    %c0_184 = arith.constant 0 : index
    %c0_185 = arith.constant 0 : index
    %424 = vector.load %arg20[%c0_183, %c0_184, %c0_185] : memref<9x32x32xf32, #tpu.memory_space<vmem>>, vector<9x32x32xf32>
    "tpu.trace_start"() <{level = 10 : i32, message = "sid,sdc->sic"}> : () -> ()
    %cst_186 = arith.constant dense<0.000000e+00> : vector<9x32x32xf32>
    %425 = tpu.matmul %423, %424, %cst_186 {dimension_numbers = #tpu.dot_dimension_numbers<[2], [1], [1], [2], [0, 0, 0, 1, 1, 2], [0], [0]>} : vector<9x32x32xf32>, vector<9x32x32xf32>, vector<9x32x32xf32> -> vector<9x32x32xf32>
    "tpu.trace_stop"() : () -> ()
    %cst_187 = arith.constant dense<0.000000e+00> : vector<32x32xf32>
    %426 = vector.multi_reduction <add>, %425, %cst_187 [0] : vector<9x32x32xf32> to vector<32x32xf32>
    %c0_188 = arith.constant 0 : index
    %c0_189 = arith.constant 0 : index
    %427 = vector.load %arg21[%c0_188, %c0_189] : memref<32x32xf32, #tpu.memory_space<vmem>>, vector<32x32xf32>
    %428 = arith.addf %426, %427 : vector<32x32xf32>
    %c0_190 = arith.constant 0 : index
    %c0_191 = arith.constant 0 : index
    %429 = vector.load %arg24[%c0_190, %c0_191] : memref<32x32xf32, #tpu.memory_space<vmem>>, vector<32x32xf32>
    tpu.vector_store %arg24[%c0_190, %c0_191], %428 {strides = array<i32>} : memref<32x32xf32, #tpu.memory_space<vmem>>, vector<32x32xf32>,
    %430 = vector.shape_cast %342 : vector<2x8x32xf32> to vector<16x32xf32>
    %c0_192 = arith.constant 0 : index
    %c0_193 = arith.constant 0 : index
    %431 = vector.load %arg22[%c0_192, %c0_193] : memref<32x32xf32, #tpu.memory_space<vmem>>, vector<32x32xf32>
    %cst_194 = arith.constant dense<0.000000e+00> : vector<16x32xf32>
    %432 = tpu.matmul %430, %431, %cst_194 {dimension_numbers = #tpu.dot_dimension_numbers<[1], [0], [0], [1], [0, 0, 1, 1], [], []>} : vector<16x32xf32>, vector<32x32xf32>, vector<16x32xf32> -> vector<16x32xf32>
    %c0_195 = arith.constant 0 : index
    %c0_196 = arith.constant 0 : index
    %433 = vector.load %arg23[%c0_195, %c0_196] : memref<1x32xf32, #tpu.memory_space<vmem>>, vector<1x32xf32>
    %434 = vector.broadcast %433 : vector<1x32xf32> to vector<16x32xf32>
    %435 = arith.addf %432, %434 : vector<16x32xf32>
    %436 = vector.shape_cast %435 : vector<16x32xf32> to vector<2x8x32xf32>
    %cst_197 = arith.constant dense<0.000000e+00> : vector<2x8x8xf32>
    %437 = tpu.matmul %342, %436, %cst_197 {dimension_numbers = #tpu.dot_dimension_numbers<[2], [2], [1], [1], [0, 0, 0, 1, 1, 1], [0], [0]>} : vector<2x8x32xf32>, vector<2x8x32xf32>, vector<2x8x8xf32> -> vector<2x8x8xf32>
    %c0_198 = arith.constant 0 : index
    %c0_199 = arith.constant 0 : index
    %c0_200 = arith.constant 0 : index
    %438 = vector.load %arg25[%c0_198, %c0_199, %c0_200] : memref<2x8x8xf32, #tpu.memory_space<vmem>>, vector<2x8x8xf32>
    tpu.vector_store %arg25[%c0_198, %c0_199, %c0_200], %437 {strides = array<i32>} : memref<2x8x8xf32, #tpu.memory_space<vmem>>, vector<2x8x8xf32>,
    return
  }
}

</mosaic_0001>

<llo_original>
// kernel: forward.1
$region0: #{forward.1}
  #allocation0 [shape = 'u32[]', space=smem, size = 0x4, offset = 0x4, fixed_abs, tag = 'smem constant byte address 0x4 - core index']
  #allocation1 [shape = 'u32[144,128]{1,0:T(1,128)}', space=vmem, size = 0x12000, scoped, tag = 'internal scratch']
  %s0 = inlined_call_operand.vmem [shape: f32[64,32], index: 0, kind: input, shape index: {}]
  %s1 = inlined_call_operand.vmem [shape: f32[64,32], index: 1, kind: input, shape index: {}]
  %s2 = inlined_call_operand.vmem [shape: f32[2,1,32], index: 2, kind: input, shape index: {}]
  %s3 = inlined_call_operand.vmem [shape: f32[2,1,32], index: 3, kind: input, shape index: {}]
  %s4 = inlined_call_operand.vmem [shape: f32[2,32,96], index: 4, kind: input, shape index: {}]
  %s5 = inlined_call_operand.vmem [shape: f32[2,32,32], index: 5, kind: input, shape index: {}]
  %s6 = inlined_call_operand.vmem [shape: f32[2,1,32], index: 6, kind: input, shape index: {}]
  %s7 = inlined_call_operand.vmem [shape: f32[2,1,32], index: 7, kind: input, shape index: {}]
  %s8 = inlined_call_operand.vmem [shape: f32[2,1,32], index: 8, kind: input, shape index: {}]
  %s9 = inlined_call_operand.vmem [shape: f32[2,32,128], index: 9, kind: input, shape index: {}]
  %s10 = inlined_call_operand.vmem [shape: f32[2,1,128], index: 10, kind: input, shape index: {}]
  %s11 = inlined_call_operand.vmem [shape: f32[2,128,32], index: 11, kind: input, shape index: {}]
  %s12 = inlined_call_operand.vmem [shape: f32[2,1,32], index: 12, kind: input, shape index: {}]
  %s13 = inlined_call_operand.vmem [shape: f32[2,32,32], index: 13, kind: input, shape index: {}]
  %s14 = inlined_call_operand.vmem [shape: f32[2,1,32], index: 14, kind: input, shape index: {}]
  %s15 = inlined_call_operand.vmem [shape: f32[2,32,32], index: 15, kind: input, shape index: {}]
  %s16 = inlined_call_operand.vmem [shape: f32[2,1,32], index: 16, kind: input, shape index: {}]
  %s17 = inlined_call_operand.vmem [shape: f32[1,32], index: 17, kind: input, shape index: {}]
  %s18 = inlined_call_operand.vmem [shape: f32[1,32], index: 18, kind: input, shape index: {}]
  %s19 = inlined_call_operand.vmem [shape: f32[288,32], index: 19, kind: input, shape index: {}]
  %s20 = inlined_call_operand.vmem [shape: f32[9,32,32], index: 20, kind: input, shape index: {}]
  %s21 = inlined_call_operand.vmem [shape: f32[32,32], index: 21, kind: input, shape index: {}]
  %s22 = inlined_call_operand.vmem [shape: f32[32,32], index: 22, kind: input, shape index: {}]
  %s23 = inlined_call_operand.vmem [shape: f32[1,32], index: 23, kind: input, shape index: {}]
  %s24 = inlined_call_operand.vmem [shape: f32[32,32], index: 24, kind: output, shape index: {0}]
  %s25 = inlined_call_operand.hbm [shape: f32[2,8,8], index: 25, kind: output, shape index: {1}]
  %26 = xla_tuple %s24, %s25
  %s27 = sld [smem:[#allocation0]]
  $region114: #{forward.1} parent=0
    _
  %s29 = ssub.s32 1, %s27
  %s30 = scalar_select 0, %s29, %s27
  $region1: #{forward.1} parent=0
    #allocation2 [shape = 'u8[8192]{0}', space=vmem, size = 0x2000, scoped, tag = 'output window, operand 1, single buffered']
    #allocation3 [shape = 's32[1]{0}', space=sflag, size = 0x4, scoped, tag = 'scoped memory for forward.1']
    %31 = vsyncpa [#allocation3], 0
    // Predicated region
    $region2: #{forward.1} parent=1 // pred_check
      _
    $region3: #{forward.1} parent=1 // pred_check_branch
      %33 = sbr.rel (0) target = $region5
    $region4: #{forward.1} parent=1 // pred_region
      _
    $region5: #{forward.1} parent=1 // pred_fallthru
      _
    // Predicated region
    $region6: #{forward.1} parent=1 // pred_check
      _
    $region7: #{forward.1} parent=1 // pred_check_branch
      %35 = sbr.rel (0) target = $region9
    $region8: #{forward.1} parent=1 // pred_region
      _
    $region9: #{forward.1} parent=1 // pred_fallthru
      _
    // Predicated region
    $region10: #{forward.1} parent=1 // pred_check
      _
    $region11: #{forward.1} parent=1 // pred_check_branch
      %37 = sbr.rel (0) target = $region13
    $region12: #{forward.1} parent=1 // pred_region
      _
    $region13: #{forward.1} parent=1 // pred_fallthru
      _
    // Predicated region
    $region14: #{forward.1} parent=1 // pred_check
      _
    $region15: #{forward.1} parent=1 // pred_check_branch
      %39 = sbr.rel (0) target = $region17
    $region16: #{forward.1} parent=1 // pred_region
      _
    $region17: #{forward.1} parent=1 // pred_fallthru
      _
    // Predicated region
    $region18: #{forward.1} parent=1 // pred_check
      _
    $region19: #{forward.1} parent=1 // pred_check_branch
      %41 = sbr.rel (0) target = $region21
    $region20: #{forward.1} parent=1 // pred_region
      _
    $region21: #{forward.1} parent=1 // pred_fallthru
      _
    // Predicated region
    $region22: #{forward.1} parent=1 // pred_check
      _
    $region23: #{forward.1} parent=1 // pred_check_branch
      %43 = sbr.rel (0) target = $region25
    $region24: #{forward.1} parent=1 // pred_region
      _
    $region25: #{forward.1} parent=1 // pred_fallthru
      _
    // Predicated region
    $region26: #{forward.1} parent=1 // pred_check
      _
    $region27: #{forward.1} parent=1 // pred_check_branch
      %45 = sbr.rel (0) target = $region29
    $region28: #{forward.1} parent=1 // pred_region
      _
    $region29: #{forward.1} parent=1 // pred_fallthru
      _
    // Predicated region
    $region30: #{forward.1} parent=1 // pred_check
      _
    $region31: #{forward.1} parent=1 // pred_check_branch
      %47 = sbr.rel (0) target = $region33
    $region32: #{forward.1} parent=1 // pred_region
      _
    $region33: #{forward.1} parent=1 // pred_fallthru
      _
    // Predicated region
    $region34: #{forward.1} parent=1 // pred_check
      _
    $region35: #{forward.1} parent=1 // pred_check_branch
      %49 = sbr.rel (0) target = $region37
    $region36: #{forward.1} parent=1 // pred_region
      _
    $region37: #{forward.1} parent=1 // pred_fallthru
      _
    // Predicated region
    $region38: #{forward.1} parent=1 // pred_check
      _
    $region39: #{forward.1} parent=1 // pred_check_branch
      %51 = sbr.rel (0) target = $region41
    $region40: #{forward.1} parent=1 // pred_region
      _
    $region41: #{forward.1} parent=1 // pred_fallthru
      _
    // Predicated region
    $region42: #{forward.1} parent=1 // pred_check
      _
    $region43: #{forward.1} parent=1 // pred_check_branch
      %53 = sbr.rel (0) target = $region45
    $region44: #{forward.1} parent=1 // pred_region
      _
    $region45: #{forward.1} parent=1 // pred_fallthru
      _
    // Predicated region
    $region46: #{forward.1} parent=1 // pred_check
      _
    $region47: #{forward.1} parent=1 // pred_check_branch
      %55 = sbr.rel (0) target = $region49
    $region48: #{forward.1} parent=1 // pred_region
      _
    $region49: #{forward.1} parent=1 // pred_fallthru
      _
    // Predicated region
    $region50: #{forward.1} parent=1 // pred_check
      _
    $region51: #{forward.1} parent=1 // pred_check_branch
      %57 = sbr.rel (0) target = $region53
    $region52: #{forward.1} parent=1 // pred_region
      _
    $region53: #{forward.1} parent=1 // pred_fallthru
      _
    // Predicated region
    $region54: #{forward.1} parent=1 // pred_check
      _
    $region55: #{forward.1} parent=1 // pred_check_branch
      %59 = sbr.rel (0) target = $region57
    $region56: #{forward.1} parent=1 // pred_region
      _
    $region57: #{forward.1} parent=1 // pred_fallthru
      _
    // Predicated region
    $region58: #{forward.1} parent=1 // pred_check
      _
    $region59: #{forward.1} parent=1 // pred_check_branch
      %61 = sbr.rel (0) target = $region61
    $region60: #{forward.1} parent=1 // pred_region
      _
    $region61: #{forward.1} parent=1 // pred_fallthru
      _
    // Predicated region
    $region62: #{forward.1} parent=1 // pred_check
      _
    $region63: #{forward.1} parent=1 // pred_check_branch
      %63 = sbr.rel (0) target = $region65
    $region64: #{forward.1} parent=1 // pred_region
      _
    $region65: #{forward.1} parent=1 // pred_fallthru
      _
    // Predicated region
    $region66: #{forward.1} parent=1 // pred_check
      _
    $region67: #{forward.1} parent=1 // pred_check_branch
      %65 = sbr.rel (0) target = $region69
    $region68: #{forward.1} parent=1 // pred_region
      _
    $region69: #{forward.1} parent=1 // pred_fallthru
      _
    // Predicated region
    $region70: #{forward.1} parent=1 // pred_check
      _
    $region71: #{forward.1} parent=1 // pred_check_branch
      %67 = sbr.rel (0) target = $region73
    $region72: #{forward.1} parent=1 // pred_region
      _
    $region73: #{forward.1} parent=1 // pred_fallthru
      _
    // Predicated region
    $region74: #{forward.1} parent=1 // pred_check
      _
    $region75: #{forward.1} parent=1 // pred_check_branch
      %69 = sbr.rel (0) target = $region77
    $region76: #{forward.1} parent=1 // pred_region
      _
    $region77: #{forward.1} parent=1 // pred_fallthru
      _
    // Predicated region
    $region78: #{forward.1} parent=1 // pred_check
      _
    $region79: #{forward.1} parent=1 // pred_check_branch
      %71 = sbr.rel (0) target = $region81
    $region80: #{forward.1} parent=1 // pred_region
      _
    $region81: #{forward.1} parent=1 // pred_fallthru
      _
    // Predicated region
    $region82: #{forward.1} parent=1 // pred_check
      _
    $region83: #{forward.1} parent=1 // pred_check_branch
      %73 = sbr.rel (0) target = $region85
    $region84: #{forward.1} parent=1 // pred_region
      _
    $region85: #{forward.1} parent=1 // pred_fallthru
      _
    // Predicated region
    $region86: #{forward.1} parent=1 // pred_check
      _
    $region87: #{forward.1} parent=1 // pred_check_branch
      %75 = sbr.rel (0) target = $region89
    $region88: #{forward.1} parent=1 // pred_region
      _
    $region89: #{forward.1} parent=1 // pred_fallthru
      _
    // Predicated region
    $region90: #{forward.1} parent=1 // pred_check
      _
    $region91: #{forward.1} parent=1 // pred_check_branch
      %77 = sbr.rel (0) target = $region93
    $region92: #{forward.1} parent=1 // pred_region
      _
    $region93: #{forward.1} parent=1 // pred_fallthru
      _
    // Predicated region
    $region94: #{forward.1} parent=1 // pred_check
      _
    $region95: #{forward.1} parent=1 // pred_check_branch
      %79 = sbr.rel (0) target = $region97
    $region96: #{forward.1} parent=1 // pred_region
      _
    $region97: #{forward.1} parent=1 // pred_fallthru
      _
    %v80 = vld [vmem:[%s0] sm:$0xff]
    %v81 = vld [vmem:[%s0 + $0x8] sm:$0xff]
    %v82 = vld [vmem:[%s0 + $0x10] sm:$0xff]
    %v83 = vld [vmem:[%s0 + $0x18] sm:$0xff]
    %v84 = vld [vmem:[%s0 + $0x20] sm:$0xff]
    %v85 = vld [vmem:[%s0 + $0x28] sm:$0xff]
    %v86 = vld [vmem:[%s0 + $0x30] sm:$0xff]
    %v87 = vld [vmem:[%s0 + $0x38] sm:$0xff]
    %v88 = vld [vmem:[%s1] sm:$0xff]
    %v89 = vld [vmem:[%s1 + $0x8] sm:$0xff]
    %v90 = vld [vmem:[%s1 + $0x10] sm:$0xff]
    %v91 = vld [vmem:[%s1 + $0x18] sm:$0xff]
    %v92 = vld [vmem:[%s1 + $0x20] sm:$0xff]
    %v93 = vld [vmem:[%s1 + $0x28] sm:$0xff]
    %v94 = vld [vmem:[%s1 + $0x30] sm:$0xff]
    %v95 = vld [vmem:[%s1 + $0x38] sm:$0xff]
    %v96 = vadd.f32 %v80, %v88
    %v97 = vadd.f32 %v81, %v89
    %v98 = vadd.f32 %v82, %v90
    %v99 = vadd.f32 %v83, %v91
    %v100 = vadd.f32 %v84, %v92
    %v101 = vadd.f32 %v85, %v93
    %v102 = vadd.f32 %v86, %v94
    %v103 = vadd.f32 %v87, %v95
    %v104 = vld [vmem:[%s2] sm:$0x1]
    %v105 = vld [vmem:[%s3] sm:$0x1]
    %vm106 = vcmask 261120
    %v107 = vsel %vm106, %v96, 0.0
    %108 = vadd.xlane.f32.xlu0 %v107
    %v109 = vpop.xlane.xlu0 %108
    %v110 = vsel %vm106, %v97, 0.0
    %111 = vadd.xlane.f32.xlu0 %v110
    %v112 = vpop.xlane.xlu0 %111
    %v113 = vsel %vm106, %v98, 0.0
    %114 = vadd.xlane.f32.xlu0 %v113
    %v115 = vpop.xlane.xlu0 %114
    %v116 = vsel %vm106, %v99, 0.0
    %117 = vadd.xlane.f32.xlu0 %v116
    %v118 = vpop.xlane.xlu0 %117
    %v119 = vsel %vm106, %v100, 0.0
    %120 = vadd.xlane.f32.xlu0 %v119
    %v121 = vpop.xlane.xlu0 %120
    %v122 = vsel %vm106, %v101, 0.0
    %123 = vadd.xlane.f32.xlu0 %v122
    %v124 = vpop.xlane.xlu0 %123
    %v125 = vsel %vm106, %v102, 0.0
    %126 = vadd.xlane.f32.xlu0 %v125
    %v127 = vpop.xlane.xlu0 %126
    %v128 = vsel %vm106, %v103, 0.0
    %129 = vadd.xlane.f32.xlu0 %v128
    %v130 = vpop.xlane.xlu0 %129
    %v131 = vrcp.pop 32.0
    %v132 = vmul.f32 %v109, %v131
    %v133 = vmul.f32 %v112, %v131
    %v134 = vmul.f32 %v115, %v131
    %v135 = vmul.f32 %v118, %v131
    %v136 = vmul.f32 %v121, %v131
    %v137 = vmul.f32 %v124, %v131
    %v138 = vmul.f32 %v127, %v131
    %v139 = vmul.f32 %v130, %v131
    %v140 = vsub.f32 %v96, %v132
    %v141 = vsub.f32 %v97, %v133
    %v142 = vsub.f32 %v98, %v134
    %v143 = vsub.f32 %v99, %v135
    %v144 = vsub.f32 %v100, %v136
    %v145 = vsub.f32 %v101, %v137
    %v146 = vsub.f32 %v102, %v138
    %v147 = vsub.f32 %v103, %v139
    %v148 = vmul.f32 %v140, %v140
    %v149 = vmul.f32 %v141, %v141
    %v150 = vmul.f32 %v142, %v142
    %v151 = vmul.f32 %v143, %v143
    %v152 = vmul.f32 %v144, %v144
    %v153 = vmul.f32 %v145, %v145
    %v154 = vmul.f32 %v146, %v146
    %v155 = vmul.f32 %v147, %v147
    %v156 = vsel %vm106, %v148, 0.0
    %157 = vadd.xlane.f32.xlu0 %v156
    %v158 = vpop.xlane.xlu0 %157
    %v159 = vsel %vm106, %v149, 0.0
    %160 = vadd.xlane.f32.xlu0 %v159
    %v161 = vpop.xlane.xlu0 %160
    %v162 = vsel %vm106, %v150, 0.0
    %163 = vadd.xlane.f32.xlu0 %v162
    %v164 = vpop.xlane.xlu0 %163
    %v165 = vsel %vm106, %v151, 0.0
    %166 = vadd.xlane.f32.xlu0 %v165
    %v167 = vpop.xlane.xlu0 %166
    %v168 = vsel %vm106, %v152, 0.0
    %169 = vadd.xlane.f32.xlu0 %v168
    %v170 = vpop.xlane.xlu0 %169
    %v171 = vsel %vm106, %v153, 0.0
    %172 = vadd.xlane.f32.xlu0 %v171
    %v173 = vpop.xlane.xlu0 %172
    %v174 = vsel %vm106, %v154, 0.0
    %175 = vadd.xlane.f32.xlu0 %v174
    %v176 = vpop.xlane.xlu0 %175
    %v177 = vsel %vm106, %v155, 0.0
    %178 = vadd.xlane.f32.xlu0 %v177
    %v179 = vpop.xlane.xlu0 %178
    %v180 = vmul.f32 %v158, %v131
    %v181 = vmul.f32 %v161, %v131
    %v182 = vmul.f32 %v164, %v131
    %v183 = vmul.f32 %v167, %v131
    %v184 = vmul.f32 %v170, %v131
    %v185 = vmul.f32 %v173, %v131
    %v186 = vmul.f32 %v176, %v131
    %v187 = vmul.f32 %v179, %v131
    %v188 = vadd.f32 %v180, 1e-05
    %v189 = vadd.f32 %v181, 1e-05
    %v190 = vadd.f32 %v182, 1e-05
    %v191 = vadd.f32 %v183, 1e-05
    %v192 = vadd.f32 %v184, 1e-05
    %v193 = vadd.f32 %v185, 1e-05
    %v194 = vadd.f32 %v186, 1e-05
    %v195 = vadd.f32 %v187, 1e-05
    %v196 = vrsqrt.pop %v188
    %v197 = vrsqrt.pop %v189
    %v198 = vrsqrt.pop %v190
    %v199 = vrsqrt.pop %v191
    %v200 = vrsqrt.pop %v192
    %v201 = vrsqrt.pop %v193
    %v202 = vrsqrt.pop %v194
    %v203 = vrsqrt.pop %v195
    %v204 = vmul.f32 %v140, %v196
    %v205 = vmul.f32 %v141, %v197
    %v206 = vmul.f32 %v142, %v198
    %v207 = vmul.f32 %v143, %v199
    %v208 = vmul.f32 %v144, %v200
    %v209 = vmul.f32 %v145, %v201
    %v210 = vmul.f32 %v146, %v202
    %v211 = vmul.f32 %v147, %v203
    %v213 = vlaneseq
    %v214 = vshrl.u32 %v213, 7
    %v215 = vsub.s32 0, %v214
    %v216 = vrot.slane %v104, %v215
    %v218 = vmul.f32 %v204, %v216
    %v219 = vmul.f32 %v205, %v216
    %v220 = vmul.f32 %v206, %v216
    %v221 = vmul.f32 %v207, %v216
    %v222 = vmul.f32 %v208, %v216
    %v223 = vmul.f32 %v209, %v216
    %v224 = vmul.f32 %v210, %v216
    %v225 = vmul.f32 %v211, %v216
    %v227 = vlaneseq
    %v228 = vshrl.u32 %v227, 7
    %v229 = vsub.s32 0, %v228
    %v230 = vrot.slane %v105, %v229
    %v232 = vadd.f32 %v218, %v230
    %v233 = vadd.f32 %v219, %v230
    %v234 = vadd.f32 %v220, %v230
    %v235 = vadd.f32 %v221, %v230
    %v236 = vadd.f32 %v222, %v230
    %v237 = vadd.f32 %v223, %v230
    %v238 = vadd.f32 %v224, %v230
    %v239 = vadd.f32 %v225, %v230
    %v240 = vld [vmem:[%s4] sm:$0xff]
    %v241 = vld [vmem:[%s4 + $0x8] sm:$0xff]
    %v242 = vld [vmem:[%s4 + $0x10] sm:$0xff]
    %v243 = vld [vmem:[%s4 + $0x18] sm:$0xff]
    %v245 = vsel %vm106, %v232, 0
    %v248 = vsel %vm106, %v233, 0
    %v251 = vsel %vm106, %v234, 0
    %v254 = vsel %vm106, %v235, 0
    %v257 = vsel %vm106, %v236, 0
    %v260 = vsel %vm106, %v237, 0
    %v263 = vsel %vm106, %v238, 0
    %v266 = vsel %vm106, %v239, 0
    %268 = vmatprep.subr.mxu0 0.0
    %269 = vmatpush1.msra.mxu0 0.0
    %270 = vmatprep.subr.mxu0 0.0
    %271 = vmatpush1.msra.mxu0 0.0
    %272 = vmatprep.subr.mxu0 0.0
    %273 = vmatpush1.msra.mxu0 0.0
    %274 = vmatprep.subr.mxu0 0.0
    %275 = vmatpush1.msra.mxu0 0.0
    %276 = vmatprep.subr.mxu0 0.0
    %277 = vmatpush1.msra.mxu0 0.0
    %278 = vmatprep.subr.mxu0 0.0
    %279 = vmatpush1.msra.mxu0 0.0
    %280 = vmatprep.subr.mxu0 0.0
    %281 = vmatpush1.msra.mxu0 0.0
    %282 = vmatprep.subr.mxu0 0.0
    %283 = vmatpush1.msra.mxu0 0.0
    %284 = vmatprep.subr.mxu0 0.0
    %285 = vmatpush1.msra.mxu0 0.0
    %286 = vmatprep.subr.mxu0 0.0
    %287 = vmatpush1.msra.mxu0 0.0
    %288 = vmatprep.subr.mxu0 0.0
    %289 = vmatpush1.msra.mxu0 0.0
    %290 = vmatprep.subr.mxu0 0.0
    %291 = vmatpush1.msra.mxu0 0.0
    %292 = vmatprep.subr.mxu0 0.0
    %293 = vmatpush1.msra.mxu0 %v243
    %294 = vmatprep.subr.mxu0 0.0
    %295 = vmatpush1.msra.mxu0 %v242
    %296 = vmatprep.subr.mxu0 0.0
    %297 = vmatpush1.msra.mxu0 %v241
    %298 = vmatprep.subr.mxu0 0.0
    %299 = vmatpush1.msra.mxu0 %v240
    %300 = vmatprep.subr.mxu0 0.0
    %301 = vmatpush2.msra.mxu0 0.0
    %302 = vmatprep.subr.mxu0 0.0
    %303 = vmatpush2.msra.mxu0 0.0
    %304 = vmatprep.subr.mxu0 0.0
    %305 = vmatpush2.msra.mxu0 0.0
    %306 = vmatprep.subr.mxu0 0.0
    %307 = vmatpush2.msra.mxu0 0.0
    %308 = vmatprep.subr.mxu0 0.0
    %309 = vmatpush2.msra.mxu0 0.0
    %310 = vmatprep.subr.mxu0 0.0
    %311 = vmatpush2.msra.mxu0 0.0
    %312 = vmatprep.subr.mxu0 0.0
    %313 = vmatpush2.msra.mxu0 0.0
    %314 = vmatprep.subr.mxu0 0.0
    %315 = vmatpush2.msra.mxu0 0.0
    %316 = vmatprep.subr.mxu0 0.0
    %317 = vmatpush2.msra.mxu0 0.0
    %318 = vmatprep.subr.mxu0 0.0
    %319 = vmatpush2.msra.mxu0 0.0
    %320 = vmatprep.subr.mxu0 0.0
    %321 = vmatpush2.msra.mxu0 0.0
    %322 = vmatprep.subr.mxu0 0.0
    %323 = vmatpush2.msra.mxu0 0.0
    %324 = vmatprep.subr.mxu0 0.0
    %325 = vmatpush2.msra.mxu0 0.0
    %326 = vmatprep.subr.mxu0 0.0
    %327 = vmatpush2.msra.mxu0 0.0
    %328 = vmatprep.subr.mxu0 0.0
    %329 = vmatpush2.msra.mxu0 0.0
    %330 = vmatprep.subr.mxu0 0.0
    %331 = vmatpush2.msra.mxu0 0.0
    %332 = vmatprep.mubr.f32.mxu0 0.0
    %333 = vmatmul.mubr.f32.gmra.mxu0 %v245
    %v334 = vpop.f32.mrf.mxu0
    %v335 = vadd.f32 0.0, %v334
    %v336 = vpop.f32.mrf.mxu0
    %337 = vmatprep.mubr.f32.mxu0 0.0
    %338 = vmatmul.mubr.f32.gmra.mxu0 %v248
    %v339 = vpop.f32.mrf.mxu0
    %v340 = vadd.f32 0.0, %v339
    %v341 = vpop.f32.mrf.mxu0
    %342 = vmatprep.mubr.f32.mxu0 0.0
    %343 = vmatmul.mubr.f32.gmra.mxu0 %v251
    %v344 = vpop.f32.mrf.mxu0
    %v345 = vadd.f32 0.0, %v344
    %v346 = vpop.f32.mrf.mxu0
    %347 = vmatprep.mubr.f32.mxu0 0.0
    %348 = vmatmul.mubr.f32.gmra.mxu0 %v254
    %v349 = vpop.f32.mrf.mxu0
    %v350 = vadd.f32 0.0, %v349
    %v351 = vpop.f32.mrf.mxu0
    %352 = vmatprep.mubr.f32.mxu0 0.0
    %353 = vmatmul.mubr.f32.gmra.mxu0 %v257
    %v354 = vpop.f32.mrf.mxu0
    %v355 = vadd.f32 0.0, %v354
    %v356 = vpop.f32.mrf.mxu0
    %357 = vmatprep.mubr.f32.mxu0 0.0
    %358 = vmatmul.mubr.f32.gmra.mxu0 %v260
    %v359 = vpop.f32.mrf.mxu0
    %v360 = vadd.f32 0.0, %v359
    %v361 = vpop.f32.mrf.mxu0
    %362 = vmatprep.mubr.f32.mxu0 0.0
    %363 = vmatmul.mubr.f32.gmra.mxu0 %v263
    %v364 = vpop.f32.mrf.mxu0
    %v365 = vadd.f32 0.0, %v364
    %v366 = vpop.f32.mrf.mxu0
    %367 = vmatprep.mubr.f32.mxu0 0.0
    %368 = vmatmul.mubr.f32.gmra.mxu0 %v266
    %v369 = vpop.f32.mrf.mxu0
    %v370 = vadd.f32 0.0, %v369
    %v371 = vpop.f32.mrf.mxu0
    %372 = vdwg.mxu0
    %377 = vrot.lane.b32.xlu0 %v335, 96
    %v378 = vpop.permute.xlu0 %377
    %379 = vrot.lane.b32.xlu0 %v340, 96
    %v380 = vpop.permute.xlu0 %379
    %381 = vrot.lane.b32.xlu0 %v345, 96
    %v382 = vpop.permute.xlu0 %381
    %383 = vrot.lane.b32.xlu0 %v350, 96
    %v384 = vpop.permute.xlu0 %383
    %vm385 = vcmask 64512
    %v386 = vsel %vm385, %v335, 0
    %v388 = vsel %vm385, %v340, 0
    %v390 = vsel %vm385, %v345, 0
    %v392 = vsel %vm385, %v350, 0
    %v394 = vsel %vm385, %v378, 0
    %v396 = vsel %vm385, %v380, 0
    %v398 = vsel %vm385, %v382, 0
    %v400 = vsel %vm385, %v384, 0
    %402 = vmatprep.subr.mxu0 0.0
    %403 = vmatpush1.xpose.msra.mxu0 0.0
    %404 = vmatprep.subr.mxu0 0.0
    %405 = vmatpush1.xpose.msra.mxu0 0.0
    %406 = vmatprep.subr.mxu0 0.0
    %407 = vmatpush1.xpose.msra.mxu0 0.0
    %408 = vmatprep.subr.mxu0 0.0
    %409 = vmatpush1.xpose.msra.mxu0 0.0
    %410 = vmatprep.subr.mxu0 0.0
    %411 = vmatpush1.xpose.msra.mxu0 0.0
    %412 = vmatprep.subr.mxu0 0.0
    %413 = vmatpush1.xpose.msra.mxu0 0.0
    %414 = vmatprep.subr.mxu0 0.0
    %415 = vmatpush1.xpose.msra.mxu0 0.0
    %416 = vmatprep.subr.mxu0 0.0
    %417 = vmatpush1.xpose.msra.mxu0 0.0
    %418 = vmatprep.subr.mxu0 0.0
    %419 = vmatpush1.xpose.msra.mxu0 0.0
    %420 = vmatprep.subr.mxu0 0.0
    %421 = vmatpush1.xpose.msra.mxu0 0.0
    %422 = vmatprep.subr.mxu0 0.0
    %423 = vmatpush1.xpose.msra.mxu0 0.0
    %424 = vmatprep.subr.mxu0 0.0
    %425 = vmatpush1.xpose.msra.mxu0 0.0
    %426 = vmatprep.subr.mxu0 0.0
    %427 = vmatpush1.xpose.msra.mxu0 %v400
    %428 = vmatprep.subr.mxu0 0.0
    %429 = vmatpush1.xpose.msra.mxu0 %v398
    %430 = vmatprep.subr.mxu0 0.0
    %431 = vmatpush1.xpose.msra.mxu0 %v396
    %432 = vmatprep.subr.mxu0 0.0
    %433 = vmatpush1.xpose.msra.mxu0 %v394
    %434 = vmatprep.subr.mxu0 0.0
    %435 = vmatpush2.xpose.msra.mxu0 0.0
    %436 = vmatprep.subr.mxu0 0.0
    %437 = vmatpush2.xpose.msra.mxu0 0.0
    %438 = vmatprep.subr.mxu0 0.0
    %439 = vmatpush2.xpose.msra.mxu0 0.0
    %440 = vmatprep.subr.mxu0 0.0
    %441 = vmatpush2.xpose.msra.mxu0 0.0
    %442 = vmatprep.subr.mxu0 0.0
    %443 = vmatpush2.xpose.msra.mxu0 0.0
    %444 = vmatprep.subr.mxu0 0.0
    %445 = vmatpush2.xpose.msra.mxu0 0.0
    %446 = vmatprep.subr.mxu0 0.0
    %447 = vmatpush2.xpose.msra.mxu0 0.0
    %448 = vmatprep.subr.mxu0 0.0
    %449 = vmatpush2.xpose.msra.mxu0 0.0
    %450 = vmatprep.subr.mxu0 0.0
    %451 = vmatpush2.xpose.msra.mxu0 0.0
    %452 = vmatprep.subr.mxu0 0.0
    %453 = vmatpush2.xpose.msra.mxu0 0.0
    %454 = vmatprep.subr.mxu0 0.0
    %455 = vmatpush2.xpose.msra.mxu0 0.0
    %456 = vmatprep.subr.mxu0 0.0
    %457 = vmatpush2.xpose.msra.mxu0 0.0
    %458 = vmatprep.subr.mxu0 0.0
    %459 = vmatpush2.xpose.msra.mxu0 0.0
    %460 = vmatprep.subr.mxu0 0.0
    %461 = vmatpush2.xpose.msra.mxu0 0.0
    %462 = vmatprep.subr.mxu0 0.0
    %463 = vmatpush2.xpose.msra.mxu0 0.0
    %464 = vmatprep.subr.mxu0 0.0
    %465 = vmatpush2.xpose.msra.mxu0 0.0
    %466 = vmatprep.mubr.f32.mxu0 0.0
    %467 = vmatmul.mubr.f32.gmra.mxu0 %v386
    %v468 = vpop.f32.mrf.mxu0
    %v469 = vadd.f32 0.0, %v468
    %v470 = vpop.f32.mrf.mxu0
    %471 = vmatprep.mubr.f32.mxu0 0.0
    %472 = vmatmul.mubr.f32.gmra.mxu0 %v388
    %v473 = vpop.f32.mrf.mxu0
    %v474 = vadd.f32 0.0, %v473
    %v475 = vpop.f32.mrf.mxu0
    %476 = vmatprep.mubr.f32.mxu0 0.0
    %477 = vmatmul.mubr.f32.gmra.mxu0 %v390
    %v478 = vpop.f32.mrf.mxu0
    %v479 = vadd.f32 0.0, %v478
    %v480 = vpop.f32.mrf.mxu0
    %481 = vmatprep.mubr.f32.mxu0 0.0
    %482 = vmatmul.mubr.f32.gmra.mxu0 %v392
    %v483 = vpop.f32.mrf.mxu0
    %v484 = vadd.f32 0.0, %v483
    %v485 = vpop.f32.mrf.mxu0
    %486 = vdwg.mxu0
    %491 = vrot.lane.b32.xlu0 %v355, 96
    %v492 = vpop.permute.xlu0 %491
    %493 = vrot.lane.b32.xlu0 %v360, 96
    %v494 = vpop.permute.xlu0 %493
    %495 = vrot.lane.b32.xlu0 %v365, 96
    %v496 = vpop.permute.xlu0 %495
    %497 = vrot.lane.b32.xlu0 %v370, 96
    %v498 = vpop.permute.xlu0 %497
    %v499 = vsel %vm385, %v355, 0
    %v501 = vsel %vm385, %v360, 0
    %v503 = vsel %vm385, %v365, 0
    %v505 = vsel %vm385, %v370, 0
    %v507 = vsel %vm385, %v492, 0
    %v509 = vsel %vm385, %v494, 0
    %v511 = vsel %vm385, %v496, 0
    %v513 = vsel %vm385, %v498, 0
    %515 = vmatprep.subr.mxu0 0.0
    %516 = vmatpush1.xpose.msra.mxu0 0.0
    %517 = vmatprep.subr.mxu0 0.0
    %518 = vmatpush1.xpose.msra.mxu0 0.0
    %519 = vmatprep.subr.mxu0 0.0
    %520 = vmatpush1.xpose.msra.mxu0 0.0
    %521 = vmatprep.subr.mxu0 0.0
    %522 = vmatpush1.xpose.msra.mxu0 0.0
    %523 = vmatprep.subr.mxu0 0.0
    %524 = vmatpush1.xpose.msra.mxu0 0.0
    %525 = vmatprep.subr.mxu0 0.0
    %526 = vmatpush1.xpose.msra.mxu0 0.0
    %527 = vmatprep.subr.mxu0 0.0
    %528 = vmatpush1.xpose.msra.mxu0 0.0
    %529 = vmatprep.subr.mxu0 0.0
    %530 = vmatpush1.xpose.msra.mxu0 0.0
    %531 = vmatprep.subr.mxu0 0.0
    %532 = vmatpush1.xpose.msra.mxu0 0.0
    %533 = vmatprep.subr.mxu0 0.0
    %534 = vmatpush1.xpose.msra.mxu0 0.0
    %535 = vmatprep.subr.mxu0 0.0
    %536 = vmatpush1.xpose.msra.mxu0 0.0
    %537 = vmatprep.subr.mxu0 0.0
    %538 = vmatpush1.xpose.msra.mxu0 0.0
    %539 = vmatprep.subr.mxu0 0.0
    %540 = vmatpush1.xpose.msra.mxu0 %v513
    %541 = vmatprep.subr.mxu0 0.0
    %542 = vmatpush1.xpose.msra.mxu0 %v511
    %543 = vmatprep.subr.mxu0 0.0
    %544 = vmatpush1.xpose.msra.mxu0 %v509
    %545 = vmatprep.subr.mxu0 0.0
    %546 = vmatpush1.xpose.msra.mxu0 %v507
    %547 = vmatprep.subr.mxu0 0.0
    %548 = vmatpush2.xpose.msra.mxu0 0.0
    %549 = vmatprep.subr.mxu0 0.0
    %550 = vmatpush2.xpose.msra.mxu0 0.0
    %551 = vmatprep.subr.mxu0 0.0
    %552 = vmatpush2.xpose.msra.mxu0 0.0
    %553 = vmatprep.subr.mxu0 0.0
    %554 = vmatpush2.xpose.msra.mxu0 0.0
    %555 = vmatprep.subr.mxu0 0.0
    %556 = vmatpush2.xpose.msra.mxu0 0.0
    %557 = vmatprep.subr.mxu0 0.0
    %558 = vmatpush2.xpose.msra.mxu0 0.0
    %559 = vmatprep.subr.mxu0 0.0
    %560 = vmatpush2.xpose.msra.mxu0 0.0
    %561 = vmatprep.subr.mxu0 0.0
    %562 = vmatpush2.xpose.msra.mxu0 0.0
    %563 = vmatprep.subr.mxu0 0.0
    %564 = vmatpush2.xpose.msra.mxu0 0.0
    %565 = vmatprep.subr.mxu0 0.0
    %566 = vmatpush2.xpose.msra.mxu0 0.0
    %567 = vmatprep.subr.mxu0 0.0
    %568 = vmatpush2.xpose.msra.mxu0 0.0
    %569 = vmatprep.subr.mxu0 0.0
    %570 = vmatpush2.xpose.msra.mxu0 0.0
    %571 = vmatprep.subr.mxu0 0.0
    %572 = vmatpush2.xpose.msra.mxu0 0.0
    %573 = vmatprep.subr.mxu0 0.0
    %574 = vmatpush2.xpose.msra.mxu0 0.0
    %575 = vmatprep.subr.mxu0 0.0
    %576 = vmatpush2.xpose.msra.mxu0 0.0
    %577 = vmatprep.subr.mxu0 0.0
    %578 = vmatpush2.xpose.msra.mxu0 0.0
    %579 = vmatprep.mubr.f32.mxu0 0.0
    %580 = vmatmul.mubr.f32.gmra.mxu0 %v499
    %v581 = vpop.f32.mrf.mxu0
    %v582 = vadd.f32 0.0, %v581
    %v583 = vpop.f32.mrf.mxu0
    %584 = vmatprep.mubr.f32.mxu0 0.0
    %585 = vmatmul.mubr.f32.gmra.mxu0 %v501
    %v586 = vpop.f32.mrf.mxu0
    %v587 = vadd.f32 0.0, %v586
    %v588 = vpop.f32.mrf.mxu0
    %589 = vmatprep.mubr.f32.mxu0 0.0
    %590 = vmatmul.mubr.f32.gmra.mxu0 %v503
    %v591 = vpop.f32.mrf.mxu0
    %v592 = vadd.f32 0.0, %v591
    %v593 = vpop.f32.mrf.mxu0
    %594 = vmatprep.mubr.f32.mxu0 0.0
    %595 = vmatmul.mubr.f32.gmra.mxu0 %v505
    %v596 = vpop.f32.mrf.mxu0
    %v597 = vadd.f32 0.0, %v596
    %v598 = vpop.f32.mrf.mxu0
    %599 = vdwg.mxu0
    %v600 = vsel %vm106, %v469, -inf
    %601 = vmax.xlane.f32.xlu0 %v600
    %v602 = vpop.xlane.xlu0 %601
    %v603 = vsel %vm106, %v474, -inf
    %604 = vmax.xlane.f32.xlu0 %v603
    %v605 = vpop.xlane.xlu0 %604
    %v606 = vsel %vm106, %v479, -inf
    %607 = vmax.xlane.f32.xlu0 %v606
    %v608 = vpop.xlane.xlu0 %607
    %v609 = vsel %vm106, %v484, -inf
    %610 = vmax.xlane.f32.xlu0 %v609
    %v611 = vpop.xlane.xlu0 %610
    %v612 = vsel %vm106, %v582, -inf
    %613 = vmax.xlane.f32.xlu0 %v612
    %v614 = vpop.xlane.xlu0 %613
    %v615 = vsel %vm106, %v587, -inf
    %616 = vmax.xlane.f32.xlu0 %v615
    %v617 = vpop.xlane.xlu0 %616
    %v618 = vsel %vm106, %v592, -inf
    %619 = vmax.xlane.f32.xlu0 %v618
    %v620 = vpop.xlane.xlu0 %619
    %v621 = vsel %vm106, %v597, -inf
    %622 = vmax.xlane.f32.xlu0 %v621
    %v623 = vpop.xlane.xlu0 %622
    %v624 = vsub.f32 %v469, %v602
    %v625 = vsub.f32 %v474, %v605
    %v626 = vsub.f32 %v479, %v608
    %v627 = vsub.f32 %v484, %v611
    %v628 = vsub.f32 %v582, %v614
    %v629 = vsub.f32 %v587, %v617
    %v630 = vsub.f32 %v592, %v620
    %v631 = vsub.f32 %v597, %v623
    %v632 = vmul.f32 %v624, 1.442695
    %v633 = vpow.pop %v632
    %v634 = vmul.f32 %v625, 1.442695
    %v635 = vpow.pop %v634
    %v636 = vmul.f32 %v626, 1.442695
    %v637 = vpow.pop %v636
    %v638 = vmul.f32 %v627, 1.442695
    %v639 = vpow.pop %v638
    %v640 = vmul.f32 %v628, 1.442695
    %v641 = vpow.pop %v640
    %v642 = vmul.f32 %v629, 1.442695
    %v643 = vpow.pop %v642
    %v644 = vmul.f32 %v630, 1.442695
    %v645 = vpow.pop %v644
    %v646 = vmul.f32 %v631, 1.442695
    %v647 = vpow.pop %v646
    %v648 = vsel %vm106, %v633, 0.0
    %649 = vadd.xlane.f32.xlu0 %v648
    %v650 = vpop.xlane.xlu0 %649
    %v651 = vsel %vm106, %v635, 0.0
    %652 = vadd.xlane.f32.xlu0 %v651
    %v653 = vpop.xlane.xlu0 %652
    %v654 = vsel %vm106, %v637, 0.0
    %655 = vadd.xlane.f32.xlu0 %v654
    %v656 = vpop.xlane.xlu0 %655
    %v657 = vsel %vm106, %v639, 0.0
    %658 = vadd.xlane.f32.xlu0 %v657
    %v659 = vpop.xlane.xlu0 %658
    %v660 = vsel %vm106, %v641, 0.0
    %661 = vadd.xlane.f32.xlu0 %v660
    %v662 = vpop.xlane.xlu0 %661
    %v663 = vsel %vm106, %v643, 0.0
    %664 = vadd.xlane.f32.xlu0 %v663
    %v665 = vpop.xlane.xlu0 %664
    %v666 = vsel %vm106, %v645, 0.0
    %667 = vadd.xlane.f32.xlu0 %v666
    %v668 = vpop.xlane.xlu0 %667
    %v669 = vsel %vm106, %v647, 0.0
    %670 = vadd.xlane.f32.xlu0 %v669
    %v671 = vpop.xlane.xlu0 %670
    %v672 = vrcp.pop %v650
    %v673 = vrcp.pop %v653
    %v674 = vrcp.pop %v656
    %v675 = vrcp.pop %v659
    %v676 = vrcp.pop %v662
    %v677 = vrcp.pop %v665
    %v678 = vrcp.pop %v668
    %v679 = vrcp.pop %v671
    %v680 = vmul.f32 %v633, %v672
    %v681 = vmul.f32 %v635, %v673
    %v682 = vmul.f32 %v637, %v674
    %v683 = vmul.f32 %v639, %v675
    %v684 = vmul.f32 %v641, %v676
    %v685 = vmul.f32 %v643, %v677
    %v686 = vmul.f32 %v645, %v678
    %v687 = vmul.f32 %v647, %v679
    %688 = vrot.lane.b32.xlu0 %v335, 64
    %v689 = vpop.permute.xlu0 %688
    %690 = vrot.lane.b32.xlu0 %v340, 64
    %v691 = vpop.permute.xlu0 %690
    %692 = vrot.lane.b32.xlu0 %v345, 64
    %v693 = vpop.permute.xlu0 %692
    %694 = vrot.lane.b32.xlu0 %v350, 64
    %v695 = vpop.permute.xlu0 %694
    %v701 = vsel %vm106, %v680, 0
    %v704 = vsel %vm106, %v681, 0
    %v707 = vsel %vm106, %v682, 0
    %v710 = vsel %vm106, %v683, 0
    %712 = vmatprep.subr.mxu0 0.0
    %713 = vmatpush1.msra.mxu0 0.0
    %714 = vmatprep.subr.mxu0 0.0
    %715 = vmatpush1.msra.mxu0 0.0
    %716 = vmatprep.subr.mxu0 0.0
    %717 = vmatpush1.msra.mxu0 0.0
    %718 = vmatprep.subr.mxu0 0.0
    %719 = vmatpush1.msra.mxu0 0.0
    %720 = vmatprep.subr.mxu0 0.0
    %721 = vmatpush1.msra.mxu0 0.0
    %722 = vmatprep.subr.mxu0 0.0
    %723 = vmatpush1.msra.mxu0 0.0
    %724 = vmatprep.subr.mxu0 0.0
    %725 = vmatpush1.msra.mxu0 0.0
    %726 = vmatprep.subr.mxu0 0.0
    %727 = vmatpush1.msra.mxu0 0.0
    %728 = vmatprep.subr.mxu0 0.0
    %729 = vmatpush1.msra.mxu0 0.0
    %730 = vmatprep.subr.mxu0 0.0
    %731 = vmatpush1.msra.mxu0 0.0
    %732 = vmatprep.subr.mxu0 0.0
    %733 = vmatpush1.msra.mxu0 0.0
    %734 = vmatprep.subr.mxu0 0.0
    %735 = vmatpush1.msra.mxu0 0.0
    %736 = vmatprep.subr.mxu0 0.0
    %737 = vmatpush1.msra.mxu0 %v695
    %738 = vmatprep.subr.mxu0 0.0
    %739 = vmatpush1.msra.mxu0 %v693
    %740 = vmatprep.subr.mxu0 0.0
    %741 = vmatpush1.msra.mxu0 %v691
    %742 = vmatprep.subr.mxu0 0.0
    %743 = vmatpush1.msra.mxu0 %v689
    %744 = vmatprep.subr.mxu0 0.0
    %745 = vmatpush2.msra.mxu0 0.0
    %746 = vmatprep.subr.mxu0 0.0
    %747 = vmatpush2.msra.mxu0 0.0
    %748 = vmatprep.subr.mxu0 0.0
    %749 = vmatpush2.msra.mxu0 0.0
    %750 = vmatprep.subr.mxu0 0.0
    %751 = vmatpush2.msra.mxu0 0.0
    %752 = vmatprep.subr.mxu0 0.0
    %753 = vmatpush2.msra.mxu0 0.0
    %754 = vmatprep.subr.mxu0 0.0
    %755 = vmatpush2.msra.mxu0 0.0
    %756 = vmatprep.subr.mxu0 0.0
    %757 = vmatpush2.msra.mxu0 0.0
    %758 = vmatprep.subr.mxu0 0.0
    %759 = vmatpush2.msra.mxu0 0.0
    %760 = vmatprep.subr.mxu0 0.0
    %761 = vmatpush2.msra.mxu0 0.0
    %762 = vmatprep.subr.mxu0 0.0
    %763 = vmatpush2.msra.mxu0 0.0
    %764 = vmatprep.subr.mxu0 0.0
    %765 = vmatpush2.msra.mxu0 0.0
    %766 = vmatprep.subr.mxu0 0.0
    %767 = vmatpush2.msra.mxu0 0.0
    %768 = vmatprep.subr.mxu0 0.0
    %769 = vmatpush2.msra.mxu0 0.0
    %770 = vmatprep.subr.mxu0 0.0
    %771 = vmatpush2.msra.mxu0 0.0
    %772 = vmatprep.subr.mxu0 0.0
    %773 = vmatpush2.msra.mxu0 0.0
    %774 = vmatprep.subr.mxu0 0.0
    %775 = vmatpush2.msra.mxu0 0.0
    %776 = vmatprep.mubr.f32.mxu0 0.0
    %777 = vmatmul.mubr.f32.gmra.mxu0 %v701
    %v778 = vpop.f32.mrf.mxu0
    %v779 = vadd.f32 0.0, %v778
    %v780 = vpop.f32.mrf.mxu0
    %781 = vmatprep.mubr.f32.mxu0 0.0
    %782 = vmatmul.mubr.f32.gmra.mxu0 %v704
    %v783 = vpop.f32.mrf.mxu0
    %v784 = vadd.f32 0.0, %v783
    %v785 = vpop.f32.mrf.mxu0
    %786 = vmatprep.mubr.f32.mxu0 0.0
    %787 = vmatmul.mubr.f32.gmra.mxu0 %v707
    %v788 = vpop.f32.mrf.mxu0
    %v789 = vadd.f32 0.0, %v788
    %v790 = vpop.f32.mrf.mxu0
    %791 = vmatprep.mubr.f32.mxu0 0.0
    %792 = vmatmul.mubr.f32.gmra.mxu0 %v710
    %v793 = vpop.f32.mrf.mxu0
    %v794 = vadd.f32 0.0, %v793
    %v795 = vpop.f32.mrf.mxu0
    %796 = vdwg.mxu0
    %797 = vrot.lane.b32.xlu0 %v355, 64
    %v798 = vpop.permute.xlu0 %797
    %799 = vrot.lane.b32.xlu0 %v360, 64
    %v800 = vpop.permute.xlu0 %799
    %801 = vrot.lane.b32.xlu0 %v365, 64
    %v802 = vpop.permute.xlu0 %801
    %803 = vrot.lane.b32.xlu0 %v370, 64
    %v804 = vpop.permute.xlu0 %803
    %v810 = vsel %vm106, %v684, 0
    %v813 = vsel %vm106, %v685, 0
    %v816 = vsel %vm106, %v686, 0
    %v819 = vsel %vm106, %v687, 0
    %821 = vmatprep.subr.mxu0 0.0
    %822 = vmatpush1.msra.mxu0 0.0
    %823 = vmatprep.subr.mxu0 0.0
    %824 = vmatpush1.msra.mxu0 0.0
    %825 = vmatprep.subr.mxu0 0.0
    %826 = vmatpush1.msra.mxu0 0.0
    %827 = vmatprep.subr.mxu0 0.0
    %828 = vmatpush1.msra.mxu0 0.0
    %829 = vmatprep.subr.mxu0 0.0
    %830 = vmatpush1.msra.mxu0 0.0
    %831 = vmatprep.subr.mxu0 0.0
    %832 = vmatpush1.msra.mxu0 0.0
    %833 = vmatprep.subr.mxu0 0.0
    %834 = vmatpush1.msra.mxu0 0.0
    %835 = vmatprep.subr.mxu0 0.0
    %836 = vmatpush1.msra.mxu0 0.0
    %837 = vmatprep.subr.mxu0 0.0
    %838 = vmatpush1.msra.mxu0 0.0
    %839 = vmatprep.subr.mxu0 0.0
    %840 = vmatpush1.msra.mxu0 0.0
    %841 = vmatprep.subr.mxu0 0.0
    %842 = vmatpush1.msra.mxu0 0.0
    %843 = vmatprep.subr.mxu0 0.0
    %844 = vmatpush1.msra.mxu0 0.0
    %845 = vmatprep.subr.mxu0 0.0
    %846 = vmatpush1.msra.mxu0 %v804
    %847 = vmatprep.subr.mxu0 0.0
    %848 = vmatpush1.msra.mxu0 %v802
    %849 = vmatprep.subr.mxu0 0.0
    %850 = vmatpush1.msra.mxu0 %v800
    %851 = vmatprep.subr.mxu0 0.0
    %852 = vmatpush1.msra.mxu0 %v798
    %853 = vmatprep.subr.mxu0 0.0
    %854 = vmatpush2.msra.mxu0 0.0
    %855 = vmatprep.subr.mxu0 0.0
    %856 = vmatpush2.msra.mxu0 0.0
    %857 = vmatprep.subr.mxu0 0.0
    %858 = vmatpush2.msra.mxu0 0.0
    %859 = vmatprep.subr.mxu0 0.0
    %860 = vmatpush2.msra.mxu0 0.0
    %861 = vmatprep.subr.mxu0 0.0
    %862 = vmatpush2.msra.mxu0 0.0
    %863 = vmatprep.subr.mxu0 0.0
    %864 = vmatpush2.msra.mxu0 0.0
    %865 = vmatprep.subr.mxu0 0.0
    %866 = vmatpush2.msra.mxu0 0.0
    %867 = vmatprep.subr.mxu0 0.0
    %868 = vmatpush2.msra.mxu0 0.0
    %869 = vmatprep.subr.mxu0 0.0
    %870 = vmatpush2.msra.mxu0 0.0
    %871 = vmatprep.subr.mxu0 0.0
    %872 = vmatpush2.msra.mxu0 0.0
    %873 = vmatprep.subr.mxu0 0.0
    %874 = vmatpush2.msra.mxu0 0.0
    %875 = vmatprep.subr.mxu0 0.0
    %876 = vmatpush2.msra.mxu0 0.0
    %877 = vmatprep.subr.mxu0 0.0
    %878 = vmatpush2.msra.mxu0 0.0
    %879 = vmatprep.subr.mxu0 0.0
    %880 = vmatpush2.msra.mxu0 0.0
    %881 = vmatprep.subr.mxu0 0.0
    %882 = vmatpush2.msra.mxu0 0.0
    %883 = vmatprep.subr.mxu0 0.0
    %884 = vmatpush2.msra.mxu0 0.0
    %885 = vmatprep.mubr.f32.mxu0 0.0
    %886 = vmatmul.mubr.f32.gmra.mxu0 %v810
    %v887 = vpop.f32.mrf.mxu0
    %v888 = vadd.f32 0.0, %v887
    %v889 = vpop.f32.mrf.mxu0
    %890 = vmatprep.mubr.f32.mxu0 0.0
    %891 = vmatmul.mubr.f32.gmra.mxu0 %v813
    %v892 = vpop.f32.mrf.mxu0
    %v893 = vadd.f32 0.0, %v892
    %v894 = vpop.f32.mrf.mxu0
    %895 = vmatprep.mubr.f32.mxu0 0.0
    %896 = vmatmul.mubr.f32.gmra.mxu0 %v816
    %v897 = vpop.f32.mrf.mxu0
    %v898 = vadd.f32 0.0, %v897
    %v899 = vpop.f32.mrf.mxu0
    %900 = vmatprep.mubr.f32.mxu0 0.0
    %901 = vmatmul.mubr.f32.gmra.mxu0 %v819
    %v902 = vpop.f32.mrf.mxu0
    %v903 = vadd.f32 0.0, %v902
    %v904 = vpop.f32.mrf.mxu0
    %905 = vdwg.mxu0
    %906 = vrot.lane.b32.xlu0 %v335, 120
    %v907 = vpop.permute.xlu0 %906
    %908 = vrot.lane.b32.xlu0 %v340, 120
    %v909 = vpop.permute.xlu0 %908
    %910 = vrot.lane.b32.xlu0 %v345, 120
    %v911 = vpop.permute.xlu0 %910
    %912 = vrot.lane.b32.xlu0 %v350, 120
    %v913 = vpop.permute.xlu0 %912
    %914 = vrot.lane.b32.xlu0 %v335, 88
    %v915 = vpop.permute.xlu0 %914
    %916 = vrot.lane.b32.xlu0 %v340, 88
    %v917 = vpop.permute.xlu0 %916
    %918 = vrot.lane.b32.xlu0 %v345, 88
    %v919 = vpop.permute.xlu0 %918
    %920 = vrot.lane.b32.xlu0 %v350, 88
    %v921 = vpop.permute.xlu0 %920
    %v922 = vsel %vm385, %v907, 0
    %v924 = vsel %vm385, %v909, 0
    %v926 = vsel %vm385, %v911, 0
    %v928 = vsel %vm385, %v913, 0
    %v930 = vsel %vm385, %v915, 0
    %v932 = vsel %vm385, %v917, 0
    %v934 = vsel %vm385, %v919, 0
    %v936 = vsel %vm385, %v921, 0
    %938 = vmatprep.subr.mxu0 0.0
    %939 = vmatpush1.xpose.msra.mxu0 0.0
    %940 = vmatprep.subr.mxu0 0.0
    %941 = vmatpush1.xpose.msra.mxu0 0.0
    %942 = vmatprep.subr.mxu0 0.0
    %943 = vmatpush1.xpose.msra.mxu0 0.0
    %944 = vmatprep.subr.mxu0 0.0
    %945 = vmatpush1.xpose.msra.mxu0 0.0
    %946 = vmatprep.subr.mxu0 0.0
    %947 = vmatpush1.xpose.msra.mxu0 0.0
    %948 = vmatprep.subr.mxu0 0.0
    %949 = vmatpush1.xpose.msra.mxu0 0.0
    %950 = vmatprep.subr.mxu0 0.0
    %951 = vmatpush1.xpose.msra.mxu0 0.0
    %952 = vmatprep.subr.mxu0 0.0
    %953 = vmatpush1.xpose.msra.mxu0 0.0
    %954 = vmatprep.subr.mxu0 0.0
    %955 = vmatpush1.xpose.msra.mxu0 0.0
    %956 = vmatprep.subr.mxu0 0.0
    %957 = vmatpush1.xpose.msra.mxu0 0.0
    %958 = vmatprep.subr.mxu0 0.0
    %959 = vmatpush1.xpose.msra.mxu0 0.0
    %960 = vmatprep.subr.mxu0 0.0
    %961 = vmatpush1.xpose.msra.mxu0 0.0
    %962 = vmatprep.subr.mxu0 0.0
    %963 = vmatpush1.xpose.msra.mxu0 %v936
    %964 = vmatprep.subr.mxu0 0.0
    %965 = vmatpush1.xpose.msra.mxu0 %v934
    %966 = vmatprep.subr.mxu0 0.0
    %967 = vmatpush1.xpose.msra.mxu0 %v932
    %968 = vmatprep.subr.mxu0 0.0
    %969 = vmatpush1.xpose.msra.mxu0 %v930
    %970 = vmatprep.subr.mxu0 0.0
    %971 = vmatpush2.xpose.msra.mxu0 0.0
    %972 = vmatprep.subr.mxu0 0.0
    %973 = vmatpush2.xpose.msra.mxu0 0.0
    %974 = vmatprep.subr.mxu0 0.0
    %975 = vmatpush2.xpose.msra.mxu0 0.0
    %976 = vmatprep.subr.mxu0 0.0
    %977 = vmatpush2.xpose.msra.mxu0 0.0
    %978 = vmatprep.subr.mxu0 0.0
    %979 = vmatpush2.xpose.msra.mxu0 0.0
    %980 = vmatprep.subr.mxu0 0.0
    %981 = vmatpush2.xpose.msra.mxu0 0.0
    %982 = vmatprep.subr.mxu0 0.0
    %983 = vmatpush2.xpose.msra.mxu0 0.0
    %984 = vmatprep.subr.mxu0 0.0
    %985 = vmatpush2.xpose.msra.mxu0 0.0
    %986 = vmatprep.subr.mxu0 0.0
    %987 = vmatpush2.xpose.msra.mxu0 0.0
    %988 = vmatprep.subr.mxu0 0.0
    %989 = vmatpush2.xpose.msra.mxu0 0.0
    %990 = vmatprep.subr.mxu0 0.0
    %991 = vmatpush2.xpose.msra.mxu0 0.0
    %992 = vmatprep.subr.mxu0 0.0
    %993 = vmatpush2.xpose.msra.mxu0 0.0
    %994 = vmatprep.subr.mxu0 0.0
    %995 = vmatpush2.xpose.msra.mxu0 0.0
    %996 = vmatprep.subr.mxu0 0.0
    %997 = vmatpush2.xpose.msra.mxu0 0.0
    %998 = vmatprep.subr.mxu0 0.0
    %999 = vmatpush2.xpose.msra.mxu0 0.0
    %1000 = vmatprep.subr.mxu0 0.0
    %1001 = vmatpush2.xpose.msra.mxu0 0.0
    %1002 = vmatprep.mubr.f32.mxu0 0.0
    %1003 = vmatmul.mubr.f32.gmra.mxu0 %v922
    %v1004 = vpop.f32.mrf.mxu0
    %v1005 = vadd.f32 0.0, %v1004
    %v1006 = vpop.f32.mrf.mxu0
    %1007 = vmatprep.mubr.f32.mxu0 0.0
    %1008 = vmatmul.mubr.f32.gmra.mxu0 %v924
    %v1009 = vpop.f32.mrf.mxu0
    %v1010 = vadd.f32 0.0, %v1009
    %v1011 = vpop.f32.mrf.mxu0
    %1012 = vmatprep.mubr.f32.mxu0 0.0
    %1013 = vmatmul.mubr.f32.gmra.mxu0 %v926
    %v1014 = vpop.f32.mrf.mxu0
    %v1015 = vadd.f32 0.0, %v1014
    %v1016 = vpop.f32.mrf.mxu0
    %1017 = vmatprep.mubr.f32.mxu0 0.0
    %1018 = vmatmul.mubr.f32.gmra.mxu0 %v928
    %v1019 = vpop.f32.mrf.mxu0
    %v1020 = vadd.f32 0.0, %v1019
    %v1021 = vpop.f32.mrf.mxu0
    %1022 = vdwg.mxu0
    %1023 = vrot.lane.b32.xlu0 %v355, 120
    %v1024 = vpop.permute.xlu0 %1023
    %1025 = vrot.lane.b32.xlu0 %v360, 120
    %v1026 = vpop.permute.xlu0 %1025
    %1027 = vrot.lane.b32.xlu0 %v365, 120
    %v1028 = vpop.permute.xlu0 %1027
    %1029 = vrot.lane.b32.xlu0 %v370, 120
    %v1030 = vpop.permute.xlu0 %1029
    %1031 = vrot.lane.b32.xlu0 %v355, 88
    %v1032 = vpop.permute.xlu0 %1031
    %1033 = vrot.lane.b32.xlu0 %v360, 88
    %v1034 = vpop.permute.xlu0 %1033
    %1035 = vrot.lane.b32.xlu0 %v365, 88
    %v1036 = vpop.permute.xlu0 %1035
    %1037 = vrot.lane.b32.xlu0 %v370, 88
    %v1038 = vpop.permute.xlu0 %1037
    %v1039 = vsel %vm385, %v1024, 0
    %v1041 = vsel %vm385, %v1026, 0
    %v1043 = vsel %vm385, %v1028, 0
    %v1045 = vsel %vm385, %v1030, 0
    %v1047 = vsel %vm385, %v1032, 0
    %v1049 = vsel %vm385, %v1034, 0
    %v1051 = vsel %vm385, %v1036, 0
    %v1053 = vsel %vm385, %v1038, 0
    %1055 = vmatprep.subr.mxu0 0.0
    %1056 = vmatpush1.xpose.msra.mxu0 0.0
    %1057 = vmatprep.subr.mxu0 0.0
    %1058 = vmatpush1.xpose.msra.mxu0 0.0
    %1059 = vmatprep.subr.mxu0 0.0
    %1060 = vmatpush1.xpose.msra.mxu0 0.0
    %1061 = vmatprep.subr.mxu0 0.0
    %1062 = vmatpush1.xpose.msra.mxu0 0.0
    %1063 = vmatprep.subr.mxu0 0.0
    %1064 = vmatpush1.xpose.msra.mxu0 0.0
    %1065 = vmatprep.subr.mxu0 0.0
    %1066 = vmatpush1.xpose.msra.mxu0 0.0
    %1067 = vmatprep.subr.mxu0 0.0
    %1068 = vmatpush1.xpose.msra.mxu0 0.0
    %1069 = vmatprep.subr.mxu0 0.0
    %1070 = vmatpush1.xpose.msra.mxu0 0.0
    %1071 = vmatprep.subr.mxu0 0.0
    %1072 = vmatpush1.xpose.msra.mxu0 0.0
    %1073 = vmatprep.subr.mxu0 0.0
    %1074 = vmatpush1.xpose.msra.mxu0 0.0
    %1075 = vmatprep.subr.mxu0 0.0
    %1076 = vmatpush1.xpose.msra.mxu0 0.0
    %1077 = vmatprep.subr.mxu0 0.0
    %1078 = vmatpush1.xpose.msra.mxu0 0.0
    %1079 = vmatprep.subr.mxu0 0.0
    %1080 = vmatpush1.xpose.msra.mxu0 %v1053
    %1081 = vmatprep.subr.mxu0 0.0
    %1082 = vmatpush1.xpose.msra.mxu0 %v1051
    %1083 = vmatprep.subr.mxu0 0.0
    %1084 = vmatpush1.xpose.msra.mxu0 %v1049
    %1085 = vmatprep.subr.mxu0 0.0
    %1086 = vmatpush1.xpose.msra.mxu0 %v1047
    %1087 = vmatprep.subr.mxu0 0.0
    %1088 = vmatpush2.xpose.msra.mxu0 0.0
    %1089 = vmatprep.subr.mxu0 0.0
    %1090 = vmatpush2.xpose.msra.mxu0 0.0
    %1091 = vmatprep.subr.mxu0 0.0
    %1092 = vmatpush2.xpose.msra.mxu0 0.0
    %1093 = vmatprep.subr.mxu0 0.0
    %1094 = vmatpush2.xpose.msra.mxu0 0.0
    %1095 = vmatprep.subr.mxu0 0.0
    %1096 = vmatpush2.xpose.msra.mxu0 0.0
    %1097 = vmatprep.subr.mxu0 0.0
    %1098 = vmatpush2.xpose.msra.mxu0 0.0
    %1099 = vmatprep.subr.mxu0 0.0
    %1100 = vmatpush2.xpose.msra.mxu0 0.0
    %1101 = vmatprep.subr.mxu0 0.0
    %1102 = vmatpush2.xpose.msra.mxu0 0.0
    %1103 = vmatprep.subr.mxu0 0.0
    %1104 = vmatpush2.xpose.msra.mxu0 0.0
    %1105 = vmatprep.subr.mxu0 0.0
    %1106 = vmatpush2.xpose.msra.mxu0 0.0
    %1107 = vmatprep.subr.mxu0 0.0
    %1108 = vmatpush2.xpose.msra.mxu0 0.0
    %1109 = vmatprep.subr.mxu0 0.0
    %1110 = vmatpush2.xpose.msra.mxu0 0.0
    %1111 = vmatprep.subr.mxu0 0.0
    %1112 = vmatpush2.xpose.msra.mxu0 0.0
    %1113 = vmatprep.subr.mxu0 0.0
    %1114 = vmatpush2.xpose.msra.mxu0 0.0
    %1115 = vmatprep.subr.mxu0 0.0
    %1116 = vmatpush2.xpose.msra.mxu0 0.0
    %1117 = vmatprep.subr.mxu0 0.0
    %1118 = vmatpush2.xpose.msra.mxu0 0.0
    %1119 = vmatprep.mubr.f32.mxu0 0.0
    %1120 = vmatmul.mubr.f32.gmra.mxu0 %v1039
    %v1121 = vpop.f32.mrf.mxu0
    %v1122 = vadd.f32 0.0, %v1121
    %v1123 = vpop.f32.mrf.mxu0
    %1124 = vmatprep.mubr.f32.mxu0 0.0
    %1125 = vmatmul.mubr.f32.gmra.mxu0 %v1041
    %v1126 = vpop.f32.mrf.mxu0
    %v1127 = vadd.f32 0.0, %v1126
    %v1128 = vpop.f32.mrf.mxu0
    %1129 = vmatprep.mubr.f32.mxu0 0.0
    %1130 = vmatmul.mubr.f32.gmra.mxu0 %v1043
    %v1131 = vpop.f32.mrf.mxu0
    %v1132 = vadd.f32 0.0, %v1131
    %v1133 = vpop.f32.mrf.mxu0
    %1134 = vmatprep.mubr.f32.mxu0 0.0
    %1135 = vmatmul.mubr.f32.gmra.mxu0 %v1045
    %v1136 = vpop.f32.mrf.mxu0
    %v1137 = vadd.f32 0.0, %v1136
    %v1138 = vpop.f32.mrf.mxu0
    %1139 = vdwg.mxu0
    %v1140 = vsel %vm106, %v1005, -inf
    %1141 = vmax.xlane.f32.xlu0 %v1140
    %v1142 = vpop.xlane.xlu0 %1141
    %v1143 = vsel %vm106, %v1010, -inf
    %1144 = vmax.xlane.f32.xlu0 %v1143
    %v1145 = vpop.xlane.xlu0 %1144
    %v1146 = vsel %vm106, %v1015, -inf
    %1147 = vmax.xlane.f32.xlu0 %v1146
    %v1148 = vpop.xlane.xlu0 %1147
    %v1149 = vsel %vm106, %v1020, -inf
    %1150 = vmax.xlane.f32.xlu0 %v1149
    %v1151 = vpop.xlane.xlu0 %1150
    %v1152 = vsel %vm106, %v1122, -inf
    %1153 = vmax.xlane.f32.xlu0 %v1152
    %v1154 = vpop.xlane.xlu0 %1153
    %v1155 = vsel %vm106, %v1127, -inf
    %1156 = vmax.xlane.f32.xlu0 %v1155
    %v1157 = vpop.xlane.xlu0 %1156
    %v1158 = vsel %vm106, %v1132, -inf
    %1159 = vmax.xlane.f32.xlu0 %v1158
    %v1160 = vpop.xlane.xlu0 %1159
    %v1161 = vsel %vm106, %v1137, -inf
    %1162 = vmax.xlane.f32.xlu0 %v1161
    %v1163 = vpop.xlane.xlu0 %1162
    %v1164 = vsub.f32 %v1005, %v1142
    %v1165 = vsub.f32 %v1010, %v1145
    %v1166 = vsub.f32 %v1015, %v1148
    %v1167 = vsub.f32 %v1020, %v1151
    %v1168 = vsub.f32 %v1122, %v1154
    %v1169 = vsub.f32 %v1127, %v1157
    %v1170 = vsub.f32 %v1132, %v1160
    %v1171 = vsub.f32 %v1137, %v1163
    %v1172 = vmul.f32 %v1164, 1.442695
    %v1173 = vpow.pop %v1172
    %v1174 = vmul.f32 %v1165, 1.442695
    %v1175 = vpow.pop %v1174
    %v1176 = vmul.f32 %v1166, 1.442695
    %v1177 = vpow.pop %v1176
    %v1178 = vmul.f32 %v1167, 1.442695
    %v1179 = vpow.pop %v1178
    %v1180 = vmul.f32 %v1168, 1.442695
    %v1181 = vpow.pop %v1180
    %v1182 = vmul.f32 %v1169, 1.442695
    %v1183 = vpow.pop %v1182
    %v1184 = vmul.f32 %v1170, 1.442695
    %v1185 = vpow.pop %v1184
    %v1186 = vmul.f32 %v1171, 1.442695
    %v1187 = vpow.pop %v1186
    %v1188 = vsel %vm106, %v1173, 0.0
    %1189 = vadd.xlane.f32.xlu0 %v1188
    %v1190 = vpop.xlane.xlu0 %1189
    %v1191 = vsel %vm106, %v1175, 0.0
    %1192 = vadd.xlane.f32.xlu0 %v1191
    %v1193 = vpop.xlane.xlu0 %1192
    %v1194 = vsel %vm106, %v1177, 0.0
    %1195 = vadd.xlane.f32.xlu0 %v1194
    %v1196 = vpop.xlane.xlu0 %1195
    %v1197 = vsel %vm106, %v1179, 0.0
    %1198 = vadd.xlane.f32.xlu0 %v1197
    %v1199 = vpop.xlane.xlu0 %1198
    %v1200 = vsel %vm106, %v1181, 0.0
    %1201 = vadd.xlane.f32.xlu0 %v1200
    %v1202 = vpop.xlane.xlu0 %1201
    %v1203 = vsel %vm106, %v1183, 0.0
    %1204 = vadd.xlane.f32.xlu0 %v1203
    %v1205 = vpop.xlane.xlu0 %1204
    %v1206 = vsel %vm106, %v1185, 0.0
    %1207 = vadd.xlane.f32.xlu0 %v1206
    %v1208 = vpop.xlane.xlu0 %1207
    %v1209 = vsel %vm106, %v1187, 0.0
    %1210 = vadd.xlane.f32.xlu0 %v1209
    %v1211 = vpop.xlane.xlu0 %1210
    %v1212 = vrcp.pop %v1190
    %v1213 = vrcp.pop %v1193
    %v1214 = vrcp.pop %v1196
    %v1215 = vrcp.pop %v1199
    %v1216 = vrcp.pop %v1202
    %v1217 = vrcp.pop %v1205
    %v1218 = vrcp.pop %v1208
    %v1219 = vrcp.pop %v1211
    %v1220 = vmul.f32 %v1173, %v1212
    %v1221 = vmul.f32 %v1175, %v1213
    %v1222 = vmul.f32 %v1177, %v1214
    %v1223 = vmul.f32 %v1179, %v1215
    %v1224 = vmul.f32 %v1181, %v1216
    %v1225 = vmul.f32 %v1183, %v1217
    %v1226 = vmul.f32 %v1185, %v1218
    %v1227 = vmul.f32 %v1187, %v1219
    %1228 = vrot.lane.b32.xlu0 %v335, 56
    %v1229 = vpop.permute.xlu0 %1228
    %1230 = vrot.lane.b32.xlu0 %v340, 56
    %v1231 = vpop.permute.xlu0 %1230
    %1232 = vrot.lane.b32.xlu0 %v345, 56
    %v1233 = vpop.permute.xlu0 %1232
    %1234 = vrot.lane.b32.xlu0 %v350, 56
    %v1235 = vpop.permute.xlu0 %1234
    %v1241 = vsel %vm106, %v1220, 0
    %v1244 = vsel %vm106, %v1221, 0
    %v1247 = vsel %vm106, %v1222, 0
    %v1250 = vsel %vm106, %v1223, 0
    %1252 = vmatprep.subr.mxu0 0.0
    %1253 = vmatpush1.msra.mxu0 0.0
    %1254 = vmatprep.subr.mxu0 0.0
    %1255 = vmatpush1.msra.mxu0 0.0
    %1256 = vmatprep.subr.mxu0 0.0
    %1257 = vmatpush1.msra.mxu0 0.0
    %1258 = vmatprep.subr.mxu0 0.0
    %1259 = vmatpush1.msra.mxu0 0.0
    %1260 = vmatprep.subr.mxu0 0.0
    %1261 = vmatpush1.msra.mxu0 0.0
    %1262 = vmatprep.subr.mxu0 0.0
    %1263 = vmatpush1.msra.mxu0 0.0
    %1264 = vmatprep.subr.mxu0 0.0
    %1265 = vmatpush1.msra.mxu0 0.0
    %1266 = vmatprep.subr.mxu0 0.0
    %1267 = vmatpush1.msra.mxu0 0.0
    %1268 = vmatprep.subr.mxu0 0.0
    %1269 = vmatpush1.msra.mxu0 0.0
    %1270 = vmatprep.subr.mxu0 0.0
    %1271 = vmatpush1.msra.mxu0 0.0
    %1272 = vmatprep.subr.mxu0 0.0
    %1273 = vmatpush1.msra.mxu0 0.0
    %1274 = vmatprep.subr.mxu0 0.0
    %1275 = vmatpush1.msra.mxu0 0.0
    %1276 = vmatprep.subr.mxu0 0.0
    %1277 = vmatpush1.msra.mxu0 %v1235
    %1278 = vmatprep.subr.mxu0 0.0
    %1279 = vmatpush1.msra.mxu0 %v1233
    %1280 = vmatprep.subr.mxu0 0.0
    %1281 = vmatpush1.msra.mxu0 %v1231
    %1282 = vmatprep.subr.mxu0 0.0
    %1283 = vmatpush1.msra.mxu0 %v1229
    %1284 = vmatprep.subr.mxu0 0.0
    %1285 = vmatpush2.msra.mxu0 0.0
    %1286 = vmatprep.subr.mxu0 0.0
    %1287 = vmatpush2.msra.mxu0 0.0
    %1288 = vmatprep.subr.mxu0 0.0
    %1289 = vmatpush2.msra.mxu0 0.0
    %1290 = vmatprep.subr.mxu0 0.0
    %1291 = vmatpush2.msra.mxu0 0.0
    %1292 = vmatprep.subr.mxu0 0.0
    %1293 = vmatpush2.msra.mxu0 0.0
    %1294 = vmatprep.subr.mxu0 0.0
    %1295 = vmatpush2.msra.mxu0 0.0
    %1296 = vmatprep.subr.mxu0 0.0
    %1297 = vmatpush2.msra.mxu0 0.0
    %1298 = vmatprep.subr.mxu0 0.0
    %1299 = vmatpush2.msra.mxu0 0.0
    %1300 = vmatprep.subr.mxu0 0.0
    %1301 = vmatpush2.msra.mxu0 0.0
    %1302 = vmatprep.subr.mxu0 0.0
    %1303 = vmatpush2.msra.mxu0 0.0
    %1304 = vmatprep.subr.mxu0 0.0
    %1305 = vmatpush2.msra.mxu0 0.0
    %1306 = vmatprep.subr.mxu0 0.0
    %1307 = vmatpush2.msra.mxu0 0.0
    %1308 = vmatprep.subr.mxu0 0.0
    %1309 = vmatpush2.msra.mxu0 0.0
    %1310 = vmatprep.subr.mxu0 0.0
    %1311 = vmatpush2.msra.mxu0 0.0
    %1312 = vmatprep.subr.mxu0 0.0
    %1313 = vmatpush2.msra.mxu0 0.0
    %1314 = vmatprep.subr.mxu0 0.0
    %1315 = vmatpush2.msra.mxu0 0.0
    %1316 = vmatprep.mubr.f32.mxu0 0.0
    %1317 = vmatmul.mubr.f32.gmra.mxu0 %v1241
    %v1318 = vpop.f32.mrf.mxu0
    %v1319 = vadd.f32 0.0, %v1318
    %v1320 = vpop.f32.mrf.mxu0
    %1321 = vmatprep.mubr.f32.mxu0 0.0
    %1322 = vmatmul.mubr.f32.gmra.mxu0 %v1244
    %v1323 = vpop.f32.mrf.mxu0
    %v1324 = vadd.f32 0.0, %v1323
    %v1325 = vpop.f32.mrf.mxu0
    %1326 = vmatprep.mubr.f32.mxu0 0.0
    %1327 = vmatmul.mubr.f32.gmra.mxu0 %v1247
    %v1328 = vpop.f32.mrf.mxu0
    %v1329 = vadd.f32 0.0, %v1328
    %v1330 = vpop.f32.mrf.mxu0
    %1331 = vmatprep.mubr.f32.mxu0 0.0
    %1332 = vmatmul.mubr.f32.gmra.mxu0 %v1250
    %v1333 = vpop.f32.mrf.mxu0
    %v1334 = vadd.f32 0.0, %v1333
    %v1335 = vpop.f32.mrf.mxu0
    %1336 = vdwg.mxu0
    %1337 = vrot.lane.b32.xlu0 %v355, 56
    %v1338 = vpop.permute.xlu0 %1337
    %1339 = vrot.lane.b32.xlu0 %v360, 56
    %v1340 = vpop.permute.xlu0 %1339
    %1341 = vrot.lane.b32.xlu0 %v365, 56
    %v1342 = vpop.permute.xlu0 %1341
    %1343 = vrot.lane.b32.xlu0 %v370, 56
    %v1344 = vpop.permute.xlu0 %1343
    %v1350 = vsel %vm106, %v1224, 0
    %v1353 = vsel %vm106, %v1225, 0
    %v1356 = vsel %vm106, %v1226, 0
    %v1359 = vsel %vm106, %v1227, 0
    %1361 = vmatprep.subr.mxu0 0.0
    %1362 = vmatpush1.msra.mxu0 0.0
    %1363 = vmatprep.subr.mxu0 0.0
    %1364 = vmatpush1.msra.mxu0 0.0
    %1365 = vmatprep.subr.mxu0 0.0
    %1366 = vmatpush1.msra.mxu0 0.0
    %1367 = vmatprep.subr.mxu0 0.0
    %1368 = vmatpush1.msra.mxu0 0.0
    %1369 = vmatprep.subr.mxu0 0.0
    %1370 = vmatpush1.msra.mxu0 0.0
    %1371 = vmatprep.subr.mxu0 0.0
    %1372 = vmatpush1.msra.mxu0 0.0
    %1373 = vmatprep.subr.mxu0 0.0
    %1374 = vmatpush1.msra.mxu0 0.0
    %1375 = vmatprep.subr.mxu0 0.0
    %1376 = vmatpush1.msra.mxu0 0.0
    %1377 = vmatprep.subr.mxu0 0.0
    %1378 = vmatpush1.msra.mxu0 0.0
    %1379 = vmatprep.subr.mxu0 0.0
    %1380 = vmatpush1.msra.mxu0 0.0
    %1381 = vmatprep.subr.mxu0 0.0
    %1382 = vmatpush1.msra.mxu0 0.0
    %1383 = vmatprep.subr.mxu0 0.0
    %1384 = vmatpush1.msra.mxu0 0.0
    %1385 = vmatprep.subr.mxu0 0.0
    %1386 = vmatpush1.msra.mxu0 %v1344
    %1387 = vmatprep.subr.mxu0 0.0
    %1388 = vmatpush1.msra.mxu0 %v1342
    %1389 = vmatprep.subr.mxu0 0.0
    %1390 = vmatpush1.msra.mxu0 %v1340
    %1391 = vmatprep.subr.mxu0 0.0
    %1392 = vmatpush1.msra.mxu0 %v1338
    %1393 = vmatprep.subr.mxu0 0.0
    %1394 = vmatpush2.msra.mxu0 0.0
    %1395 = vmatprep.subr.mxu0 0.0
    %1396 = vmatpush2.msra.mxu0 0.0
    %1397 = vmatprep.subr.mxu0 0.0
    %1398 = vmatpush2.msra.mxu0 0.0
    %1399 = vmatprep.subr.mxu0 0.0
    %1400 = vmatpush2.msra.mxu0 0.0
    %1401 = vmatprep.subr.mxu0 0.0
    %1402 = vmatpush2.msra.mxu0 0.0
    %1403 = vmatprep.subr.mxu0 0.0
    %1404 = vmatpush2.msra.mxu0 0.0
    %1405 = vmatprep.subr.mxu0 0.0
    %1406 = vmatpush2.msra.mxu0 0.0
    %1407 = vmatprep.subr.mxu0 0.0
    %1408 = vmatpush2.msra.mxu0 0.0
    %1409 = vmatprep.subr.mxu0 0.0
    %1410 = vmatpush2.msra.mxu0 0.0
    %1411 = vmatprep.subr.mxu0 0.0
    %1412 = vmatpush2.msra.mxu0 0.0
    %1413 = vmatprep.subr.mxu0 0.0
    %1414 = vmatpush2.msra.mxu0 0.0
    %1415 = vmatprep.subr.mxu0 0.0
    %1416 = vmatpush2.msra.mxu0 0.0
    %1417 = vmatprep.subr.mxu0 0.0
    %1418 = vmatpush2.msra.mxu0 0.0
    %1419 = vmatprep.subr.mxu0 0.0
    %1420 = vmatpush2.msra.mxu0 0.0
    %1421 = vmatprep.subr.mxu0 0.0
    %1422 = vmatpush2.msra.mxu0 0.0
    %1423 = vmatprep.subr.mxu0 0.0
    %1424 = vmatpush2.msra.mxu0 0.0
    %1425 = vmatprep.mubr.f32.mxu0 0.0
    %1426 = vmatmul.mubr.f32.gmra.mxu0 %v1350
    %v1427 = vpop.f32.mrf.mxu0
    %v1428 = vadd.f32 0.0, %v1427
    %v1429 = vpop.f32.mrf.mxu0
    %1430 = vmatprep.mubr.f32.mxu0 0.0
    %1431 = vmatmul.mubr.f32.gmra.mxu0 %v1353
    %v1432 = vpop.f32.mrf.mxu0
    %v1433 = vadd.f32 0.0, %v1432
    %v1434 = vpop.f32.mrf.mxu0
    %1435 = vmatprep.mubr.f32.mxu0 0.0
    %1436 = vmatmul.mubr.f32.gmra.mxu0 %v1356
    %v1437 = vpop.f32.mrf.mxu0
    %v1438 = vadd.f32 0.0, %v1437
    %v1439 = vpop.f32.mrf.mxu0
    %1440 = vmatprep.mubr.f32.mxu0 0.0
    %1441 = vmatmul.mubr.f32.gmra.mxu0 %v1359
    %v1442 = vpop.f32.mrf.mxu0
    %v1443 = vadd.f32 0.0, %v1442
    %v1444 = vpop.f32.mrf.mxu0
    %1445 = vdwg.mxu0
    %1446 = vrot.lane.b32.xlu0 %v335, 112
    %v1447 = vpop.permute.xlu0 %1446
    %1448 = vrot.lane.b32.xlu0 %v340, 112
    %v1449 = vpop.permute.xlu0 %1448
    %1450 = vrot.lane.b32.xlu0 %v345, 112
    %v1451 = vpop.permute.xlu0 %1450
    %1452 = vrot.lane.b32.xlu0 %v350, 112
    %v1453 = vpop.permute.xlu0 %1452
    %1454 = vrot.lane.b32.xlu0 %v335, 80
    %v1455 = vpop.permute.xlu0 %1454
    %1456 = vrot.lane.b32.xlu0 %v340, 80
    %v1457 = vpop.permute.xlu0 %1456
    %1458 = vrot.lane.b32.xlu0 %v345, 80
    %v1459 = vpop.permute.xlu0 %1458
    %1460 = vrot.lane.b32.xlu0 %v350, 80
    %v1461 = vpop.permute.xlu0 %1460
    %v1462 = vsel %vm385, %v1447, 0
    %v1464 = vsel %vm385, %v1449, 0
    %v1466 = vsel %vm385, %v1451, 0
    %v1468 = vsel %vm385, %v1453, 0
    %v1470 = vsel %vm385, %v1455, 0
    %v1472 = vsel %vm385, %v1457, 0
    %v1474 = vsel %vm385, %v1459, 0
    %v1476 = vsel %vm385, %v1461, 0
    %1478 = vmatprep.subr.mxu0 0.0
    %1479 = vmatpush1.xpose.msra.mxu0 0.0
    %1480 = vmatprep.subr.mxu0 0.0
    %1481 = vmatpush1.xpose.msra.mxu0 0.0
    %1482 = vmatprep.subr.mxu0 0.0
    %1483 = vmatpush1.xpose.msra.mxu0 0.0
    %1484 = vmatprep.subr.mxu0 0.0
    %1485 = vmatpush1.xpose.msra.mxu0 0.0
    %1486 = vmatprep.subr.mxu0 0.0
    %1487 = vmatpush1.xpose.msra.mxu0 0.0
    %1488 = vmatprep.subr.mxu0 0.0
    %1489 = vmatpush1.xpose.msra.mxu0 0.0
    %1490 = vmatprep.subr.mxu0 0.0
    %1491 = vmatpush1.xpose.msra.mxu0 0.0
    %1492 = vmatprep.subr.mxu0 0.0
    %1493 = vmatpush1.xpose.msra.mxu0 0.0
    %1494 = vmatprep.subr.mxu0 0.0
    %1495 = vmatpush1.xpose.msra.mxu0 0.0
    %1496 = vmatprep.subr.mxu0 0.0
    %1497 = vmatpush1.xpose.msra.mxu0 0.0
    %1498 = vmatprep.subr.mxu0 0.0
    %1499 = vmatpush1.xpose.msra.mxu0 0.0
    %1500 = vmatprep.subr.mxu0 0.0
    %1501 = vmatpush1.xpose.msra.mxu0 0.0
    %1502 = vmatprep.subr.mxu0 0.0
    %1503 = vmatpush1.xpose.msra.mxu0 %v1476
    %1504 = vmatprep.subr.mxu0 0.0
    %1505 = vmatpush1.xpose.msra.mxu0 %v1474
    %1506 = vmatprep.subr.mxu0 0.0
    %1507 = vmatpush1.xpose.msra.mxu0 %v1472
    %1508 = vmatprep.subr.mxu0 0.0
    %1509 = vmatpush1.xpose.msra.mxu0 %v1470
    %1510 = vmatprep.subr.mxu0 0.0
    %1511 = vmatpush2.xpose.msra.mxu0 0.0
    %1512 = vmatprep.subr.mxu0 0.0
    %1513 = vmatpush2.xpose.msra.mxu0 0.0
    %1514 = vmatprep.subr.mxu0 0.0
    %1515 = vmatpush2.xpose.msra.mxu0 0.0
    %1516 = vmatprep.subr.mxu0 0.0
    %1517 = vmatpush2.xpose.msra.mxu0 0.0
    %1518 = vmatprep.subr.mxu0 0.0
    %1519 = vmatpush2.xpose.msra.mxu0 0.0
    %1520 = vmatprep.subr.mxu0 0.0
    %1521 = vmatpush2.xpose.msra.mxu0 0.0
    %1522 = vmatprep.subr.mxu0 0.0
    %1523 = vmatpush2.xpose.msra.mxu0 0.0
    %1524 = vmatprep.subr.mxu0 0.0
    %1525 = vmatpush2.xpose.msra.mxu0 0.0
    %1526 = vmatprep.subr.mxu0 0.0
    %1527 = vmatpush2.xpose.msra.mxu0 0.0
    %1528 = vmatprep.subr.mxu0 0.0
    %1529 = vmatpush2.xpose.msra.mxu0 0.0
    %1530 = vmatprep.subr.mxu0 0.0
    %1531 = vmatpush2.xpose.msra.mxu0 0.0
    %1532 = vmatprep.subr.mxu0 0.0
    %1533 = vmatpush2.xpose.msra.mxu0 0.0
    %1534 = vmatprep.subr.mxu0 0.0
    %1535 = vmatpush2.xpose.msra.mxu0 0.0
    %1536 = vmatprep.subr.mxu0 0.0
    %1537 = vmatpush2.xpose.msra.mxu0 0.0
    %1538 = vmatprep.subr.mxu0 0.0
    %1539 = vmatpush2.xpose.msra.mxu0 0.0
    %1540 = vmatprep.subr.mxu0 0.0
    %1541 = vmatpush2.xpose.msra.mxu0 0.0
    %1542 = vmatprep.mubr.f32.mxu0 0.0
    %1543 = vmatmul.mubr.f32.gmra.mxu0 %v1462
    %v1544 = vpop.f32.mrf.mxu0
    %v1545 = vadd.f32 0.0, %v1544
    %v1546 = vpop.f32.mrf.mxu0
    %1547 = vmatprep.mubr.f32.mxu0 0.0
    %1548 = vmatmul.mubr.f32.gmra.mxu0 %v1464
    %v1549 = vpop.f32.mrf.mxu0
    %v1550 = vadd.f32 0.0, %v1549
    %v1551 = vpop.f32.mrf.mxu0
    %1552 = vmatprep.mubr.f32.mxu0 0.0
    %1553 = vmatmul.mubr.f32.gmra.mxu0 %v1466
    %v1554 = vpop.f32.mrf.mxu0
    %v1555 = vadd.f32 0.0, %v1554
    %v1556 = vpop.f32.mrf.mxu0
    %1557 = vmatprep.mubr.f32.mxu0 0.0
    %1558 = vmatmul.mubr.f32.gmra.mxu0 %v1468
    %v1559 = vpop.f32.mrf.mxu0
    %v1560 = vadd.f32 0.0, %v1559
    %v1561 = vpop.f32.mrf.mxu0
    %1562 = vdwg.mxu0
    %1563 = vrot.lane.b32.xlu0 %v355, 112
    %v1564 = vpop.permute.xlu0 %1563
    %1565 = vrot.lane.b32.xlu0 %v360, 112
    %v1566 = vpop.permute.xlu0 %1565
    %1567 = vrot.lane.b32.xlu0 %v365, 112
    %v1568 = vpop.permute.xlu0 %1567
    %1569 = vrot.lane.b32.xlu0 %v370, 112
    %v1570 = vpop.permute.xlu0 %1569
    %1571 = vrot.lane.b32.xlu0 %v355, 80
    %v1572 = vpop.permute.xlu0 %1571
    %1573 = vrot.lane.b32.xlu0 %v360, 80
    %v1574 = vpop.permute.xlu0 %1573
    %1575 = vrot.lane.b32.xlu0 %v365, 80
    %v1576 = vpop.permute.xlu0 %1575
    %1577 = vrot.lane.b32.xlu0 %v370, 80
    %v1578 = vpop.permute.xlu0 %1577
    %v1579 = vsel %vm385, %v1564, 0
    %v1581 = vsel %vm385, %v1566, 0
    %v1583 = vsel %vm385, %v1568, 0
    %v1585 = vsel %vm385, %v1570, 0
    %v1587 = vsel %vm385, %v1572, 0
    %v1589 = vsel %vm385, %v1574, 0
    %v1591 = vsel %vm385, %v1576, 0
    %v1593 = vsel %vm385, %v1578, 0
    %1595 = vmatprep.subr.mxu0 0.0
    %1596 = vmatpush1.xpose.msra.mxu0 0.0
    %1597 = vmatprep.subr.mxu0 0.0
    %1598 = vmatpush1.xpose.msra.mxu0 0.0
    %1599 = vmatprep.subr.mxu0 0.0
    %1600 = vmatpush1.xpose.msra.mxu0 0.0
    %1601 = vmatprep.subr.mxu0 0.0
    %1602 = vmatpush1.xpose.msra.mxu0 0.0
    %1603 = vmatprep.subr.mxu0 0.0
    %1604 = vmatpush1.xpose.msra.mxu0 0.0
    %1605 = vmatprep.subr.mxu0 0.0
    %1606 = vmatpush1.xpose.msra.mxu0 0.0
    %1607 = vmatprep.subr.mxu0 0.0
    %1608 = vmatpush1.xpose.msra.mxu0 0.0
    %1609 = vmatprep.subr.mxu0 0.0
    %1610 = vmatpush1.xpose.msra.mxu0 0.0
    %1611 = vmatprep.subr.mxu0 0.0
    %1612 = vmatpush1.xpose.msra.mxu0 0.0
    %1613 = vmatprep.subr.mxu0 0.0
    %1614 = vmatpush1.xpose.msra.mxu0 0.0
    %1615 = vmatprep.subr.mxu0 0.0
    %1616 = vmatpush1.xpose.msra.mxu0 0.0
    %1617 = vmatprep.subr.mxu0 0.0
    %1618 = vmatpush1.xpose.msra.mxu0 0.0
    %1619 = vmatprep.subr.mxu0 0.0
    %1620 = vmatpush1.xpose.msra.mxu0 %v1593
    %1621 = vmatprep.subr.mxu0 0.0
    %1622 = vmatpush1.xpose.msra.mxu0 %v1591
    %1623 = vmatprep.subr.mxu0 0.0
    %1624 = vmatpush1.xpose.msra.mxu0 %v1589
    %1625 = vmatprep.subr.mxu0 0.0
    %1626 = vmatpush1.xpose.msra.mxu0 %v1587
    %1627 = vmatprep.subr.mxu0 0.0
    %1628 = vmatpush2.xpose.msra.mxu0 0.0
    %1629 = vmatprep.subr.mxu0 0.0
    %1630 = vmatpush2.xpose.msra.mxu0 0.0
    %1631 = vmatprep.subr.mxu0 0.0
    %1632 = vmatpush2.xpose.msra.mxu0 0.0
    %1633 = vmatprep.subr.mxu0 0.0
    %1634 = vmatpush2.xpose.msra.mxu0 0.0
    %1635 = vmatprep.subr.mxu0 0.0
    %1636 = vmatpush2.xpose.msra.mxu0 0.0
    %1637 = vmatprep.subr.mxu0 0.0
    %1638 = vmatpush2.xpose.msra.mxu0 0.0
    %1639 = vmatprep.subr.mxu0 0.0
    %1640 = vmatpush2.xpose.msra.mxu0 0.0
    %1641 = vmatprep.subr.mxu0 0.0
    %1642 = vmatpush2.xpose.msra.mxu0 0.0
    %1643 = vmatprep.subr.mxu0 0.0
    %1644 = vmatpush2.xpose.msra.mxu0 0.0
    %1645 = vmatprep.subr.mxu0 0.0
    %1646 = vmatpush2.xpose.msra.mxu0 0.0
    %1647 = vmatprep.subr.mxu0 0.0
    %1648 = vmatpush2.xpose.msra.mxu0 0.0
    %1649 = vmatprep.subr.mxu0 0.0
    %1650 = vmatpush2.xpose.msra.mxu0 0.0
    %1651 = vmatprep.subr.mxu0 0.0
    %1652 = vmatpush2.xpose.msra.mxu0 0.0
    %1653 = vmatprep.subr.mxu0 0.0
    %1654 = vmatpush2.xpose.msra.mxu0 0.0
    %1655 = vmatprep.subr.mxu0 0.0
    %1656 = vmatpush2.xpose.msra.mxu0 0.0
    %1657 = vmatprep.subr.mxu0 0.0
    %1658 = vmatpush2.xpose.msra.mxu0 0.0
    %1659 = vmatprep.mubr.f32.mxu0 0.0
    %1660 = vmatmul.mubr.f32.gmra.mxu0 %v1579
    %v1661 = vpop.f32.mrf.mxu0
    %v1662 = vadd.f32 0.0, %v1661
    %v1663 = vpop.f32.mrf.mxu0
    %1664 = vmatprep.mubr.f32.mxu0 0.0
    %1665 = vmatmul.mubr.f32.gmra.mxu0 %v1581
    %v1666 = vpop.f32.mrf.mxu0
    %v1667 = vadd.f32 0.0, %v1666
    %v1668 = vpop.f32.mrf.mxu0
    %1669 = vmatprep.mubr.f32.mxu0 0.0
    %1670 = vmatmul.mubr.f32.gmra.mxu0 %v1583
    %v1671 = vpop.f32.mrf.mxu0
    %v1672 = vadd.f32 0.0, %v1671
    %v1673 = vpop.f32.mrf.mxu0
    %1674 = vmatprep.mubr.f32.mxu0 0.0
    %1675 = vmatmul.mubr.f32.gmra.mxu0 %v1585
    %v1676 = vpop.f32.mrf.mxu0
    %v1677 = vadd.f32 0.0, %v1676
    %v1678 = vpop.f32.mrf.mxu0
    %1679 = vdwg.mxu0
    %v1680 = vsel %vm106, %v1545, -inf
    %1681 = vmax.xlane.f32.xlu0 %v1680
    %v1682 = vpop.xlane.xlu0 %1681
    %v1683 = vsel %vm106, %v1550, -inf
    %1684 = vmax.xlane.f32.xlu0 %v1683
    %v1685 = vpop.xlane.xlu0 %1684
    %v1686 = vsel %vm106, %v1555, -inf
    %1687 = vmax.xlane.f32.xlu0 %v1686
    %v1688 = vpop.xlane.xlu0 %1687
    %v1689 = vsel %vm106, %v1560, -inf
    %1690 = vmax.xlane.f32.xlu0 %v1689
    %v1691 = vpop.xlane.xlu0 %1690
    %v1692 = vsel %vm106, %v1662, -inf
    %1693 = vmax.xlane.f32.xlu0 %v1692
    %v1694 = vpop.xlane.xlu0 %1693
    %v1695 = vsel %vm106, %v1667, -inf
    %1696 = vmax.xlane.f32.xlu0 %v1695
    %v1697 = vpop.xlane.xlu0 %1696
    %v1698 = vsel %vm106, %v1672, -inf
    %1699 = vmax.xlane.f32.xlu0 %v1698
    %v1700 = vpop.xlane.xlu0 %1699
    %v1701 = vsel %vm106, %v1677, -inf
    %1702 = vmax.xlane.f32.xlu0 %v1701
    %v1703 = vpop.xlane.xlu0 %1702
    %v1704 = vsub.f32 %v1545, %v1682
    %v1705 = vsub.f32 %v1550, %v1685
    %v1706 = vsub.f32 %v1555, %v1688
    %v1707 = vsub.f32 %v1560, %v1691
    %v1708 = vsub.f32 %v1662, %v1694
    %v1709 = vsub.f32 %v1667, %v1697
    %v1710 = vsub.f32 %v1672, %v1700
    %v1711 = vsub.f32 %v1677, %v1703
    %v1712 = vmul.f32 %v1704, 1.442695
    %v1713 = vpow.pop %v1712
    %v1714 = vmul.f32 %v1705, 1.442695
    %v1715 = vpow.pop %v1714
    %v1716 = vmul.f32 %v1706, 1.442695
    %v1717 = vpow.pop %v1716
    %v1718 = vmul.f32 %v1707, 1.442695
    %v1719 = vpow.pop %v1718
    %v1720 = vmul.f32 %v1708, 1.442695
    %v1721 = vpow.pop %v1720
    %v1722 = vmul.f32 %v1709, 1.442695
    %v1723 = vpow.pop %v1722
    %v1724 = vmul.f32 %v1710, 1.442695
    %v1725 = vpow.pop %v1724
    %v1726 = vmul.f32 %v1711, 1.442695
    %v1727 = vpow.pop %v1726
    %v1728 = vsel %vm106, %v1713, 0.0
    %1729 = vadd.xlane.f32.xlu0 %v1728
    %v1730 = vpop.xlane.xlu0 %1729
    %v1731 = vsel %vm106, %v1715, 0.0
    %1732 = vadd.xlane.f32.xlu0 %v1731
    %v1733 = vpop.xlane.xlu0 %1732
    %v1734 = vsel %vm106, %v1717, 0.0
    %1735 = vadd.xlane.f32.xlu0 %v1734
    %v1736 = vpop.xlane.xlu0 %1735
    %v1737 = vsel %vm106, %v1719, 0.0
    %1738 = vadd.xlane.f32.xlu0 %v1737
    %v1739 = vpop.xlane.xlu0 %1738
    %v1740 = vsel %vm106, %v1721, 0.0
    %1741 = vadd.xlane.f32.xlu0 %v1740
    %v1742 = vpop.xlane.xlu0 %1741
    %v1743 = vsel %vm106, %v1723, 0.0
    %1744 = vadd.xlane.f32.xlu0 %v1743
    %v1745 = vpop.xlane.xlu0 %1744
    %v1746 = vsel %vm106, %v1725, 0.0
    %1747 = vadd.xlane.f32.xlu0 %v1746
    %v1748 = vpop.xlane.xlu0 %1747
    %v1749 = vsel %vm106, %v1727, 0.0
    %1750 = vadd.xlane.f32.xlu0 %v1749
    %v1751 = vpop.xlane.xlu0 %1750
    %v1752 = vrcp.pop %v1730
    %v1753 = vrcp.pop %v1733
    %v1754 = vrcp.pop %v1736
    %v1755 = vrcp.pop %v1739
    %v1756 = vrcp.pop %v1742
    %v1757 = vrcp.pop %v1745
    %v1758 = vrcp.pop %v1748
    %v1759 = vrcp.pop %v1751
    %v1760 = vmul.f32 %v1713, %v1752
    %v1761 = vmul.f32 %v1715, %v1753
    %v1762 = vmul.f32 %v1717, %v1754
    %v1763 = vmul.f32 %v1719, %v1755
    %v1764 = vmul.f32 %v1721, %v1756
    %v1765 = vmul.f32 %v1723, %v1757
    %v1766 = vmul.f32 %v1725, %v1758
    %v1767 = vmul.f32 %v1727, %v1759
    %1768 = vrot.lane.b32.xlu0 %v335, 48
    %v1769 = vpop.permute.xlu0 %1768
    %1770 = vrot.lane.b32.xlu0 %v340, 48
    %v1771 = vpop.permute.xlu0 %1770
    %1772 = vrot.lane.b32.xlu0 %v345, 48
    %v1773 = vpop.permute.xlu0 %1772
    %1774 = vrot.lane.b32.xlu0 %v350, 48
    %v1775 = vpop.permute.xlu0 %1774
    %v1781 = vsel %vm106, %v1760, 0
    %v1784 = vsel %vm106, %v1761, 0
    %v1787 = vsel %vm106, %v1762, 0
    %v1790 = vsel %vm106, %v1763, 0
    %1792 = vmatprep.subr.mxu0 0.0
    %1793 = vmatpush1.msra.mxu0 0.0
    %1794 = vmatprep.subr.mxu0 0.0
    %1795 = vmatpush1.msra.mxu0 0.0
    %1796 = vmatprep.subr.mxu0 0.0
    %1797 = vmatpush1.msra.mxu0 0.0
    %1798 = vmatprep.subr.mxu0 0.0
    %1799 = vmatpush1.msra.mxu0 0.0
    %1800 = vmatprep.subr.mxu0 0.0
    %1801 = vmatpush1.msra.mxu0 0.0
    %1802 = vmatprep.subr.mxu0 0.0
    %1803 = vmatpush1.msra.mxu0 0.0
    %1804 = vmatprep.subr.mxu0 0.0
    %1805 = vmatpush1.msra.mxu0 0.0
    %1806 = vmatprep.subr.mxu0 0.0
    %1807 = vmatpush1.msra.mxu0 0.0
    %1808 = vmatprep.subr.mxu0 0.0
    %1809 = vmatpush1.msra.mxu0 0.0
    %1810 = vmatprep.subr.mxu0 0.0
    %1811 = vmatpush1.msra.mxu0 0.0
    %1812 = vmatprep.subr.mxu0 0.0
    %1813 = vmatpush1.msra.mxu0 0.0
    %1814 = vmatprep.subr.mxu0 0.0
    %1815 = vmatpush1.msra.mxu0 0.0
    %1816 = vmatprep.subr.mxu0 0.0
    %1817 = vmatpush1.msra.mxu0 %v1775
    %1818 = vmatprep.subr.mxu0 0.0
    %1819 = vmatpush1.msra.mxu0 %v1773
    %1820 = vmatprep.subr.mxu0 0.0
    %1821 = vmatpush1.msra.mxu0 %v1771
    %1822 = vmatprep.subr.mxu0 0.0
    %1823 = vmatpush1.msra.mxu0 %v1769
    %1824 = vmatprep.subr.mxu0 0.0
    %1825 = vmatpush2.msra.mxu0 0.0
    %1826 = vmatprep.subr.mxu0 0.0
    %1827 = vmatpush2.msra.mxu0 0.0
    %1828 = vmatprep.subr.mxu0 0.0
    %1829 = vmatpush2.msra.mxu0 0.0
    %1830 = vmatprep.subr.mxu0 0.0
    %1831 = vmatpush2.msra.mxu0 0.0
    %1832 = vmatprep.subr.mxu0 0.0
    %1833 = vmatpush2.msra.mxu0 0.0
    %1834 = vmatprep.subr.mxu0 0.0
    %1835 = vmatpush2.msra.mxu0 0.0
    %1836 = vmatprep.subr.mxu0 0.0
    %1837 = vmatpush2.msra.mxu0 0.0
    %1838 = vmatprep.subr.mxu0 0.0
    %1839 = vmatpush2.msra.mxu0 0.0
    %1840 = vmatprep.subr.mxu0 0.0
    %1841 = vmatpush2.msra.mxu0 0.0
    %1842 = vmatprep.subr.mxu0 0.0
    %1843 = vmatpush2.msra.mxu0 0.0
    %1844 = vmatprep.subr.mxu0 0.0
    %1845 = vmatpush2.msra.mxu0 0.0
    %1846 = vmatprep.subr.mxu0 0.0
    %1847 = vmatpush2.msra.mxu0 0.0
    %1848 = vmatprep.subr.mxu0 0.0
    %1849 = vmatpush2.msra.mxu0 0.0
    %1850 = vmatprep.subr.mxu0 0.0
    %1851 = vmatpush2.msra.mxu0 0.0
    %1852 = vmatprep.subr.mxu0 0.0
    %1853 = vmatpush2.msra.mxu0 0.0
    %1854 = vmatprep.subr.mxu0 0.0
    %1855 = vmatpush2.msra.mxu0 0.0
    %1856 = vmatprep.mubr.f32.mxu0 0.0
    %1857 = vmatmul.mubr.f32.gmra.mxu0 %v1781
    %v1858 = vpop.f32.mrf.mxu0
    %v1859 = vadd.f32 0.0, %v1858
    %v1860 = vpop.f32.mrf.mxu0
    %1861 = vmatprep.mubr.f32.mxu0 0.0
    %1862 = vmatmul.mubr.f32.gmra.mxu0 %v1784
    %v1863 = vpop.f32.mrf.mxu0
    %v1864 = vadd.f32 0.0, %v1863
    %v1865 = vpop.f32.mrf.mxu0
    %1866 = vmatprep.mubr.f32.mxu0 0.0
    %1867 = vmatmul.mubr.f32.gmra.mxu0 %v1787
    %v1868 = vpop.f32.mrf.mxu0
    %v1869 = vadd.f32 0.0, %v1868
    %v1870 = vpop.f32.mrf.mxu0
    %1871 = vmatprep.mubr.f32.mxu0 0.0
    %1872 = vmatmul.mubr.f32.gmra.mxu0 %v1790
    %v1873 = vpop.f32.mrf.mxu0
    %v1874 = vadd.f32 0.0, %v1873
    %v1875 = vpop.f32.mrf.mxu0
    %1876 = vdwg.mxu0
    %1877 = vrot.lane.b32.xlu0 %v355, 48
    %v1878 = vpop.permute.xlu0 %1877
    %1879 = vrot.lane.b32.xlu0 %v360, 48
    %v1880 = vpop.permute.xlu0 %1879
    %1881 = vrot.lane.b32.xlu0 %v365, 48
    %v1882 = vpop.permute.xlu0 %1881
    %1883 = vrot.lane.b32.xlu0 %v370, 48
    %v1884 = vpop.permute.xlu0 %1883
    %v1890 = vsel %vm106, %v1764, 0
    %v1893 = vsel %vm106, %v1765, 0
    %v1896 = vsel %vm106, %v1766, 0
    %v1899 = vsel %vm106, %v1767, 0
    %1901 = vmatprep.subr.mxu0 0.0
    %1902 = vmatpush1.msra.mxu0 0.0
    %1903 = vmatprep.subr.mxu0 0.0
    %1904 = vmatpush1.msra.mxu0 0.0
    %1905 = vmatprep.subr.mxu0 0.0
    %1906 = vmatpush1.msra.mxu0 0.0
    %1907 = vmatprep.subr.mxu0 0.0
    %1908 = vmatpush1.msra.mxu0 0.0
    %1909 = vmatprep.subr.mxu0 0.0
    %1910 = vmatpush1.msra.mxu0 0.0
    %1911 = vmatprep.subr.mxu0 0.0
    %1912 = vmatpush1.msra.mxu0 0.0
    %1913 = vmatprep.subr.mxu0 0.0
    %1914 = vmatpush1.msra.mxu0 0.0
    %1915 = vmatprep.subr.mxu0 0.0
    %1916 = vmatpush1.msra.mxu0 0.0
    %1917 = vmatprep.subr.mxu0 0.0
    %1918 = vmatpush1.msra.mxu0 0.0
    %1919 = vmatprep.subr.mxu0 0.0
    %1920 = vmatpush1.msra.mxu0 0.0
    %1921 = vmatprep.subr.mxu0 0.0
    %1922 = vmatpush1.msra.mxu0 0.0
    %1923 = vmatprep.subr.mxu0 0.0
    %1924 = vmatpush1.msra.mxu0 0.0
    %1925 = vmatprep.subr.mxu0 0.0
    %1926 = vmatpush1.msra.mxu0 %v1884
    %1927 = vmatprep.subr.mxu0 0.0
    %1928 = vmatpush1.msra.mxu0 %v1882
    %1929 = vmatprep.subr.mxu0 0.0
    %1930 = vmatpush1.msra.mxu0 %v1880
    %1931 = vmatprep.subr.mxu0 0.0
    %1932 = vmatpush1.msra.mxu0 %v1878
    %1933 = vmatprep.subr.mxu0 0.0
    %1934 = vmatpush2.msra.mxu0 0.0
    %1935 = vmatprep.subr.mxu0 0.0
    %1936 = vmatpush2.msra.mxu0 0.0
    %1937 = vmatprep.subr.mxu0 0.0
    %1938 = vmatpush2.msra.mxu0 0.0
    %1939 = vmatprep.subr.mxu0 0.0
    %1940 = vmatpush2.msra.mxu0 0.0
    %1941 = vmatprep.subr.mxu0 0.0
    %1942 = vmatpush2.msra.mxu0 0.0
    %1943 = vmatprep.subr.mxu0 0.0
    %1944 = vmatpush2.msra.mxu0 0.0
    %1945 = vmatprep.subr.mxu0 0.0
    %1946 = vmatpush2.msra.mxu0 0.0
    %1947 = vmatprep.subr.mxu0 0.0
    %1948 = vmatpush2.msra.mxu0 0.0
    %1949 = vmatprep.subr.mxu0 0.0
    %1950 = vmatpush2.msra.mxu0 0.0
    %1951 = vmatprep.subr.mxu0 0.0
    %1952 = vmatpush2.msra.mxu0 0.0
    %1953 = vmatprep.subr.mxu0 0.0
    %1954 = vmatpush2.msra.mxu0 0.0
    %1955 = vmatprep.subr.mxu0 0.0
    %1956 = vmatpush2.msra.mxu0 0.0
    %1957 = vmatprep.subr.mxu0 0.0
    %1958 = vmatpush2.msra.mxu0 0.0
    %1959 = vmatprep.subr.mxu0 0.0
    %1960 = vmatpush2.msra.mxu0 0.0
    %1961 = vmatprep.subr.mxu0 0.0
    %1962 = vmatpush2.msra.mxu0 0.0
    %1963 = vmatprep.subr.mxu0 0.0
    %1964 = vmatpush2.msra.mxu0 0.0
    %1965 = vmatprep.mubr.f32.mxu0 0.0
    %1966 = vmatmul.mubr.f32.gmra.mxu0 %v1890
    %v1967 = vpop.f32.mrf.mxu0
    %v1968 = vadd.f32 0.0, %v1967
    %v1969 = vpop.f32.mrf.mxu0
    %1970 = vmatprep.mubr.f32.mxu0 0.0
    %1971 = vmatmul.mubr.f32.gmra.mxu0 %v1893
    %v1972 = vpop.f32.mrf.mxu0
    %v1973 = vadd.f32 0.0, %v1972
    %v1974 = vpop.f32.mrf.mxu0
    %1975 = vmatprep.mubr.f32.mxu0 0.0
    %1976 = vmatmul.mubr.f32.gmra.mxu0 %v1896
    %v1977 = vpop.f32.mrf.mxu0
    %v1978 = vadd.f32 0.0, %v1977
    %v1979 = vpop.f32.mrf.mxu0
    %1980 = vmatprep.mubr.f32.mxu0 0.0
    %1981 = vmatmul.mubr.f32.gmra.mxu0 %v1899
    %v1982 = vpop.f32.mrf.mxu0
    %v1983 = vadd.f32 0.0, %v1982
    %v1984 = vpop.f32.mrf.mxu0
    %1985 = vdwg.mxu0
    %1986 = vrot.lane.b32.xlu0 %v335, 104
    %v1987 = vpop.permute.xlu0 %1986
    %1988 = vrot.lane.b32.xlu0 %v340, 104
    %v1989 = vpop.permute.xlu0 %1988
    %1990 = vrot.lane.b32.xlu0 %v345, 104
    %v1991 = vpop.permute.xlu0 %1990
    %1992 = vrot.lane.b32.xlu0 %v350, 104
    %v1993 = vpop.permute.xlu0 %1992
    %1994 = vrot.lane.b32.xlu0 %v335, 72
    %v1995 = vpop.permute.xlu0 %1994
    %1996 = vrot.lane.b32.xlu0 %v340, 72
    %v1997 = vpop.permute.xlu0 %1996
    %1998 = vrot.lane.b32.xlu0 %v345, 72
    %v1999 = vpop.permute.xlu0 %1998
    %2000 = vrot.lane.b32.xlu0 %v350, 72
    %v2001 = vpop.permute.xlu0 %2000
    %v2002 = vsel %vm385, %v1987, 0
    %v2004 = vsel %vm385, %v1989, 0
    %v2006 = vsel %vm385, %v1991, 0
    %v2008 = vsel %vm385, %v1993, 0
    %v2010 = vsel %vm385, %v1995, 0
    %v2012 = vsel %vm385, %v1997, 0
    %v2014 = vsel %vm385, %v1999, 0
    %v2016 = vsel %vm385, %v2001, 0
    %2018 = vmatprep.subr.mxu0 0.0
    %2019 = vmatpush1.xpose.msra.mxu0 0.0
    %2020 = vmatprep.subr.mxu0 0.0
    %2021 = vmatpush1.xpose.msra.mxu0 0.0
    %2022 = vmatprep.subr.mxu0 0.0
    %2023 = vmatpush1.xpose.msra.mxu0 0.0
    %2024 = vmatprep.subr.mxu0 0.0
    %2025 = vmatpush1.xpose.msra.mxu0 0.0
    %2026 = vmatprep.subr.mxu0 0.0
    %2027 = vmatpush1.xpose.msra.mxu0 0.0
    %2028 = vmatprep.subr.mxu0 0.0
    %2029 = vmatpush1.xpose.msra.mxu0 0.0
    %2030 = vmatprep.subr.mxu0 0.0
    %2031 = vmatpush1.xpose.msra.mxu0 0.0
    %2032 = vmatprep.subr.mxu0 0.0
    %2033 = vmatpush1.xpose.msra.mxu0 0.0
    %2034 = vmatprep.subr.mxu0 0.0
    %2035 = vmatpush1.xpose.msra.mxu0 0.0
    %2036 = vmatprep.subr.mxu0 0.0
    %2037 = vmatpush1.xpose.msra.mxu0 0.0
    %2038 = vmatprep.subr.mxu0 0.0
    %2039 = vmatpush1.xpose.msra.mxu0 0.0
    %2040 = vmatprep.subr.mxu0 0.0
    %2041 = vmatpush1.xpose.msra.mxu0 0.0
    %2042 = vmatprep.subr.mxu0 0.0
    %2043 = vmatpush1.xpose.msra.mxu0 %v2016
    %2044 = vmatprep.subr.mxu0 0.0
    %2045 = vmatpush1.xpose.msra.mxu0 %v2014
    %2046 = vmatprep.subr.mxu0 0.0
    %2047 = vmatpush1.xpose.msra.mxu0 %v2012
    %2048 = vmatprep.subr.mxu0 0.0
    %2049 = vmatpush1.xpose.msra.mxu0 %v2010
    %2050 = vmatprep.subr.mxu0 0.0
    %2051 = vmatpush2.xpose.msra.mxu0 0.0
    %2052 = vmatprep.subr.mxu0 0.0
    %2053 = vmatpush2.xpose.msra.mxu0 0.0
    %2054 = vmatprep.subr.mxu0 0.0
    %2055 = vmatpush2.xpose.msra.mxu0 0.0
    %2056 = vmatprep.subr.mxu0 0.0
    %2057 = vmatpush2.xpose.msra.mxu0 0.0
    %2058 = vmatprep.subr.mxu0 0.0
    %2059 = vmatpush2.xpose.msra.mxu0 0.0
    %2060 = vmatprep.subr.mxu0 0.0
    %2061 = vmatpush2.xpose.msra.mxu0 0.0
    %2062 = vmatprep.subr.mxu0 0.0
    %2063 = vmatpush2.xpose.msra.mxu0 0.0
    %2064 = vmatprep.subr.mxu0 0.0
    %2065 = vmatpush2.xpose.msra.mxu0 0.0
    %2066 = vmatprep.subr.mxu0 0.0
    %2067 = vmatpush2.xpose.msra.mxu0 0.0
    %2068 = vmatprep.subr.mxu0 0.0
    %2069 = vmatpush2.xpose.msra.mxu0 0.0
    %2070 = vmatprep.subr.mxu0 0.0
    %2071 = vmatpush2.xpose.msra.mxu0 0.0
    %2072 = vmatprep.subr.mxu0 0.0
    %2073 = vmatpush2.xpose.msra.mxu0 0.0
    %2074 = vmatprep.subr.mxu0 0.0
    %2075 = vmatpush2.xpose.msra.mxu0 0.0
    %2076 = vmatprep.subr.mxu0 0.0
    %2077 = vmatpush2.xpose.msra.mxu0 0.0
    %2078 = vmatprep.subr.mxu0 0.0
    %2079 = vmatpush2.xpose.msra.mxu0 0.0
    %2080 = vmatprep.subr.mxu0 0.0
    %2081 = vmatpush2.xpose.msra.mxu0 0.0
    %2082 = vmatprep.mubr.f32.mxu0 0.0
    %2083 = vmatmul.mubr.f32.gmra.mxu0 %v2002
    %v2084 = vpop.f32.mrf.mxu0
    %v2085 = vadd.f32 0.0, %v2084
    %v2086 = vpop.f32.mrf.mxu0
    %2087 = vmatprep.mubr.f32.mxu0 0.0
    %2088 = vmatmul.mubr.f32.gmra.mxu0 %v2004
    %v2089 = vpop.f32.mrf.mxu0
    %v2090 = vadd.f32 0.0, %v2089
    %v2091 = vpop.f32.mrf.mxu0
    %2092 = vmatprep.mubr.f32.mxu0 0.0
    %2093 = vmatmul.mubr.f32.gmra.mxu0 %v2006
    %v2094 = vpop.f32.mrf.mxu0
    %v2095 = vadd.f32 0.0, %v2094
    %v2096 = vpop.f32.mrf.mxu0
    %2097 = vmatprep.mubr.f32.mxu0 0.0
    %2098 = vmatmul.mubr.f32.gmra.mxu0 %v2008
    %v2099 = vpop.f32.mrf.mxu0
    %v2100 = vadd.f32 0.0, %v2099
    %v2101 = vpop.f32.mrf.mxu0
    %2102 = vdwg.mxu0
    %2103 = vrot.lane.b32.xlu0 %v355, 104
    %v2104 = vpop.permute.xlu0 %2103
    %2105 = vrot.lane.b32.xlu0 %v360, 104
    %v2106 = vpop.permute.xlu0 %2105
    %2107 = vrot.lane.b32.xlu0 %v365, 104
    %v2108 = vpop.permute.xlu0 %2107
    %2109 = vrot.lane.b32.xlu0 %v370, 104
    %v2110 = vpop.permute.xlu0 %2109
    %2111 = vrot.lane.b32.xlu0 %v355, 72
    %v2112 = vpop.permute.xlu0 %2111
    %2113 = vrot.lane.b32.xlu0 %v360, 72
    %v2114 = vpop.permute.xlu0 %2113
    %2115 = vrot.lane.b32.xlu0 %v365, 72
    %v2116 = vpop.permute.xlu0 %2115
    %2117 = vrot.lane.b32.xlu0 %v370, 72
    %v2118 = vpop.permute.xlu0 %2117
    %v2119 = vsel %vm385, %v2104, 0
    %v2121 = vsel %vm385, %v2106, 0
    %v2123 = vsel %vm385, %v2108, 0
    %v2125 = vsel %vm385, %v2110, 0
    %v2127 = vsel %vm385, %v2112, 0
    %v2129 = vsel %vm385, %v2114, 0
    %v2131 = vsel %vm385, %v2116, 0
    %v2133 = vsel %vm385, %v2118, 0
    %2135 = vmatprep.subr.mxu0 0.0
    %2136 = vmatpush1.xpose.msra.mxu0 0.0
    %2137 = vmatprep.subr.mxu0 0.0
    %2138 = vmatpush1.xpose.msra.mxu0 0.0
    %2139 = vmatprep.subr.mxu0 0.0
    %2140 = vmatpush1.xpose.msra.mxu0 0.0
    %2141 = vmatprep.subr.mxu0 0.0
    %2142 = vmatpush1.xpose.msra.mxu0 0.0
    %2143 = vmatprep.subr.mxu0 0.0
    %2144 = vmatpush1.xpose.msra.mxu0 0.0
    %2145 = vmatprep.subr.mxu0 0.0
    %2146 = vmatpush1.xpose.msra.mxu0 0.0
    %2147 = vmatprep.subr.mxu0 0.0
    %2148 = vmatpush1.xpose.msra.mxu0 0.0
    %2149 = vmatprep.subr.mxu0 0.0
    %2150 = vmatpush1.xpose.msra.mxu0 0.0
    %2151 = vmatprep.subr.mxu0 0.0
    %2152 = vmatpush1.xpose.msra.mxu0 0.0
    %2153 = vmatprep.subr.mxu0 0.0
    %2154 = vmatpush1.xpose.msra.mxu0 0.0
    %2155 = vmatprep.subr.mxu0 0.0
    %2156 = vmatpush1.xpose.msra.mxu0 0.0
    %2157 = vmatprep.subr.mxu0 0.0
    %2158 = vmatpush1.xpose.msra.mxu0 0.0
    %2159 = vmatprep.subr.mxu0 0.0
    %2160 = vmatpush1.xpose.msra.mxu0 %v2133
    %2161 = vmatprep.subr.mxu0 0.0
    %2162 = vmatpush1.xpose.msra.mxu0 %v2131
    %2163 = vmatprep.subr.mxu0 0.0
    %2164 = vmatpush1.xpose.msra.mxu0 %v2129
    %2165 = vmatprep.subr.mxu0 0.0
    %2166 = vmatpush1.xpose.msra.mxu0 %v2127
    %2167 = vmatprep.subr.mxu0 0.0
    %2168 = vmatpush2.xpose.msra.mxu0 0.0
    %2169 = vmatprep.subr.mxu0 0.0
    %2170 = vmatpush2.xpose.msra.mxu0 0.0
    %2171 = vmatprep.subr.mxu0 0.0
    %2172 = vmatpush2.xpose.msra.mxu0 0.0
    %2173 = vmatprep.subr.mxu0 0.0
    %2174 = vmatpush2.xpose.msra.mxu0 0.0
    %2175 = vmatprep.subr.mxu0 0.0
    %2176 = vmatpush2.xpose.msra.mxu0 0.0
    %2177 = vmatprep.subr.mxu0 0.0
    %2178 = vmatpush2.xpose.msra.mxu0 0.0
    %2179 = vmatprep.subr.mxu0 0.0
    %2180 = vmatpush2.xpose.msra.mxu0 0.0
    %2181 = vmatprep.subr.mxu0 0.0
    %2182 = vmatpush2.xpose.msra.mxu0 0.0
    %2183 = vmatprep.subr.mxu0 0.0
    %2184 = vmatpush2.xpose.msra.mxu0 0.0
    %2185 = vmatprep.subr.mxu0 0.0
    %2186 = vmatpush2.xpose.msra.mxu0 0.0
    %2187 = vmatprep.subr.mxu0 0.0
    %2188 = vmatpush2.xpose.msra.mxu0 0.0
    %2189 = vmatprep.subr.mxu0 0.0
    %2190 = vmatpush2.xpose.msra.mxu0 0.0
    %2191 = vmatprep.subr.mxu0 0.0
    %2192 = vmatpush2.xpose.msra.mxu0 0.0
    %2193 = vmatprep.subr.mxu0 0.0
    %2194 = vmatpush2.xpose.msra.mxu0 0.0
    %2195 = vmatprep.subr.mxu0 0.0
    %2196 = vmatpush2.xpose.msra.mxu0 0.0
    %2197 = vmatprep.subr.mxu0 0.0
    %2198 = vmatpush2.xpose.msra.mxu0 0.0
    %2199 = vmatprep.mubr.f32.mxu0 0.0
    %2200 = vmatmul.mubr.f32.gmra.mxu0 %v2119
    %v2201 = vpop.f32.mrf.mxu0
    %v2202 = vadd.f32 0.0, %v2201
    %v2203 = vpop.f32.mrf.mxu0
    %2204 = vmatprep.mubr.f32.mxu0 0.0
    %2205 = vmatmul.mubr.f32.gmra.mxu0 %v2121
    %v2206 = vpop.f32.mrf.mxu0
    %v2207 = vadd.f32 0.0, %v2206
    %v2208 = vpop.f32.mrf.mxu0
    %2209 = vmatprep.mubr.f32.mxu0 0.0
    %2210 = vmatmul.mubr.f32.gmra.mxu0 %v2123
    %v2211 = vpop.f32.mrf.mxu0
    %v2212 = vadd.f32 0.0, %v2211
    %v2213 = vpop.f32.mrf.mxu0
    %2214 = vmatprep.mubr.f32.mxu0 0.0
    %2215 = vmatmul.mubr.f32.gmra.mxu0 %v2125
    %v2216 = vpop.f32.mrf.mxu0
    %v2217 = vadd.f32 0.0, %v2216
    %v2218 = vpop.f32.mrf.mxu0
    %2219 = vdwg.mxu0
    %v2220 = vsel %vm106, %v2085, -inf
    %2221 = vmax.xlane.f32.xlu0 %v2220
    %v2222 = vpop.xlane.xlu0 %2221
    %v2223 = vsel %vm106, %v2090, -inf
    %2224 = vmax.xlane.f32.xlu0 %v2223
    %v2225 = vpop.xlane.xlu0 %2224
    %v2226 = vsel %vm106, %v2095, -inf
    %2227 = vmax.xlane.f32.xlu0 %v2226
    %v2228 = vpop.xlane.xlu0 %2227
    %v2229 = vsel %vm106, %v2100, -inf
    %2230 = vmax.xlane.f32.xlu0 %v2229
    %v2231 = vpop.xlane.xlu0 %2230
    %v2232 = vsel %vm106, %v2202, -inf
    %2233 = vmax.xlane.f32.xlu0 %v2232
    %v2234 = vpop.xlane.xlu0 %2233
    %v2235 = vsel %vm106, %v2207, -inf
    %2236 = vmax.xlane.f32.xlu0 %v2235
    %v2237 = vpop.xlane.xlu0 %2236
    %v2238 = vsel %vm106, %v2212, -inf
    %2239 = vmax.xlane.f32.xlu0 %v2238
    %v2240 = vpop.xlane.xlu0 %2239
    %v2241 = vsel %vm106, %v2217, -inf
    %2242 = vmax.xlane.f32.xlu0 %v2241
    %v2243 = vpop.xlane.xlu0 %2242
    %v2244 = vsub.f32 %v2085, %v2222
    %v2245 = vsub.f32 %v2090, %v2225
    %v2246 = vsub.f32 %v2095, %v2228
    %v2247 = vsub.f32 %v2100, %v2231
    %v2248 = vsub.f32 %v2202, %v2234
    %v2249 = vsub.f32 %v2207, %v2237
    %v2250 = vsub.f32 %v2212, %v2240
    %v2251 = vsub.f32 %v2217, %v2243
    %v2252 = vmul.f32 %v2244, 1.442695
    %v2253 = vpow.pop %v2252
    %v2254 = vmul.f32 %v2245, 1.442695
    %v2255 = vpow.pop %v2254
    %v2256 = vmul.f32 %v2246, 1.442695
    %v2257 = vpow.pop %v2256
    %v2258 = vmul.f32 %v2247, 1.442695
    %v2259 = vpow.pop %v2258
    %v2260 = vmul.f32 %v2248, 1.442695
    %v2261 = vpow.pop %v2260
    %v2262 = vmul.f32 %v2249, 1.442695
    %v2263 = vpow.pop %v2262
    %v2264 = vmul.f32 %v2250, 1.442695
    %v2265 = vpow.pop %v2264
    %v2266 = vmul.f32 %v2251, 1.442695
    %v2267 = vpow.pop %v2266
    %v2268 = vsel %vm106, %v2253, 0.0
    %2269 = vadd.xlane.f32.xlu0 %v2268
    %v2270 = vpop.xlane.xlu0 %2269
    %v2271 = vsel %vm106, %v2255, 0.0
    %2272 = vadd.xlane.f32.xlu0 %v2271
    %v2273 = vpop.xlane.xlu0 %2272
    %v2274 = vsel %vm106, %v2257, 0.0
    %2275 = vadd.xlane.f32.xlu0 %v2274
    %v2276 = vpop.xlane.xlu0 %2275
    %v2277 = vsel %vm106, %v2259, 0.0
    %2278 = vadd.xlane.f32.xlu0 %v2277
    %v2279 = vpop.xlane.xlu0 %2278
    %v2280 = vsel %vm106, %v2261, 0.0
    %2281 = vadd.xlane.f32.xlu0 %v2280
    %v2282 = vpop.xlane.xlu0 %2281
    %v2283 = vsel %vm106, %v2263, 0.0
    %2284 = vadd.xlane.f32.xlu0 %v2283
    %v2285 = vpop.xlane.xlu0 %2284
    %v2286 = vsel %vm106, %v2265, 0.0
    %2287 = vadd.xlane.f32.xlu0 %v2286
    %v2288 = vpop.xlane.xlu0 %2287
    %v2289 = vsel %vm106, %v2267, 0.0
    %2290 = vadd.xlane.f32.xlu0 %v2289
    %v2291 = vpop.xlane.xlu0 %2290
    %v2292 = vrcp.pop %v2270
    %v2293 = vrcp.pop %v2273
    %v2294 = vrcp.pop %v2276
    %v2295 = vrcp.pop %v2279
    %v2296 = vrcp.pop %v2282
    %v2297 = vrcp.pop %v2285
    %v2298 = vrcp.pop %v2288
    %v2299 = vrcp.pop %v2291
    %v2300 = vmul.f32 %v2253, %v2292
    %v2301 = vmul.f32 %v2255, %v2293
    %v2302 = vmul.f32 %v2257, %v2294
    %v2303 = vmul.f32 %v2259, %v2295
    %v2304 = vmul.f32 %v2261, %v2296
    %v2305 = vmul.f32 %v2263, %v2297
    %v2306 = vmul.f32 %v2265, %v2298
    %v2307 = vmul.f32 %v2267, %v2299
    %2308 = vrot.lane.b32.xlu0 %v335, 40
    %v2309 = vpop.permute.xlu0 %2308
    %2310 = vrot.lane.b32.xlu0 %v340, 40
    %v2311 = vpop.permute.xlu0 %2310
    %2312 = vrot.lane.b32.xlu0 %v345, 40
    %v2313 = vpop.permute.xlu0 %2312
    %2314 = vrot.lane.b32.xlu0 %v350, 40
    %v2315 = vpop.permute.xlu0 %2314
    %v2321 = vsel %vm106, %v2300, 0
    %v2324 = vsel %vm106, %v2301, 0
    %v2327 = vsel %vm106, %v2302, 0
    %v2330 = vsel %vm106, %v2303, 0
    %2332 = vmatprep.subr.mxu0 0.0
    %2333 = vmatpush1.msra.mxu0 0.0
    %2334 = vmatprep.subr.mxu0 0.0
    %2335 = vmatpush1.msra.mxu0 0.0
    %2336 = vmatprep.subr.mxu0 0.0
    %2337 = vmatpush1.msra.mxu0 0.0
    %2338 = vmatprep.subr.mxu0 0.0
    %2339 = vmatpush1.msra.mxu0 0.0
    %2340 = vmatprep.subr.mxu0 0.0
    %2341 = vmatpush1.msra.mxu0 0.0
    %2342 = vmatprep.subr.mxu0 0.0
    %2343 = vmatpush1.msra.mxu0 0.0
    %2344 = vmatprep.subr.mxu0 0.0
    %2345 = vmatpush1.msra.mxu0 0.0
    %2346 = vmatprep.subr.mxu0 0.0
    %2347 = vmatpush1.msra.mxu0 0.0
    %2348 = vmatprep.subr.mxu0 0.0
    %2349 = vmatpush1.msra.mxu0 0.0
    %2350 = vmatprep.subr.mxu0 0.0
    %2351 = vmatpush1.msra.mxu0 0.0
    %2352 = vmatprep.subr.mxu0 0.0
    %2353 = vmatpush1.msra.mxu0 0.0
    %2354 = vmatprep.subr.mxu0 0.0
    %2355 = vmatpush1.msra.mxu0 0.0
    %2356 = vmatprep.subr.mxu0 0.0
    %2357 = vmatpush1.msra.mxu0 %v2315
    %2358 = vmatprep.subr.mxu0 0.0
    %2359 = vmatpush1.msra.mxu0 %v2313
    %2360 = vmatprep.subr.mxu0 0.0
    %2361 = vmatpush1.msra.mxu0 %v2311
    %2362 = vmatprep.subr.mxu0 0.0
    %2363 = vmatpush1.msra.mxu0 %v2309
    %2364 = vmatprep.subr.mxu0 0.0
    %2365 = vmatpush2.msra.mxu0 0.0
    %2366 = vmatprep.subr.mxu0 0.0
    %2367 = vmatpush2.msra.mxu0 0.0
    %2368 = vmatprep.subr.mxu0 0.0
    %2369 = vmatpush2.msra.mxu0 0.0
    %2370 = vmatprep.subr.mxu0 0.0
    %2371 = vmatpush2.msra.mxu0 0.0
    %2372 = vmatprep.subr.mxu0 0.0
    %2373 = vmatpush2.msra.mxu0 0.0
    %2374 = vmatprep.subr.mxu0 0.0
    %2375 = vmatpush2.msra.mxu0 0.0
    %2376 = vmatprep.subr.mxu0 0.0
    %2377 = vmatpush2.msra.mxu0 0.0
    %2378 = vmatprep.subr.mxu0 0.0
    %2379 = vmatpush2.msra.mxu0 0.0
    %2380 = vmatprep.subr.mxu0 0.0
    %2381 = vmatpush2.msra.mxu0 0.0
    %2382 = vmatprep.subr.mxu0 0.0
    %2383 = vmatpush2.msra.mxu0 0.0
    %2384 = vmatprep.subr.mxu0 0.0
    %2385 = vmatpush2.msra.mxu0 0.0
    %2386 = vmatprep.subr.mxu0 0.0
    %2387 = vmatpush2.msra.mxu0 0.0
    %2388 = vmatprep.subr.mxu0 0.0
    %2389 = vmatpush2.msra.mxu0 0.0
    %2390 = vmatprep.subr.mxu0 0.0
    %2391 = vmatpush2.msra.mxu0 0.0
    %2392 = vmatprep.subr.mxu0 0.0
    %2393 = vmatpush2.msra.mxu0 0.0
    %2394 = vmatprep.subr.mxu0 0.0
    %2395 = vmatpush2.msra.mxu0 0.0
    %2396 = vmatprep.mubr.f32.mxu0 0.0
    %2397 = vmatmul.mubr.f32.gmra.mxu0 %v2321
    %v2398 = vpop.f32.mrf.mxu0
    %v2399 = vadd.f32 0.0, %v2398
    %v2400 = vpop.f32.mrf.mxu0
    %2401 = vmatprep.mubr.f32.mxu0 0.0
    %2402 = vmatmul.mubr.f32.gmra.mxu0 %v2324
    %v2403 = vpop.f32.mrf.mxu0
    %v2404 = vadd.f32 0.0, %v2403
    %v2405 = vpop.f32.mrf.mxu0
    %2406 = vmatprep.mubr.f32.mxu0 0.0
    %2407 = vmatmul.mubr.f32.gmra.mxu0 %v2327
    %v2408 = vpop.f32.mrf.mxu0
    %v2409 = vadd.f32 0.0, %v2408
    %v2410 = vpop.f32.mrf.mxu0
    %2411 = vmatprep.mubr.f32.mxu0 0.0
    %2412 = vmatmul.mubr.f32.gmra.mxu0 %v2330
    %v2413 = vpop.f32.mrf.mxu0
    %v2414 = vadd.f32 0.0, %v2413
    %v2415 = vpop.f32.mrf.mxu0
    %2416 = vdwg.mxu0
    %2417 = vrot.lane.b32.xlu0 %v355, 40
    %v2418 = vpop.permute.xlu0 %2417
    %2419 = vrot.lane.b32.xlu0 %v360, 40
    %v2420 = vpop.permute.xlu0 %2419
    %2421 = vrot.lane.b32.xlu0 %v365, 40
    %v2422 = vpop.permute.xlu0 %2421
    %2423 = vrot.lane.b32.xlu0 %v370, 40
    %v2424 = vpop.permute.xlu0 %2423
    %v2430 = vsel %vm106, %v2304, 0
    %v2433 = vsel %vm106, %v2305, 0
    %v2436 = vsel %vm106, %v2306, 0
    %v2439 = vsel %vm106, %v2307, 0
    %2441 = vmatprep.subr.mxu0 0.0
    %2442 = vmatpush1.msra.mxu0 0.0
    %2443 = vmatprep.subr.mxu0 0.0
    %2444 = vmatpush1.msra.mxu0 0.0
    %2445 = vmatprep.subr.mxu0 0.0
    %2446 = vmatpush1.msra.mxu0 0.0
    %2447 = vmatprep.subr.mxu0 0.0
    %2448 = vmatpush1.msra.mxu0 0.0
    %2449 = vmatprep.subr.mxu0 0.0
    %2450 = vmatpush1.msra.mxu0 0.0
    %2451 = vmatprep.subr.mxu0 0.0
    %2452 = vmatpush1.msra.mxu0 0.0
    %2453 = vmatprep.subr.mxu0 0.0
    %2454 = vmatpush1.msra.mxu0 0.0
    %2455 = vmatprep.subr.mxu0 0.0
    %2456 = vmatpush1.msra.mxu0 0.0
    %2457 = vmatprep.subr.mxu0 0.0
    %2458 = vmatpush1.msra.mxu0 0.0
    %2459 = vmatprep.subr.mxu0 0.0
    %2460 = vmatpush1.msra.mxu0 0.0
    %2461 = vmatprep.subr.mxu0 0.0
    %2462 = vmatpush1.msra.mxu0 0.0
    %2463 = vmatprep.subr.mxu0 0.0
    %2464 = vmatpush1.msra.mxu0 0.0
    %2465 = vmatprep.subr.mxu0 0.0
    %2466 = vmatpush1.msra.mxu0 %v2424
    %2467 = vmatprep.subr.mxu0 0.0
    %2468 = vmatpush1.msra.mxu0 %v2422
    %2469 = vmatprep.subr.mxu0 0.0
    %2470 = vmatpush1.msra.mxu0 %v2420
    %2471 = vmatprep.subr.mxu0 0.0
    %2472 = vmatpush1.msra.mxu0 %v2418
    %2473 = vmatprep.subr.mxu0 0.0
    %2474 = vmatpush2.msra.mxu0 0.0
    %2475 = vmatprep.subr.mxu0 0.0
    %2476 = vmatpush2.msra.mxu0 0.0
    %2477 = vmatprep.subr.mxu0 0.0
    %2478 = vmatpush2.msra.mxu0 0.0
    %2479 = vmatprep.subr.mxu0 0.0
    %2480 = vmatpush2.msra.mxu0 0.0
    %2481 = vmatprep.subr.mxu0 0.0
    %2482 = vmatpush2.msra.mxu0 0.0
    %2483 = vmatprep.subr.mxu0 0.0
    %2484 = vmatpush2.msra.mxu0 0.0
    %2485 = vmatprep.subr.mxu0 0.0
    %2486 = vmatpush2.msra.mxu0 0.0
    %2487 = vmatprep.subr.mxu0 0.0
    %2488 = vmatpush2.msra.mxu0 0.0
    %2489 = vmatprep.subr.mxu0 0.0
    %2490 = vmatpush2.msra.mxu0 0.0
    %2491 = vmatprep.subr.mxu0 0.0
    %2492 = vmatpush2.msra.mxu0 0.0
    %2493 = vmatprep.subr.mxu0 0.0
    %2494 = vmatpush2.msra.mxu0 0.0
    %2495 = vmatprep.subr.mxu0 0.0
    %2496 = vmatpush2.msra.mxu0 0.0
    %2497 = vmatprep.subr.mxu0 0.0
    %2498 = vmatpush2.msra.mxu0 0.0
    %2499 = vmatprep.subr.mxu0 0.0
    %2500 = vmatpush2.msra.mxu0 0.0
    %2501 = vmatprep.subr.mxu0 0.0
    %2502 = vmatpush2.msra.mxu0 0.0
    %2503 = vmatprep.subr.mxu0 0.0
    %2504 = vmatpush2.msra.mxu0 0.0
    %2505 = vmatprep.mubr.f32.mxu0 0.0
    %2506 = vmatmul.mubr.f32.gmra.mxu0 %v2430
    %v2507 = vpop.f32.mrf.mxu0
    %v2508 = vadd.f32 0.0, %v2507
    %v2509 = vpop.f32.mrf.mxu0
    %2510 = vmatprep.mubr.f32.mxu0 0.0
    %2511 = vmatmul.mubr.f32.gmra.mxu0 %v2433
    %v2512 = vpop.f32.mrf.mxu0
    %v2513 = vadd.f32 0.0, %v2512
    %v2514 = vpop.f32.mrf.mxu0
    %2515 = vmatprep.mubr.f32.mxu0 0.0
    %2516 = vmatmul.mubr.f32.gmra.mxu0 %v2436
    %v2517 = vpop.f32.mrf.mxu0
    %v2518 = vadd.f32 0.0, %v2517
    %v2519 = vpop.f32.mrf.mxu0
    %2520 = vmatprep.mubr.f32.mxu0 0.0
    %2521 = vmatmul.mubr.f32.gmra.mxu0 %v2439
    %v2522 = vpop.f32.mrf.mxu0
    %v2523 = vadd.f32 0.0, %v2522
    %v2524 = vpop.f32.mrf.mxu0
    %2525 = vdwg.mxu0
    %2534 = vrot.lane.b32.xlu0 %v1319, 8
    %v2535 = vpop.permute.xlu0 %2534
    %2536 = vrot.lane.b32.xlu0 %v1324, 8
    %v2537 = vpop.permute.xlu0 %2536
    %2538 = vrot.lane.b32.xlu0 %v1329, 8
    %v2539 = vpop.permute.xlu0 %2538
    %2540 = vrot.lane.b32.xlu0 %v1334, 8
    %v2541 = vpop.permute.xlu0 %2540
    %2542 = vrot.lane.b32.xlu0 %v1428, 8
    %v2543 = vpop.permute.xlu0 %2542
    %2544 = vrot.lane.b32.xlu0 %v1433, 8
    %v2545 = vpop.permute.xlu0 %2544
    %2546 = vrot.lane.b32.xlu0 %v1438, 8
    %v2547 = vpop.permute.xlu0 %2546
    %2548 = vrot.lane.b32.xlu0 %v1443, 8
    %v2549 = vpop.permute.xlu0 %2548
    %2566 = vrot.lane.b32.xlu0 %v1859, 16
    %v2567 = vpop.permute.xlu0 %2566
    %2568 = vrot.lane.b32.xlu0 %v1864, 16
    %v2569 = vpop.permute.xlu0 %2568
    %2570 = vrot.lane.b32.xlu0 %v1869, 16
    %v2571 = vpop.permute.xlu0 %2570
    %2572 = vrot.lane.b32.xlu0 %v1874, 16
    %v2573 = vpop.permute.xlu0 %2572
    %2574 = vrot.lane.b32.xlu0 %v1968, 16
    %v2575 = vpop.permute.xlu0 %2574
    %2576 = vrot.lane.b32.xlu0 %v1973, 16
    %v2577 = vpop.permute.xlu0 %2576
    %2578 = vrot.lane.b32.xlu0 %v1978, 16
    %v2579 = vpop.permute.xlu0 %2578
    %2580 = vrot.lane.b32.xlu0 %v1983, 16
    %v2581 = vpop.permute.xlu0 %2580
    %2598 = vrot.lane.b32.xlu0 %v2399, 24
    %v2599 = vpop.permute.xlu0 %2598
    %2600 = vrot.lane.b32.xlu0 %v2404, 24
    %v2601 = vpop.permute.xlu0 %2600
    %2602 = vrot.lane.b32.xlu0 %v2409, 24
    %v2603 = vpop.permute.xlu0 %2602
    %2604 = vrot.lane.b32.xlu0 %v2414, 24
    %v2605 = vpop.permute.xlu0 %2604
    %2606 = vrot.lane.b32.xlu0 %v2508, 24
    %v2607 = vpop.permute.xlu0 %2606
    %2608 = vrot.lane.b32.xlu0 %v2513, 24
    %v2609 = vpop.permute.xlu0 %2608
    %2610 = vrot.lane.b32.xlu0 %v2518, 24
    %v2611 = vpop.permute.xlu0 %2610
    %2612 = vrot.lane.b32.xlu0 %v2523, 24
    %v2613 = vpop.permute.xlu0 %2612
    %v2622 = vsel %vm385, %v779, %v2535
    %v2623 = vsel %vm385, %v784, %v2537
    %v2624 = vsel %vm385, %v789, %v2539
    %v2625 = vsel %vm385, %v794, %v2541
    %v2626 = vsel %vm385, %v888, %v2543
    %v2627 = vsel %vm385, %v893, %v2545
    %v2628 = vsel %vm385, %v898, %v2547
    %v2629 = vsel %vm385, %v903, %v2549
    %vm2630 = vcmask 130048
    %v2631 = vsel %vm2630, %v2622, %v2567
    %v2632 = vsel %vm2630, %v2623, %v2569
    %v2633 = vsel %vm2630, %v2624, %v2571
    %v2634 = vsel %vm2630, %v2625, %v2573
    %v2635 = vsel %vm2630, %v2626, %v2575
    %v2636 = vsel %vm2630, %v2627, %v2577
    %v2637 = vsel %vm2630, %v2628, %v2579
    %v2638 = vsel %vm2630, %v2629, %v2581
    %vm2639 = vcmask 195584
    %v2640 = vsel %vm2639, %v2631, %v2599
    %v2641 = vsel %vm2639, %v2632, %v2601
    %v2642 = vsel %vm2639, %v2633, %v2603
    %v2643 = vsel %vm2639, %v2634, %v2605
    %v2644 = vsel %vm2639, %v2635, %v2607
    %v2645 = vsel %vm2639, %v2636, %v2609
    %v2646 = vsel %vm2639, %v2637, %v2611
    %v2647 = vsel %vm2639, %v2638, %v2613
    %v2648 = vld [vmem:[%s5] sm:$0xff]
    %v2649 = vld [vmem:[%s5 + $0x8] sm:$0xff]
    %v2650 = vld [vmem:[%s5 + $0x10] sm:$0xff]
    %v2651 = vld [vmem:[%s5 + $0x18] sm:$0xff]
    %v2653 = vsel %vm106, %v2640, 0
    %v2656 = vsel %vm106, %v2641, 0
    %v2659 = vsel %vm106, %v2642, 0
    %v2662 = vsel %vm106, %v2643, 0
    %v2665 = vsel %vm106, %v2644, 0
    %v2668 = vsel %vm106, %v2645, 0
    %v2671 = vsel %vm106, %v2646, 0
    %v2674 = vsel %vm106, %v2647, 0
    %2676 = vmatprep.subr.mxu0 0.0
    %2677 = vmatpush1.msra.mxu0 0.0
    %2678 = vmatprep.subr.mxu0 0.0
    %2679 = vmatpush1.msra.mxu0 0.0
    %2680 = vmatprep.subr.mxu0 0.0
    %2681 = vmatpush1.msra.mxu0 0.0
    %2682 = vmatprep.subr.mxu0 0.0
    %2683 = vmatpush1.msra.mxu0 0.0
    %2684 = vmatprep.subr.mxu0 0.0
    %2685 = vmatpush1.msra.mxu0 0.0
    %2686 = vmatprep.subr.mxu0 0.0
    %2687 = vmatpush1.msra.mxu0 0.0
    %2688 = vmatprep.subr.mxu0 0.0
    %2689 = vmatpush1.msra.mxu0 0.0
    %2690 = vmatprep.subr.mxu0 0.0
    %2691 = vmatpush1.msra.mxu0 0.0
    %2692 = vmatprep.subr.mxu0 0.0
    %2693 = vmatpush1.msra.mxu0 0.0
    %2694 = vmatprep.subr.mxu0 0.0
    %2695 = vmatpush1.msra.mxu0 0.0
    %2696 = vmatprep.subr.mxu0 0.0
    %2697 = vmatpush1.msra.mxu0 0.0
    %2698 = vmatprep.subr.mxu0 0.0
    %2699 = vmatpush1.msra.mxu0 0.0
    %2700 = vmatprep.subr.mxu0 0.0
    %2701 = vmatpush1.msra.mxu0 %v2651
    %2702 = vmatprep.subr.mxu0 0.0
    %2703 = vmatpush1.msra.mxu0 %v2650
    %2704 = vmatprep.subr.mxu0 0.0
    %2705 = vmatpush1.msra.mxu0 %v2649
    %2706 = vmatprep.subr.mxu0 0.0
    %2707 = vmatpush1.msra.mxu0 %v2648
    %2708 = vmatprep.subr.mxu0 0.0
    %2709 = vmatpush2.msra.mxu0 0.0
    %2710 = vmatprep.subr.mxu0 0.0
    %2711 = vmatpush2.msra.mxu0 0.0
    %2712 = vmatprep.subr.mxu0 0.0
    %2713 = vmatpush2.msra.mxu0 0.0
    %2714 = vmatprep.subr.mxu0 0.0
    %2715 = vmatpush2.msra.mxu0 0.0
    %2716 = vmatprep.subr.mxu0 0.0
    %2717 = vmatpush2.msra.mxu0 0.0
    %2718 = vmatprep.subr.mxu0 0.0
    %2719 = vmatpush2.msra.mxu0 0.0
    %2720 = vmatprep.subr.mxu0 0.0
    %2721 = vmatpush2.msra.mxu0 0.0
    %2722 = vmatprep.subr.mxu0 0.0
    %2723 = vmatpush2.msra.mxu0 0.0
    %2724 = vmatprep.subr.mxu0 0.0
    %2725 = vmatpush2.msra.mxu0 0.0
    %2726 = vmatprep.subr.mxu0 0.0
    %2727 = vmatpush2.msra.mxu0 0.0
    %2728 = vmatprep.subr.mxu0 0.0
    %2729 = vmatpush2.msra.mxu0 0.0
    %2730 = vmatprep.subr.mxu0 0.0
    %2731 = vmatpush2.msra.mxu0 0.0
    %2732 = vmatprep.subr.mxu0 0.0
    %2733 = vmatpush2.msra.mxu0 0.0
    %2734 = vmatprep.subr.mxu0 0.0
    %2735 = vmatpush2.msra.mxu0 0.0
    %2736 = vmatprep.subr.mxu0 0.0
    %2737 = vmatpush2.msra.mxu0 0.0
    %2738 = vmatprep.subr.mxu0 0.0
    %2739 = vmatpush2.msra.mxu0 0.0
    %2740 = vmatprep.mubr.f32.mxu0 0.0
    %2741 = vmatmul.mubr.f32.gmra.mxu0 %v2653
    %v2742 = vpop.f32.mrf.mxu0
    %v2743 = vadd.f32 0.0, %v2742
    %v2744 = vpop.f32.mrf.mxu0
    %2745 = vmatprep.mubr.f32.mxu0 0.0
    %2746 = vmatmul.mubr.f32.gmra.mxu0 %v2656
    %v2747 = vpop.f32.mrf.mxu0
    %v2748 = vadd.f32 0.0, %v2747
    %v2749 = vpop.f32.mrf.mxu0
    %2750 = vmatprep.mubr.f32.mxu0 0.0
    %2751 = vmatmul.mubr.f32.gmra.mxu0 %v2659
    %v2752 = vpop.f32.mrf.mxu0
    %v2753 = vadd.f32 0.0, %v2752
    %v2754 = vpop.f32.mrf.mxu0
    %2755 = vmatprep.mubr.f32.mxu0 0.0
    %2756 = vmatmul.mubr.f32.gmra.mxu0 %v2662
    %v2757 = vpop.f32.mrf.mxu0
    %v2758 = vadd.f32 0.0, %v2757
    %v2759 = vpop.f32.mrf.mxu0
    %2760 = vmatprep.mubr.f32.mxu0 0.0
    %2761 = vmatmul.mubr.f32.gmra.mxu0 %v2665
    %v2762 = vpop.f32.mrf.mxu0
    %v2763 = vadd.f32 0.0, %v2762
    %v2764 = vpop.f32.mrf.mxu0
    %2765 = vmatprep.mubr.f32.mxu0 0.0
    %2766 = vmatmul.mubr.f32.gmra.mxu0 %v2668
    %v2767 = vpop.f32.mrf.mxu0
    %v2768 = vadd.f32 0.0, %v2767
    %v2769 = vpop.f32.mrf.mxu0
    %2770 = vmatprep.mubr.f32.mxu0 0.0
    %2771 = vmatmul.mubr.f32.gmra.mxu0 %v2671
    %v2772 = vpop.f32.mrf.mxu0
    %v2773 = vadd.f32 0.0, %v2772
    %v2774 = vpop.f32.mrf.mxu0
    %2775 = vmatprep.mubr.f32.mxu0 0.0
    %2776 = vmatmul.mubr.f32.gmra.mxu0 %v2674
    %v2777 = vpop.f32.mrf.mxu0
    %v2778 = vadd.f32 0.0, %v2777
    %v2779 = vpop.f32.mrf.mxu0
    %2780 = vdwg.mxu0
    %v2781 = vadd.f32 %v96, %v2743
    %v2782 = vadd.f32 %v97, %v2748
    %v2783 = vadd.f32 %v98, %v2753
    %v2784 = vadd.f32 %v99, %v2758
    %v2785 = vadd.f32 %v100, %v2763
    %v2786 = vadd.f32 %v101, %v2768
    %v2787 = vadd.f32 %v102, %v2773
    %v2788 = vadd.f32 %v103, %v2778
    %v2789 = vld [vmem:[%s6] sm:$0x1]
    %v2791 = vlaneseq
    %v2792 = vshrl.u32 %v2791, 7
    %v2793 = vsub.s32 0, %v2792
    %v2794 = vrot.slane %v2789, %v2793
    %v2796 = vadd.f32 %v2781, %v2794
    %v2797 = vadd.f32 %v2782, %v2794
    %v2798 = vadd.f32 %v2783, %v2794
    %v2799 = vadd.f32 %v2784, %v2794
    %v2800 = vadd.f32 %v2785, %v2794
    %v2801 = vadd.f32 %v2786, %v2794
    %v2802 = vadd.f32 %v2787, %v2794
    %v2803 = vadd.f32 %v2788, %v2794
    %v2804 = vld [vmem:[%s7] sm:$0x1]
    %v2805 = vld [vmem:[%s8] sm:$0x1]
    %v2806 = vsel %vm106, %v2796, 0.0
    %2807 = vadd.xlane.f32.xlu0 %v2806
    %v2808 = vpop.xlane.xlu0 %2807
    %v2809 = vsel %vm106, %v2797, 0.0
    %2810 = vadd.xlane.f32.xlu0 %v2809
    %v2811 = vpop.xlane.xlu0 %2810
    %v2812 = vsel %vm106, %v2798, 0.0
    %2813 = vadd.xlane.f32.xlu0 %v2812
    %v2814 = vpop.xlane.xlu0 %2813
    %v2815 = vsel %vm106, %v2799, 0.0
    %2816 = vadd.xlane.f32.xlu0 %v2815
    %v2817 = vpop.xlane.xlu0 %2816
    %v2818 = vsel %vm106, %v2800, 0.0
    %2819 = vadd.xlane.f32.xlu0 %v2818
    %v2820 = vpop.xlane.xlu0 %2819
    %v2821 = vsel %vm106, %v2801, 0.0
    %2822 = vadd.xlane.f32.xlu0 %v2821
    %v2823 = vpop.xlane.xlu0 %2822
    %v2824 = vsel %vm106, %v2802, 0.0
    %2825 = vadd.xlane.f32.xlu0 %v2824
    %v2826 = vpop.xlane.xlu0 %2825
    %v2827 = vsel %vm106, %v2803, 0.0
    %2828 = vadd.xlane.f32.xlu0 %v2827
    %v2829 = vpop.xlane.xlu0 %2828
    %v2830 = vmul.f32 %v2808, %v131
    %v2831 = vmul.f32 %v2811, %v131
    %v2832 = vmul.f32 %v2814, %v131
    %v2833 = vmul.f32 %v2817, %v131
    %v2834 = vmul.f32 %v2820, %v131
    %v2835 = vmul.f32 %v2823, %v131
    %v2836 = vmul.f32 %v2826, %v131
    %v2837 = vmul.f32 %v2829, %v131
    %v2838 = vsub.f32 %v2796, %v2830
    %v2839 = vsub.f32 %v2797, %v2831
    %v2840 = vsub.f32 %v2798, %v2832
    %v2841 = vsub.f32 %v2799, %v2833
    %v2842 = vsub.f32 %v2800, %v2834
    %v2843 = vsub.f32 %v2801, %v2835
    %v2844 = vsub.f32 %v2802, %v2836
    %v2845 = vsub.f32 %v2803, %v2837
    %v2846 = vmul.f32 %v2838, %v2838
    %v2847 = vmul.f32 %v2839, %v2839
    %v2848 = vmul.f32 %v2840, %v2840
    %v2849 = vmul.f32 %v2841, %v2841
    %v2850 = vmul.f32 %v2842, %v2842
    %v2851 = vmul.f32 %v2843, %v2843
    %v2852 = vmul.f32 %v2844, %v2844
    %v2853 = vmul.f32 %v2845, %v2845
    %v2854 = vsel %vm106, %v2846, 0.0
    %2855 = vadd.xlane.f32.xlu0 %v2854
    %v2856 = vpop.xlane.xlu0 %2855
    %v2857 = vsel %vm106, %v2847, 0.0
    %2858 = vadd.xlane.f32.xlu0 %v2857
    %v2859 = vpop.xlane.xlu0 %2858
    %v2860 = vsel %vm106, %v2848, 0.0
    %2861 = vadd.xlane.f32.xlu0 %v2860
    %v2862 = vpop.xlane.xlu0 %2861
    %v2863 = vsel %vm106, %v2849, 0.0
    %2864 = vadd.xlane.f32.xlu0 %v2863
    %v2865 = vpop.xlane.xlu0 %2864
    %v2866 = vsel %vm106, %v2850, 0.0
    %2867 = vadd.xlane.f32.xlu0 %v2866
    %v2868 = vpop.xlane.xlu0 %2867
    %v2869 = vsel %vm106, %v2851, 0.0
    %2870 = vadd.xlane.f32.xlu0 %v2869
    %v2871 = vpop.xlane.xlu0 %2870
    %v2872 = vsel %vm106, %v2852, 0.0
    %2873 = vadd.xlane.f32.xlu0 %v2872
    %v2874 = vpop.xlane.xlu0 %2873
    %v2875 = vsel %vm106, %v2853, 0.0
    %2876 = vadd.xlane.f32.xlu0 %v2875
    %v2877 = vpop.xlane.xlu0 %2876
    %v2878 = vmul.f32 %v2856, %v131
    %v2879 = vmul.f32 %v2859, %v131
    %v2880 = vmul.f32 %v2862, %v131
    %v2881 = vmul.f32 %v2865, %v131
    %v2882 = vmul.f32 %v2868, %v131
    %v2883 = vmul.f32 %v2871, %v131
    %v2884 = vmul.f32 %v2874, %v131
    %v2885 = vmul.f32 %v2877, %v131
    %v2886 = vadd.f32 %v2878, 1e-05
    %v2887 = vadd.f32 %v2879, 1e-05
    %v2888 = vadd.f32 %v2880, 1e-05
    %v2889 = vadd.f32 %v2881, 1e-05
    %v2890 = vadd.f32 %v2882, 1e-05
    %v2891 = vadd.f32 %v2883, 1e-05
    %v2892 = vadd.f32 %v2884, 1e-05
    %v2893 = vadd.f32 %v2885, 1e-05
    %v2894 = vrsqrt.pop %v2886
    %v2895 = vrsqrt.pop %v2887
    %v2896 = vrsqrt.pop %v2888
    %v2897 = vrsqrt.pop %v2889
    %v2898 = vrsqrt.pop %v2890
    %v2899 = vrsqrt.pop %v2891
    %v2900 = vrsqrt.pop %v2892
    %v2901 = vrsqrt.pop %v2893
    %v2902 = vmul.f32 %v2838, %v2894
    %v2903 = vmul.f32 %v2839, %v2895
    %v2904 = vmul.f32 %v2840, %v2896
    %v2905 = vmul.f32 %v2841, %v2897
    %v2906 = vmul.f32 %v2842, %v2898
    %v2907 = vmul.f32 %v2843, %v2899
    %v2908 = vmul.f32 %v2844, %v2900
    %v2909 = vmul.f32 %v2845, %v2901
    %v2911 = vlaneseq
    %v2912 = vshrl.u32 %v2911, 7
    %v2913 = vsub.s32 0, %v2912
    %v2914 = vrot.slane %v2804, %v2913
    %v2916 = vmul.f32 %v2902, %v2914
    %v2917 = vmul.f32 %v2903, %v2914
    %v2918 = vmul.f32 %v2904, %v2914
    %v2919 = vmul.f32 %v2905, %v2914
    %v2920 = vmul.f32 %v2906, %v2914
    %v2921 = vmul.f32 %v2907, %v2914
    %v2922 = vmul.f32 %v2908, %v2914
    %v2923 = vmul.f32 %v2909, %v2914
    %v2925 = vlaneseq
    %v2926 = vshrl.u32 %v2925, 7
    %v2927 = vsub.s32 0, %v2926
    %v2928 = vrot.slane %v2805, %v2927
    %v2930 = vadd.f32 %v2916, %v2928
    %v2931 = vadd.f32 %v2917, %v2928
    %v2932 = vadd.f32 %v2918, %v2928
    %v2933 = vadd.f32 %v2919, %v2928
    %v2934 = vadd.f32 %v2920, %v2928
    %v2935 = vadd.f32 %v2921, %v2928
    %v2936 = vadd.f32 %v2922, %v2928
    %v2937 = vadd.f32 %v2923, %v2928
    %v2938 = vld [vmem:[%s9] sm:$0xff]
    %v2939 = vld [vmem:[%s9 + $0x8] sm:$0xff]
    %v2940 = vld [vmem:[%s9 + $0x10] sm:$0xff]
    %v2941 = vld [vmem:[%s9 + $0x18] sm:$0xff]
    %v2942 = vld [vmem:[%s10] sm:$0x1]
    %v2944 = vlaneseq
    %v2945 = vshrl.u32 %v2944, 7
    %v2946 = vsub.s32 0, %v2945
    %v2947 = vrot.slane %v2942, %v2946
    %v2950 = vsel %vm106, %v2930, 0
    %v2953 = vsel %vm106, %v2931, 0
    %v2956 = vsel %vm106, %v2932, 0
    %v2959 = vsel %vm106, %v2933, 0
    %v2962 = vsel %vm106, %v2934, 0
    %v2965 = vsel %vm106, %v2935, 0
    %v2968 = vsel %vm106, %v2936, 0
    %v2971 = vsel %vm106, %v2937, 0
    %2973 = vmatprep.subr.mxu0 0.0
    %2974 = vmatpush1.msra.mxu0 0.0
    %2975 = vmatprep.subr.mxu0 0.0
    %2976 = vmatpush1.msra.mxu0 0.0
    %2977 = vmatprep.subr.mxu0 0.0
    %2978 = vmatpush1.msra.mxu0 0.0
    %2979 = vmatprep.subr.mxu0 0.0
    %2980 = vmatpush1.msra.mxu0 0.0
    %2981 = vmatprep.subr.mxu0 0.0
    %2982 = vmatpush1.msra.mxu0 0.0
    %2983 = vmatprep.subr.mxu0 0.0
    %2984 = vmatpush1.msra.mxu0 0.0
    %2985 = vmatprep.subr.mxu0 0.0
    %2986 = vmatpush1.msra.mxu0 0.0
    %2987 = vmatprep.subr.mxu0 0.0
    %2988 = vmatpush1.msra.mxu0 0.0
    %2989 = vmatprep.subr.mxu0 0.0
    %2990 = vmatpush1.msra.mxu0 0.0
    %2991 = vmatprep.subr.mxu0 0.0
    %2992 = vmatpush1.msra.mxu0 0.0
    %2993 = vmatprep.subr.mxu0 0.0
    %2994 = vmatpush1.msra.mxu0 0.0
    %2995 = vmatprep.subr.mxu0 0.0
    %2996 = vmatpush1.msra.mxu0 0.0
    %2997 = vmatprep.subr.mxu0 0.0
    %2998 = vmatpush1.msra.mxu0 %v2941
    %2999 = vmatprep.subr.mxu0 0.0
    %3000 = vmatpush1.msra.mxu0 %v2940
    %3001 = vmatprep.subr.mxu0 0.0
    %3002 = vmatpush1.msra.mxu0 %v2939
    %3003 = vmatprep.subr.mxu0 0.0
    %3004 = vmatpush1.msra.mxu0 %v2938
    %3005 = vmatprep.subr.mxu0 0.0
    %3006 = vmatpush2.msra.mxu0 0.0
    %3007 = vmatprep.subr.mxu0 0.0
    %3008 = vmatpush2.msra.mxu0 0.0
    %3009 = vmatprep.subr.mxu0 0.0
    %3010 = vmatpush2.msra.mxu0 0.0
    %3011 = vmatprep.subr.mxu0 0.0
    %3012 = vmatpush2.msra.mxu0 0.0
    %3013 = vmatprep.subr.mxu0 0.0
    %3014 = vmatpush2.msra.mxu0 0.0
    %3015 = vmatprep.subr.mxu0 0.0
    %3016 = vmatpush2.msra.mxu0 0.0
    %3017 = vmatprep.subr.mxu0 0.0
    %3018 = vmatpush2.msra.mxu0 0.0
    %3019 = vmatprep.subr.mxu0 0.0
    %3020 = vmatpush2.msra.mxu0 0.0
    %3021 = vmatprep.subr.mxu0 0.0
    %3022 = vmatpush2.msra.mxu0 0.0
    %3023 = vmatprep.subr.mxu0 0.0
    %3024 = vmatpush2.msra.mxu0 0.0
    %3025 = vmatprep.subr.mxu0 0.0
    %3026 = vmatpush2.msra.mxu0 0.0
    %3027 = vmatprep.subr.mxu0 0.0
    %3028 = vmatpush2.msra.mxu0 0.0
    %3029 = vmatprep.subr.mxu0 0.0
    %3030 = vmatpush2.msra.mxu0 0.0
    %3031 = vmatprep.subr.mxu0 0.0
    %3032 = vmatpush2.msra.mxu0 0.0
    %3033 = vmatprep.subr.mxu0 0.0
    %3034 = vmatpush2.msra.mxu0 0.0
    %3035 = vmatprep.subr.mxu0 0.0
    %3036 = vmatpush2.msra.mxu0 0.0
    %3037 = vmatprep.mubr.f32.mxu0 0.0
    %3038 = vmatmul.mubr.f32.gmra.mxu0 %v2950
    %v3039 = vpop.f32.mrf.mxu0
    %v3040 = vadd.f32 %v2947, %v3039
    %v3041 = vpop.f32.mrf.mxu0
    %3042 = vmatprep.mubr.f32.mxu0 0.0
    %3043 = vmatmul.mubr.f32.gmra.mxu0 %v2953
    %v3044 = vpop.f32.mrf.mxu0
    %v3045 = vadd.f32 %v2947, %v3044
    %v3046 = vpop.f32.mrf.mxu0
    %3047 = vmatprep.mubr.f32.mxu0 0.0
    %3048 = vmatmul.mubr.f32.gmra.mxu0 %v2956
    %v3049 = vpop.f32.mrf.mxu0
    %v3050 = vadd.f32 %v2947, %v3049
    %v3051 = vpop.f32.mrf.mxu0
    %3052 = vmatprep.mubr.f32.mxu0 0.0
    %3053 = vmatmul.mubr.f32.gmra.mxu0 %v2959
    %v3054 = vpop.f32.mrf.mxu0
    %v3055 = vadd.f32 %v2947, %v3054
    %v3056 = vpop.f32.mrf.mxu0
    %3057 = vmatprep.mubr.f32.mxu0 0.0
    %3058 = vmatmul.mubr.f32.gmra.mxu0 %v2962
    %v3059 = vpop.f32.mrf.mxu0
    %v3060 = vadd.f32 %v2947, %v3059
    %v3061 = vpop.f32.mrf.mxu0
    %3062 = vmatprep.mubr.f32.mxu0 0.0
    %3063 = vmatmul.mubr.f32.gmra.mxu0 %v2965
    %v3064 = vpop.f32.mrf.mxu0
    %v3065 = vadd.f32 %v2947, %v3064
    %v3066 = vpop.f32.mrf.mxu0
    %3067 = vmatprep.mubr.f32.mxu0 0.0
    %3068 = vmatmul.mubr.f32.gmra.mxu0 %v2968
    %v3069 = vpop.f32.mrf.mxu0
    %v3070 = vadd.f32 %v2947, %v3069
    %v3071 = vpop.f32.mrf.mxu0
    %3072 = vmatprep.mubr.f32.mxu0 0.0
    %3073 = vmatmul.mubr.f32.gmra.mxu0 %v2971
    %v3074 = vpop.f32.mrf.mxu0
    %v3075 = vadd.f32 %v2947, %v3074
    %v3076 = vpop.f32.mrf.mxu0
    %3077 = vdwg.mxu0
    %v3078 = vmul.f32 %v3040, %v3040
    %v3079 = vmul.f32 %v3045, %v3045
    %v3080 = vmul.f32 %v3050, %v3050
    %v3081 = vmul.f32 %v3055, %v3055
    %v3082 = vmul.f32 %v3060, %v3060
    %v3083 = vmul.f32 %v3065, %v3065
    %v3084 = vmul.f32 %v3070, %v3070
    %v3085 = vmul.f32 %v3075, %v3075
    %v3086 = vmul.f32 %v3040, %v3078
    %v3087 = vmul.f32 %v3045, %v3079
    %v3088 = vmul.f32 %v3050, %v3080
    %v3089 = vmul.f32 %v3055, %v3081
    %v3090 = vmul.f32 %v3060, %v3082
    %v3091 = vmul.f32 %v3065, %v3083
    %v3092 = vmul.f32 %v3070, %v3084
    %v3093 = vmul.f32 %v3075, %v3085
    %v3094 = vmul.f32 %v3086, 0.044715
    %v3095 = vmul.f32 %v3087, 0.044715
    %v3096 = vmul.f32 %v3088, 0.044715
    %v3097 = vmul.f32 %v3089, 0.044715
    %v3098 = vmul.f32 %v3090, 0.044715
    %v3099 = vmul.f32 %v3091, 0.044715
    %v3100 = vmul.f32 %v3092, 0.044715
    %v3101 = vmul.f32 %v3093, 0.044715
    %v3102 = vadd.f32 %v3040, %v3094
    %v3103 = vadd.f32 %v3045, %v3095
    %v3104 = vadd.f32 %v3050, %v3096
    %v3105 = vadd.f32 %v3055, %v3097
    %v3106 = vadd.f32 %v3060, %v3098
    %v3107 = vadd.f32 %v3065, %v3099
    %v3108 = vadd.f32 %v3070, %v3100
    %v3109 = vadd.f32 %v3075, %v3101
    %v3110 = vmul.f32 %v3102, 0.7978846
    %v3111 = vmul.f32 %v3103, 0.7978846
    %v3112 = vmul.f32 %v3104, 0.7978846
    %v3113 = vmul.f32 %v3105, 0.7978846
    %v3114 = vmul.f32 %v3106, 0.7978846
    %v3115 = vmul.f32 %v3107, 0.7978846
    %v3116 = vmul.f32 %v3108, 0.7978846
    %v3117 = vmul.f32 %v3109, 0.7978846
    %v3118 = vtanh.pop %v3110
    %v3119 = vtanh.pop %v3111
    %v3120 = vtanh.pop %v3112
    %v3121 = vtanh.pop %v3113
    %v3122 = vtanh.pop %v3114
    %v3123 = vtanh.pop %v3115
    %v3124 = vtanh.pop %v3116
    %v3125 = vtanh.pop %v3117
    %v3126 = vadd.f32 %v3118, 1.0
    %v3127 = vadd.f32 %v3119, 1.0
    %v3128 = vadd.f32 %v3120, 1.0
    %v3129 = vadd.f32 %v3121, 1.0
    %v3130 = vadd.f32 %v3122, 1.0
    %v3131 = vadd.f32 %v3123, 1.0
    %v3132 = vadd.f32 %v3124, 1.0
    %v3133 = vadd.f32 %v3125, 1.0
    %v3134 = vmul.f32 %v3126, 0.5
    %v3135 = vmul.f32 %v3127, 0.5
    %v3136 = vmul.f32 %v3128, 0.5
    %v3137 = vmul.f32 %v3129, 0.5
    %v3138 = vmul.f32 %v3130, 0.5
    %v3139 = vmul.f32 %v3131, 0.5
    %v3140 = vmul.f32 %v3132, 0.5
    %v3141 = vmul.f32 %v3133, 0.5
    %v3142 = vmul.f32 %v3040, %v3134
    %v3143 = vmul.f32 %v3045, %v3135
    %v3144 = vmul.f32 %v3050, %v3136
    %v3145 = vmul.f32 %v3055, %v3137
    %v3146 = vmul.f32 %v3060, %v3138
    %v3147 = vmul.f32 %v3065, %v3139
    %v3148 = vmul.f32 %v3070, %v3140
    %v3149 = vmul.f32 %v3075, %v3141
    %v3150 = vld [vmem:[%s11] sm:$0xff]
    %v3151 = vld [vmem:[%s11 + $0x8] sm:$0xff]
    %v3152 = vld [vmem:[%s11 + $0x10] sm:$0xff]
    %v3153 = vld [vmem:[%s11 + $0x18] sm:$0xff]
    %v3154 = vld [vmem:[%s11 + $0x20] sm:$0xff]
    %v3155 = vld [vmem:[%s11 + $0x28] sm:$0xff]
    %v3156 = vld [vmem:[%s11 + $0x30] sm:$0xff]
    %v3157 = vld [vmem:[%s11 + $0x38] sm:$0xff]
    %v3158 = vld [vmem:[%s11 + $0x40] sm:$0xff]
    %v3159 = vld [vmem:[%s11 + $0x48] sm:$0xff]
    %v3160 = vld [vmem:[%s11 + $0x50] sm:$0xff]
    %v3161 = vld [vmem:[%s11 + $0x58] sm:$0xff]
    %v3162 = vld [vmem:[%s11 + $0x60] sm:$0xff]
    %v3163 = vld [vmem:[%s11 + $0x68] sm:$0xff]
    %v3164 = vld [vmem:[%s11 + $0x70] sm:$0xff]
    %v3165 = vld [vmem:[%s11 + $0x78] sm:$0xff]
    %3166 = vmatprep.subr.mxu0 0.0
    %3167 = vmatpush1.msra.mxu0 %v3165
    %3168 = vmatprep.subr.mxu0 0.0
    %3169 = vmatpush1.msra.mxu0 %v3164
    %3170 = vmatprep.subr.mxu0 0.0
    %3171 = vmatpush1.msra.mxu0 %v3163
    %3172 = vmatprep.subr.mxu0 0.0
    %3173 = vmatpush1.msra.mxu0 %v3162
    %3174 = vmatprep.subr.mxu0 0.0
    %3175 = vmatpush1.msra.mxu0 %v3161
    %3176 = vmatprep.subr.mxu0 0.0
    %3177 = vmatpush1.msra.mxu0 %v3160
    %3178 = vmatprep.subr.mxu0 0.0
    %3179 = vmatpush1.msra.mxu0 %v3159
    %3180 = vmatprep.subr.mxu0 0.0
    %3181 = vmatpush1.msra.mxu0 %v3158
    %3182 = vmatprep.subr.mxu0 0.0
    %3183 = vmatpush1.msra.mxu0 %v3157
    %3184 = vmatprep.subr.mxu0 0.0
    %3185 = vmatpush1.msra.mxu0 %v3156
    %3186 = vmatprep.subr.mxu0 0.0
    %3187 = vmatpush1.msra.mxu0 %v3155
    %3188 = vmatprep.subr.mxu0 0.0
    %3189 = vmatpush1.msra.mxu0 %v3154
    %3190 = vmatprep.subr.mxu0 0.0
    %3191 = vmatpush1.msra.mxu0 %v3153
    %3192 = vmatprep.subr.mxu0 0.0
    %3193 = vmatpush1.msra.mxu0 %v3152
    %3194 = vmatprep.subr.mxu0 0.0
    %3195 = vmatpush1.msra.mxu0 %v3151
    %3196 = vmatprep.subr.mxu0 0.0
    %3197 = vmatpush1.msra.mxu0 %v3150
    %3198 = vmatprep.subr.mxu0 0.0
    %3199 = vmatpush2.msra.mxu0 0.0
    %3200 = vmatprep.subr.mxu0 0.0
    %3201 = vmatpush2.msra.mxu0 0.0
    %3202 = vmatprep.subr.mxu0 0.0
    %3203 = vmatpush2.msra.mxu0 0.0
    %3204 = vmatprep.subr.mxu0 0.0
    %3205 = vmatpush2.msra.mxu0 0.0
    %3206 = vmatprep.subr.mxu0 0.0
    %3207 = vmatpush2.msra.mxu0 0.0
    %3208 = vmatprep.subr.mxu0 0.0
    %3209 = vmatpush2.msra.mxu0 0.0
    %3210 = vmatprep.subr.mxu0 0.0
    %3211 = vmatpush2.msra.mxu0 0.0
    %3212 = vmatprep.subr.mxu0 0.0
    %3213 = vmatpush2.msra.mxu0 0.0
    %3214 = vmatprep.subr.mxu0 0.0
    %3215 = vmatpush2.msra.mxu0 0.0
    %3216 = vmatprep.subr.mxu0 0.0
    %3217 = vmatpush2.msra.mxu0 0.0
    %3218 = vmatprep.subr.mxu0 0.0
    %3219 = vmatpush2.msra.mxu0 0.0
    %3220 = vmatprep.subr.mxu0 0.0
    %3221 = vmatpush2.msra.mxu0 0.0
    %3222 = vmatprep.subr.mxu0 0.0
    %3223 = vmatpush2.msra.mxu0 0.0
    %3224 = vmatprep.subr.mxu0 0.0
    %3225 = vmatpush2.msra.mxu0 0.0
    %3226 = vmatprep.subr.mxu0 0.0
    %3227 = vmatpush2.msra.mxu0 0.0
    %3228 = vmatprep.subr.mxu0 0.0
    %3229 = vmatpush2.msra.mxu0 0.0
    %3230 = vmatprep.mubr.f32.mxu0 0.0
    %3231 = vmatmul.mubr.f32.gmra.mxu0 %v3142
    %v3232 = vpop.f32.mrf.mxu0
    %v3233 = vadd.f32 0.0, %v3232
    %v3234 = vpop.f32.mrf.mxu0
    %3235 = vmatprep.mubr.f32.mxu0 0.0
    %3236 = vmatmul.mubr.f32.gmra.mxu0 %v3143
    %v3237 = vpop.f32.mrf.mxu0
    %v3238 = vadd.f32 0.0, %v3237
    %v3239 = vpop.f32.mrf.mxu0
    %3240 = vmatprep.mubr.f32.mxu0 0.0
    %3241 = vmatmul.mubr.f32.gmra.mxu0 %v3144
    %v3242 = vpop.f32.mrf.mxu0
    %v3243 = vadd.f32 0.0, %v3242
    %v3244 = vpop.f32.mrf.mxu0
    %3245 = vmatprep.mubr.f32.mxu0 0.0
    %3246 = vmatmul.mubr.f32.gmra.mxu0 %v3145
    %v3247 = vpop.f32.mrf.mxu0
    %v3248 = vadd.f32 0.0, %v3247
    %v3249 = vpop.f32.mrf.mxu0
    %3250 = vmatprep.mubr.f32.mxu0 0.0
    %3251 = vmatmul.mubr.f32.gmra.mxu0 %v3146
    %v3252 = vpop.f32.mrf.mxu0
    %v3253 = vadd.f32 0.0, %v3252
    %v3254 = vpop.f32.mrf.mxu0
    %3255 = vmatprep.mubr.f32.mxu0 0.0
    %3256 = vmatmul.mubr.f32.gmra.mxu0 %v3147
    %v3257 = vpop.f32.mrf.mxu0
    %v3258 = vadd.f32 0.0, %v3257
    %v3259 = vpop.f32.mrf.mxu0
    %3260 = vmatprep.mubr.f32.mxu0 0.0
    %3261 = vmatmul.mubr.f32.gmra.mxu0 %v3148
    %v3262 = vpop.f32.mrf.mxu0
    %v3263 = vadd.f32 0.0, %v3262
    %v3264 = vpop.f32.mrf.mxu0
    %3265 = vmatprep.mubr.f32.mxu0 0.0
    %3266 = vmatmul.mubr.f32.gmra.mxu0 %v3149
    %v3267 = vpop.f32.mrf.mxu0
    %v3268 = vadd.f32 0.0, %v3267
    %v3269 = vpop.f32.mrf.mxu0
    %3270 = vdwg.mxu0
    %v3271 = vadd.f32 %v2796, %v3233
    %v3272 = vadd.f32 %v2797, %v3238
    %v3273 = vadd.f32 %v2798, %v3243
    %v3274 = vadd.f32 %v2799, %v3248
    %v3275 = vadd.f32 %v2800, %v3253
    %v3276 = vadd.f32 %v2801, %v3258
    %v3277 = vadd.f32 %v2802, %v3263
    %v3278 = vadd.f32 %v2803, %v3268
    %v3279 = vld [vmem:[%s12] sm:$0x1]
    %v3281 = vlaneseq
    %v3282 = vshrl.u32 %v3281, 7
    %v3283 = vsub.s32 0, %v3282
    %v3284 = vrot.slane %v3279, %v3283
    %v3286 = vadd.f32 %v3271, %v3284
    %v3287 = vadd.f32 %v3272, %v3284
    %v3288 = vadd.f32 %v3273, %v3284
    %v3289 = vadd.f32 %v3274, %v3284
    %v3290 = vadd.f32 %v3275, %v3284
    %v3291 = vadd.f32 %v3276, %v3284
    %v3292 = vadd.f32 %v3277, %v3284
    %v3293 = vadd.f32 %v3278, %v3284
    %s3294 = scalar_lea.vmem %s2, 1
    %v3295 = vld [vmem:[%s3294] sm:$0x1]
    %s3296 = scalar_lea.vmem %s3, 1
    %v3297 = vld [vmem:[%s3296] sm:$0x1]
    %v3298 = vsel %vm106, %v3286, 0.0
    %3299 = vadd.xlane.f32.xlu0 %v3298
    %v3300 = vpop.xlane.xlu0 %3299
    %v3301 = vsel %vm106, %v3287, 0.0
    %3302 = vadd.xlane.f32.xlu0 %v3301
    %v3303 = vpop.xlane.xlu0 %3302
    %v3304 = vsel %vm106, %v3288, 0.0
    %3305 = vadd.xlane.f32.xlu0 %v3304
    %v3306 = vpop.xlane.xlu0 %3305
    %v3307 = vsel %vm106, %v3289, 0.0
    %3308 = vadd.xlane.f32.xlu0 %v3307
    %v3309 = vpop.xlane.xlu0 %3308
    %v3310 = vsel %vm106, %v3290, 0.0
    %3311 = vadd.xlane.f32.xlu0 %v3310
    %v3312 = vpop.xlane.xlu0 %3311
    %v3313 = vsel %vm106, %v3291, 0.0
    %3314 = vadd.xlane.f32.xlu0 %v3313
    %v3315 = vpop.xlane.xlu0 %3314
    %v3316 = vsel %vm106, %v3292, 0.0
    %3317 = vadd.xlane.f32.xlu0 %v3316
    %v3318 = vpop.xlane.xlu0 %3317
    %v3319 = vsel %vm106, %v3293, 0.0
    %3320 = vadd.xlane.f32.xlu0 %v3319
    %v3321 = vpop.xlane.xlu0 %3320
    %v3322 = vmul.f32 %v3300, %v131
    %v3323 = vmul.f32 %v3303, %v131
    %v3324 = vmul.f32 %v3306, %v131
    %v3325 = vmul.f32 %v3309, %v131
    %v3326 = vmul.f32 %v3312, %v131
    %v3327 = vmul.f32 %v3315, %v131
    %v3328 = vmul.f32 %v3318, %v131
    %v3329 = vmul.f32 %v3321, %v131
    %v3330 = vsub.f32 %v3286, %v3322
    %v3331 = vsub.f32 %v3287, %v3323
    %v3332 = vsub.f32 %v3288, %v3324
    %v3333 = vsub.f32 %v3289, %v3325
    %v3334 = vsub.f32 %v3290, %v3326
    %v3335 = vsub.f32 %v3291, %v3327
    %v3336 = vsub.f32 %v3292, %v3328
    %v3337 = vsub.f32 %v3293, %v3329
    %v3338 = vmul.f32 %v3330, %v3330
    %v3339 = vmul.f32 %v3331, %v3331
    %v3340 = vmul.f32 %v3332, %v3332
    %v3341 = vmul.f32 %v3333, %v3333
    %v3342 = vmul.f32 %v3334, %v3334
    %v3343 = vmul.f32 %v3335, %v3335
    %v3344 = vmul.f32 %v3336, %v3336
    %v3345 = vmul.f32 %v3337, %v3337
    %v3346 = vsel %vm106, %v3338, 0.0
    %3347 = vadd.xlane.f32.xlu0 %v3346
    %v3348 = vpop.xlane.xlu0 %3347
    %v3349 = vsel %vm106, %v3339, 0.0
    %3350 = vadd.xlane.f32.xlu0 %v3349
    %v3351 = vpop.xlane.xlu0 %3350
    %v3352 = vsel %vm106, %v3340, 0.0
    %3353 = vadd.xlane.f32.xlu0 %v3352
    %v3354 = vpop.xlane.xlu0 %3353
    %v3355 = vsel %vm106, %v3341, 0.0
    %3356 = vadd.xlane.f32.xlu0 %v3355
    %v3357 = vpop.xlane.xlu0 %3356
    %v3358 = vsel %vm106, %v3342, 0.0
    %3359 = vadd.xlane.f32.xlu0 %v3358
    %v3360 = vpop.xlane.xlu0 %3359
    %v3361 = vsel %vm106, %v3343, 0.0
    %3362 = vadd.xlane.f32.xlu0 %v3361
    %v3363 = vpop.xlane.xlu0 %3362
    %v3364 = vsel %vm106, %v3344, 0.0
    %3365 = vadd.xlane.f32.xlu0 %v3364
    %v3366 = vpop.xlane.xlu0 %3365
    %v3367 = vsel %vm106, %v3345, 0.0
    %3368 = vadd.xlane.f32.xlu0 %v3367
    %v3369 = vpop.xlane.xlu0 %3368
    %v3370 = vmul.f32 %v3348, %v131
    %v3371 = vmul.f32 %v3351, %v131
    %v3372 = vmul.f32 %v3354, %v131
    %v3373 = vmul.f32 %v3357, %v131
    %v3374 = vmul.f32 %v3360, %v131
    %v3375 = vmul.f32 %v3363, %v131
    %v3376 = vmul.f32 %v3366, %v131
    %v3377 = vmul.f32 %v3369, %v131
    %v3378 = vadd.f32 %v3370, 1e-05
    %v3379 = vadd.f32 %v3371, 1e-05
    %v3380 = vadd.f32 %v3372, 1e-05
    %v3381 = vadd.f32 %v3373, 1e-05
    %v3382 = vadd.f32 %v3374, 1e-05
    %v3383 = vadd.f32 %v3375, 1e-05
    %v3384 = vadd.f32 %v3376, 1e-05
    %v3385 = vadd.f32 %v3377, 1e-05
    %v3386 = vrsqrt.pop %v3378
    %v3387 = vrsqrt.pop %v3379
    %v3388 = vrsqrt.pop %v3380
    %v3389 = vrsqrt.pop %v3381
    %v3390 = vrsqrt.pop %v3382
    %v3391 = vrsqrt.pop %v3383
    %v3392 = vrsqrt.pop %v3384
    %v3393 = vrsqrt.pop %v3385
    %v3394 = vmul.f32 %v3330, %v3386
    %v3395 = vmul.f32 %v3331, %v3387
    %v3396 = vmul.f32 %v3332, %v3388
    %v3397 = vmul.f32 %v3333, %v3389
    %v3398 = vmul.f32 %v3334, %v3390
    %v3399 = vmul.f32 %v3335, %v3391
    %v3400 = vmul.f32 %v3336, %v3392
    %v3401 = vmul.f32 %v3337, %v3393
    %v3403 = vlaneseq
    %v3404 = vshrl.u32 %v3403, 7
    %v3405 = vsub.s32 0, %v3404
    %v3406 = vrot.slane %v3295, %v3405
    %v3408 = vmul.f32 %v3394, %v3406
    %v3409 = vmul.f32 %v3395, %v3406
    %v3410 = vmul.f32 %v3396, %v3406
    %v3411 = vmul.f32 %v3397, %v3406
    %v3412 = vmul.f32 %v3398, %v3406
    %v3413 = vmul.f32 %v3399, %v3406
    %v3414 = vmul.f32 %v3400, %v3406
    %v3415 = vmul.f32 %v3401, %v3406
    %v3417 = vlaneseq
    %v3418 = vshrl.u32 %v3417, 7
    %v3419 = vsub.s32 0, %v3418
    %v3420 = vrot.slane %v3297, %v3419
    %v3422 = vadd.f32 %v3408, %v3420
    %v3423 = vadd.f32 %v3409, %v3420
    %v3424 = vadd.f32 %v3410, %v3420
    %v3425 = vadd.f32 %v3411, %v3420
    %v3426 = vadd.f32 %v3412, %v3420
    %v3427 = vadd.f32 %v3413, %v3420
    %v3428 = vadd.f32 %v3414, %v3420
    %v3429 = vadd.f32 %v3415, %v3420
    %s3430 = scalar_lea.vmem %s4, 32
    %v3431 = vld [vmem:[%s3430] sm:$0xff]
    %v3432 = vld [vmem:[%s3430 + $0x8] sm:$0xff]
    %v3433 = vld [vmem:[%s3430 + $0x10] sm:$0xff]
    %v3434 = vld [vmem:[%s3430 + $0x18] sm:$0xff]
    %v3436 = vsel %vm106, %v3422, 0
    %v3439 = vsel %vm106, %v3423, 0
    %v3442 = vsel %vm106, %v3424, 0
    %v3445 = vsel %vm106, %v3425, 0
    %v3448 = vsel %vm106, %v3426, 0
    %v3451 = vsel %vm106, %v3427, 0
    %v3454 = vsel %vm106, %v3428, 0
    %v3457 = vsel %vm106, %v3429, 0
    %3459 = vmatprep.subr.mxu0 0.0
    %3460 = vmatpush1.msra.mxu0 0.0
    %3461 = vmatprep.subr.mxu0 0.0
    %3462 = vmatpush1.msra.mxu0 0.0
    %3463 = vmatprep.subr.mxu0 0.0
    %3464 = vmatpush1.msra.mxu0 0.0
    %3465 = vmatprep.subr.mxu0 0.0
    %3466 = vmatpush1.msra.mxu0 0.0
    %3467 = vmatprep.subr.mxu0 0.0
    %3468 = vmatpush1.msra.mxu0 0.0
    %3469 = vmatprep.subr.mxu0 0.0
    %3470 = vmatpush1.msra.mxu0 0.0
    %3471 = vmatprep.subr.mxu0 0.0
    %3472 = vmatpush1.msra.mxu0 0.0
    %3473 = vmatprep.subr.mxu0 0.0
    %3474 = vmatpush1.msra.mxu0 0.0
    %3475 = vmatprep.subr.mxu0 0.0
    %3476 = vmatpush1.msra.mxu0 0.0
    %3477 = vmatprep.subr.mxu0 0.0
    %3478 = vmatpush1.msra.mxu0 0.0
    %3479 = vmatprep.subr.mxu0 0.0
    %3480 = vmatpush1.msra.mxu0 0.0
    %3481 = vmatprep.subr.mxu0 0.0
    %3482 = vmatpush1.msra.mxu0 0.0
    %3483 = vmatprep.subr.mxu0 0.0
    %3484 = vmatpush1.msra.mxu0 %v3434
    %3485 = vmatprep.subr.mxu0 0.0
    %3486 = vmatpush1.msra.mxu0 %v3433
    %3487 = vmatprep.subr.mxu0 0.0
    %3488 = vmatpush1.msra.mxu0 %v3432
    %3489 = vmatprep.subr.mxu0 0.0
    %3490 = vmatpush1.msra.mxu0 %v3431
    %3491 = vmatprep.subr.mxu0 0.0
    %3492 = vmatpush2.msra.mxu0 0.0
    %3493 = vmatprep.subr.mxu0 0.0
    %3494 = vmatpush2.msra.mxu0 0.0
    %3495 = vmatprep.subr.mxu0 0.0
    %3496 = vmatpush2.msra.mxu0 0.0
    %3497 = vmatprep.subr.mxu0 0.0
    %3498 = vmatpush2.msra.mxu0 0.0
    %3499 = vmatprep.subr.mxu0 0.0
    %3500 = vmatpush2.msra.mxu0 0.0
    %3501 = vmatprep.subr.mxu0 0.0
    %3502 = vmatpush2.msra.mxu0 0.0
    %3503 = vmatprep.subr.mxu0 0.0
    %3504 = vmatpush2.msra.mxu0 0.0
    %3505 = vmatprep.subr.mxu0 0.0
    %3506 = vmatpush2.msra.mxu0 0.0
    %3507 = vmatprep.subr.mxu0 0.0
    %3508 = vmatpush2.msra.mxu0 0.0
    %3509 = vmatprep.subr.mxu0 0.0
    %3510 = vmatpush2.msra.mxu0 0.0
    %3511 = vmatprep.subr.mxu0 0.0
    %3512 = vmatpush2.msra.mxu0 0.0
    %3513 = vmatprep.subr.mxu0 0.0
    %3514 = vmatpush2.msra.mxu0 0.0
    %3515 = vmatprep.subr.mxu0 0.0
    %3516 = vmatpush2.msra.mxu0 0.0
    %3517 = vmatprep.subr.mxu0 0.0
    %3518 = vmatpush2.msra.mxu0 0.0
    %3519 = vmatprep.subr.mxu0 0.0
    %3520 = vmatpush2.msra.mxu0 0.0
    %3521 = vmatprep.subr.mxu0 0.0
    %3522 = vmatpush2.msra.mxu0 0.0
    %3523 = vmatprep.mubr.f32.mxu0 0.0
    %3524 = vmatmul.mubr.f32.gmra.mxu0 %v3436
    %v3525 = vpop.f32.mrf.mxu0
    %v3526 = vadd.f32 0.0, %v3525
    %v3527 = vpop.f32.mrf.mxu0
    %3528 = vmatprep.mubr.f32.mxu0 0.0
    %3529 = vmatmul.mubr.f32.gmra.mxu0 %v3439
    %v3530 = vpop.f32.mrf.mxu0
    %v3531 = vadd.f32 0.0, %v3530
    %v3532 = vpop.f32.mrf.mxu0
    %3533 = vmatprep.mubr.f32.mxu0 0.0
    %3534 = vmatmul.mubr.f32.gmra.mxu0 %v3442
    %v3535 = vpop.f32.mrf.mxu0
    %v3536 = vadd.f32 0.0, %v3535
    %v3537 = vpop.f32.mrf.mxu0
    %3538 = vmatprep.mubr.f32.mxu0 0.0
    %3539 = vmatmul.mubr.f32.gmra.mxu0 %v3445
    %v3540 = vpop.f32.mrf.mxu0
    %v3541 = vadd.f32 0.0, %v3540
    %v3542 = vpop.f32.mrf.mxu0
    %3543 = vmatprep.mubr.f32.mxu0 0.0
    %3544 = vmatmul.mubr.f32.gmra.mxu0 %v3448
    %v3545 = vpop.f32.mrf.mxu0
    %v3546 = vadd.f32 0.0, %v3545
    %v3547 = vpop.f32.mrf.mxu0
    %3548 = vmatprep.mubr.f32.mxu0 0.0
    %3549 = vmatmul.mubr.f32.gmra.mxu0 %v3451
    %v3550 = vpop.f32.mrf.mxu0
    %v3551 = vadd.f32 0.0, %v3550
    %v3552 = vpop.f32.mrf.mxu0
    %3553 = vmatprep.mubr.f32.mxu0 0.0
    %3554 = vmatmul.mubr.f32.gmra.mxu0 %v3454
    %v3555 = vpop.f32.mrf.mxu0
    %v3556 = vadd.f32 0.0, %v3555
    %v3557 = vpop.f32.mrf.mxu0
    %3558 = vmatprep.mubr.f32.mxu0 0.0
    %3559 = vmatmul.mubr.f32.gmra.mxu0 %v3457
    %v3560 = vpop.f32.mrf.mxu0
    %v3561 = vadd.f32 0.0, %v3560
    %v3562 = vpop.f32.mrf.mxu0
    %3563 = vdwg.mxu0
    %3568 = vrot.lane.b32.xlu0 %v3526, 96
    %v3569 = vpop.permute.xlu0 %3568
    %3570 = vrot.lane.b32.xlu0 %v3531, 96
    %v3571 = vpop.permute.xlu0 %3570
    %3572 = vrot.lane.b32.xlu0 %v3536, 96
    %v3573 = vpop.permute.xlu0 %3572
    %3574 = vrot.lane.b32.xlu0 %v3541, 96
    %v3575 = vpop.permute.xlu0 %3574
    %v3576 = vsel %vm385, %v3526, 0
    %v3578 = vsel %vm385, %v3531, 0
    %v3580 = vsel %vm385, %v3536, 0
    %v3582 = vsel %vm385, %v3541, 0
    %v3584 = vsel %vm385, %v3569, 0
    %v3586 = vsel %vm385, %v3571, 0
    %v3588 = vsel %vm385, %v3573, 0
    %v3590 = vsel %vm385, %v3575, 0
    %3592 = vmatprep.subr.mxu0 0.0
    %3593 = vmatpush1.xpose.msra.mxu0 0.0
    %3594 = vmatprep.subr.mxu0 0.0
    %3595 = vmatpush1.xpose.msra.mxu0 0.0
    %3596 = vmatprep.subr.mxu0 0.0
    %3597 = vmatpush1.xpose.msra.mxu0 0.0
    %3598 = vmatprep.subr.mxu0 0.0
    %3599 = vmatpush1.xpose.msra.mxu0 0.0
    %3600 = vmatprep.subr.mxu0 0.0
    %3601 = vmatpush1.xpose.msra.mxu0 0.0
    %3602 = vmatprep.subr.mxu0 0.0
    %3603 = vmatpush1.xpose.msra.mxu0 0.0
    %3604 = vmatprep.subr.mxu0 0.0
    %3605 = vmatpush1.xpose.msra.mxu0 0.0
    %3606 = vmatprep.subr.mxu0 0.0
    %3607 = vmatpush1.xpose.msra.mxu0 0.0
    %3608 = vmatprep.subr.mxu0 0.0
    %3609 = vmatpush1.xpose.msra.mxu0 0.0
    %3610 = vmatprep.subr.mxu0 0.0
    %3611 = vmatpush1.xpose.msra.mxu0 0.0
    %3612 = vmatprep.subr.mxu0 0.0
    %3613 = vmatpush1.xpose.msra.mxu0 0.0
    %3614 = vmatprep.subr.mxu0 0.0
    %3615 = vmatpush1.xpose.msra.mxu0 0.0
    %3616 = vmatprep.subr.mxu0 0.0
    %3617 = vmatpush1.xpose.msra.mxu0 %v3590
    %3618 = vmatprep.subr.mxu0 0.0
    %3619 = vmatpush1.xpose.msra.mxu0 %v3588
    %3620 = vmatprep.subr.mxu0 0.0
    %3621 = vmatpush1.xpose.msra.mxu0 %v3586
    %3622 = vmatprep.subr.mxu0 0.0
    %3623 = vmatpush1.xpose.msra.mxu0 %v3584
    %3624 = vmatprep.subr.mxu0 0.0
    %3625 = vmatpush2.xpose.msra.mxu0 0.0
    %3626 = vmatprep.subr.mxu0 0.0
    %3627 = vmatpush2.xpose.msra.mxu0 0.0
    %3628 = vmatprep.subr.mxu0 0.0
    %3629 = vmatpush2.xpose.msra.mxu0 0.0
    %3630 = vmatprep.subr.mxu0 0.0
    %3631 = vmatpush2.xpose.msra.mxu0 0.0
    %3632 = vmatprep.subr.mxu0 0.0
    %3633 = vmatpush2.xpose.msra.mxu0 0.0
    %3634 = vmatprep.subr.mxu0 0.0
    %3635 = vmatpush2.xpose.msra.mxu0 0.0
    %3636 = vmatprep.subr.mxu0 0.0
    %3637 = vmatpush2.xpose.msra.mxu0 0.0
    %3638 = vmatprep.subr.mxu0 0.0
    %3639 = vmatpush2.xpose.msra.mxu0 0.0
    %3640 = vmatprep.subr.mxu0 0.0
    %3641 = vmatpush2.xpose.msra.mxu0 0.0
    %3642 = vmatprep.subr.mxu0 0.0
    %3643 = vmatpush2.xpose.msra.mxu0 0.0
    %3644 = vmatprep.subr.mxu0 0.0
    %3645 = vmatpush2.xpose.msra.mxu0 0.0
    %3646 = vmatprep.subr.mxu0 0.0
    %3647 = vmatpush2.xpose.msra.mxu0 0.0
    %3648 = vmatprep.subr.mxu0 0.0
    %3649 = vmatpush2.xpose.msra.mxu0 0.0
    %3650 = vmatprep.subr.mxu0 0.0
    %3651 = vmatpush2.xpose.msra.mxu0 0.0
    %3652 = vmatprep.subr.mxu0 0.0
    %3653 = vmatpush2.xpose.msra.mxu0 0.0
    %3654 = vmatprep.subr.mxu0 0.0
    %3655 = vmatpush2.xpose.msra.mxu0 0.0
    %3656 = vmatprep.mubr.f32.mxu0 0.0
    %3657 = vmatmul.mubr.f32.gmra.mxu0 %v3576
    %v3658 = vpop.f32.mrf.mxu0
    %v3659 = vadd.f32 0.0, %v3658
    %v3660 = vpop.f32.mrf.mxu0
    %3661 = vmatprep.mubr.f32.mxu0 0.0
    %3662 = vmatmul.mubr.f32.gmra.mxu0 %v3578
    %v3663 = vpop.f32.mrf.mxu0
    %v3664 = vadd.f32 0.0, %v3663
    %v3665 = vpop.f32.mrf.mxu0
    %3666 = vmatprep.mubr.f32.mxu0 0.0
    %3667 = vmatmul.mubr.f32.gmra.mxu0 %v3580
    %v3668 = vpop.f32.mrf.mxu0
    %v3669 = vadd.f32 0.0, %v3668
    %v3670 = vpop.f32.mrf.mxu0
    %3671 = vmatprep.mubr.f32.mxu0 0.0
    %3672 = vmatmul.mubr.f32.gmra.mxu0 %v3582
    %v3673 = vpop.f32.mrf.mxu0
    %v3674 = vadd.f32 0.0, %v3673
    %v3675 = vpop.f32.mrf.mxu0
    %3676 = vdwg.mxu0
    %3681 = vrot.lane.b32.xlu0 %v3546, 96
    %v3682 = vpop.permute.xlu0 %3681
    %3683 = vrot.lane.b32.xlu0 %v3551, 96
    %v3684 = vpop.permute.xlu0 %3683
    %3685 = vrot.lane.b32.xlu0 %v3556, 96
    %v3686 = vpop.permute.xlu0 %3685
    %3687 = vrot.lane.b32.xlu0 %v3561, 96
    %v3688 = vpop.permute.xlu0 %3687
    %v3689 = vsel %vm385, %v3546, 0
    %v3691 = vsel %vm385, %v3551, 0
    %v3693 = vsel %vm385, %v3556, 0
    %v3695 = vsel %vm385, %v3561, 0
    %v3697 = vsel %vm385, %v3682, 0
    %v3699 = vsel %vm385, %v3684, 0
    %v3701 = vsel %vm385, %v3686, 0
    %v3703 = vsel %vm385, %v3688, 0
    %3705 = vmatprep.subr.mxu0 0.0
    %3706 = vmatpush1.xpose.msra.mxu0 0.0
    %3707 = vmatprep.subr.mxu0 0.0
    %3708 = vmatpush1.xpose.msra.mxu0 0.0
    %3709 = vmatprep.subr.mxu0 0.0
    %3710 = vmatpush1.xpose.msra.mxu0 0.0
    %3711 = vmatprep.subr.mxu0 0.0
    %3712 = vmatpush1.xpose.msra.mxu0 0.0
    %3713 = vmatprep.subr.mxu0 0.0
    %3714 = vmatpush1.xpose.msra.mxu0 0.0
    %3715 = vmatprep.subr.mxu0 0.0
    %3716 = vmatpush1.xpose.msra.mxu0 0.0
    %3717 = vmatprep.subr.mxu0 0.0
    %3718 = vmatpush1.xpose.msra.mxu0 0.0
    %3719 = vmatprep.subr.mxu0 0.0
    %3720 = vmatpush1.xpose.msra.mxu0 0.0
    %3721 = vmatprep.subr.mxu0 0.0
    %3722 = vmatpush1.xpose.msra.mxu0 0.0
    %3723 = vmatprep.subr.mxu0 0.0
    %3724 = vmatpush1.xpose.msra.mxu0 0.0
    %3725 = vmatprep.subr.mxu0 0.0
    %3726 = vmatpush1.xpose.msra.mxu0 0.0
    %3727 = vmatprep.subr.mxu0 0.0
    %3728 = vmatpush1.xpose.msra.mxu0 0.0
    %3729 = vmatprep.subr.mxu0 0.0
    %3730 = vmatpush1.xpose.msra.mxu0 %v3703
    %3731 = vmatprep.subr.mxu0 0.0
    %3732 = vmatpush1.xpose.msra.mxu0 %v3701
    %3733 = vmatprep.subr.mxu0 0.0
    %3734 = vmatpush1.xpose.msra.mxu0 %v3699
    %3735 = vmatprep.subr.mxu0 0.0
    %3736 = vmatpush1.xpose.msra.mxu0 %v3697
    %3737 = vmatprep.subr.mxu0 0.0
    %3738 = vmatpush2.xpose.msra.mxu0 0.0
    %3739 = vmatprep.subr.mxu0 0.0
    %3740 = vmatpush2.xpose.msra.mxu0 0.0
    %3741 = vmatprep.subr.mxu0 0.0
    %3742 = vmatpush2.xpose.msra.mxu0 0.0
    %3743 = vmatprep.subr.mxu0 0.0
    %3744 = vmatpush2.xpose.msra.mxu0 0.0
    %3745 = vmatprep.subr.mxu0 0.0
    %3746 = vmatpush2.xpose.msra.mxu0 0.0
    %3747 = vmatprep.subr.mxu0 0.0
    %3748 = vmatpush2.xpose.msra.mxu0 0.0
    %3749 = vmatprep.subr.mxu0 0.0
    %3750 = vmatpush2.xpose.msra.mxu0 0.0
    %3751 = vmatprep.subr.mxu0 0.0
    %3752 = vmatpush2.xpose.msra.mxu0 0.0
    %3753 = vmatprep.subr.mxu0 0.0
    %3754 = vmatpush2.xpose.msra.mxu0 0.0
    %3755 = vmatprep.subr.mxu0 0.0
    %3756 = vmatpush2.xpose.msra.mxu0 0.0
    %3757 = vmatprep.subr.mxu0 0.0
    %3758 = vmatpush2.xpose.msra.mxu0 0.0
    %3759 = vmatprep.subr.mxu0 0.0
    %3760 = vmatpush2.xpose.msra.mxu0 0.0
    %3761 = vmatprep.subr.mxu0 0.0
    %3762 = vmatpush2.xpose.msra.mxu0 0.0
    %3763 = vmatprep.subr.mxu0 0.0
    %3764 = vmatpush2.xpose.msra.mxu0 0.0
    %3765 = vmatprep.subr.mxu0 0.0
    %3766 = vmatpush2.xpose.msra.mxu0 0.0
    %3767 = vmatprep.subr.mxu0 0.0
    %3768 = vmatpush2.xpose.msra.mxu0 0.0
    %3769 = vmatprep.mubr.f32.mxu0 0.0
    %3770 = vmatmul.mubr.f32.gmra.mxu0 %v3689
    %v3771 = vpop.f32.mrf.mxu0
    %v3772 = vadd.f32 0.0, %v3771
    %v3773 = vpop.f32.mrf.mxu0
    %3774 = vmatprep.mubr.f32.mxu0 0.0
    %3775 = vmatmul.mubr.f32.gmra.mxu0 %v3691
    %v3776 = vpop.f32.mrf.mxu0
    %v3777 = vadd.f32 0.0, %v3776
    %v3778 = vpop.f32.mrf.mxu0
    %3779 = vmatprep.mubr.f32.mxu0 0.0
    %3780 = vmatmul.mubr.f32.gmra.mxu0 %v3693
    %v3781 = vpop.f32.mrf.mxu0
    %v3782 = vadd.f32 0.0, %v3781
    %v3783 = vpop.f32.mrf.mxu0
    %3784 = vmatprep.mubr.f32.mxu0 0.0
    %3785 = vmatmul.mubr.f32.gmra.mxu0 %v3695
    %v3786 = vpop.f32.mrf.mxu0
    %v3787 = vadd.f32 0.0, %v3786
    %v3788 = vpop.f32.mrf.mxu0
    %3789 = vdwg.mxu0
    %v3790 = vsel %vm106, %v3659, -inf
    %3791 = vmax.xlane.f32.xlu0 %v3790
    %v3792 = vpop.xlane.xlu0 %3791
    %v3793 = vsel %vm106, %v3664, -inf
    %3794 = vmax.xlane.f32.xlu0 %v3793
    %v3795 = vpop.xlane.xlu0 %3794
    %v3796 = vsel %vm106, %v3669, -inf
    %3797 = vmax.xlane.f32.xlu0 %v3796
    %v3798 = vpop.xlane.xlu0 %3797
    %v3799 = vsel %vm106, %v3674, -inf
    %3800 = vmax.xlane.f32.xlu0 %v3799
    %v3801 = vpop.xlane.xlu0 %3800
    %v3802 = vsel %vm106, %v3772, -inf
    %3803 = vmax.xlane.f32.xlu0 %v3802
    %v3804 = vpop.xlane.xlu0 %3803
    %v3805 = vsel %vm106, %v3777, -inf
    %3806 = vmax.xlane.f32.xlu0 %v3805
    %v3807 = vpop.xlane.xlu0 %3806
    %v3808 = vsel %vm106, %v3782, -inf
    %3809 = vmax.xlane.f32.xlu0 %v3808
    %v3810 = vpop.xlane.xlu0 %3809
    %v3811 = vsel %vm106, %v3787, -inf
    %3812 = vmax.xlane.f32.xlu0 %v3811
    %v3813 = vpop.xlane.xlu0 %3812
    %v3814 = vsub.f32 %v3659, %v3792
    %v3815 = vsub.f32 %v3664, %v3795
    %v3816 = vsub.f32 %v3669, %v3798
    %v3817 = vsub.f32 %v3674, %v3801
    %v3818 = vsub.f32 %v3772, %v3804
    %v3819 = vsub.f32 %v3777, %v3807
    %v3820 = vsub.f32 %v3782, %v3810
    %v3821 = vsub.f32 %v3787, %v3813
    %v3822 = vmul.f32 %v3814, 1.442695
    %v3823 = vpow.pop %v3822
    %v3824 = vmul.f32 %v3815, 1.442695
    %v3825 = vpow.pop %v3824
    %v3826 = vmul.f32 %v3816, 1.442695
    %v3827 = vpow.pop %v3826
    %v3828 = vmul.f32 %v3817, 1.442695
    %v3829 = vpow.pop %v3828
    %v3830 = vmul.f32 %v3818, 1.442695
    %v3831 = vpow.pop %v3830
    %v3832 = vmul.f32 %v3819, 1.442695
    %v3833 = vpow.pop %v3832
    %v3834 = vmul.f32 %v3820, 1.442695
    %v3835 = vpow.pop %v3834
    %v3836 = vmul.f32 %v3821, 1.442695
    %v3837 = vpow.pop %v3836
    %v3838 = vsel %vm106, %v3823, 0.0
    %3839 = vadd.xlane.f32.xlu0 %v3838
    %v3840 = vpop.xlane.xlu0 %3839
    %v3841 = vsel %vm106, %v3825, 0.0
    %3842 = vadd.xlane.f32.xlu0 %v3841
    %v3843 = vpop.xlane.xlu0 %3842
    %v3844 = vsel %vm106, %v3827, 0.0
    %3845 = vadd.xlane.f32.xlu0 %v3844
    %v3846 = vpop.xlane.xlu0 %3845
    %v3847 = vsel %vm106, %v3829, 0.0
    %3848 = vadd.xlane.f32.xlu0 %v3847
    %v3849 = vpop.xlane.xlu0 %3848
    %v3850 = vsel %vm106, %v3831, 0.0
    %3851 = vadd.xlane.f32.xlu0 %v3850
    %v3852 = vpop.xlane.xlu0 %3851
    %v3853 = vsel %vm106, %v3833, 0.0
    %3854 = vadd.xlane.f32.xlu0 %v3853
    %v3855 = vpop.xlane.xlu0 %3854
    %v3856 = vsel %vm106, %v3835, 0.0
    %3857 = vadd.xlane.f32.xlu0 %v3856
    %v3858 = vpop.xlane.xlu0 %3857
    %v3859 = vsel %vm106, %v3837, 0.0
    %3860 = vadd.xlane.f32.xlu0 %v3859
    %v3861 = vpop.xlane.xlu0 %3860
    %v3862 = vrcp.pop %v3840
    %v3863 = vrcp.pop %v3843
    %v3864 = vrcp.pop %v3846
    %v3865 = vrcp.pop %v3849
    %v3866 = vrcp.pop %v3852
    %v3867 = vrcp.pop %v3855
    %v3868 = vrcp.pop %v3858
    %v3869 = vrcp.pop %v3861
    %v3870 = vmul.f32 %v3823, %v3862
    %v3871 = vmul.f32 %v3825, %v3863
    %v3872 = vmul.f32 %v3827, %v3864
    %v3873 = vmul.f32 %v3829, %v3865
    %v3874 = vmul.f32 %v3831, %v3866
    %v3875 = vmul.f32 %v3833, %v3867
    %v3876 = vmul.f32 %v3835, %v3868
    %v3877 = vmul.f32 %v3837, %v3869
    %3878 = vrot.lane.b32.xlu0 %v3526, 64
    %v3879 = vpop.permute.xlu0 %3878
    %3880 = vrot.lane.b32.xlu0 %v3531, 64
    %v3881 = vpop.permute.xlu0 %3880
    %3882 = vrot.lane.b32.xlu0 %v3536, 64
    %v3883 = vpop.permute.xlu0 %3882
    %3884 = vrot.lane.b32.xlu0 %v3541, 64
    %v3885 = vpop.permute.xlu0 %3884
    %v3891 = vsel %vm106, %v3870, 0
    %v3894 = vsel %vm106, %v3871, 0
    %v3897 = vsel %vm106, %v3872, 0
    %v3900 = vsel %vm106, %v3873, 0
    %3902 = vmatprep.subr.mxu0 0.0
    %3903 = vmatpush1.msra.mxu0 0.0
    %3904 = vmatprep.subr.mxu0 0.0
    %3905 = vmatpush1.msra.mxu0 0.0
    %3906 = vmatprep.subr.mxu0 0.0
    %3907 = vmatpush1.msra.mxu0 0.0
    %3908 = vmatprep.subr.mxu0 0.0
    %3909 = vmatpush1.msra.mxu0 0.0
    %3910 = vmatprep.subr.mxu0 0.0
    %3911 = vmatpush1.msra.mxu0 0.0
    %3912 = vmatprep.subr.mxu0 0.0
    %3913 = vmatpush1.msra.mxu0 0.0
    %3914 = vmatprep.subr.mxu0 0.0
    %3915 = vmatpush1.msra.mxu0 0.0
    %3916 = vmatprep.subr.mxu0 0.0
    %3917 = vmatpush1.msra.mxu0 0.0
    %3918 = vmatprep.subr.mxu0 0.0
    %3919 = vmatpush1.msra.mxu0 0.0
    %3920 = vmatprep.subr.mxu0 0.0
    %3921 = vmatpush1.msra.mxu0 0.0
    %3922 = vmatprep.subr.mxu0 0.0
    %3923 = vmatpush1.msra.mxu0 0.0
    %3924 = vmatprep.subr.mxu0 0.0
    %3925 = vmatpush1.msra.mxu0 0.0
    %3926 = vmatprep.subr.mxu0 0.0
    %3927 = vmatpush1.msra.mxu0 %v3885
    %3928 = vmatprep.subr.mxu0 0.0
    %3929 = vmatpush1.msra.mxu0 %v3883
    %3930 = vmatprep.subr.mxu0 0.0
    %3931 = vmatpush1.msra.mxu0 %v3881
    %3932 = vmatprep.subr.mxu0 0.0
    %3933 = vmatpush1.msra.mxu0 %v3879
    %3934 = vmatprep.subr.mxu0 0.0
    %3935 = vmatpush2.msra.mxu0 0.0
    %3936 = vmatprep.subr.mxu0 0.0
    %3937 = vmatpush2.msra.mxu0 0.0
    %3938 = vmatprep.subr.mxu0 0.0
    %3939 = vmatpush2.msra.mxu0 0.0
    %3940 = vmatprep.subr.mxu0 0.0
    %3941 = vmatpush2.msra.mxu0 0.0
    %3942 = vmatprep.subr.mxu0 0.0
    %3943 = vmatpush2.msra.mxu0 0.0
    %3944 = vmatprep.subr.mxu0 0.0
    %3945 = vmatpush2.msra.mxu0 0.0
    %3946 = vmatprep.subr.mxu0 0.0
    %3947 = vmatpush2.msra.mxu0 0.0
    %3948 = vmatprep.subr.mxu0 0.0
    %3949 = vmatpush2.msra.mxu0 0.0
    %3950 = vmatprep.subr.mxu0 0.0
    %3951 = vmatpush2.msra.mxu0 0.0
    %3952 = vmatprep.subr.mxu0 0.0
    %3953 = vmatpush2.msra.mxu0 0.0
    %3954 = vmatprep.subr.mxu0 0.0
    %3955 = vmatpush2.msra.mxu0 0.0
    %3956 = vmatprep.subr.mxu0 0.0
    %3957 = vmatpush2.msra.mxu0 0.0
    %3958 = vmatprep.subr.mxu0 0.0
    %3959 = vmatpush2.msra.mxu0 0.0
    %3960 = vmatprep.subr.mxu0 0.0
    %3961 = vmatpush2.msra.mxu0 0.0
    %3962 = vmatprep.subr.mxu0 0.0
    %3963 = vmatpush2.msra.mxu0 0.0
    %3964 = vmatprep.subr.mxu0 0.0
    %3965 = vmatpush2.msra.mxu0 0.0
    %3966 = vmatprep.mubr.f32.mxu0 0.0
    %3967 = vmatmul.mubr.f32.gmra.mxu0 %v3891
    %v3968 = vpop.f32.mrf.mxu0
    %v3969 = vadd.f32 0.0, %v3968
    %v3970 = vpop.f32.mrf.mxu0
    %3971 = vmatprep.mubr.f32.mxu0 0.0
    %3972 = vmatmul.mubr.f32.gmra.mxu0 %v3894
    %v3973 = vpop.f32.mrf.mxu0
    %v3974 = vadd.f32 0.0, %v3973
    %v3975 = vpop.f32.mrf.mxu0
    %3976 = vmatprep.mubr.f32.mxu0 0.0
    %3977 = vmatmul.mubr.f32.gmra.mxu0 %v3897
    %v3978 = vpop.f32.mrf.mxu0
    %v3979 = vadd.f32 0.0, %v3978
    %v3980 = vpop.f32.mrf.mxu0
    %3981 = vmatprep.mubr.f32.mxu0 0.0
    %3982 = vmatmul.mubr.f32.gmra.mxu0 %v3900
    %v3983 = vpop.f32.mrf.mxu0
    %v3984 = vadd.f32 0.0, %v3983
    %v3985 = vpop.f32.mrf.mxu0
    %3986 = vdwg.mxu0
    %3987 = vrot.lane.b32.xlu0 %v3546, 64
    %v3988 = vpop.permute.xlu0 %3987
    %3989 = vrot.lane.b32.xlu0 %v3551, 64
    %v3990 = vpop.permute.xlu0 %3989
    %3991 = vrot.lane.b32.xlu0 %v3556, 64
    %v3992 = vpop.permute.xlu0 %3991
    %3993 = vrot.lane.b32.xlu0 %v3561, 64
    %v3994 = vpop.permute.xlu0 %3993
    %v4000 = vsel %vm106, %v3874, 0
    %v4003 = vsel %vm106, %v3875, 0
    %v4006 = vsel %vm106, %v3876, 0
    %v4009 = vsel %vm106, %v3877, 0
    %4011 = vmatprep.subr.mxu0 0.0
    %4012 = vmatpush1.msra.mxu0 0.0
    %4013 = vmatprep.subr.mxu0 0.0
    %4014 = vmatpush1.msra.mxu0 0.0
    %4015 = vmatprep.subr.mxu0 0.0
    %4016 = vmatpush1.msra.mxu0 0.0
    %4017 = vmatprep.subr.mxu0 0.0
    %4018 = vmatpush1.msra.mxu0 0.0
    %4019 = vmatprep.subr.mxu0 0.0
    %4020 = vmatpush1.msra.mxu0 0.0
    %4021 = vmatprep.subr.mxu0 0.0
    %4022 = vmatpush1.msra.mxu0 0.0
    %4023 = vmatprep.subr.mxu0 0.0
    %4024 = vmatpush1.msra.mxu0 0.0
    %4025 = vmatprep.subr.mxu0 0.0
    %4026 = vmatpush1.msra.mxu0 0.0
    %4027 = vmatprep.subr.mxu0 0.0
    %4028 = vmatpush1.msra.mxu0 0.0
    %4029 = vmatprep.subr.mxu0 0.0
    %4030 = vmatpush1.msra.mxu0 0.0
    %4031 = vmatprep.subr.mxu0 0.0
    %4032 = vmatpush1.msra.mxu0 0.0
    %4033 = vmatprep.subr.mxu0 0.0
    %4034 = vmatpush1.msra.mxu0 0.0
    %4035 = vmatprep.subr.mxu0 0.0
    %4036 = vmatpush1.msra.mxu0 %v3994
    %4037 = vmatprep.subr.mxu0 0.0
    %4038 = vmatpush1.msra.mxu0 %v3992
    %4039 = vmatprep.subr.mxu0 0.0
    %4040 = vmatpush1.msra.mxu0 %v3990
    %4041 = vmatprep.subr.mxu0 0.0
    %4042 = vmatpush1.msra.mxu0 %v3988
    %4043 = vmatprep.subr.mxu0 0.0
    %4044 = vmatpush2.msra.mxu0 0.0
    %4045 = vmatprep.subr.mxu0 0.0
    %4046 = vmatpush2.msra.mxu0 0.0
    %4047 = vmatprep.subr.mxu0 0.0
    %4048 = vmatpush2.msra.mxu0 0.0
    %4049 = vmatprep.subr.mxu0 0.0
    %4050 = vmatpush2.msra.mxu0 0.0
    %4051 = vmatprep.subr.mxu0 0.0
    %4052 = vmatpush2.msra.mxu0 0.0
    %4053 = vmatprep.subr.mxu0 0.0
    %4054 = vmatpush2.msra.mxu0 0.0
    %4055 = vmatprep.subr.mxu0 0.0
    %4056 = vmatpush2.msra.mxu0 0.0
    %4057 = vmatprep.subr.mxu0 0.0
    %4058 = vmatpush2.msra.mxu0 0.0
    %4059 = vmatprep.subr.mxu0 0.0
    %4060 = vmatpush2.msra.mxu0 0.0
    %4061 = vmatprep.subr.mxu0 0.0
    %4062 = vmatpush2.msra.mxu0 0.0
    %4063 = vmatprep.subr.mxu0 0.0
    %4064 = vmatpush2.msra.mxu0 0.0
    %4065 = vmatprep.subr.mxu0 0.0
    %4066 = vmatpush2.msra.mxu0 0.0
    %4067 = vmatprep.subr.mxu0 0.0
    %4068 = vmatpush2.msra.mxu0 0.0
    %4069 = vmatprep.subr.mxu0 0.0
    %4070 = vmatpush2.msra.mxu0 0.0
    %4071 = vmatprep.subr.mxu0 0.0
    %4072 = vmatpush2.msra.mxu0 0.0
    %4073 = vmatprep.subr.mxu0 0.0
    %4074 = vmatpush2.msra.mxu0 0.0
    %4075 = vmatprep.mubr.f32.mxu0 0.0
    %4076 = vmatmul.mubr.f32.gmra.mxu0 %v4000
    %v4077 = vpop.f32.mrf.mxu0
    %v4078 = vadd.f32 0.0, %v4077
    %v4079 = vpop.f32.mrf.mxu0
    %4080 = vmatprep.mubr.f32.mxu0 0.0
    %4081 = vmatmul.mubr.f32.gmra.mxu0 %v4003
    %v4082 = vpop.f32.mrf.mxu0
    %v4083 = vadd.f32 0.0, %v4082
    %v4084 = vpop.f32.mrf.mxu0
    %4085 = vmatprep.mubr.f32.mxu0 0.0
    %4086 = vmatmul.mubr.f32.gmra.mxu0 %v4006
    %v4087 = vpop.f32.mrf.mxu0
    %v4088 = vadd.f32 0.0, %v4087
    %v4089 = vpop.f32.mrf.mxu0
    %4090 = vmatprep.mubr.f32.mxu0 0.0
    %4091 = vmatmul.mubr.f32.gmra.mxu0 %v4009
    %v4092 = vpop.f32.mrf.mxu0
    %v4093 = vadd.f32 0.0, %v4092
    %v4094 = vpop.f32.mrf.mxu0
    %4095 = vdwg.mxu0
    %4096 = vrot.lane.b32.xlu0 %v3526, 120
    %v4097 = vpop.permute.xlu0 %4096
    %4098 = vrot.lane.b32.xlu0 %v3531, 120
    %v4099 = vpop.permute.xlu0 %4098
    %4100 = vrot.lane.b32.xlu0 %v3536, 120
    %v4101 = vpop.permute.xlu0 %4100
    %4102 = vrot.lane.b32.xlu0 %v3541, 120
    %v4103 = vpop.permute.xlu0 %4102
    %4104 = vrot.lane.b32.xlu0 %v3526, 88
    %v4105 = vpop.permute.xlu0 %4104
    %4106 = vrot.lane.b32.xlu0 %v3531, 88
    %v4107 = vpop.permute.xlu0 %4106
    %4108 = vrot.lane.b32.xlu0 %v3536, 88
    %v4109 = vpop.permute.xlu0 %4108
    %4110 = vrot.lane.b32.xlu0 %v3541, 88
    %v4111 = vpop.permute.xlu0 %4110
    %v4112 = vsel %vm385, %v4097, 0
    %v4114 = vsel %vm385, %v4099, 0
    %v4116 = vsel %vm385, %v4101, 0
    %v4118 = vsel %vm385, %v4103, 0
    %v4120 = vsel %vm385, %v4105, 0
    %v4122 = vsel %vm385, %v4107, 0
    %v4124 = vsel %vm385, %v4109, 0
    %v4126 = vsel %vm385, %v4111, 0
    %4128 = vmatprep.subr.mxu0 0.0
    %4129 = vmatpush1.xpose.msra.mxu0 0.0
    %4130 = vmatprep.subr.mxu0 0.0
    %4131 = vmatpush1.xpose.msra.mxu0 0.0
    %4132 = vmatprep.subr.mxu0 0.0
    %4133 = vmatpush1.xpose.msra.mxu0 0.0
    %4134 = vmatprep.subr.mxu0 0.0
    %4135 = vmatpush1.xpose.msra.mxu0 0.0
    %4136 = vmatprep.subr.mxu0 0.0
    %4137 = vmatpush1.xpose.msra.mxu0 0.0
    %4138 = vmatprep.subr.mxu0 0.0
    %4139 = vmatpush1.xpose.msra.mxu0 0.0
    %4140 = vmatprep.subr.mxu0 0.0
    %4141 = vmatpush1.xpose.msra.mxu0 0.0
    %4142 = vmatprep.subr.mxu0 0.0
    %4143 = vmatpush1.xpose.msra.mxu0 0.0
    %4144 = vmatprep.subr.mxu0 0.0
    %4145 = vmatpush1.xpose.msra.mxu0 0.0
    %4146 = vmatprep.subr.mxu0 0.0
    %4147 = vmatpush1.xpose.msra.mxu0 0.0
    %4148 = vmatprep.subr.mxu0 0.0
    %4149 = vmatpush1.xpose.msra.mxu0 0.0
    %4150 = vmatprep.subr.mxu0 0.0
    %4151 = vmatpush1.xpose.msra.mxu0 0.0
    %4152 = vmatprep.subr.mxu0 0.0
    %4153 = vmatpush1.xpose.msra.mxu0 %v4126
    %4154 = vmatprep.subr.mxu0 0.0
    %4155 = vmatpush1.xpose.msra.mxu0 %v4124
    %4156 = vmatprep.subr.mxu0 0.0
    %4157 = vmatpush1.xpose.msra.mxu0 %v4122
    %4158 = vmatprep.subr.mxu0 0.0
    %4159 = vmatpush1.xpose.msra.mxu0 %v4120
    %4160 = vmatprep.subr.mxu0 0.0
    %4161 = vmatpush2.xpose.msra.mxu0 0.0
    %4162 = vmatprep.subr.mxu0 0.0
    %4163 = vmatpush2.xpose.msra.mxu0 0.0
    %4164 = vmatprep.subr.mxu0 0.0
    %4165 = vmatpush2.xpose.msra.mxu0 0.0
    %4166 = vmatprep.subr.mxu0 0.0
    %4167 = vmatpush2.xpose.msra.mxu0 0.0
    %4168 = vmatprep.subr.mxu0 0.0
    %4169 = vmatpush2.xpose.msra.mxu0 0.0
    %4170 = vmatprep.subr.mxu0 0.0
    %4171 = vmatpush2.xpose.msra.mxu0 0.0
    %4172 = vmatprep.subr.mxu0 0.0
    %4173 = vmatpush2.xpose.msra.mxu0 0.0
    %4174 = vmatprep.subr.mxu0 0.0
    %4175 = vmatpush2.xpose.msra.mxu0 0.0
    %4176 = vmatprep.subr.mxu0 0.0
    %4177 = vmatpush2.xpose.msra.mxu0 0.0
    %4178 = vmatprep.subr.mxu0 0.0
    %4179 = vmatpush2.xpose.msra.mxu0 0.0
    %4180 = vmatprep.subr.mxu0 0.0
    %4181 = vmatpush2.xpose.msra.mxu0 0.0
    %4182 = vmatprep.subr.mxu0 0.0
    %4183 = vmatpush2.xpose.msra.mxu0 0.0
    %4184 = vmatprep.subr.mxu0 0.0
    %4185 = vmatpush2.xpose.msra.mxu0 0.0
    %4186 = vmatprep.subr.mxu0 0.0
    %4187 = vmatpush2.xpose.msra.mxu0 0.0
    %4188 = vmatprep.subr.mxu0 0.0
    %4189 = vmatpush2.xpose.msra.mxu0 0.0
    %4190 = vmatprep.subr.mxu0 0.0
    %4191 = vmatpush2.xpose.msra.mxu0 0.0
    %4192 = vmatprep.mubr.f32.mxu0 0.0
    %4193 = vmatmul.mubr.f32.gmra.mxu0 %v4112
    %v4194 = vpop.f32.mrf.mxu0
    %v4195 = vadd.f32 0.0, %v4194
    %v4196 = vpop.f32.mrf.mxu0
    %4197 = vmatprep.mubr.f32.mxu0 0.0
    %4198 = vmatmul.mubr.f32.gmra.mxu0 %v4114
    %v4199 = vpop.f32.mrf.mxu0
    %v4200 = vadd.f32 0.0, %v4199
    %v4201 = vpop.f32.mrf.mxu0
    %4202 = vmatprep.mubr.f32.mxu0 0.0
    %4203 = vmatmul.mubr.f32.gmra.mxu0 %v4116
    %v4204 = vpop.f32.mrf.mxu0
    %v4205 = vadd.f32 0.0, %v4204
    %v4206 = vpop.f32.mrf.mxu0
    %4207 = vmatprep.mubr.f32.mxu0 0.0
    %4208 = vmatmul.mubr.f32.gmra.mxu0 %v4118
    %v4209 = vpop.f32.mrf.mxu0
    %v4210 = vadd.f32 0.0, %v4209
    %v4211 = vpop.f32.mrf.mxu0
    %4212 = vdwg.mxu0
    %4213 = vrot.lane.b32.xlu0 %v3546, 120
    %v4214 = vpop.permute.xlu0 %4213
    %4215 = vrot.lane.b32.xlu0 %v3551, 120
    %v4216 = vpop.permute.xlu0 %4215
    %4217 = vrot.lane.b32.xlu0 %v3556, 120
    %v4218 = vpop.permute.xlu0 %4217
    %4219 = vrot.lane.b32.xlu0 %v3561, 120
    %v4220 = vpop.permute.xlu0 %4219
    %4221 = vrot.lane.b32.xlu0 %v3546, 88
    %v4222 = vpop.permute.xlu0 %4221
    %4223 = vrot.lane.b32.xlu0 %v3551, 88
    %v4224 = vpop.permute.xlu0 %4223
    %4225 = vrot.lane.b32.xlu0 %v3556, 88
    %v4226 = vpop.permute.xlu0 %4225
    %4227 = vrot.lane.b32.xlu0 %v3561, 88
    %v4228 = vpop.permute.xlu0 %4227
    %v4229 = vsel %vm385, %v4214, 0
    %v4231 = vsel %vm385, %v4216, 0
    %v4233 = vsel %vm385, %v4218, 0
    %v4235 = vsel %vm385, %v4220, 0
    %v4237 = vsel %vm385, %v4222, 0
    %v4239 = vsel %vm385, %v4224, 0
    %v4241 = vsel %vm385, %v4226, 0
    %v4243 = vsel %vm385, %v4228, 0
    %4245 = vmatprep.subr.mxu0 0.0
    %4246 = vmatpush1.xpose.msra.mxu0 0.0
    %4247 = vmatprep.subr.mxu0 0.0
    %4248 = vmatpush1.xpose.msra.mxu0 0.0
    %4249 = vmatprep.subr.mxu0 0.0
    %4250 = vmatpush1.xpose.msra.mxu0 0.0
    %4251 = vmatprep.subr.mxu0 0.0
    %4252 = vmatpush1.xpose.msra.mxu0 0.0
    %4253 = vmatprep.subr.mxu0 0.0
    %4254 = vmatpush1.xpose.msra.mxu0 0.0
    %4255 = vmatprep.subr.mxu0 0.0
    %4256 = vmatpush1.xpose.msra.mxu0 0.0
    %4257 = vmatprep.subr.mxu0 0.0
    %4258 = vmatpush1.xpose.msra.mxu0 0.0
    %4259 = vmatprep.subr.mxu0 0.0
    %4260 = vmatpush1.xpose.msra.mxu0 0.0
    %4261 = vmatprep.subr.mxu0 0.0
    %4262 = vmatpush1.xpose.msra.mxu0 0.0
    %4263 = vmatprep.subr.mxu0 0.0
    %4264 = vmatpush1.xpose.msra.mxu0 0.0
    %4265 = vmatprep.subr.mxu0 0.0
    %4266 = vmatpush1.xpose.msra.mxu0 0.0
    %4267 = vmatprep.subr.mxu0 0.0
    %4268 = vmatpush1.xpose.msra.mxu0 0.0
    %4269 = vmatprep.subr.mxu0 0.0
    %4270 = vmatpush1.xpose.msra.mxu0 %v4243
    %4271 = vmatprep.subr.mxu0 0.0
    %4272 = vmatpush1.xpose.msra.mxu0 %v4241
    %4273 = vmatprep.subr.mxu0 0.0
    %4274 = vmatpush1.xpose.msra.mxu0 %v4239
    %4275 = vmatprep.subr.mxu0 0.0
    %4276 = vmatpush1.xpose.msra.mxu0 %v4237
    %4277 = vmatprep.subr.mxu0 0.0
    %4278 = vmatpush2.xpose.msra.mxu0 0.0
    %4279 = vmatprep.subr.mxu0 0.0
    %4280 = vmatpush2.xpose.msra.mxu0 0.0
    %4281 = vmatprep.subr.mxu0 0.0
    %4282 = vmatpush2.xpose.msra.mxu0 0.0
    %4283 = vmatprep.subr.mxu0 0.0
    %4284 = vmatpush2.xpose.msra.mxu0 0.0
    %4285 = vmatprep.subr.mxu0 0.0
    %4286 = vmatpush2.xpose.msra.mxu0 0.0
    %4287 = vmatprep.subr.mxu0 0.0
    %4288 = vmatpush2.xpose.msra.mxu0 0.0
    %4289 = vmatprep.subr.mxu0 0.0
    %4290 = vmatpush2.xpose.msra.mxu0 0.0
    %4291 = vmatprep.subr.mxu0 0.0
    %4292 = vmatpush2.xpose.msra.mxu0 0.0
    %4293 = vmatprep.subr.mxu0 0.0
    %4294 = vmatpush2.xpose.msra.mxu0 0.0
    %4295 = vmatprep.subr.mxu0 0.0
    %4296 = vmatpush2.xpose.msra.mxu0 0.0
    %4297 = vmatprep.subr.mxu0 0.0
    %4298 = vmatpush2.xpose.msra.mxu0 0.0
    %4299 = vmatprep.subr.mxu0 0.0
    %4300 = vmatpush2.xpose.msra.mxu0 0.0
    %4301 = vmatprep.subr.mxu0 0.0
    %4302 = vmatpush2.xpose.msra.mxu0 0.0
    %4303 = vmatprep.subr.mxu0 0.0
    %4304 = vmatpush2.xpose.msra.mxu0 0.0
    %4305 = vmatprep.subr.mxu0 0.0
    %4306 = vmatpush2.xpose.msra.mxu0 0.0
    %4307 = vmatprep.subr.mxu0 0.0
    %4308 = vmatpush2.xpose.msra.mxu0 0.0
    %4309 = vmatprep.mubr.f32.mxu0 0.0
    %4310 = vmatmul.mubr.f32.gmra.mxu0 %v4229
    %v4311 = vpop.f32.mrf.mxu0
    %v4312 = vadd.f32 0.0, %v4311
    %v4313 = vpop.f32.mrf.mxu0
    %4314 = vmatprep.mubr.f32.mxu0 0.0
    %4315 = vmatmul.mubr.f32.gmra.mxu0 %v4231
    %v4316 = vpop.f32.mrf.mxu0
    %v4317 = vadd.f32 0.0, %v4316
    %v4318 = vpop.f32.mrf.mxu0
    %4319 = vmatprep.mubr.f32.mxu0 0.0
    %4320 = vmatmul.mubr.f32.gmra.mxu0 %v4233
    %v4321 = vpop.f32.mrf.mxu0
    %v4322 = vadd.f32 0.0, %v4321
    %v4323 = vpop.f32.mrf.mxu0
    %4324 = vmatprep.mubr.f32.mxu0 0.0
    %4325 = vmatmul.mubr.f32.gmra.mxu0 %v4235
    %v4326 = vpop.f32.mrf.mxu0
    %v4327 = vadd.f32 0.0, %v4326
    %v4328 = vpop.f32.mrf.mxu0
    %4329 = vdwg.mxu0
    %v4330 = vsel %vm106, %v4195, -inf
    %4331 = vmax.xlane.f32.xlu0 %v4330
    %v4332 = vpop.xlane.xlu0 %4331
    %v4333 = vsel %vm106, %v4200, -inf
    %4334 = vmax.xlane.f32.xlu0 %v4333
    %v4335 = vpop.xlane.xlu0 %4334
    %v4336 = vsel %vm106, %v4205, -inf
    %4337 = vmax.xlane.f32.xlu0 %v4336
    %v4338 = vpop.xlane.xlu0 %4337
    %v4339 = vsel %vm106, %v4210, -inf
    %4340 = vmax.xlane.f32.xlu0 %v4339
    %v4341 = vpop.xlane.xlu0 %4340
    %v4342 = vsel %vm106, %v4312, -inf
    %4343 = vmax.xlane.f32.xlu0 %v4342
    %v4344 = vpop.xlane.xlu0 %4343
    %v4345 = vsel %vm106, %v4317, -inf
    %4346 = vmax.xlane.f32.xlu0 %v4345
    %v4347 = vpop.xlane.xlu0 %4346
    %v4348 = vsel %vm106, %v4322, -inf
    %4349 = vmax.xlane.f32.xlu0 %v4348
    %v4350 = vpop.xlane.xlu0 %4349
    %v4351 = vsel %vm106, %v4327, -inf
    %4352 = vmax.xlane.f32.xlu0 %v4351
    %v4353 = vpop.xlane.xlu0 %4352
    %v4354 = vsub.f32 %v4195, %v4332
    %v4355 = vsub.f32 %v4200, %v4335
    %v4356 = vsub.f32 %v4205, %v4338
    %v4357 = vsub.f32 %v4210, %v4341
    %v4358 = vsub.f32 %v4312, %v4344
    %v4359 = vsub.f32 %v4317, %v4347
    %v4360 = vsub.f32 %v4322, %v4350
    %v4361 = vsub.f32 %v4327, %v4353
    %v4362 = vmul.f32 %v4354, 1.442695
    %v4363 = vpow.pop %v4362
    %v4364 = vmul.f32 %v4355, 1.442695
    %v4365 = vpow.pop %v4364
    %v4366 = vmul.f32 %v4356, 1.442695
    %v4367 = vpow.pop %v4366
    %v4368 = vmul.f32 %v4357, 1.442695
    %v4369 = vpow.pop %v4368
    %v4370 = vmul.f32 %v4358, 1.442695
    %v4371 = vpow.pop %v4370
    %v4372 = vmul.f32 %v4359, 1.442695
    %v4373 = vpow.pop %v4372
    %v4374 = vmul.f32 %v4360, 1.442695
    %v4375 = vpow.pop %v4374
    %v4376 = vmul.f32 %v4361, 1.442695
    %v4377 = vpow.pop %v4376
    %v4378 = vsel %vm106, %v4363, 0.0
    %4379 = vadd.xlane.f32.xlu0 %v4378
    %v4380 = vpop.xlane.xlu0 %4379
    %v4381 = vsel %vm106, %v4365, 0.0
    %4382 = vadd.xlane.f32.xlu0 %v4381
    %v4383 = vpop.xlane.xlu0 %4382
    %v4384 = vsel %vm106, %v4367, 0.0
    %4385 = vadd.xlane.f32.xlu0 %v4384
    %v4386 = vpop.xlane.xlu0 %4385
    %v4387 = vsel %vm106, %v4369, 0.0
    %4388 = vadd.xlane.f32.xlu0 %v4387
    %v4389 = vpop.xlane.xlu0 %4388
    %v4390 = vsel %vm106, %v4371, 0.0
    %4391 = vadd.xlane.f32.xlu0 %v4390
    %v4392 = vpop.xlane.xlu0 %4391
    %v4393 = vsel %vm106, %v4373, 0.0
    %4394 = vadd.xlane.f32.xlu0 %v4393
    %v4395 = vpop.xlane.xlu0 %4394
    %v4396 = vsel %vm106, %v4375, 0.0
    %4397 = vadd.xlane.f32.xlu0 %v4396
    %v4398 = vpop.xlane.xlu0 %4397
    %v4399 = vsel %vm106, %v4377, 0.0
    %4400 = vadd.xlane.f32.xlu0 %v4399
    %v4401 = vpop.xlane.xlu0 %4400
    %v4402 = vrcp.pop %v4380
    %v4403 = vrcp.pop %v4383
    %v4404 = vrcp.pop %v4386
    %v4405 = vrcp.pop %v4389
    %v4406 = vrcp.pop %v4392
    %v4407 = vrcp.pop %v4395
    %v4408 = vrcp.pop %v4398
    %v4409 = vrcp.pop %v4401
    %v4410 = vmul.f32 %v4363, %v4402
    %v4411 = vmul.f32 %v4365, %v4403
    %v4412 = vmul.f32 %v4367, %v4404
    %v4413 = vmul.f32 %v4369, %v4405
    %v4414 = vmul.f32 %v4371, %v4406
    %v4415 = vmul.f32 %v4373, %v4407
    %v4416 = vmul.f32 %v4375, %v4408
    %v4417 = vmul.f32 %v4377, %v4409
    %4418 = vrot.lane.b32.xlu0 %v3526, 56
    %v4419 = vpop.permute.xlu0 %4418
    %4420 = vrot.lane.b32.xlu0 %v3531, 56
    %v4421 = vpop.permute.xlu0 %4420
    %4422 = vrot.lane.b32.xlu0 %v3536, 56
    %v4423 = vpop.permute.xlu0 %4422
    %4424 = vrot.lane.b32.xlu0 %v3541, 56
    %v4425 = vpop.permute.xlu0 %4424
    %v4431 = vsel %vm106, %v4410, 0
    %v4434 = vsel %vm106, %v4411, 0
    %v4437 = vsel %vm106, %v4412, 0
    %v4440 = vsel %vm106, %v4413, 0
    %4442 = vmatprep.subr.mxu0 0.0
    %4443 = vmatpush1.msra.mxu0 0.0
    %4444 = vmatprep.subr.mxu0 0.0
    %4445 = vmatpush1.msra.mxu0 0.0
    %4446 = vmatprep.subr.mxu0 0.0
    %4447 = vmatpush1.msra.mxu0 0.0
    %4448 = vmatprep.subr.mxu0 0.0
    %4449 = vmatpush1.msra.mxu0 0.0
    %4450 = vmatprep.subr.mxu0 0.0
    %4451 = vmatpush1.msra.mxu0 0.0
    %4452 = vmatprep.subr.mxu0 0.0
    %4453 = vmatpush1.msra.mxu0 0.0
    %4454 = vmatprep.subr.mxu0 0.0
    %4455 = vmatpush1.msra.mxu0 0.0
    %4456 = vmatprep.subr.mxu0 0.0
    %4457 = vmatpush1.msra.mxu0 0.0
    %4458 = vmatprep.subr.mxu0 0.0
    %4459 = vmatpush1.msra.mxu0 0.0
    %4460 = vmatprep.subr.mxu0 0.0
    %4461 = vmatpush1.msra.mxu0 0.0
    %4462 = vmatprep.subr.mxu0 0.0
    %4463 = vmatpush1.msra.mxu0 0.0
    %4464 = vmatprep.subr.mxu0 0.0
    %4465 = vmatpush1.msra.mxu0 0.0
    %4466 = vmatprep.subr.mxu0 0.0
    %4467 = vmatpush1.msra.mxu0 %v4425
    %4468 = vmatprep.subr.mxu0 0.0
    %4469 = vmatpush1.msra.mxu0 %v4423
    %4470 = vmatprep.subr.mxu0 0.0
    %4471 = vmatpush1.msra.mxu0 %v4421
    %4472 = vmatprep.subr.mxu0 0.0
    %4473 = vmatpush1.msra.mxu0 %v4419
    %4474 = vmatprep.subr.mxu0 0.0
    %4475 = vmatpush2.msra.mxu0 0.0
    %4476 = vmatprep.subr.mxu0 0.0
    %4477 = vmatpush2.msra.mxu0 0.0
    %4478 = vmatprep.subr.mxu0 0.0
    %4479 = vmatpush2.msra.mxu0 0.0
    %4480 = vmatprep.subr.mxu0 0.0
    %4481 = vmatpush2.msra.mxu0 0.0
    %4482 = vmatprep.subr.mxu0 0.0
    %4483 = vmatpush2.msra.mxu0 0.0
    %4484 = vmatprep.subr.mxu0 0.0
    %4485 = vmatpush2.msra.mxu0 0.0
    %4486 = vmatprep.subr.mxu0 0.0
    %4487 = vmatpush2.msra.mxu0 0.0
    %4488 = vmatprep.subr.mxu0 0.0
    %4489 = vmatpush2.msra.mxu0 0.0
    %4490 = vmatprep.subr.mxu0 0.0
    %4491 = vmatpush2.msra.mxu0 0.0
    %4492 = vmatprep.subr.mxu0 0.0
    %4493 = vmatpush2.msra.mxu0 0.0
    %4494 = vmatprep.subr.mxu0 0.0
    %4495 = vmatpush2.msra.mxu0 0.0
    %4496 = vmatprep.subr.mxu0 0.0
    %4497 = vmatpush2.msra.mxu0 0.0
    %4498 = vmatprep.subr.mxu0 0.0
    %4499 = vmatpush2.msra.mxu0 0.0
    %4500 = vmatprep.subr.mxu0 0.0
    %4501 = vmatpush2.msra.mxu0 0.0
    %4502 = vmatprep.subr.mxu0 0.0
    %4503 = vmatpush2.msra.mxu0 0.0
    %4504 = vmatprep.subr.mxu0 0.0
    %4505 = vmatpush2.msra.mxu0 0.0
    %4506 = vmatprep.mubr.f32.mxu0 0.0
    %4507 = vmatmul.mubr.f32.gmra.mxu0 %v4431
    %v4508 = vpop.f32.mrf.mxu0
    %v4509 = vadd.f32 0.0, %v4508
    %v4510 = vpop.f32.mrf.mxu0
    %4511 = vmatprep.mubr.f32.mxu0 0.0
    %4512 = vmatmul.mubr.f32.gmra.mxu0 %v4434
    %v4513 = vpop.f32.mrf.mxu0
    %v4514 = vadd.f32 0.0, %v4513
    %v4515 = vpop.f32.mrf.mxu0
    %4516 = vmatprep.mubr.f32.mxu0 0.0
    %4517 = vmatmul.mubr.f32.gmra.mxu0 %v4437
    %v4518 = vpop.f32.mrf.mxu0
    %v4519 = vadd.f32 0.0, %v4518
    %v4520 = vpop.f32.mrf.mxu0
    %4521 = vmatprep.mubr.f32.mxu0 0.0
    %4522 = vmatmul.mubr.f32.gmra.mxu0 %v4440
    %v4523 = vpop.f32.mrf.mxu0
    %v4524 = vadd.f32 0.0, %v4523
    %v4525 = vpop.f32.mrf.mxu0
    %4526 = vdwg.mxu0
    %4527 = vrot.lane.b32.xlu0 %v3546, 56
    %v4528 = vpop.permute.xlu0 %4527
    %4529 = vrot.lane.b32.xlu0 %v3551, 56
    %v4530 = vpop.permute.xlu0 %4529
    %4531 = vrot.lane.b32.xlu0 %v3556, 56
    %v4532 = vpop.permute.xlu0 %4531
    %4533 = vrot.lane.b32.xlu0 %v3561, 56
    %v4534 = vpop.permute.xlu0 %4533
    %v4540 = vsel %vm106, %v4414, 0
    %v4543 = vsel %vm106, %v4415, 0
    %v4546 = vsel %vm106, %v4416, 0
    %v4549 = vsel %vm106, %v4417, 0
    %4551 = vmatprep.subr.mxu0 0.0
    %4552 = vmatpush1.msra.mxu0 0.0
    %4553 = vmatprep.subr.mxu0 0.0
    %4554 = vmatpush1.msra.mxu0 0.0
    %4555 = vmatprep.subr.mxu0 0.0
    %4556 = vmatpush1.msra.mxu0 0.0
    %4557 = vmatprep.subr.mxu0 0.0
    %4558 = vmatpush1.msra.mxu0 0.0
    %4559 = vmatprep.subr.mxu0 0.0
    %4560 = vmatpush1.msra.mxu0 0.0
    %4561 = vmatprep.subr.mxu0 0.0
    %4562 = vmatpush1.msra.mxu0 0.0
    %4563 = vmatprep.subr.mxu0 0.0
    %4564 = vmatpush1.msra.mxu0 0.0
    %4565 = vmatprep.subr.mxu0 0.0
    %4566 = vmatpush1.msra.mxu0 0.0
    %4567 = vmatprep.subr.mxu0 0.0
    %4568 = vmatpush1.msra.mxu0 0.0
    %4569 = vmatprep.subr.mxu0 0.0
    %4570 = vmatpush1.msra.mxu0 0.0
    %4571 = vmatprep.subr.mxu0 0.0
    %4572 = vmatpush1.msra.mxu0 0.0
    %4573 = vmatprep.subr.mxu0 0.0
    %4574 = vmatpush1.msra.mxu0 0.0
    %4575 = vmatprep.subr.mxu0 0.0
    %4576 = vmatpush1.msra.mxu0 %v4534
    %4577 = vmatprep.subr.mxu0 0.0
    %4578 = vmatpush1.msra.mxu0 %v4532
    %4579 = vmatprep.subr.mxu0 0.0
    %4580 = vmatpush1.msra.mxu0 %v4530
    %4581 = vmatprep.subr.mxu0 0.0
    %4582 = vmatpush1.msra.mxu0 %v4528
    %4583 = vmatprep.subr.mxu0 0.0
    %4584 = vmatpush2.msra.mxu0 0.0
    %4585 = vmatprep.subr.mxu0 0.0
    %4586 = vmatpush2.msra.mxu0 0.0
    %4587 = vmatprep.subr.mxu0 0.0
    %4588 = vmatpush2.msra.mxu0 0.0
    %4589 = vmatprep.subr.mxu0 0.0
    %4590 = vmatpush2.msra.mxu0 0.0
    %4591 = vmatprep.subr.mxu0 0.0
    %4592 = vmatpush2.msra.mxu0 0.0
    %4593 = vmatprep.subr.mxu0 0.0
    %4594 = vmatpush2.msra.mxu0 0.0
    %4595 = vmatprep.subr.mxu0 0.0
    %4596 = vmatpush2.msra.mxu0 0.0
    %4597 = vmatprep.subr.mxu0 0.0
    %4598 = vmatpush2.msra.mxu0 0.0
    %4599 = vmatprep.subr.mxu0 0.0
    %4600 = vmatpush2.msra.mxu0 0.0
    %4601 = vmatprep.subr.mxu0 0.0
    %4602 = vmatpush2.msra.mxu0 0.0
    %4603 = vmatprep.subr.mxu0 0.0
    %4604 = vmatpush2.msra.mxu0 0.0
    %4605 = vmatprep.subr.mxu0 0.0
    %4606 = vmatpush2.msra.mxu0 0.0
    %4607 = vmatprep.subr.mxu0 0.0
    %4608 = vmatpush2.msra.mxu0 0.0
    %4609 = vmatprep.subr.mxu0 0.0
    %4610 = vmatpush2.msra.mxu0 0.0
    %4611 = vmatprep.subr.mxu0 0.0
    %4612 = vmatpush2.msra.mxu0 0.0
    %4613 = vmatprep.subr.mxu0 0.0
    %4614 = vmatpush2.msra.mxu0 0.0
    %4615 = vmatprep.mubr.f32.mxu0 0.0
    %4616 = vmatmul.mubr.f32.gmra.mxu0 %v4540
    %v4617 = vpop.f32.mrf.mxu0
    %v4618 = vadd.f32 0.0, %v4617
    %v4619 = vpop.f32.mrf.mxu0
    %4620 = vmatprep.mubr.f32.mxu0 0.0
    %4621 = vmatmul.mubr.f32.gmra.mxu0 %v4543
    %v4622 = vpop.f32.mrf.mxu0
    %v4623 = vadd.f32 0.0, %v4622
    %v4624 = vpop.f32.mrf.mxu0
    %4625 = vmatprep.mubr.f32.mxu0 0.0
    %4626 = vmatmul.mubr.f32.gmra.mxu0 %v4546
    %v4627 = vpop.f32.mrf.mxu0
    %v4628 = vadd.f32 0.0, %v4627
    %v4629 = vpop.f32.mrf.mxu0
    %4630 = vmatprep.mubr.f32.mxu0 0.0
    %4631 = vmatmul.mubr.f32.gmra.mxu0 %v4549
    %v4632 = vpop.f32.mrf.mxu0
    %v4633 = vadd.f32 0.0, %v4632
    %v4634 = vpop.f32.mrf.mxu0
    %4635 = vdwg.mxu0
    %4636 = vrot.lane.b32.xlu0 %v3526, 112
    %v4637 = vpop.permute.xlu0 %4636
    %4638 = vrot.lane.b32.xlu0 %v3531, 112
    %v4639 = vpop.permute.xlu0 %4638
    %4640 = vrot.lane.b32.xlu0 %v3536, 112
    %v4641 = vpop.permute.xlu0 %4640
    %4642 = vrot.lane.b32.xlu0 %v3541, 112
    %v4643 = vpop.permute.xlu0 %4642
    %4644 = vrot.lane.b32.xlu0 %v3526, 80
    %v4645 = vpop.permute.xlu0 %4644
    %4646 = vrot.lane.b32.xlu0 %v3531, 80
    %v4647 = vpop.permute.xlu0 %4646
    %4648 = vrot.lane.b32.xlu0 %v3536, 80
    %v4649 = vpop.permute.xlu0 %4648
    %4650 = vrot.lane.b32.xlu0 %v3541, 80
    %v4651 = vpop.permute.xlu0 %4650
    %v4652 = vsel %vm385, %v4637, 0
    %v4654 = vsel %vm385, %v4639, 0
    %v4656 = vsel %vm385, %v4641, 0
    %v4658 = vsel %vm385, %v4643, 0
    %v4660 = vsel %vm385, %v4645, 0
    %v4662 = vsel %vm385, %v4647, 0
    %v4664 = vsel %vm385, %v4649, 0
    %v4666 = vsel %vm385, %v4651, 0
    %4668 = vmatprep.subr.mxu0 0.0
    %4669 = vmatpush1.xpose.msra.mxu0 0.0
    %4670 = vmatprep.subr.mxu0 0.0
    %4671 = vmatpush1.xpose.msra.mxu0 0.0
    %4672 = vmatprep.subr.mxu0 0.0
    %4673 = vmatpush1.xpose.msra.mxu0 0.0
    %4674 = vmatprep.subr.mxu0 0.0
    %4675 = vmatpush1.xpose.msra.mxu0 0.0
    %4676 = vmatprep.subr.mxu0 0.0
    %4677 = vmatpush1.xpose.msra.mxu0 0.0
    %4678 = vmatprep.subr.mxu0 0.0
    %4679 = vmatpush1.xpose.msra.mxu0 0.0
    %4680 = vmatprep.subr.mxu0 0.0
    %4681 = vmatpush1.xpose.msra.mxu0 0.0
    %4682 = vmatprep.subr.mxu0 0.0
    %4683 = vmatpush1.xpose.msra.mxu0 0.0
    %4684 = vmatprep.subr.mxu0 0.0
    %4685 = vmatpush1.xpose.msra.mxu0 0.0
    %4686 = vmatprep.subr.mxu0 0.0
    %4687 = vmatpush1.xpose.msra.mxu0 0.0
    %4688 = vmatprep.subr.mxu0 0.0
    %4689 = vmatpush1.xpose.msra.mxu0 0.0
    %4690 = vmatprep.subr.mxu0 0.0
    %4691 = vmatpush1.xpose.msra.mxu0 0.0
    %4692 = vmatprep.subr.mxu0 0.0
    %4693 = vmatpush1.xpose.msra.mxu0 %v4666
    %4694 = vmatprep.subr.mxu0 0.0
    %4695 = vmatpush1.xpose.msra.mxu0 %v4664
    %4696 = vmatprep.subr.mxu0 0.0
    %4697 = vmatpush1.xpose.msra.mxu0 %v4662
    %4698 = vmatprep.subr.mxu0 0.0
    %4699 = vmatpush1.xpose.msra.mxu0 %v4660
    %4700 = vmatprep.subr.mxu0 0.0
    %4701 = vmatpush2.xpose.msra.mxu0 0.0
    %4702 = vmatprep.subr.mxu0 0.0
    %4703 = vmatpush2.xpose.msra.mxu0 0.0
    %4704 = vmatprep.subr.mxu0 0.0
    %4705 = vmatpush2.xpose.msra.mxu0 0.0
    %4706 = vmatprep.subr.mxu0 0.0
    %4707 = vmatpush2.xpose.msra.mxu0 0.0
    %4708 = vmatprep.subr.mxu0 0.0
    %4709 = vmatpush2.xpose.msra.mxu0 0.0
    %4710 = vmatprep.subr.mxu0 0.0
    %4711 = vmatpush2.xpose.msra.mxu0 0.0
    %4712 = vmatprep.subr.mxu0 0.0
    %4713 = vmatpush2.xpose.msra.mxu0 0.0
    %4714 = vmatprep.subr.mxu0 0.0
    %4715 = vmatpush2.xpose.msra.mxu0 0.0
    %4716 = vmatprep.subr.mxu0 0.0
    %4717 = vmatpush2.xpose.msra.mxu0 0.0
    %4718 = vmatprep.subr.mxu0 0.0
    %4719 = vmatpush2.xpose.msra.mxu0 0.0
    %4720 = vmatprep.subr.mxu0 0.0
    %4721 = vmatpush2.xpose.msra.mxu0 0.0
    %4722 = vmatprep.subr.mxu0 0.0
    %4723 = vmatpush2.xpose.msra.mxu0 0.0
    %4724 = vmatprep.subr.mxu0 0.0
    %4725 = vmatpush2.xpose.msra.mxu0 0.0
    %4726 = vmatprep.subr.mxu0 0.0
    %4727 = vmatpush2.xpose.msra.mxu0 0.0
    %4728 = vmatprep.subr.mxu0 0.0
    %4729 = vmatpush2.xpose.msra.mxu0 0.0
    %4730 = vmatprep.subr.mxu0 0.0
    %4731 = vmatpush2.xpose.msra.mxu0 0.0
    %4732 = vmatprep.mubr.f32.mxu0 0.0
    %4733 = vmatmul.mubr.f32.gmra.mxu0 %v4652
    %v4734 = vpop.f32.mrf.mxu0
    %v4735 = vadd.f32 0.0, %v4734
    %v4736 = vpop.f32.mrf.mxu0
    %4737 = vmatprep.mubr.f32.mxu0 0.0
    %4738 = vmatmul.mubr.f32.gmra.mxu0 %v4654
    %v4739 = vpop.f32.mrf.mxu0
    %v4740 = vadd.f32 0.0, %v4739
    %v4741 = vpop.f32.mrf.mxu0
    %4742 = vmatprep.mubr.f32.mxu0 0.0
    %4743 = vmatmul.mubr.f32.gmra.mxu0 %v4656
    %v4744 = vpop.f32.mrf.mxu0
    %v4745 = vadd.f32 0.0, %v4744
    %v4746 = vpop.f32.mrf.mxu0
    %4747 = vmatprep.mubr.f32.mxu0 0.0
    %4748 = vmatmul.mubr.f32.gmra.mxu0 %v4658
    %v4749 = vpop.f32.mrf.mxu0
    %v4750 = vadd.f32 0.0, %v4749
    %v4751 = vpop.f32.mrf.mxu0
    %4752 = vdwg.mxu0
    %4753 = vrot.lane.b32.xlu0 %v3546, 112
    %v4754 = vpop.permute.xlu0 %4753
    %4755 = vrot.lane.b32.xlu0 %v3551, 112
    %v4756 = vpop.permute.xlu0 %4755
    %4757 = vrot.lane.b32.xlu0 %v3556, 112
    %v4758 = vpop.permute.xlu0 %4757
    %4759 = vrot.lane.b32.xlu0 %v3561, 112
    %v4760 = vpop.permute.xlu0 %4759
    %4761 = vrot.lane.b32.xlu0 %v3546, 80
    %v4762 = vpop.permute.xlu0 %4761
    %4763 = vrot.lane.b32.xlu0 %v3551, 80
    %v4764 = vpop.permute.xlu0 %4763
    %4765 = vrot.lane.b32.xlu0 %v3556, 80
    %v4766 = vpop.permute.xlu0 %4765
    %4767 = vrot.lane.b32.xlu0 %v3561, 80
    %v4768 = vpop.permute.xlu0 %4767
    %v4769 = vsel %vm385, %v4754, 0
    %v4771 = vsel %vm385, %v4756, 0
    %v4773 = vsel %vm385, %v4758, 0
    %v4775 = vsel %vm385, %v4760, 0
    %v4777 = vsel %vm385, %v4762, 0
    %v4779 = vsel %vm385, %v4764, 0
    %v4781 = vsel %vm385, %v4766, 0
    %v4783 = vsel %vm385, %v4768, 0
    %4785 = vmatprep.subr.mxu0 0.0
    %4786 = vmatpush1.xpose.msra.mxu0 0.0
    %4787 = vmatprep.subr.mxu0 0.0
    %4788 = vmatpush1.xpose.msra.mxu0 0.0
    %4789 = vmatprep.subr.mxu0 0.0
    %4790 = vmatpush1.xpose.msra.mxu0 0.0
    %4791 = vmatprep.subr.mxu0 0.0
    %4792 = vmatpush1.xpose.msra.mxu0 0.0
    %4793 = vmatprep.subr.mxu0 0.0
    %4794 = vmatpush1.xpose.msra.mxu0 0.0
    %4795 = vmatprep.subr.mxu0 0.0
    %4796 = vmatpush1.xpose.msra.mxu0 0.0
    %4797 = vmatprep.subr.mxu0 0.0
    %4798 = vmatpush1.xpose.msra.mxu0 0.0
    %4799 = vmatprep.subr.mxu0 0.0
    %4800 = vmatpush1.xpose.msra.mxu0 0.0
    %4801 = vmatprep.subr.mxu0 0.0
    %4802 = vmatpush1.xpose.msra.mxu0 0.0
    %4803 = vmatprep.subr.mxu0 0.0
    %4804 = vmatpush1.xpose.msra.mxu0 0.0
    %4805 = vmatprep.subr.mxu0 0.0
    %4806 = vmatpush1.xpose.msra.mxu0 0.0
    %4807 = vmatprep.subr.mxu0 0.0
    %4808 = vmatpush1.xpose.msra.mxu0 0.0
    %4809 = vmatprep.subr.mxu0 0.0
    %4810 = vmatpush1.xpose.msra.mxu0 %v4783
    %4811 = vmatprep.subr.mxu0 0.0
    %4812 = vmatpush1.xpose.msra.mxu0 %v4781
    %4813 = vmatprep.subr.mxu0 0.0
    %4814 = vmatpush1.xpose.msra.mxu0 %v4779
    %4815 = vmatprep.subr.mxu0 0.0
    %4816 = vmatpush1.xpose.msra.mxu0 %v4777
    %4817 = vmatprep.subr.mxu0 0.0
    %4818 = vmatpush2.xpose.msra.mxu0 0.0
    %4819 = vmatprep.subr.mxu0 0.0
    %4820 = vmatpush2.xpose.msra.mxu0 0.0
    %4821 = vmatprep.subr.mxu0 0.0
    %4822 = vmatpush2.xpose.msra.mxu0 0.0
    %4823 = vmatprep.subr.mxu0 0.0
    %4824 = vmatpush2.xpose.msra.mxu0 0.0
    %4825 = vmatprep.subr.mxu0 0.0
    %4826 = vmatpush2.xpose.msra.mxu0 0.0
    %4827 = vmatprep.subr.mxu0 0.0
    %4828 = vmatpush2.xpose.msra.mxu0 0.0
    %4829 = vmatprep.subr.mxu0 0.0
    %4830 = vmatpush2.xpose.msra.mxu0 0.0
    %4831 = vmatprep.subr.mxu0 0.0
    %4832 = vmatpush2.xpose.msra.mxu0 0.0
    %4833 = vmatprep.subr.mxu0 0.0
    %4834 = vmatpush2.xpose.msra.mxu0 0.0
    %4835 = vmatprep.subr.mxu0 0.0
    %4836 = vmatpush2.xpose.msra.mxu0 0.0
    %4837 = vmatprep.subr.mxu0 0.0
    %4838 = vmatpush2.xpose.msra.mxu0 0.0
    %4839 = vmatprep.subr.mxu0 0.0
    %4840 = vmatpush2.xpose.msra.mxu0 0.0
    %4841 = vmatprep.subr.mxu0 0.0
    %4842 = vmatpush2.xpose.msra.mxu0 0.0
    %4843 = vmatprep.subr.mxu0 0.0
    %4844 = vmatpush2.xpose.msra.mxu0 0.0
    %4845 = vmatprep.subr.mxu0 0.0
    %4846 = vmatpush2.xpose.msra.mxu0 0.0
    %4847 = vmatprep.subr.mxu0 0.0
    %4848 = vmatpush2.xpose.msra.mxu0 0.0
    %4849 = vmatprep.mubr.f32.mxu0 0.0
    %4850 = vmatmul.mubr.f32.gmra.mxu0 %v4769
    %v4851 = vpop.f32.mrf.mxu0
    %v4852 = vadd.f32 0.0, %v4851
    %v4853 = vpop.f32.mrf.mxu0
    %4854 = vmatprep.mubr.f32.mxu0 0.0
    %4855 = vmatmul.mubr.f32.gmra.mxu0 %v4771
    %v4856 = vpop.f32.mrf.mxu0
    %v4857 = vadd.f32 0.0, %v4856
    %v4858 = vpop.f32.mrf.mxu0
    %4859 = vmatprep.mubr.f32.mxu0 0.0
    %4860 = vmatmul.mubr.f32.gmra.mxu0 %v4773
    %v4861 = vpop.f32.mrf.mxu0
    %v4862 = vadd.f32 0.0, %v4861
    %v4863 = vpop.f32.mrf.mxu0
    %4864 = vmatprep.mubr.f32.mxu0 0.0
    %4865 = vmatmul.mubr.f32.gmra.mxu0 %v4775
    %v4866 = vpop.f32.mrf.mxu0
    %v4867 = vadd.f32 0.0, %v4866
    %v4868 = vpop.f32.mrf.mxu0
    %4869 = vdwg.mxu0
    %v4870 = vsel %vm106, %v4735, -inf
    %4871 = vmax.xlane.f32.xlu0 %v4870
    %v4872 = vpop.xlane.xlu0 %4871
    %v4873 = vsel %vm106, %v4740, -inf
    %4874 = vmax.xlane.f32.xlu0 %v4873
    %v4875 = vpop.xlane.xlu0 %4874
    %v4876 = vsel %vm106, %v4745, -inf
    %4877 = vmax.xlane.f32.xlu0 %v4876
    %v4878 = vpop.xlane.xlu0 %4877
    %v4879 = vsel %vm106, %v4750, -inf
    %4880 = vmax.xlane.f32.xlu0 %v4879
    %v4881 = vpop.xlane.xlu0 %4880
    %v4882 = vsel %vm106, %v4852, -inf
    %4883 = vmax.xlane.f32.xlu0 %v4882
    %v4884 = vpop.xlane.xlu0 %4883
    %v4885 = vsel %vm106, %v4857, -inf
    %4886 = vmax.xlane.f32.xlu0 %v4885
    %v4887 = vpop.xlane.xlu0 %4886
    %v4888 = vsel %vm106, %v4862, -inf
    %4889 = vmax.xlane.f32.xlu0 %v4888
    %v4890 = vpop.xlane.xlu0 %4889
    %v4891 = vsel %vm106, %v4867, -inf
    %4892 = vmax.xlane.f32.xlu0 %v4891
    %v4893 = vpop.xlane.xlu0 %4892
    %v4894 = vsub.f32 %v4735, %v4872
    %v4895 = vsub.f32 %v4740, %v4875
    %v4896 = vsub.f32 %v4745, %v4878
    %v4897 = vsub.f32 %v4750, %v4881
    %v4898 = vsub.f32 %v4852, %v4884
    %v4899 = vsub.f32 %v4857, %v4887
    %v4900 = vsub.f32 %v4862, %v4890
    %v4901 = vsub.f32 %v4867, %v4893
    %v4902 = vmul.f32 %v4894, 1.442695
    %v4903 = vpow.pop %v4902
    %v4904 = vmul.f32 %v4895, 1.442695
    %v4905 = vpow.pop %v4904
    %v4906 = vmul.f32 %v4896, 1.442695
    %v4907 = vpow.pop %v4906
    %v4908 = vmul.f32 %v4897, 1.442695
    %v4909 = vpow.pop %v4908
    %v4910 = vmul.f32 %v4898, 1.442695
    %v4911 = vpow.pop %v4910
    %v4912 = vmul.f32 %v4899, 1.442695
    %v4913 = vpow.pop %v4912
    %v4914 = vmul.f32 %v4900, 1.442695
    %v4915 = vpow.pop %v4914
    %v4916 = vmul.f32 %v4901, 1.442695
    %v4917 = vpow.pop %v4916
    %v4918 = vsel %vm106, %v4903, 0.0
    %4919 = vadd.xlane.f32.xlu0 %v4918
    %v4920 = vpop.xlane.xlu0 %4919
    %v4921 = vsel %vm106, %v4905, 0.0
    %4922 = vadd.xlane.f32.xlu0 %v4921
    %v4923 = vpop.xlane.xlu0 %4922
    %v4924 = vsel %vm106, %v4907, 0.0
    %4925 = vadd.xlane.f32.xlu0 %v4924
    %v4926 = vpop.xlane.xlu0 %4925
    %v4927 = vsel %vm106, %v4909, 0.0
    %4928 = vadd.xlane.f32.xlu0 %v4927
    %v4929 = vpop.xlane.xlu0 %4928
    %v4930 = vsel %vm106, %v4911, 0.0
    %4931 = vadd.xlane.f32.xlu0 %v4930
    %v4932 = vpop.xlane.xlu0 %4931
    %v4933 = vsel %vm106, %v4913, 0.0
    %4934 = vadd.xlane.f32.xlu0 %v4933
    %v4935 = vpop.xlane.xlu0 %4934
    %v4936 = vsel %vm106, %v4915, 0.0
    %4937 = vadd.xlane.f32.xlu0 %v4936
    %v4938 = vpop.xlane.xlu0 %4937
    %v4939 = vsel %vm106, %v4917, 0.0
    %4940 = vadd.xlane.f32.xlu0 %v4939
    %v4941 = vpop.xlane.xlu0 %4940
    %v4942 = vrcp.pop %v4920
    %v4943 = vrcp.pop %v4923
    %v4944 = vrcp.pop %v4926
    %v4945 = vrcp.pop %v4929
    %v4946 = vrcp.pop %v4932
    %v4947 = vrcp.pop %v4935
    %v4948 = vrcp.pop %v4938
    %v4949 = vrcp.pop %v4941
    %v4950 = vmul.f32 %v4903, %v4942
    %v4951 = vmul.f32 %v4905, %v4943
    %v4952 = vmul.f32 %v4907, %v4944
    %v4953 = vmul.f32 %v4909, %v4945
    %v4954 = vmul.f32 %v4911, %v4946
    %v4955 = vmul.f32 %v4913, %v4947
    %v4956 = vmul.f32 %v4915, %v4948
    %v4957 = vmul.f32 %v4917, %v4949
    %4958 = vrot.lane.b32.xlu0 %v3526, 48
    %v4959 = vpop.permute.xlu0 %4958
    %4960 = vrot.lane.b32.xlu0 %v3531, 48
    %v4961 = vpop.permute.xlu0 %4960
    %4962 = vrot.lane.b32.xlu0 %v3536, 48
    %v4963 = vpop.permute.xlu0 %4962
    %4964 = vrot.lane.b32.xlu0 %v3541, 48
    %v4965 = vpop.permute.xlu0 %4964
    %v4971 = vsel %vm106, %v4950, 0
    %v4974 = vsel %vm106, %v4951, 0
    %v4977 = vsel %vm106, %v4952, 0
    %v4980 = vsel %vm106, %v4953, 0
    %4982 = vmatprep.subr.mxu0 0.0
    %4983 = vmatpush1.msra.mxu0 0.0
    %4984 = vmatprep.subr.mxu0 0.0
    %4985 = vmatpush1.msra.mxu0 0.0
    %4986 = vmatprep.subr.mxu0 0.0
    %4987 = vmatpush1.msra.mxu0 0.0
    %4988 = vmatprep.subr.mxu0 0.0
    %4989 = vmatpush1.msra.mxu0 0.0
    %4990 = vmatprep.subr.mxu0 0.0
    %4991 = vmatpush1.msra.mxu0 0.0
    %4992 = vmatprep.subr.mxu0 0.0
    %4993 = vmatpush1.msra.mxu0 0.0
    %4994 = vmatprep.subr.mxu0 0.0
    %4995 = vmatpush1.msra.mxu0 0.0
    %4996 = vmatprep.subr.mxu0 0.0
    %4997 = vmatpush1.msra.mxu0 0.0
    %4998 = vmatprep.subr.mxu0 0.0
    %4999 = vmatpush1.msra.mxu0 0.0
    %5000 = vmatprep.subr.mxu0 0.0
    %5001 = vmatpush1.msra.mxu0 0.0
    %5002 = vmatprep.subr.mxu0 0.0
    %5003 = vmatpush1.msra.mxu0 0.0
    %5004 = vmatprep.subr.mxu0 0.0
    %5005 = vmatpush1.msra.mxu0 0.0
    %5006 = vmatprep.subr.mxu0 0.0
    %5007 = vmatpush1.msra.mxu0 %v4965
    %5008 = vmatprep.subr.mxu0 0.0
    %5009 = vmatpush1.msra.mxu0 %v4963
    %5010 = vmatprep.subr.mxu0 0.0
    %5011 = vmatpush1.msra.mxu0 %v4961
    %5012 = vmatprep.subr.mxu0 0.0
    %5013 = vmatpush1.msra.mxu0 %v4959
    %5014 = vmatprep.subr.mxu0 0.0
    %5015 = vmatpush2.msra.mxu0 0.0
    %5016 = vmatprep.subr.mxu0 0.0
    %5017 = vmatpush2.msra.mxu0 0.0
    %5018 = vmatprep.subr.mxu0 0.0
    %5019 = vmatpush2.msra.mxu0 0.0
    %5020 = vmatprep.subr.mxu0 0.0
    %5021 = vmatpush2.msra.mxu0 0.0
    %5022 = vmatprep.subr.mxu0 0.0
    %5023 = vmatpush2.msra.mxu0 0.0
    %5024 = vmatprep.subr.mxu0 0.0
    %5025 = vmatpush2.msra.mxu0 0.0
    %5026 = vmatprep.subr.mxu0 0.0
    %5027 = vmatpush2.msra.mxu0 0.0
    %5028 = vmatprep.subr.mxu0 0.0
    %5029 = vmatpush2.msra.mxu0 0.0
    %5030 = vmatprep.subr.mxu0 0.0
    %5031 = vmatpush2.msra.mxu0 0.0
    %5032 = vmatprep.subr.mxu0 0.0
    %5033 = vmatpush2.msra.mxu0 0.0
    %5034 = vmatprep.subr.mxu0 0.0
    %5035 = vmatpush2.msra.mxu0 0.0
    %5036 = vmatprep.subr.mxu0 0.0
    %5037 = vmatpush2.msra.mxu0 0.0
    %5038 = vmatprep.subr.mxu0 0.0
    %5039 = vmatpush2.msra.mxu0 0.0
    %5040 = vmatprep.subr.mxu0 0.0
    %5041 = vmatpush2.msra.mxu0 0.0
    %5042 = vmatprep.subr.mxu0 0.0
    %5043 = vmatpush2.msra.mxu0 0.0
    %5044 = vmatprep.subr.mxu0 0.0
    %5045 = vmatpush2.msra.mxu0 0.0
    %5046 = vmatprep.mubr.f32.mxu0 0.0
    %5047 = vmatmul.mubr.f32.gmra.mxu0 %v4971
    %v5048 = vpop.f32.mrf.mxu0
    %v5049 = vadd.f32 0.0, %v5048
    %v5050 = vpop.f32.mrf.mxu0
    %5051 = vmatprep.mubr.f32.mxu0 0.0
    %5052 = vmatmul.mubr.f32.gmra.mxu0 %v4974
    %v5053 = vpop.f32.mrf.mxu0
    %v5054 = vadd.f32 0.0, %v5053
    %v5055 = vpop.f32.mrf.mxu0
    %5056 = vmatprep.mubr.f32.mxu0 0.0
    %5057 = vmatmul.mubr.f32.gmra.mxu0 %v4977
    %v5058 = vpop.f32.mrf.mxu0
    %v5059 = vadd.f32 0.0, %v5058
    %v5060 = vpop.f32.mrf.mxu0
    %5061 = vmatprep.mubr.f32.mxu0 0.0
    %5062 = vmatmul.mubr.f32.gmra.mxu0 %v4980
    %v5063 = vpop.f32.mrf.mxu0
    %v5064 = vadd.f32 0.0, %v5063
    %v5065 = vpop.f32.mrf.mxu0
    %5066 = vdwg.mxu0
    %5067 = vrot.lane.b32.xlu0 %v3546, 48
    %v5068 = vpop.permute.xlu0 %5067
    %5069 = vrot.lane.b32.xlu0 %v3551, 48
    %v5070 = vpop.permute.xlu0 %5069
    %5071 = vrot.lane.b32.xlu0 %v3556, 48
    %v5072 = vpop.permute.xlu0 %5071
    %5073 = vrot.lane.b32.xlu0 %v3561, 48
    %v5074 = vpop.permute.xlu0 %5073
    %v5080 = vsel %vm106, %v4954, 0
    %v5083 = vsel %vm106, %v4955, 0
    %v5086 = vsel %vm106, %v4956, 0
    %v5089 = vsel %vm106, %v4957, 0
    %5091 = vmatprep.subr.mxu0 0.0
    %5092 = vmatpush1.msra.mxu0 0.0
    %5093 = vmatprep.subr.mxu0 0.0
    %5094 = vmatpush1.msra.mxu0 0.0
    %5095 = vmatprep.subr.mxu0 0.0
    %5096 = vmatpush1.msra.mxu0 0.0
    %5097 = vmatprep.subr.mxu0 0.0
    %5098 = vmatpush1.msra.mxu0 0.0
    %5099 = vmatprep.subr.mxu0 0.0
    %5100 = vmatpush1.msra.mxu0 0.0
    %5101 = vmatprep.subr.mxu0 0.0
    %5102 = vmatpush1.msra.mxu0 0.0
    %5103 = vmatprep.subr.mxu0 0.0
    %5104 = vmatpush1.msra.mxu0 0.0
    %5105 = vmatprep.subr.mxu0 0.0
    %5106 = vmatpush1.msra.mxu0 0.0
    %5107 = vmatprep.subr.mxu0 0.0
    %5108 = vmatpush1.msra.mxu0 0.0
    %5109 = vmatprep.subr.mxu0 0.0
    %5110 = vmatpush1.msra.mxu0 0.0
    %5111 = vmatprep.subr.mxu0 0.0
    %5112 = vmatpush1.msra.mxu0 0.0
    %5113 = vmatprep.subr.mxu0 0.0
    %5114 = vmatpush1.msra.mxu0 0.0
    %5115 = vmatprep.subr.mxu0 0.0
    %5116 = vmatpush1.msra.mxu0 %v5074
    %5117 = vmatprep.subr.mxu0 0.0
    %5118 = vmatpush1.msra.mxu0 %v5072
    %5119 = vmatprep.subr.mxu0 0.0
    %5120 = vmatpush1.msra.mxu0 %v5070
    %5121 = vmatprep.subr.mxu0 0.0
    %5122 = vmatpush1.msra.mxu0 %v5068
    %5123 = vmatprep.subr.mxu0 0.0
    %5124 = vmatpush2.msra.mxu0 0.0
    %5125 = vmatprep.subr.mxu0 0.0
    %5126 = vmatpush2.msra.mxu0 0.0
    %5127 = vmatprep.subr.mxu0 0.0
    %5128 = vmatpush2.msra.mxu0 0.0
    %5129 = vmatprep.subr.mxu0 0.0
    %5130 = vmatpush2.msra.mxu0 0.0
    %5131 = vmatprep.subr.mxu0 0.0
    %5132 = vmatpush2.msra.mxu0 0.0
    %5133 = vmatprep.subr.mxu0 0.0
    %5134 = vmatpush2.msra.mxu0 0.0
    %5135 = vmatprep.subr.mxu0 0.0
    %5136 = vmatpush2.msra.mxu0 0.0
    %5137 = vmatprep.subr.mxu0 0.0
    %5138 = vmatpush2.msra.mxu0 0.0
    %5139 = vmatprep.subr.mxu0 0.0
    %5140 = vmatpush2.msra.mxu0 0.0
    %5141 = vmatprep.subr.mxu0 0.0
    %5142 = vmatpush2.msra.mxu0 0.0
    %5143 = vmatprep.subr.mxu0 0.0
    %5144 = vmatpush2.msra.mxu0 0.0
    %5145 = vmatprep.subr.mxu0 0.0
    %5146 = vmatpush2.msra.mxu0 0.0
    %5147 = vmatprep.subr.mxu0 0.0
    %5148 = vmatpush2.msra.mxu0 0.0
    %5149 = vmatprep.subr.mxu0 0.0
    %5150 = vmatpush2.msra.mxu0 0.0
    %5151 = vmatprep.subr.mxu0 0.0
    %5152 = vmatpush2.msra.mxu0 0.0
    %5153 = vmatprep.subr.mxu0 0.0
    %5154 = vmatpush2.msra.mxu0 0.0
    %5155 = vmatprep.mubr.f32.mxu0 0.0
    %5156 = vmatmul.mubr.f32.gmra.mxu0 %v5080
    %v5157 = vpop.f32.mrf.mxu0
    %v5158 = vadd.f32 0.0, %v5157
    %v5159 = vpop.f32.mrf.mxu0
    %5160 = vmatprep.mubr.f32.mxu0 0.0
    %5161 = vmatmul.mubr.f32.gmra.mxu0 %v5083
    %v5162 = vpop.f32.mrf.mxu0
    %v5163 = vadd.f32 0.0, %v5162
    %v5164 = vpop.f32.mrf.mxu0
    %5165 = vmatprep.mubr.f32.mxu0 0.0
    %5166 = vmatmul.mubr.f32.gmra.mxu0 %v5086
    %v5167 = vpop.f32.mrf.mxu0
    %v5168 = vadd.f32 0.0, %v5167
    %v5169 = vpop.f32.mrf.mxu0
    %5170 = vmatprep.mubr.f32.mxu0 0.0
    %5171 = vmatmul.mubr.f32.gmra.mxu0 %v5089
    %v5172 = vpop.f32.mrf.mxu0
    %v5173 = vadd.f32 0.0, %v5172
    %v5174 = vpop.f32.mrf.mxu0
    %5175 = vdwg.mxu0
    %5176 = vrot.lane.b32.xlu0 %v3526, 104
    %v5177 = vpop.permute.xlu0 %5176
    %5178 = vrot.lane.b32.xlu0 %v3531, 104
    %v5179 = vpop.permute.xlu0 %5178
    %5180 = vrot.lane.b32.xlu0 %v3536, 104
    %v5181 = vpop.permute.xlu0 %5180
    %5182 = vrot.lane.b32.xlu0 %v3541, 104
    %v5183 = vpop.permute.xlu0 %5182
    %5184 = vrot.lane.b32.xlu0 %v3526, 72
    %v5185 = vpop.permute.xlu0 %5184
    %5186 = vrot.lane.b32.xlu0 %v3531, 72
    %v5187 = vpop.permute.xlu0 %5186
    %5188 = vrot.lane.b32.xlu0 %v3536, 72
    %v5189 = vpop.permute.xlu0 %5188
    %5190 = vrot.lane.b32.xlu0 %v3541, 72
    %v5191 = vpop.permute.xlu0 %5190
    %v5192 = vsel %vm385, %v5177, 0
    %v5194 = vsel %vm385, %v5179, 0
    %v5196 = vsel %vm385, %v5181, 0
    %v5198 = vsel %vm385, %v5183, 0
    %v5200 = vsel %vm385, %v5185, 0
    %v5202 = vsel %vm385, %v5187, 0
    %v5204 = vsel %vm385, %v5189, 0
    %v5206 = vsel %vm385, %v5191, 0
    %5208 = vmatprep.subr.mxu0 0.0
    %5209 = vmatpush1.xpose.msra.mxu0 0.0
    %5210 = vmatprep.subr.mxu0 0.0
    %5211 = vmatpush1.xpose.msra.mxu0 0.0
    %5212 = vmatprep.subr.mxu0 0.0
    %5213 = vmatpush1.xpose.msra.mxu0 0.0
    %5214 = vmatprep.subr.mxu0 0.0
    %5215 = vmatpush1.xpose.msra.mxu0 0.0
    %5216 = vmatprep.subr.mxu0 0.0
    %5217 = vmatpush1.xpose.msra.mxu0 0.0
    %5218 = vmatprep.subr.mxu0 0.0
    %5219 = vmatpush1.xpose.msra.mxu0 0.0
    %5220 = vmatprep.subr.mxu0 0.0
    %5221 = vmatpush1.xpose.msra.mxu0 0.0
    %5222 = vmatprep.subr.mxu0 0.0
    %5223 = vmatpush1.xpose.msra.mxu0 0.0
    %5224 = vmatprep.subr.mxu0 0.0
    %5225 = vmatpush1.xpose.msra.mxu0 0.0
    %5226 = vmatprep.subr.mxu0 0.0
    %5227 = vmatpush1.xpose.msra.mxu0 0.0
    %5228 = vmatprep.subr.mxu0 0.0
    %5229 = vmatpush1.xpose.msra.mxu0 0.0
    %5230 = vmatprep.subr.mxu0 0.0
    %5231 = vmatpush1.xpose.msra.mxu0 0.0
    %5232 = vmatprep.subr.mxu0 0.0
    %5233 = vmatpush1.xpose.msra.mxu0 %v5206
    %5234 = vmatprep.subr.mxu0 0.0
    %5235 = vmatpush1.xpose.msra.mxu0 %v5204
    %5236 = vmatprep.subr.mxu0 0.0
    %5237 = vmatpush1.xpose.msra.mxu0 %v5202
    %5238 = vmatprep.subr.mxu0 0.0
    %5239 = vmatpush1.xpose.msra.mxu0 %v5200
    %5240 = vmatprep.subr.mxu0 0.0
    %5241 = vmatpush2.xpose.msra.mxu0 0.0
    %5242 = vmatprep.subr.mxu0 0.0
    %5243 = vmatpush2.xpose.msra.mxu0 0.0
    %5244 = vmatprep.subr.mxu0 0.0
    %5245 = vmatpush2.xpose.msra.mxu0 0.0
    %5246 = vmatprep.subr.mxu0 0.0
    %5247 = vmatpush2.xpose.msra.mxu0 0.0
    %5248 = vmatprep.subr.mxu0 0.0
    %5249 = vmatpush2.xpose.msra.mxu0 0.0
    %5250 = vmatprep.subr.mxu0 0.0
    %5251 = vmatpush2.xpose.msra.mxu0 0.0
    %5252 = vmatprep.subr.mxu0 0.0
    %5253 = vmatpush2.xpose.msra.mxu0 0.0
    %5254 = vmatprep.subr.mxu0 0.0
    %5255 = vmatpush2.xpose.msra.mxu0 0.0
    %5256 = vmatprep.subr.mxu0 0.0
    %5257 = vmatpush2.xpose.msra.mxu0 0.0
    %5258 = vmatprep.subr.mxu0 0.0
    %5259 = vmatpush2.xpose.msra.mxu0 0.0
    %5260 = vmatprep.subr.mxu0 0.0
    %5261 = vmatpush2.xpose.msra.mxu0 0.0
    %5262 = vmatprep.subr.mxu0 0.0
    %5263 = vmatpush2.xpose.msra.mxu0 0.0
    %5264 = vmatprep.subr.mxu0 0.0
    %5265 = vmatpush2.xpose.msra.mxu0 0.0
    %5266 = vmatprep.subr.mxu0 0.0
    %5267 = vmatpush2.xpose.msra.mxu0 0.0
    %5268 = vmatprep.subr.mxu0 0.0
    %5269 = vmatpush2.xpose.msra.mxu0 0.0
    %5270 = vmatprep.subr.mxu0 0.0
    %5271 = vmatpush2.xpose.msra.mxu0 0.0
    %5272 = vmatprep.mubr.f32.mxu0 0.0
    %5273 = vmatmul.mubr.f32.gmra.mxu0 %v5192
    %v5274 = vpop.f32.mrf.mxu0
    %v5275 = vadd.f32 0.0, %v5274
    %v5276 = vpop.f32.mrf.mxu0
    %5277 = vmatprep.mubr.f32.mxu0 0.0
    %5278 = vmatmul.mubr.f32.gmra.mxu0 %v5194
    %v5279 = vpop.f32.mrf.mxu0
    %v5280 = vadd.f32 0.0, %v5279
    %v5281 = vpop.f32.mrf.mxu0
    %5282 = vmatprep.mubr.f32.mxu0 0.0
    %5283 = vmatmul.mubr.f32.gmra.mxu0 %v5196
    %v5284 = vpop.f32.mrf.mxu0
    %v5285 = vadd.f32 0.0, %v5284
    %v5286 = vpop.f32.mrf.mxu0
    %5287 = vmatprep.mubr.f32.mxu0 0.0
    %5288 = vmatmul.mubr.f32.gmra.mxu0 %v5198
    %v5289 = vpop.f32.mrf.mxu0
    %v5290 = vadd.f32 0.0, %v5289
    %v5291 = vpop.f32.mrf.mxu0
    %5292 = vdwg.mxu0
    %5293 = vrot.lane.b32.xlu0 %v3546, 104
    %v5294 = vpop.permute.xlu0 %5293
    %5295 = vrot.lane.b32.xlu0 %v3551, 104
    %v5296 = vpop.permute.xlu0 %5295
    %5297 = vrot.lane.b32.xlu0 %v3556, 104
    %v5298 = vpop.permute.xlu0 %5297
    %5299 = vrot.lane.b32.xlu0 %v3561, 104
    %v5300 = vpop.permute.xlu0 %5299
    %5301 = vrot.lane.b32.xlu0 %v3546, 72
    %v5302 = vpop.permute.xlu0 %5301
    %5303 = vrot.lane.b32.xlu0 %v3551, 72
    %v5304 = vpop.permute.xlu0 %5303
    %5305 = vrot.lane.b32.xlu0 %v3556, 72
    %v5306 = vpop.permute.xlu0 %5305
    %5307 = vrot.lane.b32.xlu0 %v3561, 72
    %v5308 = vpop.permute.xlu0 %5307
    %v5309 = vsel %vm385, %v5294, 0
    %v5311 = vsel %vm385, %v5296, 0
    %v5313 = vsel %vm385, %v5298, 0
    %v5315 = vsel %vm385, %v5300, 0
    %v5317 = vsel %vm385, %v5302, 0
    %v5319 = vsel %vm385, %v5304, 0
    %v5321 = vsel %vm385, %v5306, 0
    %v5323 = vsel %vm385, %v5308, 0
    %5325 = vmatprep.subr.mxu0 0.0
    %5326 = vmatpush1.xpose.msra.mxu0 0.0
    %5327 = vmatprep.subr.mxu0 0.0
    %5328 = vmatpush1.xpose.msra.mxu0 0.0
    %5329 = vmatprep.subr.mxu0 0.0
    %5330 = vmatpush1.xpose.msra.mxu0 0.0
    %5331 = vmatprep.subr.mxu0 0.0
    %5332 = vmatpush1.xpose.msra.mxu0 0.0
    %5333 = vmatprep.subr.mxu0 0.0
    %5334 = vmatpush1.xpose.msra.mxu0 0.0
    %5335 = vmatprep.subr.mxu0 0.0
    %5336 = vmatpush1.xpose.msra.mxu0 0.0
    %5337 = vmatprep.subr.mxu0 0.0
    %5338 = vmatpush1.xpose.msra.mxu0 0.0
    %5339 = vmatprep.subr.mxu0 0.0
    %5340 = vmatpush1.xpose.msra.mxu0 0.0
    %5341 = vmatprep.subr.mxu0 0.0
    %5342 = vmatpush1.xpose.msra.mxu0 0.0
    %5343 = vmatprep.subr.mxu0 0.0
    %5344 = vmatpush1.xpose.msra.mxu0 0.0
    %5345 = vmatprep.subr.mxu0 0.0
    %5346 = vmatpush1.xpose.msra.mxu0 0.0
    %5347 = vmatprep.subr.mxu0 0.0
    %5348 = vmatpush1.xpose.msra.mxu0 0.0
    %5349 = vmatprep.subr.mxu0 0.0
    %5350 = vmatpush1.xpose.msra.mxu0 %v5323
    %5351 = vmatprep.subr.mxu0 0.0
    %5352 = vmatpush1.xpose.msra.mxu0 %v5321
    %5353 = vmatprep.subr.mxu0 0.0
    %5354 = vmatpush1.xpose.msra.mxu0 %v5319
    %5355 = vmatprep.subr.mxu0 0.0
    %5356 = vmatpush1.xpose.msra.mxu0 %v5317
    %5357 = vmatprep.subr.mxu0 0.0
    %5358 = vmatpush2.xpose.msra.mxu0 0.0
    %5359 = vmatprep.subr.mxu0 0.0
    %5360 = vmatpush2.xpose.msra.mxu0 0.0
    %5361 = vmatprep.subr.mxu0 0.0
    %5362 = vmatpush2.xpose.msra.mxu0 0.0
    %5363 = vmatprep.subr.mxu0 0.0
    %5364 = vmatpush2.xpose.msra.mxu0 0.0
    %5365 = vmatprep.subr.mxu0 0.0
    %5366 = vmatpush2.xpose.msra.mxu0 0.0
    %5367 = vmatprep.subr.mxu0 0.0
    %5368 = vmatpush2.xpose.msra.mxu0 0.0
    %5369 = vmatprep.subr.mxu0 0.0
    %5370 = vmatpush2.xpose.msra.mxu0 0.0
    %5371 = vmatprep.subr.mxu0 0.0
    %5372 = vmatpush2.xpose.msra.mxu0 0.0
    %5373 = vmatprep.subr.mxu0 0.0
    %5374 = vmatpush2.xpose.msra.mxu0 0.0
    %5375 = vmatprep.subr.mxu0 0.0
    %5376 = vmatpush2.xpose.msra.mxu0 0.0
    %5377 = vmatprep.subr.mxu0 0.0
    %5378 = vmatpush2.xpose.msra.mxu0 0.0
    %5379 = vmatprep.subr.mxu0 0.0
    %5380 = vmatpush2.xpose.msra.mxu0 0.0
    %5381 = vmatprep.subr.mxu0 0.0
    %5382 = vmatpush2.xpose.msra.mxu0 0.0
    %5383 = vmatprep.subr.mxu0 0.0
    %5384 = vmatpush2.xpose.msra.mxu0 0.0
    %5385 = vmatprep.subr.mxu0 0.0
    %5386 = vmatpush2.xpose.msra.mxu0 0.0
    %5387 = vmatprep.subr.mxu0 0.0
    %5388 = vmatpush2.xpose.msra.mxu0 0.0
    %5389 = vmatprep.mubr.f32.mxu0 0.0
    %5390 = vmatmul.mubr.f32.gmra.mxu0 %v5309
    %v5391 = vpop.f32.mrf.mxu0
    %v5392 = vadd.f32 0.0, %v5391
    %v5393 = vpop.f32.mrf.mxu0
    %5394 = vmatprep.mubr.f32.mxu0 0.0
    %5395 = vmatmul.mubr.f32.gmra.mxu0 %v5311
    %v5396 = vpop.f32.mrf.mxu0
    %v5397 = vadd.f32 0.0, %v5396
    %v5398 = vpop.f32.mrf.mxu0
    %5399 = vmatprep.mubr.f32.mxu0 0.0
    %5400 = vmatmul.mubr.f32.gmra.mxu0 %v5313
    %v5401 = vpop.f32.mrf.mxu0
    %v5402 = vadd.f32 0.0, %v5401
    %v5403 = vpop.f32.mrf.mxu0
    %5404 = vmatprep.mubr.f32.mxu0 0.0
    %5405 = vmatmul.mubr.f32.gmra.mxu0 %v5315
    %v5406 = vpop.f32.mrf.mxu0
    %v5407 = vadd.f32 0.0, %v5406
    %v5408 = vpop.f32.mrf.mxu0
    %5409 = vdwg.mxu0
    %v5410 = vsel %vm106, %v5275, -inf
    %5411 = vmax.xlane.f32.xlu0 %v5410
    %v5412 = vpop.xlane.xlu0 %5411
    %v5413 = vsel %vm106, %v5280, -inf
    %5414 = vmax.xlane.f32.xlu0 %v5413
    %v5415 = vpop.xlane.xlu0 %5414
    %v5416 = vsel %vm106, %v5285, -inf
    %5417 = vmax.xlane.f32.xlu0 %v5416
    %v5418 = vpop.xlane.xlu0 %5417
    %v5419 = vsel %vm106, %v5290, -inf
    %5420 = vmax.xlane.f32.xlu0 %v5419
    %v5421 = vpop.xlane.xlu0 %5420
    %v5422 = vsel %vm106, %v5392, -inf
    %5423 = vmax.xlane.f32.xlu0 %v5422
    %v5424 = vpop.xlane.xlu0 %5423
    %v5425 = vsel %vm106, %v5397, -inf
    %5426 = vmax.xlane.f32.xlu0 %v5425
    %v5427 = vpop.xlane.xlu0 %5426
    %v5428 = vsel %vm106, %v5402, -inf
    %5429 = vmax.xlane.f32.xlu0 %v5428
    %v5430 = vpop.xlane.xlu0 %5429
    %v5431 = vsel %vm106, %v5407, -inf
    %5432 = vmax.xlane.f32.xlu0 %v5431
    %v5433 = vpop.xlane.xlu0 %5432
    %v5434 = vsub.f32 %v5275, %v5412
    %v5435 = vsub.f32 %v5280, %v5415
    %v5436 = vsub.f32 %v5285, %v5418
    %v5437 = vsub.f32 %v5290, %v5421
    %v5438 = vsub.f32 %v5392, %v5424
    %v5439 = vsub.f32 %v5397, %v5427
    %v5440 = vsub.f32 %v5402, %v5430
    %v5441 = vsub.f32 %v5407, %v5433
    %v5442 = vmul.f32 %v5434, 1.442695
    %v5443 = vpow.pop %v5442
    %v5444 = vmul.f32 %v5435, 1.442695
    %v5445 = vpow.pop %v5444
    %v5446 = vmul.f32 %v5436, 1.442695
    %v5447 = vpow.pop %v5446
    %v5448 = vmul.f32 %v5437, 1.442695
    %v5449 = vpow.pop %v5448
    %v5450 = vmul.f32 %v5438, 1.442695
    %v5451 = vpow.pop %v5450
    %v5452 = vmul.f32 %v5439, 1.442695
    %v5453 = vpow.pop %v5452
    %v5454 = vmul.f32 %v5440, 1.442695
    %v5455 = vpow.pop %v5454
    %v5456 = vmul.f32 %v5441, 1.442695
    %v5457 = vpow.pop %v5456
    %v5458 = vsel %vm106, %v5443, 0.0
    %5459 = vadd.xlane.f32.xlu0 %v5458
    %v5460 = vpop.xlane.xlu0 %5459
    %v5461 = vsel %vm106, %v5445, 0.0
    %5462 = vadd.xlane.f32.xlu0 %v5461
    %v5463 = vpop.xlane.xlu0 %5462
    %v5464 = vsel %vm106, %v5447, 0.0
    %5465 = vadd.xlane.f32.xlu0 %v5464
    %v5466 = vpop.xlane.xlu0 %5465
    %v5467 = vsel %vm106, %v5449, 0.0
    %5468 = vadd.xlane.f32.xlu0 %v5467
    %v5469 = vpop.xlane.xlu0 %5468
    %v5470 = vsel %vm106, %v5451, 0.0
    %5471 = vadd.xlane.f32.xlu0 %v5470
    %v5472 = vpop.xlane.xlu0 %5471
    %v5473 = vsel %vm106, %v5453, 0.0
    %5474 = vadd.xlane.f32.xlu0 %v5473
    %v5475 = vpop.xlane.xlu0 %5474
    %v5476 = vsel %vm106, %v5455, 0.0
    %5477 = vadd.xlane.f32.xlu0 %v5476
    %v5478 = vpop.xlane.xlu0 %5477
    %v5479 = vsel %vm106, %v5457, 0.0
    %5480 = vadd.xlane.f32.xlu0 %v5479
    %v5481 = vpop.xlane.xlu0 %5480
    %v5482 = vrcp.pop %v5460
    %v5483 = vrcp.pop %v5463
    %v5484 = vrcp.pop %v5466
    %v5485 = vrcp.pop %v5469
    %v5486 = vrcp.pop %v5472
    %v5487 = vrcp.pop %v5475
    %v5488 = vrcp.pop %v5478
    %v5489 = vrcp.pop %v5481
    %v5490 = vmul.f32 %v5443, %v5482
    %v5491 = vmul.f32 %v5445, %v5483
    %v5492 = vmul.f32 %v5447, %v5484
    %v5493 = vmul.f32 %v5449, %v5485
    %v5494 = vmul.f32 %v5451, %v5486
    %v5495 = vmul.f32 %v5453, %v5487
    %v5496 = vmul.f32 %v5455, %v5488
    %v5497 = vmul.f32 %v5457, %v5489
    %5498 = vrot.lane.b32.xlu0 %v3526, 40
    %v5499 = vpop.permute.xlu0 %5498
    %5500 = vrot.lane.b32.xlu0 %v3531, 40
    %v5501 = vpop.permute.xlu0 %5500
    %5502 = vrot.lane.b32.xlu0 %v3536, 40
    %v5503 = vpop.permute.xlu0 %5502
    %5504 = vrot.lane.b32.xlu0 %v3541, 40
    %v5505 = vpop.permute.xlu0 %5504
    %v5511 = vsel %vm106, %v5490, 0
    %v5514 = vsel %vm106, %v5491, 0
    %v5517 = vsel %vm106, %v5492, 0
    %v5520 = vsel %vm106, %v5493, 0
    %5522 = vmatprep.subr.mxu0 0.0
    %5523 = vmatpush1.msra.mxu0 0.0
    %5524 = vmatprep.subr.mxu0 0.0
    %5525 = vmatpush1.msra.mxu0 0.0
    %5526 = vmatprep.subr.mxu0 0.0
    %5527 = vmatpush1.msra.mxu0 0.0
    %5528 = vmatprep.subr.mxu0 0.0
    %5529 = vmatpush1.msra.mxu0 0.0
    %5530 = vmatprep.subr.mxu0 0.0
    %5531 = vmatpush1.msra.mxu0 0.0
    %5532 = vmatprep.subr.mxu0 0.0
    %5533 = vmatpush1.msra.mxu0 0.0
    %5534 = vmatprep.subr.mxu0 0.0
    %5535 = vmatpush1.msra.mxu0 0.0
    %5536 = vmatprep.subr.mxu0 0.0
    %5537 = vmatpush1.msra.mxu0 0.0
    %5538 = vmatprep.subr.mxu0 0.0
    %5539 = vmatpush1.msra.mxu0 0.0
    %5540 = vmatprep.subr.mxu0 0.0
    %5541 = vmatpush1.msra.mxu0 0.0
    %5542 = vmatprep.subr.mxu0 0.0
    %5543 = vmatpush1.msra.mxu0 0.0
    %5544 = vmatprep.subr.mxu0 0.0
    %5545 = vmatpush1.msra.mxu0 0.0
    %5546 = vmatprep.subr.mxu0 0.0
    %5547 = vmatpush1.msra.mxu0 %v5505
    %5548 = vmatprep.subr.mxu0 0.0
    %5549 = vmatpush1.msra.mxu0 %v5503
    %5550 = vmatprep.subr.mxu0 0.0
    %5551 = vmatpush1.msra.mxu0 %v5501
    %5552 = vmatprep.subr.mxu0 0.0
    %5553 = vmatpush1.msra.mxu0 %v5499
    %5554 = vmatprep.subr.mxu0 0.0
    %5555 = vmatpush2.msra.mxu0 0.0
    %5556 = vmatprep.subr.mxu0 0.0
    %5557 = vmatpush2.msra.mxu0 0.0
    %5558 = vmatprep.subr.mxu0 0.0
    %5559 = vmatpush2.msra.mxu0 0.0
    %5560 = vmatprep.subr.mxu0 0.0
    %5561 = vmatpush2.msra.mxu0 0.0
    %5562 = vmatprep.subr.mxu0 0.0
    %5563 = vmatpush2.msra.mxu0 0.0
    %5564 = vmatprep.subr.mxu0 0.0
    %5565 = vmatpush2.msra.mxu0 0.0
    %5566 = vmatprep.subr.mxu0 0.0
    %5567 = vmatpush2.msra.mxu0 0.0
    %5568 = vmatprep.subr.mxu0 0.0
    %5569 = vmatpush2.msra.mxu0 0.0
    %5570 = vmatprep.subr.mxu0 0.0
    %5571 = vmatpush2.msra.mxu0 0.0
    %5572 = vmatprep.subr.mxu0 0.0
    %5573 = vmatpush2.msra.mxu0 0.0
    %5574 = vmatprep.subr.mxu0 0.0
    %5575 = vmatpush2.msra.mxu0 0.0
    %5576 = vmatprep.subr.mxu0 0.0
    %5577 = vmatpush2.msra.mxu0 0.0
    %5578 = vmatprep.subr.mxu0 0.0
    %5579 = vmatpush2.msra.mxu0 0.0
    %5580 = vmatprep.subr.mxu0 0.0
    %5581 = vmatpush2.msra.mxu0 0.0
    %5582 = vmatprep.subr.mxu0 0.0
    %5583 = vmatpush2.msra.mxu0 0.0
    %5584 = vmatprep.subr.mxu0 0.0
    %5585 = vmatpush2.msra.mxu0 0.0
    %5586 = vmatprep.mubr.f32.mxu0 0.0
    %5587 = vmatmul.mubr.f32.gmra.mxu0 %v5511
    %v5588 = vpop.f32.mrf.mxu0
    %v5589 = vadd.f32 0.0, %v5588
    %v5590 = vpop.f32.mrf.mxu0
    %5591 = vmatprep.mubr.f32.mxu0 0.0
    %5592 = vmatmul.mubr.f32.gmra.mxu0 %v5514
    %v5593 = vpop.f32.mrf.mxu0
    %v5594 = vadd.f32 0.0, %v5593
    %v5595 = vpop.f32.mrf.mxu0
    %5596 = vmatprep.mubr.f32.mxu0 0.0
    %5597 = vmatmul.mubr.f32.gmra.mxu0 %v5517
    %v5598 = vpop.f32.mrf.mxu0
    %v5599 = vadd.f32 0.0, %v5598
    %v5600 = vpop.f32.mrf.mxu0
    %5601 = vmatprep.mubr.f32.mxu0 0.0
    %5602 = vmatmul.mubr.f32.gmra.mxu0 %v5520
    %v5603 = vpop.f32.mrf.mxu0
    %v5604 = vadd.f32 0.0, %v5603
    %v5605 = vpop.f32.mrf.mxu0
    %5606 = vdwg.mxu0
    %5607 = vrot.lane.b32.xlu0 %v3546, 40
    %v5608 = vpop.permute.xlu0 %5607
    %5609 = vrot.lane.b32.xlu0 %v3551, 40
    %v5610 = vpop.permute.xlu0 %5609
    %5611 = vrot.lane.b32.xlu0 %v3556, 40
    %v5612 = vpop.permute.xlu0 %5611
    %5613 = vrot.lane.b32.xlu0 %v3561, 40
    %v5614 = vpop.permute.xlu0 %5613
    %v5620 = vsel %vm106, %v5494, 0
    %v5623 = vsel %vm106, %v5495, 0
    %v5626 = vsel %vm106, %v5496, 0
    %v5629 = vsel %vm106, %v5497, 0
    %5631 = vmatprep.subr.mxu0 0.0
    %5632 = vmatpush1.msra.mxu0 0.0
    %5633 = vmatprep.subr.mxu0 0.0
    %5634 = vmatpush1.msra.mxu0 0.0
    %5635 = vmatprep.subr.mxu0 0.0
    %5636 = vmatpush1.msra.mxu0 0.0
    %5637 = vmatprep.subr.mxu0 0.0
    %5638 = vmatpush1.msra.mxu0 0.0
    %5639 = vmatprep.subr.mxu0 0.0
    %5640 = vmatpush1.msra.mxu0 0.0
    %5641 = vmatprep.subr.mxu0 0.0
    %5642 = vmatpush1.msra.mxu0 0.0
    %5643 = vmatprep.subr.mxu0 0.0
    %5644 = vmatpush1.msra.mxu0 0.0
    %5645 = vmatprep.subr.mxu0 0.0
    %5646 = vmatpush1.msra.mxu0 0.0
    %5647 = vmatprep.subr.mxu0 0.0
    %5648 = vmatpush1.msra.mxu0 0.0
    %5649 = vmatprep.subr.mxu0 0.0
    %5650 = vmatpush1.msra.mxu0 0.0
    %5651 = vmatprep.subr.mxu0 0.0
    %5652 = vmatpush1.msra.mxu0 0.0
    %5653 = vmatprep.subr.mxu0 0.0
    %5654 = vmatpush1.msra.mxu0 0.0
    %5655 = vmatprep.subr.mxu0 0.0
    %5656 = vmatpush1.msra.mxu0 %v5614
    %5657 = vmatprep.subr.mxu0 0.0
    %5658 = vmatpush1.msra.mxu0 %v5612
    %5659 = vmatprep.subr.mxu0 0.0
    %5660 = vmatpush1.msra.mxu0 %v5610
    %5661 = vmatprep.subr.mxu0 0.0
    %5662 = vmatpush1.msra.mxu0 %v5608
    %5663 = vmatprep.subr.mxu0 0.0
    %5664 = vmatpush2.msra.mxu0 0.0
    %5665 = vmatprep.subr.mxu0 0.0
    %5666 = vmatpush2.msra.mxu0 0.0
    %5667 = vmatprep.subr.mxu0 0.0
    %5668 = vmatpush2.msra.mxu0 0.0
    %5669 = vmatprep.subr.mxu0 0.0
    %5670 = vmatpush2.msra.mxu0 0.0
    %5671 = vmatprep.subr.mxu0 0.0
    %5672 = vmatpush2.msra.mxu0 0.0
    %5673 = vmatprep.subr.mxu0 0.0
    %5674 = vmatpush2.msra.mxu0 0.0
    %5675 = vmatprep.subr.mxu0 0.0
    %5676 = vmatpush2.msra.mxu0 0.0
    %5677 = vmatprep.subr.mxu0 0.0
    %5678 = vmatpush2.msra.mxu0 0.0
    %5679 = vmatprep.subr.mxu0 0.0
    %5680 = vmatpush2.msra.mxu0 0.0
    %5681 = vmatprep.subr.mxu0 0.0
    %5682 = vmatpush2.msra.mxu0 0.0
    %5683 = vmatprep.subr.mxu0 0.0
    %5684 = vmatpush2.msra.mxu0 0.0
    %5685 = vmatprep.subr.mxu0 0.0
    %5686 = vmatpush2.msra.mxu0 0.0
    %5687 = vmatprep.subr.mxu0 0.0
    %5688 = vmatpush2.msra.mxu0 0.0
    %5689 = vmatprep.subr.mxu0 0.0
    %5690 = vmatpush2.msra.mxu0 0.0
    %5691 = vmatprep.subr.mxu0 0.0
    %5692 = vmatpush2.msra.mxu0 0.0
    %5693 = vmatprep.subr.mxu0 0.0
    %5694 = vmatpush2.msra.mxu0 0.0
    %5695 = vmatprep.mubr.f32.mxu0 0.0
    %5696 = vmatmul.mubr.f32.gmra.mxu0 %v5620
    %v5697 = vpop.f32.mrf.mxu0
    %v5698 = vadd.f32 0.0, %v5697
    %v5699 = vpop.f32.mrf.mxu0
    %5700 = vmatprep.mubr.f32.mxu0 0.0
    %5701 = vmatmul.mubr.f32.gmra.mxu0 %v5623
    %v5702 = vpop.f32.mrf.mxu0
    %v5703 = vadd.f32 0.0, %v5702
    %v5704 = vpop.f32.mrf.mxu0
    %5705 = vmatprep.mubr.f32.mxu0 0.0
    %5706 = vmatmul.mubr.f32.gmra.mxu0 %v5626
    %v5707 = vpop.f32.mrf.mxu0
    %v5708 = vadd.f32 0.0, %v5707
    %v5709 = vpop.f32.mrf.mxu0
    %5710 = vmatprep.mubr.f32.mxu0 0.0
    %5711 = vmatmul.mubr.f32.gmra.mxu0 %v5629
    %v5712 = vpop.f32.mrf.mxu0
    %v5713 = vadd.f32 0.0, %v5712
    %v5714 = vpop.f32.mrf.mxu0
    %5715 = vdwg.mxu0
    %5724 = vrot.lane.b32.xlu0 %v4509, 8
    %v5725 = vpop.permute.xlu0 %5724
    %5726 = vrot.lane.b32.xlu0 %v4514, 8
    %v5727 = vpop.permute.xlu0 %5726
    %5728 = vrot.lane.b32.xlu0 %v4519, 8
    %v5729 = vpop.permute.xlu0 %5728
    %5730 = vrot.lane.b32.xlu0 %v4524, 8
    %v5731 = vpop.permute.xlu0 %5730
    %5732 = vrot.lane.b32.xlu0 %v4618, 8
    %v5733 = vpop.permute.xlu0 %5732
    %5734 = vrot.lane.b32.xlu0 %v4623, 8
    %v5735 = vpop.permute.xlu0 %5734
    %5736 = vrot.lane.b32.xlu0 %v4628, 8
    %v5737 = vpop.permute.xlu0 %5736
    %5738 = vrot.lane.b32.xlu0 %v4633, 8
    %v5739 = vpop.permute.xlu0 %5738
    %5756 = vrot.lane.b32.xlu0 %v5049, 16
    %v5757 = vpop.permute.xlu0 %5756
    %5758 = vrot.lane.b32.xlu0 %v5054, 16
    %v5759 = vpop.permute.xlu0 %5758
    %5760 = vrot.lane.b32.xlu0 %v5059, 16
    %v5761 = vpop.permute.xlu0 %5760
    %5762 = vrot.lane.b32.xlu0 %v5064, 16
    %v5763 = vpop.permute.xlu0 %5762
    %5764 = vrot.lane.b32.xlu0 %v5158, 16
    %v5765 = vpop.permute.xlu0 %5764
    %5766 = vrot.lane.b32.xlu0 %v5163, 16
    %v5767 = vpop.permute.xlu0 %5766
    %5768 = vrot.lane.b32.xlu0 %v5168, 16
    %v5769 = vpop.permute.xlu0 %5768
    %5770 = vrot.lane.b32.xlu0 %v5173, 16
    %v5771 = vpop.permute.xlu0 %5770
    %5788 = vrot.lane.b32.xlu0 %v5589, 24
    %v5789 = vpop.permute.xlu0 %5788
    %5790 = vrot.lane.b32.xlu0 %v5594, 24
    %v5791 = vpop.permute.xlu0 %5790
    %5792 = vrot.lane.b32.xlu0 %v5599, 24
    %v5793 = vpop.permute.xlu0 %5792
    %5794 = vrot.lane.b32.xlu0 %v5604, 24
    %v5795 = vpop.permute.xlu0 %5794
    %5796 = vrot.lane.b32.xlu0 %v5698, 24
    %v5797 = vpop.permute.xlu0 %5796
    %5798 = vrot.lane.b32.xlu0 %v5703, 24
    %v5799 = vpop.permute.xlu0 %5798
    %5800 = vrot.lane.b32.xlu0 %v5708, 24
    %v5801 = vpop.permute.xlu0 %5800
    %5802 = vrot.lane.b32.xlu0 %v5713, 24
    %v5803 = vpop.permute.xlu0 %5802
    %v5812 = vsel %vm385, %v3969, %v5725
    %v5813 = vsel %vm385, %v3974, %v5727
    %v5814 = vsel %vm385, %v3979, %v5729
    %v5815 = vsel %vm385, %v3984, %v5731
    %v5816 = vsel %vm385, %v4078, %v5733
    %v5817 = vsel %vm385, %v4083, %v5735
    %v5818 = vsel %vm385, %v4088, %v5737
    %v5819 = vsel %vm385, %v4093, %v5739
    %v5820 = vsel %vm2630, %v5812, %v5757
    %v5821 = vsel %vm2630, %v5813, %v5759
    %v5822 = vsel %vm2630, %v5814, %v5761
    %v5823 = vsel %vm2630, %v5815, %v5763
    %v5824 = vsel %vm2630, %v5816, %v5765
    %v5825 = vsel %vm2630, %v5817, %v5767
    %v5826 = vsel %vm2630, %v5818, %v5769
    %v5827 = vsel %vm2630, %v5819, %v5771
    %v5828 = vsel %vm2639, %v5820, %v5789
    %v5829 = vsel %vm2639, %v5821, %v5791
    %v5830 = vsel %vm2639, %v5822, %v5793
    %v5831 = vsel %vm2639, %v5823, %v5795
    %v5832 = vsel %vm2639, %v5824, %v5797
    %v5833 = vsel %vm2639, %v5825, %v5799
    %v5834 = vsel %vm2639, %v5826, %v5801
    %v5835 = vsel %vm2639, %v5827, %v5803
    %s5836 = scalar_lea.vmem %s5, 32
    %v5837 = vld [vmem:[%s5836] sm:$0xff]
    %v5838 = vld [vmem:[%s5836 + $0x8] sm:$0xff]
    %v5839 = vld [vmem:[%s5836 + $0x10] sm:$0xff]
    %v5840 = vld [vmem:[%s5836 + $0x18] sm:$0xff]
    %v5842 = vsel %vm106, %v5828, 0
    %v5845 = vsel %vm106, %v5829, 0
    %v5848 = vsel %vm106, %v5830, 0
    %v5851 = vsel %vm106, %v5831, 0
    %v5854 = vsel %vm106, %v5832, 0
    %v5857 = vsel %vm106, %v5833, 0
    %v5860 = vsel %vm106, %v5834, 0
    %v5863 = vsel %vm106, %v5835, 0
    %5865 = vmatprep.subr.mxu0 0.0
    %5866 = vmatpush1.msra.mxu0 0.0
    %5867 = vmatprep.subr.mxu0 0.0
    %5868 = vmatpush1.msra.mxu0 0.0
    %5869 = vmatprep.subr.mxu0 0.0
    %5870 = vmatpush1.msra.mxu0 0.0
    %5871 = vmatprep.subr.mxu0 0.0
    %5872 = vmatpush1.msra.mxu0 0.0
    %5873 = vmatprep.subr.mxu0 0.0
    %5874 = vmatpush1.msra.mxu0 0.0
    %5875 = vmatprep.subr.mxu0 0.0
    %5876 = vmatpush1.msra.mxu0 0.0
    %5877 = vmatprep.subr.mxu0 0.0
    %5878 = vmatpush1.msra.mxu0 0.0
    %5879 = vmatprep.subr.mxu0 0.0
    %5880 = vmatpush1.msra.mxu0 0.0
    %5881 = vmatprep.subr.mxu0 0.0
    %5882 = vmatpush1.msra.mxu0 0.0
    %5883 = vmatprep.subr.mxu0 0.0
    %5884 = vmatpush1.msra.mxu0 0.0
    %5885 = vmatprep.subr.mxu0 0.0
    %5886 = vmatpush1.msra.mxu0 0.0
    %5887 = vmatprep.subr.mxu0 0.0
    %5888 = vmatpush1.msra.mxu0 0.0
    %5889 = vmatprep.subr.mxu0 0.0
    %5890 = vmatpush1.msra.mxu0 %v5840
    %5891 = vmatprep.subr.mxu0 0.0
    %5892 = vmatpush1.msra.mxu0 %v5839
    %5893 = vmatprep.subr.mxu0 0.0
    %5894 = vmatpush1.msra.mxu0 %v5838
    %5895 = vmatprep.subr.mxu0 0.0
    %5896 = vmatpush1.msra.mxu0 %v5837
    %5897 = vmatprep.subr.mxu0 0.0
    %5898 = vmatpush2.msra.mxu0 0.0
    %5899 = vmatprep.subr.mxu0 0.0
    %5900 = vmatpush2.msra.mxu0 0.0
    %5901 = vmatprep.subr.mxu0 0.0
    %5902 = vmatpush2.msra.mxu0 0.0
    %5903 = vmatprep.subr.mxu0 0.0
    %5904 = vmatpush2.msra.mxu0 0.0
    %5905 = vmatprep.subr.mxu0 0.0
    %5906 = vmatpush2.msra.mxu0 0.0
    %5907 = vmatprep.subr.mxu0 0.0
    %5908 = vmatpush2.msra.mxu0 0.0
    %5909 = vmatprep.subr.mxu0 0.0
    %5910 = vmatpush2.msra.mxu0 0.0
    %5911 = vmatprep.subr.mxu0 0.0
    %5912 = vmatpush2.msra.mxu0 0.0
    %5913 = vmatprep.subr.mxu0 0.0
    %5914 = vmatpush2.msra.mxu0 0.0
    %5915 = vmatprep.subr.mxu0 0.0
    %5916 = vmatpush2.msra.mxu0 0.0
    %5917 = vmatprep.subr.mxu0 0.0
    %5918 = vmatpush2.msra.mxu0 0.0
    %5919 = vmatprep.subr.mxu0 0.0
    %5920 = vmatpush2.msra.mxu0 0.0
    %5921 = vmatprep.subr.mxu0 0.0
    %5922 = vmatpush2.msra.mxu0 0.0
    %5923 = vmatprep.subr.mxu0 0.0
    %5924 = vmatpush2.msra.mxu0 0.0
    %5925 = vmatprep.subr.mxu0 0.0
    %5926 = vmatpush2.msra.mxu0 0.0
    %5927 = vmatprep.subr.mxu0 0.0
    %5928 = vmatpush2.msra.mxu0 0.0
    %5929 = vmatprep.mubr.f32.mxu0 0.0
    %5930 = vmatmul.mubr.f32.gmra.mxu0 %v5842
    %v5931 = vpop.f32.mrf.mxu0
    %v5932 = vadd.f32 0.0, %v5931
    %v5933 = vpop.f32.mrf.mxu0
    %5934 = vmatprep.mubr.f32.mxu0 0.0
    %5935 = vmatmul.mubr.f32.gmra.mxu0 %v5845
    %v5936 = vpop.f32.mrf.mxu0
    %v5937 = vadd.f32 0.0, %v5936
    %v5938 = vpop.f32.mrf.mxu0
    %5939 = vmatprep.mubr.f32.mxu0 0.0
    %5940 = vmatmul.mubr.f32.gmra.mxu0 %v5848
    %v5941 = vpop.f32.mrf.mxu0
    %v5942 = vadd.f32 0.0, %v5941
    %v5943 = vpop.f32.mrf.mxu0
    %5944 = vmatprep.mubr.f32.mxu0 0.0
    %5945 = vmatmul.mubr.f32.gmra.mxu0 %v5851
    %v5946 = vpop.f32.mrf.mxu0
    %v5947 = vadd.f32 0.0, %v5946
    %v5948 = vpop.f32.mrf.mxu0
    %5949 = vmatprep.mubr.f32.mxu0 0.0
    %5950 = vmatmul.mubr.f32.gmra.mxu0 %v5854
    %v5951 = vpop.f32.mrf.mxu0
    %v5952 = vadd.f32 0.0, %v5951
    %v5953 = vpop.f32.mrf.mxu0
    %5954 = vmatprep.mubr.f32.mxu0 0.0
    %5955 = vmatmul.mubr.f32.gmra.mxu0 %v5857
    %v5956 = vpop.f32.mrf.mxu0
    %v5957 = vadd.f32 0.0, %v5956
    %v5958 = vpop.f32.mrf.mxu0
    %5959 = vmatprep.mubr.f32.mxu0 0.0
    %5960 = vmatmul.mubr.f32.gmra.mxu0 %v5860
    %v5961 = vpop.f32.mrf.mxu0
    %v5962 = vadd.f32 0.0, %v5961
    %v5963 = vpop.f32.mrf.mxu0
    %5964 = vmatprep.mubr.f32.mxu0 0.0
    %5965 = vmatmul.mubr.f32.gmra.mxu0 %v5863
    %v5966 = vpop.f32.mrf.mxu0
    %v5967 = vadd.f32 0.0, %v5966
    %v5968 = vpop.f32.mrf.mxu0
    %5969 = vdwg.mxu0
    %v5970 = vadd.f32 %v3286, %v5932
    %v5971 = vadd.f32 %v3287, %v5937
    %v5972 = vadd.f32 %v3288, %v5942
    %v5973 = vadd.f32 %v3289, %v5947
    %v5974 = vadd.f32 %v3290, %v5952
    %v5975 = vadd.f32 %v3291, %v5957
    %v5976 = vadd.f32 %v3292, %v5962
    %v5977 = vadd.f32 %v3293, %v5967
    %s5978 = scalar_lea.vmem %s6, 1
    %v5979 = vld [vmem:[%s5978] sm:$0x1]
    %v5981 = vlaneseq
    %v5982 = vshrl.u32 %v5981, 7
    %v5983 = vsub.s32 0, %v5982
    %v5984 = vrot.slane %v5979, %v5983
    %v5986 = vadd.f32 %v5970, %v5984
    %v5987 = vadd.f32 %v5971, %v5984
    %v5988 = vadd.f32 %v5972, %v5984
    %v5989 = vadd.f32 %v5973, %v5984
    %v5990 = vadd.f32 %v5974, %v5984
    %v5991 = vadd.f32 %v5975, %v5984
    %v5992 = vadd.f32 %v5976, %v5984
    %v5993 = vadd.f32 %v5977, %v5984
    %s5994 = scalar_lea.vmem %s7, 1
    %v5995 = vld [vmem:[%s5994] sm:$0x1]
    %s5996 = scalar_lea.vmem %s8, 1
    %v5997 = vld [vmem:[%s5996] sm:$0x1]
    %v5998 = vsel %vm106, %v5986, 0.0
    %5999 = vadd.xlane.f32.xlu0 %v5998
    %v6000 = vpop.xlane.xlu0 %5999
    %v6001 = vsel %vm106, %v5987, 0.0
    %6002 = vadd.xlane.f32.xlu0 %v6001
    %v6003 = vpop.xlane.xlu0 %6002
    %v6004 = vsel %vm106, %v5988, 0.0
    %6005 = vadd.xlane.f32.xlu0 %v6004
    %v6006 = vpop.xlane.xlu0 %6005
    %v6007 = vsel %vm106, %v5989, 0.0
    %6008 = vadd.xlane.f32.xlu0 %v6007
    %v6009 = vpop.xlane.xlu0 %6008
    %v6010 = vsel %vm106, %v5990, 0.0
    %6011 = vadd.xlane.f32.xlu0 %v6010
    %v6012 = vpop.xlane.xlu0 %6011
    %v6013 = vsel %vm106, %v5991, 0.0
    %6014 = vadd.xlane.f32.xlu0 %v6013
    %v6015 = vpop.xlane.xlu0 %6014
    %v6016 = vsel %vm106, %v5992, 0.0
    %6017 = vadd.xlane.f32.xlu0 %v6016
    %v6018 = vpop.xlane.xlu0 %6017
    %v6019 = vsel %vm106, %v5993, 0.0
    %6020 = vadd.xlane.f32.xlu0 %v6019
    %v6021 = vpop.xlane.xlu0 %6020
    %v6022 = vmul.f32 %v6000, %v131
    %v6023 = vmul.f32 %v6003, %v131
    %v6024 = vmul.f32 %v6006, %v131
    %v6025 = vmul.f32 %v6009, %v131
    %v6026 = vmul.f32 %v6012, %v131
    %v6027 = vmul.f32 %v6015, %v131
    %v6028 = vmul.f32 %v6018, %v131
    %v6029 = vmul.f32 %v6021, %v131
    %v6030 = vsub.f32 %v5986, %v6022
    %v6031 = vsub.f32 %v5987, %v6023
    %v6032 = vsub.f32 %v5988, %v6024
    %v6033 = vsub.f32 %v5989, %v6025
    %v6034 = vsub.f32 %v5990, %v6026
    %v6035 = vsub.f32 %v5991, %v6027
    %v6036 = vsub.f32 %v5992, %v6028
    %v6037 = vsub.f32 %v5993, %v6029
    %v6038 = vmul.f32 %v6030, %v6030
    %v6039 = vmul.f32 %v6031, %v6031
    %v6040 = vmul.f32 %v6032, %v6032
    %v6041 = vmul.f32 %v6033, %v6033
    %v6042 = vmul.f32 %v6034, %v6034
    %v6043 = vmul.f32 %v6035, %v6035
    %v6044 = vmul.f32 %v6036, %v6036
    %v6045 = vmul.f32 %v6037, %v6037
    %v6046 = vsel %vm106, %v6038, 0.0
    %6047 = vadd.xlane.f32.xlu0 %v6046
    %v6048 = vpop.xlane.xlu0 %6047
    %v6049 = vsel %vm106, %v6039, 0.0
    %6050 = vadd.xlane.f32.xlu0 %v6049
    %v6051 = vpop.xlane.xlu0 %6050
    %v6052 = vsel %vm106, %v6040, 0.0
    %6053 = vadd.xlane.f32.xlu0 %v6052
    %v6054 = vpop.xlane.xlu0 %6053
    %v6055 = vsel %vm106, %v6041, 0.0
    %6056 = vadd.xlane.f32.xlu0 %v6055
    %v6057 = vpop.xlane.xlu0 %6056
    %v6058 = vsel %vm106, %v6042, 0.0
    %6059 = vadd.xlane.f32.xlu0 %v6058
    %v6060 = vpop.xlane.xlu0 %6059
    %v6061 = vsel %vm106, %v6043, 0.0
    %6062 = vadd.xlane.f32.xlu0 %v6061
    %v6063 = vpop.xlane.xlu0 %6062
    %v6064 = vsel %vm106, %v6044, 0.0
    %6065 = vadd.xlane.f32.xlu0 %v6064
    %v6066 = vpop.xlane.xlu0 %6065
    %v6067 = vsel %vm106, %v6045, 0.0
    %6068 = vadd.xlane.f32.xlu0 %v6067
    %v6069 = vpop.xlane.xlu0 %6068
    %v6070 = vmul.f32 %v6048, %v131
    %v6071 = vmul.f32 %v6051, %v131
    %v6072 = vmul.f32 %v6054, %v131
    %v6073 = vmul.f32 %v6057, %v131
    %v6074 = vmul.f32 %v6060, %v131
    %v6075 = vmul.f32 %v6063, %v131
    %v6076 = vmul.f32 %v6066, %v131
    %v6077 = vmul.f32 %v6069, %v131
    %v6078 = vadd.f32 %v6070, 1e-05
    %v6079 = vadd.f32 %v6071, 1e-05
    %v6080 = vadd.f32 %v6072, 1e-05
    %v6081 = vadd.f32 %v6073, 1e-05
    %v6082 = vadd.f32 %v6074, 1e-05
    %v6083 = vadd.f32 %v6075, 1e-05
    %v6084 = vadd.f32 %v6076, 1e-05
    %v6085 = vadd.f32 %v6077, 1e-05
    %v6086 = vrsqrt.pop %v6078
    %v6087 = vrsqrt.pop %v6079
    %v6088 = vrsqrt.pop %v6080
    %v6089 = vrsqrt.pop %v6081
    %v6090 = vrsqrt.pop %v6082
    %v6091 = vrsqrt.pop %v6083
    %v6092 = vrsqrt.pop %v6084
    %v6093 = vrsqrt.pop %v6085
    %v6094 = vmul.f32 %v6030, %v6086
    %v6095 = vmul.f32 %v6031, %v6087
    %v6096 = vmul.f32 %v6032, %v6088
    %v6097 = vmul.f32 %v6033, %v6089
    %v6098 = vmul.f32 %v6034, %v6090
    %v6099 = vmul.f32 %v6035, %v6091
    %v6100 = vmul.f32 %v6036, %v6092
    %v6101 = vmul.f32 %v6037, %v6093
    %v6103 = vlaneseq
    %v6104 = vshrl.u32 %v6103, 7
    %v6105 = vsub.s32 0, %v6104
    %v6106 = vrot.slane %v5995, %v6105
    %v6108 = vmul.f32 %v6094, %v6106
    %v6109 = vmul.f32 %v6095, %v6106
    %v6110 = vmul.f32 %v6096, %v6106
    %v6111 = vmul.f32 %v6097, %v6106
    %v6112 = vmul.f32 %v6098, %v6106
    %v6113 = vmul.f32 %v6099, %v6106
    %v6114 = vmul.f32 %v6100, %v6106
    %v6115 = vmul.f32 %v6101, %v6106
    %v6117 = vlaneseq
    %v6118 = vshrl.u32 %v6117, 7
    %v6119 = vsub.s32 0, %v6118
    %v6120 = vrot.slane %v5997, %v6119
    %v6122 = vadd.f32 %v6108, %v6120
    %v6123 = vadd.f32 %v6109, %v6120
    %v6124 = vadd.f32 %v6110, %v6120
    %v6125 = vadd.f32 %v6111, %v6120
    %v6126 = vadd.f32 %v6112, %v6120
    %v6127 = vadd.f32 %v6113, %v6120
    %v6128 = vadd.f32 %v6114, %v6120
    %v6129 = vadd.f32 %v6115, %v6120
    %s6130 = scalar_lea.vmem %s9, 32
    %v6131 = vld [vmem:[%s6130] sm:$0xff]
    %v6132 = vld [vmem:[%s6130 + $0x8] sm:$0xff]
    %v6133 = vld [vmem:[%s6130 + $0x10] sm:$0xff]
    %v6134 = vld [vmem:[%s6130 + $0x18] sm:$0xff]
    %s6135 = scalar_lea.vmem %s10, 1
    %v6136 = vld [vmem:[%s6135] sm:$0x1]
    %v6138 = vlaneseq
    %v6139 = vshrl.u32 %v6138, 7
    %v6140 = vsub.s32 0, %v6139
    %v6141 = vrot.slane %v6136, %v6140
    %v6144 = vsel %vm106, %v6122, 0
    %v6147 = vsel %vm106, %v6123, 0
    %v6150 = vsel %vm106, %v6124, 0
    %v6153 = vsel %vm106, %v6125, 0
    %v6156 = vsel %vm106, %v6126, 0
    %v6159 = vsel %vm106, %v6127, 0
    %v6162 = vsel %vm106, %v6128, 0
    %v6165 = vsel %vm106, %v6129, 0
    %6167 = vmatprep.subr.mxu0 0.0
    %6168 = vmatpush1.msra.mxu0 0.0
    %6169 = vmatprep.subr.mxu0 0.0
    %6170 = vmatpush1.msra.mxu0 0.0
    %6171 = vmatprep.subr.mxu0 0.0
    %6172 = vmatpush1.msra.mxu0 0.0
    %6173 = vmatprep.subr.mxu0 0.0
    %6174 = vmatpush1.msra.mxu0 0.0
    %6175 = vmatprep.subr.mxu0 0.0
    %6176 = vmatpush1.msra.mxu0 0.0
    %6177 = vmatprep.subr.mxu0 0.0
    %6178 = vmatpush1.msra.mxu0 0.0
    %6179 = vmatprep.subr.mxu0 0.0
    %6180 = vmatpush1.msra.mxu0 0.0
    %6181 = vmatprep.subr.mxu0 0.0
    %6182 = vmatpush1.msra.mxu0 0.0
    %6183 = vmatprep.subr.mxu0 0.0
    %6184 = vmatpush1.msra.mxu0 0.0
    %6185 = vmatprep.subr.mxu0 0.0
    %6186 = vmatpush1.msra.mxu0 0.0
    %6187 = vmatprep.subr.mxu0 0.0
    %6188 = vmatpush1.msra.mxu0 0.0
    %6189 = vmatprep.subr.mxu0 0.0
    %6190 = vmatpush1.msra.mxu0 0.0
    %6191 = vmatprep.subr.mxu0 0.0
    %6192 = vmatpush1.msra.mxu0 %v6134
    %6193 = vmatprep.subr.mxu0 0.0
    %6194 = vmatpush1.msra.mxu0 %v6133
    %6195 = vmatprep.subr.mxu0 0.0
    %6196 = vmatpush1.msra.mxu0 %v6132
    %6197 = vmatprep.subr.mxu0 0.0
    %6198 = vmatpush1.msra.mxu0 %v6131
    %6199 = vmatprep.subr.mxu0 0.0
    %6200 = vmatpush2.msra.mxu0 0.0
    %6201 = vmatprep.subr.mxu0 0.0
    %6202 = vmatpush2.msra.mxu0 0.0
    %6203 = vmatprep.subr.mxu0 0.0
    %6204 = vmatpush2.msra.mxu0 0.0
    %6205 = vmatprep.subr.mxu0 0.0
    %6206 = vmatpush2.msra.mxu0 0.0
    %6207 = vmatprep.subr.mxu0 0.0
    %6208 = vmatpush2.msra.mxu0 0.0
    %6209 = vmatprep.subr.mxu0 0.0
    %6210 = vmatpush2.msra.mxu0 0.0
    %6211 = vmatprep.subr.mxu0 0.0
    %6212 = vmatpush2.msra.mxu0 0.0
    %6213 = vmatprep.subr.mxu0 0.0
    %6214 = vmatpush2.msra.mxu0 0.0
    %6215 = vmatprep.subr.mxu0 0.0
    %6216 = vmatpush2.msra.mxu0 0.0
    %6217 = vmatprep.subr.mxu0 0.0
    %6218 = vmatpush2.msra.mxu0 0.0
    %6219 = vmatprep.subr.mxu0 0.0
    %6220 = vmatpush2.msra.mxu0 0.0
    %6221 = vmatprep.subr.mxu0 0.0
    %6222 = vmatpush2.msra.mxu0 0.0
    %6223 = vmatprep.subr.mxu0 0.0
    %6224 = vmatpush2.msra.mxu0 0.0
    %6225 = vmatprep.subr.mxu0 0.0
    %6226 = vmatpush2.msra.mxu0 0.0
    %6227 = vmatprep.subr.mxu0 0.0
    %6228 = vmatpush2.msra.mxu0 0.0
    %6229 = vmatprep.subr.mxu0 0.0
    %6230 = vmatpush2.msra.mxu0 0.0
    %6231 = vmatprep.mubr.f32.mxu0 0.0
    %6232 = vmatmul.mubr.f32.gmra.mxu0 %v6144
    %v6233 = vpop.f32.mrf.mxu0
    %v6234 = vadd.f32 %v6141, %v6233
    %v6235 = vpop.f32.mrf.mxu0
    %6236 = vmatprep.mubr.f32.mxu0 0.0
    %6237 = vmatmul.mubr.f32.gmra.mxu0 %v6147
    %v6238 = vpop.f32.mrf.mxu0
    %v6239 = vadd.f32 %v6141, %v6238
    %v6240 = vpop.f32.mrf.mxu0
    %6241 = vmatprep.mubr.f32.mxu0 0.0
    %6242 = vmatmul.mubr.f32.gmra.mxu0 %v6150
    %v6243 = vpop.f32.mrf.mxu0
    %v6244 = vadd.f32 %v6141, %v6243
    %v6245 = vpop.f32.mrf.mxu0
    %6246 = vmatprep.mubr.f32.mxu0 0.0
    %6247 = vmatmul.mubr.f32.gmra.mxu0 %v6153
    %v6248 = vpop.f32.mrf.mxu0
    %v6249 = vadd.f32 %v6141, %v6248
    %v6250 = vpop.f32.mrf.mxu0
    %6251 = vmatprep.mubr.f32.mxu0 0.0
    %6252 = vmatmul.mubr.f32.gmra.mxu0 %v6156
    %v6253 = vpop.f32.mrf.mxu0
    %v6254 = vadd.f32 %v6141, %v6253
    %v6255 = vpop.f32.mrf.mxu0
    %6256 = vmatprep.mubr.f32.mxu0 0.0
    %6257 = vmatmul.mubr.f32.gmra.mxu0 %v6159
    %v6258 = vpop.f32.mrf.mxu0
    %v6259 = vadd.f32 %v6141, %v6258
    %v6260 = vpop.f32.mrf.mxu0
    %6261 = vmatprep.mubr.f32.mxu0 0.0
    %6262 = vmatmul.mubr.f32.gmra.mxu0 %v6162
    %v6263 = vpop.f32.mrf.mxu0
    %v6264 = vadd.f32 %v6141, %v6263
    %v6265 = vpop.f32.mrf.mxu0
    %6266 = vmatprep.mubr.f32.mxu0 0.0
    %6267 = vmatmul.mubr.f32.gmra.mxu0 %v6165
    %v6268 = vpop.f32.mrf.mxu0
    %v6269 = vadd.f32 %v6141, %v6268
    %v6270 = vpop.f32.mrf.mxu0
    %6271 = vdwg.mxu0
    %v6272 = vmul.f32 %v6234, %v6234
    %v6273 = vmul.f32 %v6239, %v6239
    %v6274 = vmul.f32 %v6244, %v6244
    %v6275 = vmul.f32 %v6249, %v6249
    %v6276 = vmul.f32 %v6254, %v6254
    %v6277 = vmul.f32 %v6259, %v6259
    %v6278 = vmul.f32 %v6264, %v6264
    %v6279 = vmul.f32 %v6269, %v6269
    %v6280 = vmul.f32 %v6234, %v6272
    %v6281 = vmul.f32 %v6239, %v6273
    %v6282 = vmul.f32 %v6244, %v6274
    %v6283 = vmul.f32 %v6249, %v6275
    %v6284 = vmul.f32 %v6254, %v6276
    %v6285 = vmul.f32 %v6259, %v6277
    %v6286 = vmul.f32 %v6264, %v6278
    %v6287 = vmul.f32 %v6269, %v6279
    %v6288 = vmul.f32 %v6280, 0.044715
    %v6289 = vmul.f32 %v6281, 0.044715
    %v6290 = vmul.f32 %v6282, 0.044715
    %v6291 = vmul.f32 %v6283, 0.044715
    %v6292 = vmul.f32 %v6284, 0.044715
    %v6293 = vmul.f32 %v6285, 0.044715
    %v6294 = vmul.f32 %v6286, 0.044715
    %v6295 = vmul.f32 %v6287, 0.044715
    %v6296 = vadd.f32 %v6234, %v6288
    %v6297 = vadd.f32 %v6239, %v6289
    %v6298 = vadd.f32 %v6244, %v6290
    %v6299 = vadd.f32 %v6249, %v6291
    %v6300 = vadd.f32 %v6254, %v6292
    %v6301 = vadd.f32 %v6259, %v6293
    %v6302 = vadd.f32 %v6264, %v6294
    %v6303 = vadd.f32 %v6269, %v6295
    %v6304 = vmul.f32 %v6296, 0.7978846
    %v6305 = vmul.f32 %v6297, 0.7978846
    %v6306 = vmul.f32 %v6298, 0.7978846
    %v6307 = vmul.f32 %v6299, 0.7978846
    %v6308 = vmul.f32 %v6300, 0.7978846
    %v6309 = vmul.f32 %v6301, 0.7978846
    %v6310 = vmul.f32 %v6302, 0.7978846
    %v6311 = vmul.f32 %v6303, 0.7978846
    %v6312 = vtanh.pop %v6304
    %v6313 = vtanh.pop %v6305
    %v6314 = vtanh.pop %v6306
    %v6315 = vtanh.pop %v6307
    %v6316 = vtanh.pop %v6308
    %v6317 = vtanh.pop %v6309
    %v6318 = vtanh.pop %v6310
    %v6319 = vtanh.pop %v6311
    %v6320 = vadd.f32 %v6312, 1.0
    %v6321 = vadd.f32 %v6313, 1.0
    %v6322 = vadd.f32 %v6314, 1.0
    %v6323 = vadd.f32 %v6315, 1.0
    %v6324 = vadd.f32 %v6316, 1.0
    %v6325 = vadd.f32 %v6317, 1.0
    %v6326 = vadd.f32 %v6318, 1.0
    %v6327 = vadd.f32 %v6319, 1.0
    %v6328 = vmul.f32 %v6320, 0.5
    %v6329 = vmul.f32 %v6321, 0.5
    %v6330 = vmul.f32 %v6322, 0.5
    %v6331 = vmul.f32 %v6323, 0.5
    %v6332 = vmul.f32 %v6324, 0.5
    %v6333 = vmul.f32 %v6325, 0.5
    %v6334 = vmul.f32 %v6326, 0.5
    %v6335 = vmul.f32 %v6327, 0.5
    %v6336 = vmul.f32 %v6234, %v6328
    %v6337 = vmul.f32 %v6239, %v6329
    %v6338 = vmul.f32 %v6244, %v6330
    %v6339 = vmul.f32 %v6249, %v6331
    %v6340 = vmul.f32 %v6254, %v6332
    %v6341 = vmul.f32 %v6259, %v6333
    %v6342 = vmul.f32 %v6264, %v6334
    %v6343 = vmul.f32 %v6269, %v6335
    %s6344 = scalar_lea.vmem %s11, 128
    %v6345 = vld [vmem:[%s6344] sm:$0xff]
    %v6346 = vld [vmem:[%s6344 + $0x8] sm:$0xff]
    %v6347 = vld [vmem:[%s6344 + $0x10] sm:$0xff]
    %v6348 = vld [vmem:[%s6344 + $0x18] sm:$0xff]
    %v6349 = vld [vmem:[%s6344 + $0x20] sm:$0xff]
    %v6350 = vld [vmem:[%s6344 + $0x28] sm:$0xff]
    %v6351 = vld [vmem:[%s6344 + $0x30] sm:$0xff]
    %v6352 = vld [vmem:[%s6344 + $0x38] sm:$0xff]
    %v6353 = vld [vmem:[%s6344 + $0x40] sm:$0xff]
    %v6354 = vld [vmem:[%s6344 + $0x48] sm:$0xff]
    %v6355 = vld [vmem:[%s6344 + $0x50] sm:$0xff]
    %v6356 = vld [vmem:[%s6344 + $0x58] sm:$0xff]
    %v6357 = vld [vmem:[%s6344 + $0x60] sm:$0xff]
    %v6358 = vld [vmem:[%s6344 + $0x68] sm:$0xff]
    %v6359 = vld [vmem:[%s6344 + $0x70] sm:$0xff]
    %v6360 = vld [vmem:[%s6344 + $0x78] sm:$0xff]
    %6361 = vmatprep.subr.mxu0 0.0
    %6362 = vmatpush1.msra.mxu0 %v6360
    %6363 = vmatprep.subr.mxu0 0.0
    %6364 = vmatpush1.msra.mxu0 %v6359
    %6365 = vmatprep.subr.mxu0 0.0
    %6366 = vmatpush1.msra.mxu0 %v6358
    %6367 = vmatprep.subr.mxu0 0.0
    %6368 = vmatpush1.msra.mxu0 %v6357
    %6369 = vmatprep.subr.mxu0 0.0
    %6370 = vmatpush1.msra.mxu0 %v6356
    %6371 = vmatprep.subr.mxu0 0.0
    %6372 = vmatpush1.msra.mxu0 %v6355
    %6373 = vmatprep.subr.mxu0 0.0
    %6374 = vmatpush1.msra.mxu0 %v6354
    %6375 = vmatprep.subr.mxu0 0.0
    %6376 = vmatpush1.msra.mxu0 %v6353
    %6377 = vmatprep.subr.mxu0 0.0
    %6378 = vmatpush1.msra.mxu0 %v6352
    %6379 = vmatprep.subr.mxu0 0.0
    %6380 = vmatpush1.msra.mxu0 %v6351
    %6381 = vmatprep.subr.mxu0 0.0
    %6382 = vmatpush1.msra.mxu0 %v6350
    %6383 = vmatprep.subr.mxu0 0.0
    %6384 = vmatpush1.msra.mxu0 %v6349
    %6385 = vmatprep.subr.mxu0 0.0
    %6386 = vmatpush1.msra.mxu0 %v6348
    %6387 = vmatprep.subr.mxu0 0.0
    %6388 = vmatpush1.msra.mxu0 %v6347
    %6389 = vmatprep.subr.mxu0 0.0
    %6390 = vmatpush1.msra.mxu0 %v6346
    %6391 = vmatprep.subr.mxu0 0.0
    %6392 = vmatpush1.msra.mxu0 %v6345
    %6393 = vmatprep.subr.mxu0 0.0
    %6394 = vmatpush2.msra.mxu0 0.0
    %6395 = vmatprep.subr.mxu0 0.0
    %6396 = vmatpush2.msra.mxu0 0.0
    %6397 = vmatprep.subr.mxu0 0.0
    %6398 = vmatpush2.msra.mxu0 0.0
    %6399 = vmatprep.subr.mxu0 0.0
    %6400 = vmatpush2.msra.mxu0 0.0
    %6401 = vmatprep.subr.mxu0 0.0
    %6402 = vmatpush2.msra.mxu0 0.0
    %6403 = vmatprep.subr.mxu0 0.0
    %6404 = vmatpush2.msra.mxu0 0.0
    %6405 = vmatprep.subr.mxu0 0.0
    %6406 = vmatpush2.msra.mxu0 0.0
    %6407 = vmatprep.subr.mxu0 0.0
    %6408 = vmatpush2.msra.mxu0 0.0
    %6409 = vmatprep.subr.mxu0 0.0
    %6410 = vmatpush2.msra.mxu0 0.0
    %6411 = vmatprep.subr.mxu0 0.0
    %6412 = vmatpush2.msra.mxu0 0.0
    %6413 = vmatprep.subr.mxu0 0.0
    %6414 = vmatpush2.msra.mxu0 0.0
    %6415 = vmatprep.subr.mxu0 0.0
    %6416 = vmatpush2.msra.mxu0 0.0
    %6417 = vmatprep.subr.mxu0 0.0
    %6418 = vmatpush2.msra.mxu0 0.0
    %6419 = vmatprep.subr.mxu0 0.0
    %6420 = vmatpush2.msra.mxu0 0.0
    %6421 = vmatprep.subr.mxu0 0.0
    %6422 = vmatpush2.msra.mxu0 0.0
    %6423 = vmatprep.subr.mxu0 0.0
    %6424 = vmatpush2.msra.mxu0 0.0
    %6425 = vmatprep.mubr.f32.mxu0 0.0
    %6426 = vmatmul.mubr.f32.gmra.mxu0 %v6336
    %v6427 = vpop.f32.mrf.mxu0
    %v6428 = vadd.f32 0.0, %v6427
    %v6429 = vpop.f32.mrf.mxu0
    %6430 = vmatprep.mubr.f32.mxu0 0.0
    %6431 = vmatmul.mubr.f32.gmra.mxu0 %v6337
    %v6432 = vpop.f32.mrf.mxu0
    %v6433 = vadd.f32 0.0, %v6432
    %v6434 = vpop.f32.mrf.mxu0
    %6435 = vmatprep.mubr.f32.mxu0 0.0
    %6436 = vmatmul.mubr.f32.gmra.mxu0 %v6338
    %v6437 = vpop.f32.mrf.mxu0
    %v6438 = vpop.f32.mrf.mxu0
    %6439 = vmatprep.mubr.f32.mxu0 0.0
    %6440 = vmatmul.mubr.f32.gmra.mxu0 %v6339
    %v6441 = vpop.f32.mrf.mxu0
    %v6442 = vpop.f32.mrf.mxu0
    %6443 = vmatprep.mubr.f32.mxu0 0.0
    %6444 = vmatmul.mubr.f32.gmra.mxu0 %v6340
    %v6445 = vpop.f32.mrf.mxu0
    %v6446 = vadd.f32 0.0, %v6445
    %v6447 = vpop.f32.mrf.mxu0
    %6448 = vmatprep.mubr.f32.mxu0 0.0
    %6449 = vmatmul.mubr.f32.gmra.mxu0 %v6341
    %v6450 = vpop.f32.mrf.mxu0
    %v6451 = vadd.f32 0.0, %v6450
    %v6452 = vpop.f32.mrf.mxu0
    %6453 = vmatprep.mubr.f32.mxu0 0.0
    %6454 = vmatmul.mubr.f32.gmra.mxu0 %v6342
    %v6455 = vpop.f32.mrf.mxu0
    %v6456 = vpop.f32.mrf.mxu0
    %6457 = vmatprep.mubr.f32.mxu0 0.0
    %6458 = vmatmul.mubr.f32.gmra.mxu0 %v6343
    %v6459 = vpop.f32.mrf.mxu0
    %v6460 = vpop.f32.mrf.mxu0
    %6461 = vdwg.mxu0
    %v6462 = vadd.f32 %v5986, %v6428
    %v6463 = vadd.f32 %v5987, %v6433
    %v6464 = vadd.f32 %v5990, %v6446
    %v6465 = vadd.f32 %v5991, %v6451
    %s6466 = scalar_lea.vmem %s12, 1
    %v6467 = vld [vmem:[%s6466] sm:$0x1]
    %v6469 = vlaneseq
    %v6470 = vshrl.u32 %v6469, 7
    %v6471 = vsub.s32 0, %v6470
    %v6472 = vrot.slane %v6467, %v6471
    %v6474 = vadd.f32 %v6462, %v6472
    %v6475 = vadd.f32 %v6463, %v6472
    %v6476 = vadd.f32 %v6464, %v6472
    %v6477 = vadd.f32 %v6465, %v6472
    %v6478 = vld [vmem:[%s13] sm:$0xff]
    %v6479 = vld [vmem:[%s13 + $0x8] sm:$0xff]
    %v6480 = vld [vmem:[%s13 + $0x10] sm:$0xff]
    %v6481 = vld [vmem:[%s13 + $0x18] sm:$0xff]
    %v6482 = vld [vmem:[%s14] sm:$0x1]
    %v6484 = vlaneseq
    %v6485 = vshrl.u32 %v6484, 7
    %v6486 = vsub.s32 0, %v6485
    %v6487 = vrot.slane %v6482, %v6486
    %v6490 = vsel %vm106, %v6474, 0
    %v6493 = vsel %vm106, %v6475, 0
    %v6496 = vsel %vm106, %v6476, 0
    %v6499 = vsel %vm106, %v6477, 0
    %6501 = vmatprep.subr.mxu0 0.0
    %6502 = vmatpush1.msra.mxu0 0.0
    %6503 = vmatprep.subr.mxu0 0.0
    %6504 = vmatpush1.msra.mxu0 0.0
    %6505 = vmatprep.subr.mxu0 0.0
    %6506 = vmatpush1.msra.mxu0 0.0
    %6507 = vmatprep.subr.mxu0 0.0
    %6508 = vmatpush1.msra.mxu0 0.0
    %6509 = vmatprep.subr.mxu0 0.0
    %6510 = vmatpush1.msra.mxu0 0.0
    %6511 = vmatprep.subr.mxu0 0.0
    %6512 = vmatpush1.msra.mxu0 0.0
    %6513 = vmatprep.subr.mxu0 0.0
    %6514 = vmatpush1.msra.mxu0 0.0
    %6515 = vmatprep.subr.mxu0 0.0
    %6516 = vmatpush1.msra.mxu0 0.0
    %6517 = vmatprep.subr.mxu0 0.0
    %6518 = vmatpush1.msra.mxu0 0.0
    %6519 = vmatprep.subr.mxu0 0.0
    %6520 = vmatpush1.msra.mxu0 0.0
    %6521 = vmatprep.subr.mxu0 0.0
    %6522 = vmatpush1.msra.mxu0 0.0
    %6523 = vmatprep.subr.mxu0 0.0
    %6524 = vmatpush1.msra.mxu0 0.0
    %6525 = vmatprep.subr.mxu0 0.0
    %6526 = vmatpush1.msra.mxu0 %v6481
    %6527 = vmatprep.subr.mxu0 0.0
    %6528 = vmatpush1.msra.mxu0 %v6480
    %6529 = vmatprep.subr.mxu0 0.0
    %6530 = vmatpush1.msra.mxu0 %v6479
    %6531 = vmatprep.subr.mxu0 0.0
    %6532 = vmatpush1.msra.mxu0 %v6478
    %6533 = vmatprep.subr.mxu0 0.0
    %6534 = vmatpush2.msra.mxu0 0.0
    %6535 = vmatprep.subr.mxu0 0.0
    %6536 = vmatpush2.msra.mxu0 0.0
    %6537 = vmatprep.subr.mxu0 0.0
    %6538 = vmatpush2.msra.mxu0 0.0
    %6539 = vmatprep.subr.mxu0 0.0
    %6540 = vmatpush2.msra.mxu0 0.0
    %6541 = vmatprep.subr.mxu0 0.0
    %6542 = vmatpush2.msra.mxu0 0.0
    %6543 = vmatprep.subr.mxu0 0.0
    %6544 = vmatpush2.msra.mxu0 0.0
    %6545 = vmatprep.subr.mxu0 0.0
    %6546 = vmatpush2.msra.mxu0 0.0
    %6547 = vmatprep.subr.mxu0 0.0
    %6548 = vmatpush2.msra.mxu0 0.0
    %6549 = vmatprep.subr.mxu0 0.0
    %6550 = vmatpush2.msra.mxu0 0.0
    %6551 = vmatprep.subr.mxu0 0.0
    %6552 = vmatpush2.msra.mxu0 0.0
    %6553 = vmatprep.subr.mxu0 0.0
    %6554 = vmatpush2.msra.mxu0 0.0
    %6555 = vmatprep.subr.mxu0 0.0
    %6556 = vmatpush2.msra.mxu0 0.0
    %6557 = vmatprep.subr.mxu0 0.0
    %6558 = vmatpush2.msra.mxu0 0.0
    %6559 = vmatprep.subr.mxu0 0.0
    %6560 = vmatpush2.msra.mxu0 0.0
    %6561 = vmatprep.subr.mxu0 0.0
    %6562 = vmatpush2.msra.mxu0 0.0
    %6563 = vmatprep.subr.mxu0 0.0
    %6564 = vmatpush2.msra.mxu0 0.0
    %6565 = vmatprep.mubr.f32.mxu0 0.0
    %6566 = vmatmul.mubr.f32.gmra.mxu0 %v6490
    %v6567 = vpop.f32.mrf.mxu0
    %v6568 = vadd.f32 %v6487, %v6567
    %v6569 = vpop.f32.mrf.mxu0
    %6570 = vmatprep.mubr.f32.mxu0 0.0
    %6571 = vmatmul.mubr.f32.gmra.mxu0 %v6493
    %v6572 = vpop.f32.mrf.mxu0
    %v6573 = vadd.f32 %v6487, %v6572
    %v6574 = vpop.f32.mrf.mxu0
    %6575 = vmatprep.mubr.f32.mxu0 0.0
    %6576 = vmatmul.mubr.f32.gmra.mxu0 %v6496
    %v6577 = vpop.f32.mrf.mxu0
    %v6578 = vadd.f32 %v6487, %v6577
    %v6579 = vpop.f32.mrf.mxu0
    %6580 = vmatprep.mubr.f32.mxu0 0.0
    %6581 = vmatmul.mubr.f32.gmra.mxu0 %v6499
    %v6582 = vpop.f32.mrf.mxu0
    %v6583 = vadd.f32 %v6487, %v6582
    %v6584 = vpop.f32.mrf.mxu0
    %6585 = vdwg.mxu0
    %v6586 = vmul.f32 %v6568, %v6568
    %v6587 = vmul.f32 %v6573, %v6573
    %v6588 = vmul.f32 %v6578, %v6578
    %v6589 = vmul.f32 %v6583, %v6583
    %v6590 = vmul.f32 %v6568, %v6586
    %v6591 = vmul.f32 %v6573, %v6587
    %v6592 = vmul.f32 %v6578, %v6588
    %v6593 = vmul.f32 %v6583, %v6589
    %v6594 = vmul.f32 %v6590, 0.044715
    %v6595 = vmul.f32 %v6591, 0.044715
    %v6596 = vmul.f32 %v6592, 0.044715
    %v6597 = vmul.f32 %v6593, 0.044715
    %v6598 = vadd.f32 %v6568, %v6594
    %v6599 = vadd.f32 %v6573, %v6595
    %v6600 = vadd.f32 %v6578, %v6596
    %v6601 = vadd.f32 %v6583, %v6597
    %v6602 = vmul.f32 %v6598, 0.7978846
    %v6603 = vmul.f32 %v6599, 0.7978846
    %v6604 = vmul.f32 %v6600, 0.7978846
    %v6605 = vmul.f32 %v6601, 0.7978846
    %v6606 = vtanh.pop %v6602
    %v6607 = vtanh.pop %v6603
    %v6608 = vtanh.pop %v6604
    %v6609 = vtanh.pop %v6605
    %v6610 = vadd.f32 %v6606, 1.0
    %v6611 = vadd.f32 %v6607, 1.0
    %v6612 = vadd.f32 %v6608, 1.0
    %v6613 = vadd.f32 %v6609, 1.0
    %v6614 = vmul.f32 %v6610, 0.5
    %v6615 = vmul.f32 %v6611, 0.5
    %v6616 = vmul.f32 %v6612, 0.5
    %v6617 = vmul.f32 %v6613, 0.5
    %v6618 = vmul.f32 %v6568, %v6614
    %v6619 = vmul.f32 %v6573, %v6615
    %v6620 = vmul.f32 %v6578, %v6616
    %v6621 = vmul.f32 %v6583, %v6617
    %v6622 = vld [vmem:[%s15] sm:$0xff]
    %v6623 = vld [vmem:[%s15 + $0x8] sm:$0xff]
    %v6624 = vld [vmem:[%s15 + $0x10] sm:$0xff]
    %v6625 = vld [vmem:[%s15 + $0x18] sm:$0xff]
    %v6626 = vld [vmem:[%s16] sm:$0x1]
    %v6628 = vlaneseq
    %v6629 = vshrl.u32 %v6628, 7
    %v6630 = vsub.s32 0, %v6629
    %v6631 = vrot.slane %v6626, %v6630
    %v6634 = vsel %vm106, %v6618, 0
    %v6637 = vsel %vm106, %v6619, 0
    %v6640 = vsel %vm106, %v6620, 0
    %v6643 = vsel %vm106, %v6621, 0
    %6645 = vmatprep.subr.mxu0 0.0
    %6646 = vmatpush1.msra.mxu0 0.0
    %6647 = vmatprep.subr.mxu0 0.0
    %6648 = vmatpush1.msra.mxu0 0.0
    %6649 = vmatprep.subr.mxu0 0.0
    %6650 = vmatpush1.msra.mxu0 0.0
    %6651 = vmatprep.subr.mxu0 0.0
    %6652 = vmatpush1.msra.mxu0 0.0
    %6653 = vmatprep.subr.mxu0 0.0
    %6654 = vmatpush1.msra.mxu0 0.0
    %6655 = vmatprep.subr.mxu0 0.0
    %6656 = vmatpush1.msra.mxu0 0.0
    %6657 = vmatprep.subr.mxu0 0.0
    %6658 = vmatpush1.msra.mxu0 0.0
    %6659 = vmatprep.subr.mxu0 0.0
    %6660 = vmatpush1.msra.mxu0 0.0
    %6661 = vmatprep.subr.mxu0 0.0
    %6662 = vmatpush1.msra.mxu0 0.0
    %6663 = vmatprep.subr.mxu0 0.0
    %6664 = vmatpush1.msra.mxu0 0.0
    %6665 = vmatprep.subr.mxu0 0.0
    %6666 = vmatpush1.msra.mxu0 0.0
    %6667 = vmatprep.subr.mxu0 0.0
    %6668 = vmatpush1.msra.mxu0 0.0
    %6669 = vmatprep.subr.mxu0 0.0
    %6670 = vmatpush1.msra.mxu0 %v6625
    %6671 = vmatprep.subr.mxu0 0.0
    %6672 = vmatpush1.msra.mxu0 %v6624
    %6673 = vmatprep.subr.mxu0 0.0
    %6674 = vmatpush1.msra.mxu0 %v6623
    %6675 = vmatprep.subr.mxu0 0.0
    %6676 = vmatpush1.msra.mxu0 %v6622
    %6677 = vmatprep.subr.mxu0 0.0
    %6678 = vmatpush2.msra.mxu0 0.0
    %6679 = vmatprep.subr.mxu0 0.0
    %6680 = vmatpush2.msra.mxu0 0.0
    %6681 = vmatprep.subr.mxu0 0.0
    %6682 = vmatpush2.msra.mxu0 0.0
    %6683 = vmatprep.subr.mxu0 0.0
    %6684 = vmatpush2.msra.mxu0 0.0
    %6685 = vmatprep.subr.mxu0 0.0
    %6686 = vmatpush2.msra.mxu0 0.0
    %6687 = vmatprep.subr.mxu0 0.0
    %6688 = vmatpush2.msra.mxu0 0.0
    %6689 = vmatprep.subr.mxu0 0.0
    %6690 = vmatpush2.msra.mxu0 0.0
    %6691 = vmatprep.subr.mxu0 0.0
    %6692 = vmatpush2.msra.mxu0 0.0
    %6693 = vmatprep.subr.mxu0 0.0
    %6694 = vmatpush2.msra.mxu0 0.0
    %6695 = vmatprep.subr.mxu0 0.0
    %6696 = vmatpush2.msra.mxu0 0.0
    %6697 = vmatprep.subr.mxu0 0.0
    %6698 = vmatpush2.msra.mxu0 0.0
    %6699 = vmatprep.subr.mxu0 0.0
    %6700 = vmatpush2.msra.mxu0 0.0
    %6701 = vmatprep.subr.mxu0 0.0
    %6702 = vmatpush2.msra.mxu0 0.0
    %6703 = vmatprep.subr.mxu0 0.0
    %6704 = vmatpush2.msra.mxu0 0.0
    %6705 = vmatprep.subr.mxu0 0.0
    %6706 = vmatpush2.msra.mxu0 0.0
    %6707 = vmatprep.subr.mxu0 0.0
    %6708 = vmatpush2.msra.mxu0 0.0
    %6709 = vmatprep.mubr.f32.mxu0 0.0
    %6710 = vmatmul.mubr.f32.gmra.mxu0 %v6634
    %v6711 = vpop.f32.mrf.mxu0
    %v6712 = vadd.f32 %v6631, %v6711
    %v6713 = vpop.f32.mrf.mxu0
    %6714 = vmatprep.mubr.f32.mxu0 0.0
    %6715 = vmatmul.mubr.f32.gmra.mxu0 %v6637
    %v6716 = vpop.f32.mrf.mxu0
    %v6717 = vadd.f32 %v6631, %v6716
    %v6718 = vpop.f32.mrf.mxu0
    %6719 = vmatprep.mubr.f32.mxu0 0.0
    %6720 = vmatmul.mubr.f32.gmra.mxu0 %v6640
    %v6721 = vpop.f32.mrf.mxu0
    %v6722 = vadd.f32 %v6631, %v6721
    %v6723 = vpop.f32.mrf.mxu0
    %6724 = vmatprep.mubr.f32.mxu0 0.0
    %6725 = vmatmul.mubr.f32.gmra.mxu0 %v6643
    %v6726 = vpop.f32.mrf.mxu0
    %v6727 = vadd.f32 %v6631, %v6726
    %v6728 = vpop.f32.mrf.mxu0
    %6729 = vdwg.mxu0
    %s6730 = scalar_lea.vmem %s13, 32
    %v6731 = vld [vmem:[%s6730] sm:$0xff]
    %v6732 = vld [vmem:[%s6730 + $0x8] sm:$0xff]
    %v6733 = vld [vmem:[%s6730 + $0x10] sm:$0xff]
    %v6734 = vld [vmem:[%s6730 + $0x18] sm:$0xff]
    %s6735 = scalar_lea.vmem %s14, 1
    %v6736 = vld [vmem:[%s6735] sm:$0x1]
    %v6738 = vlaneseq
    %v6739 = vshrl.u32 %v6738, 7
    %v6740 = vsub.s32 0, %v6739
    %v6741 = vrot.slane %v6736, %v6740
    %v6744 = vsel %vm106, %v6712, 0
    %v6747 = vsel %vm106, %v6717, 0
    %v6750 = vsel %vm106, %v6722, 0
    %v6753 = vsel %vm106, %v6727, 0
    %6755 = vmatprep.subr.mxu0 0.0
    %6756 = vmatpush1.msra.mxu0 0.0
    %6757 = vmatprep.subr.mxu0 0.0
    %6758 = vmatpush1.msra.mxu0 0.0
    %6759 = vmatprep.subr.mxu0 0.0
    %6760 = vmatpush1.msra.mxu0 0.0
    %6761 = vmatprep.subr.mxu0 0.0
    %6762 = vmatpush1.msra.mxu0 0.0
    %6763 = vmatprep.subr.mxu0 0.0
    %6764 = vmatpush1.msra.mxu0 0.0
    %6765 = vmatprep.subr.mxu0 0.0
    %6766 = vmatpush1.msra.mxu0 0.0
    %6767 = vmatprep.subr.mxu0 0.0
    %6768 = vmatpush1.msra.mxu0 0.0
    %6769 = vmatprep.subr.mxu0 0.0
    %6770 = vmatpush1.msra.mxu0 0.0
    %6771 = vmatprep.subr.mxu0 0.0
    %6772 = vmatpush1.msra.mxu0 0.0
    %6773 = vmatprep.subr.mxu0 0.0
    %6774 = vmatpush1.msra.mxu0 0.0
    %6775 = vmatprep.subr.mxu0 0.0
    %6776 = vmatpush1.msra.mxu0 0.0
    %6777 = vmatprep.subr.mxu0 0.0
    %6778 = vmatpush1.msra.mxu0 0.0
    %6779 = vmatprep.subr.mxu0 0.0
    %6780 = vmatpush1.msra.mxu0 %v6734
    %6781 = vmatprep.subr.mxu0 0.0
    %6782 = vmatpush1.msra.mxu0 %v6733
    %6783 = vmatprep.subr.mxu0 0.0
    %6784 = vmatpush1.msra.mxu0 %v6732
    %6785 = vmatprep.subr.mxu0 0.0
    %6786 = vmatpush1.msra.mxu0 %v6731
    %6787 = vmatprep.subr.mxu0 0.0
    %6788 = vmatpush2.msra.mxu0 0.0
    %6789 = vmatprep.subr.mxu0 0.0
    %6790 = vmatpush2.msra.mxu0 0.0
    %6791 = vmatprep.subr.mxu0 0.0
    %6792 = vmatpush2.msra.mxu0 0.0
    %6793 = vmatprep.subr.mxu0 0.0
    %6794 = vmatpush2.msra.mxu0 0.0
    %6795 = vmatprep.subr.mxu0 0.0
    %6796 = vmatpush2.msra.mxu0 0.0
    %6797 = vmatprep.subr.mxu0 0.0
    %6798 = vmatpush2.msra.mxu0 0.0
    %6799 = vmatprep.subr.mxu0 0.0
    %6800 = vmatpush2.msra.mxu0 0.0
    %6801 = vmatprep.subr.mxu0 0.0
    %6802 = vmatpush2.msra.mxu0 0.0
    %6803 = vmatprep.subr.mxu0 0.0
    %6804 = vmatpush2.msra.mxu0 0.0
    %6805 = vmatprep.subr.mxu0 0.0
    %6806 = vmatpush2.msra.mxu0 0.0
    %6807 = vmatprep.subr.mxu0 0.0
    %6808 = vmatpush2.msra.mxu0 0.0
    %6809 = vmatprep.subr.mxu0 0.0
    %6810 = vmatpush2.msra.mxu0 0.0
    %6811 = vmatprep.subr.mxu0 0.0
    %6812 = vmatpush2.msra.mxu0 0.0
    %6813 = vmatprep.subr.mxu0 0.0
    %6814 = vmatpush2.msra.mxu0 0.0
    %6815 = vmatprep.subr.mxu0 0.0
    %6816 = vmatpush2.msra.mxu0 0.0
    %6817 = vmatprep.subr.mxu0 0.0
    %6818 = vmatpush2.msra.mxu0 0.0
    %6819 = vmatprep.mubr.f32.mxu0 0.0
    %6820 = vmatmul.mubr.f32.gmra.mxu0 %v6744
    %v6821 = vpop.f32.mrf.mxu0
    %v6822 = vadd.f32 %v6741, %v6821
    %v6823 = vpop.f32.mrf.mxu0
    %6824 = vmatprep.mubr.f32.mxu0 0.0
    %6825 = vmatmul.mubr.f32.gmra.mxu0 %v6747
    %v6826 = vpop.f32.mrf.mxu0
    %v6827 = vadd.f32 %v6741, %v6826
    %v6828 = vpop.f32.mrf.mxu0
    %6829 = vmatprep.mubr.f32.mxu0 0.0
    %6830 = vmatmul.mubr.f32.gmra.mxu0 %v6750
    %v6831 = vpop.f32.mrf.mxu0
    %v6832 = vadd.f32 %v6741, %v6831
    %v6833 = vpop.f32.mrf.mxu0
    %6834 = vmatprep.mubr.f32.mxu0 0.0
    %6835 = vmatmul.mubr.f32.gmra.mxu0 %v6753
    %v6836 = vpop.f32.mrf.mxu0
    %v6837 = vadd.f32 %v6741, %v6836
    %v6838 = vpop.f32.mrf.mxu0
    %6839 = vdwg.mxu0
    %v6840 = vmul.f32 %v6822, %v6822
    %v6841 = vmul.f32 %v6827, %v6827
    %v6842 = vmul.f32 %v6832, %v6832
    %v6843 = vmul.f32 %v6837, %v6837
    %v6844 = vmul.f32 %v6822, %v6840
    %v6845 = vmul.f32 %v6827, %v6841
    %v6846 = vmul.f32 %v6832, %v6842
    %v6847 = vmul.f32 %v6837, %v6843
    %v6848 = vmul.f32 %v6844, 0.044715
    %v6849 = vmul.f32 %v6845, 0.044715
    %v6850 = vmul.f32 %v6846, 0.044715
    %v6851 = vmul.f32 %v6847, 0.044715
    %v6852 = vadd.f32 %v6822, %v6848
    %v6853 = vadd.f32 %v6827, %v6849
    %v6854 = vadd.f32 %v6832, %v6850
    %v6855 = vadd.f32 %v6837, %v6851
    %v6856 = vmul.f32 %v6852, 0.7978846
    %v6857 = vmul.f32 %v6853, 0.7978846
    %v6858 = vmul.f32 %v6854, 0.7978846
    %v6859 = vmul.f32 %v6855, 0.7978846
    %v6860 = vtanh.pop %v6856
    %v6861 = vtanh.pop %v6857
    %v6862 = vtanh.pop %v6858
    %v6863 = vtanh.pop %v6859
    %v6864 = vadd.f32 %v6860, 1.0
    %v6865 = vadd.f32 %v6861, 1.0
    %v6866 = vadd.f32 %v6862, 1.0
    %v6867 = vadd.f32 %v6863, 1.0
    %v6868 = vmul.f32 %v6864, 0.5
    %v6869 = vmul.f32 %v6865, 0.5
    %v6870 = vmul.f32 %v6866, 0.5
    %v6871 = vmul.f32 %v6867, 0.5
    %v6872 = vmul.f32 %v6822, %v6868
    %v6873 = vmul.f32 %v6827, %v6869
    %v6874 = vmul.f32 %v6832, %v6870
    %v6875 = vmul.f32 %v6837, %v6871
    %s6876 = scalar_lea.vmem %s15, 32
    %v6877 = vld [vmem:[%s6876] sm:$0xff]
    %v6878 = vld [vmem:[%s6876 + $0x8] sm:$0xff]
    %v6879 = vld [vmem:[%s6876 + $0x10] sm:$0xff]
    %v6880 = vld [vmem:[%s6876 + $0x18] sm:$0xff]
    %s6881 = scalar_lea.vmem %s16, 1
    %v6882 = vld [vmem:[%s6881] sm:$0x1]
    %v6884 = vlaneseq
    %v6885 = vshrl.u32 %v6884, 7
    %v6886 = vsub.s32 0, %v6885
    %v6887 = vrot.slane %v6882, %v6886
    %v6890 = vsel %vm106, %v6872, 0
    %v6893 = vsel %vm106, %v6873, 0
    %v6896 = vsel %vm106, %v6874, 0
    %v6899 = vsel %vm106, %v6875, 0
    %6901 = vmatprep.subr.mxu0 0.0
    %6902 = vmatpush1.msra.mxu0 0.0
    %6903 = vmatprep.subr.mxu0 0.0
    %6904 = vmatpush1.msra.mxu0 0.0
    %6905 = vmatprep.subr.mxu0 0.0
    %6906 = vmatpush1.msra.mxu0 0.0
    %6907 = vmatprep.subr.mxu0 0.0
    %6908 = vmatpush1.msra.mxu0 0.0
    %6909 = vmatprep.subr.mxu0 0.0
    %6910 = vmatpush1.msra.mxu0 0.0
    %6911 = vmatprep.subr.mxu0 0.0
    %6912 = vmatpush1.msra.mxu0 0.0
    %6913 = vmatprep.subr.mxu0 0.0
    %6914 = vmatpush1.msra.mxu0 0.0
    %6915 = vmatprep.subr.mxu0 0.0
    %6916 = vmatpush1.msra.mxu0 0.0
    %6917 = vmatprep.subr.mxu0 0.0
    %6918 = vmatpush1.msra.mxu0 0.0
    %6919 = vmatprep.subr.mxu0 0.0
    %6920 = vmatpush1.msra.mxu0 0.0
    %6921 = vmatprep.subr.mxu0 0.0
    %6922 = vmatpush1.msra.mxu0 0.0
    %6923 = vmatprep.subr.mxu0 0.0
    %6924 = vmatpush1.msra.mxu0 0.0
    %6925 = vmatprep.subr.mxu0 0.0
    %6926 = vmatpush1.msra.mxu0 %v6880
    %6927 = vmatprep.subr.mxu0 0.0
    %6928 = vmatpush1.msra.mxu0 %v6879
    %6929 = vmatprep.subr.mxu0 0.0
    %6930 = vmatpush1.msra.mxu0 %v6878
    %6931 = vmatprep.subr.mxu0 0.0
    %6932 = vmatpush1.msra.mxu0 %v6877
    %6933 = vmatprep.subr.mxu0 0.0
    %6934 = vmatpush2.msra.mxu0 0.0
    %6935 = vmatprep.subr.mxu0 0.0
    %6936 = vmatpush2.msra.mxu0 0.0
    %6937 = vmatprep.subr.mxu0 0.0
    %6938 = vmatpush2.msra.mxu0 0.0
    %6939 = vmatprep.subr.mxu0 0.0
    %6940 = vmatpush2.msra.mxu0 0.0
    %6941 = vmatprep.subr.mxu0 0.0
    %6942 = vmatpush2.msra.mxu0 0.0
    %6943 = vmatprep.subr.mxu0 0.0
    %6944 = vmatpush2.msra.mxu0 0.0
    %6945 = vmatprep.subr.mxu0 0.0
    %6946 = vmatpush2.msra.mxu0 0.0
    %6947 = vmatprep.subr.mxu0 0.0
    %6948 = vmatpush2.msra.mxu0 0.0
    %6949 = vmatprep.subr.mxu0 0.0
    %6950 = vmatpush2.msra.mxu0 0.0
    %6951 = vmatprep.subr.mxu0 0.0
    %6952 = vmatpush2.msra.mxu0 0.0
    %6953 = vmatprep.subr.mxu0 0.0
    %6954 = vmatpush2.msra.mxu0 0.0
    %6955 = vmatprep.subr.mxu0 0.0
    %6956 = vmatpush2.msra.mxu0 0.0
    %6957 = vmatprep.subr.mxu0 0.0
    %6958 = vmatpush2.msra.mxu0 0.0
    %6959 = vmatprep.subr.mxu0 0.0
    %6960 = vmatpush2.msra.mxu0 0.0
    %6961 = vmatprep.subr.mxu0 0.0
    %6962 = vmatpush2.msra.mxu0 0.0
    %6963 = vmatprep.subr.mxu0 0.0
    %6964 = vmatpush2.msra.mxu0 0.0
    %6965 = vmatprep.mubr.f32.mxu0 0.0
    %6966 = vmatmul.mubr.f32.gmra.mxu0 %v6890
    %v6967 = vpop.f32.mrf.mxu0
    %v6968 = vadd.f32 %v6887, %v6967
    %v6969 = vpop.f32.mrf.mxu0
    %6970 = vmatprep.mubr.f32.mxu0 0.0
    %6971 = vmatmul.mubr.f32.gmra.mxu0 %v6893
    %v6972 = vpop.f32.mrf.mxu0
    %v6973 = vadd.f32 %v6887, %v6972
    %v6974 = vpop.f32.mrf.mxu0
    %6975 = vmatprep.mubr.f32.mxu0 0.0
    %6976 = vmatmul.mubr.f32.gmra.mxu0 %v6896
    %v6977 = vpop.f32.mrf.mxu0
    %v6978 = vadd.f32 %v6887, %v6977
    %v6979 = vpop.f32.mrf.mxu0
    %6980 = vmatprep.mubr.f32.mxu0 0.0
    %6981 = vmatmul.mubr.f32.gmra.mxu0 %v6899
    %v6982 = vpop.f32.mrf.mxu0
    %v6983 = vadd.f32 %v6887, %v6982
    %v6984 = vpop.f32.mrf.mxu0
    %6985 = vdwg.mxu0
    %v6986 = vld [vmem:[%s17] sm:$0x1]
    %v6987 = vld [vmem:[%s18] sm:$0x1]
    %v6988 = vsel %vm106, %v6968, 0.0
    %6989 = vadd.xlane.f32.xlu0 %v6988
    %v6990 = vpop.xlane.xlu0 %6989
    %v6991 = vsel %vm106, %v6973, 0.0
    %6992 = vadd.xlane.f32.xlu0 %v6991
    %v6993 = vpop.xlane.xlu0 %6992
    %v6994 = vsel %vm106, %v6978, 0.0
    %6995 = vadd.xlane.f32.xlu0 %v6994
    %v6996 = vpop.xlane.xlu0 %6995
    %v6997 = vsel %vm106, %v6983, 0.0
    %6998 = vadd.xlane.f32.xlu0 %v6997
    %v6999 = vpop.xlane.xlu0 %6998
    %v7000 = vmul.f32 %v6990, %v131
    %v7001 = vmul.f32 %v6993, %v131
    %v7002 = vmul.f32 %v6996, %v131
    %v7003 = vmul.f32 %v6999, %v131
    %v7004 = vsub.f32 %v6968, %v7000
    %v7005 = vsub.f32 %v6973, %v7001
    %v7006 = vsub.f32 %v6978, %v7002
    %v7007 = vsub.f32 %v6983, %v7003
    %v7008 = vmul.f32 %v7004, %v7004
    %v7009 = vmul.f32 %v7005, %v7005
    %v7010 = vmul.f32 %v7006, %v7006
    %v7011 = vmul.f32 %v7007, %v7007
    %v7012 = vsel %vm106, %v7008, 0.0
    %7013 = vadd.xlane.f32.xlu0 %v7012
    %v7014 = vpop.xlane.xlu0 %7013
    %v7015 = vsel %vm106, %v7009, 0.0
    %7016 = vadd.xlane.f32.xlu0 %v7015
    %v7017 = vpop.xlane.xlu0 %7016
    %v7018 = vsel %vm106, %v7010, 0.0
    %7019 = vadd.xlane.f32.xlu0 %v7018
    %v7020 = vpop.xlane.xlu0 %7019
    %v7021 = vsel %vm106, %v7011, 0.0
    %7022 = vadd.xlane.f32.xlu0 %v7021
    %v7023 = vpop.xlane.xlu0 %7022
    %v7024 = vmul.f32 %v7014, %v131
    %v7025 = vmul.f32 %v7017, %v131
    %v7026 = vmul.f32 %v7020, %v131
    %v7027 = vmul.f32 %v7023, %v131
    %v7028 = vadd.f32 %v7024, 1e-05
    %v7029 = vadd.f32 %v7025, 1e-05
    %v7030 = vadd.f32 %v7026, 1e-05
    %v7031 = vadd.f32 %v7027, 1e-05
    %v7032 = vrsqrt.pop %v7028
    %v7033 = vrsqrt.pop %v7029
    %v7034 = vrsqrt.pop %v7030
    %v7035 = vrsqrt.pop %v7031
    %v7036 = vmul.f32 %v7004, %v7032
    %v7037 = vmul.f32 %v7005, %v7033
    %v7038 = vmul.f32 %v7006, %v7034
    %v7039 = vmul.f32 %v7007, %v7035
    %v7041 = vlaneseq
    %v7042 = vshrl.u32 %v7041, 7
    %v7043 = vsub.s32 0, %v7042
    %v7044 = vrot.slane %v6986, %v7043
    %v7046 = vmul.f32 %v7036, %v7044
    %v7047 = vmul.f32 %v7037, %v7044
    %v7048 = vmul.f32 %v7038, %v7044
    %v7049 = vmul.f32 %v7039, %v7044
    %v7051 = vlaneseq
    %v7052 = vshrl.u32 %v7051, 7
    %v7053 = vsub.s32 0, %v7052
    %v7054 = vrot.slane %v6987, %v7053
    %v7056 = vadd.f32 %v7046, %v7054
    %v7057 = vadd.f32 %v7047, %v7054
    %v7058 = vadd.f32 %v7048, %v7054
    %v7059 = vadd.f32 %v7049, %v7054
    %v7060 = vld [vmem:[%s19] sm:$0xff]
    %v7061 = vld [vmem:[%s19 + $0x8] sm:$0xff]
    %v7062 = vld [vmem:[%s19 + $0x10] sm:$0xff]
    %v7063 = vld [vmem:[%s19 + $0x18] sm:$0xff]
    %v7064 = vld [vmem:[%s19 + $0x20] sm:$0xff]
    %v7065 = vld [vmem:[%s19 + $0x28] sm:$0xff]
    %v7066 = vld [vmem:[%s19 + $0x30] sm:$0xff]
    %v7067 = vld [vmem:[%s19 + $0x38] sm:$0xff]
    %v7068 = vld [vmem:[%s19 + $0x40] sm:$0xff]
    %v7069 = vld [vmem:[%s19 + $0x48] sm:$0xff]
    %v7070 = vld [vmem:[%s19 + $0x50] sm:$0xff]
    %v7071 = vld [vmem:[%s19 + $0x58] sm:$0xff]
    %v7072 = vld [vmem:[%s19 + $0x60] sm:$0xff]
    %v7073 = vld [vmem:[%s19 + $0x68] sm:$0xff]
    %v7074 = vld [vmem:[%s19 + $0x70] sm:$0xff]
    %v7075 = vld [vmem:[%s19 + $0x78] sm:$0xff]
    %v7076 = vld [vmem:[%s19 + $0x80] sm:$0xff]
    %v7077 = vld [vmem:[%s19 + $0x88] sm:$0xff]
    %v7078 = vld [vmem:[%s19 + $0x90] sm:$0xff]
    %v7079 = vld [vmem:[%s19 + $0x98] sm:$0xff]
    %v7080 = vld [vmem:[%s19 + $0xa0] sm:$0xff]
    %v7081 = vld [vmem:[%s19 + $0xa8] sm:$0xff]
    %v7082 = vld [vmem:[%s19 + $0xb0] sm:$0xff]
    %v7083 = vld [vmem:[%s19 + $0xb8] sm:$0xff]
    %v7084 = vld [vmem:[%s19 + $0xc0] sm:$0xff]
    %v7085 = vld [vmem:[%s19 + $0xc8] sm:$0xff]
    %v7086 = vld [vmem:[%s19 + $0xd0] sm:$0xff]
    %v7087 = vld [vmem:[%s19 + $0xd8] sm:$0xff]
    %v7088 = vld [vmem:[%s19 + $0xe0] sm:$0xff]
    %v7089 = vld [vmem:[%s19 + $0xe8] sm:$0xff]
    %v7090 = vld [vmem:[%s19 + $0xf0] sm:$0xff]
    %v7091 = vld [vmem:[%s19 + $0xf8] sm:$0xff]
    %v7092 = vld [vmem:[%s19 + $0x100] sm:$0xff]
    %v7093 = vld [vmem:[%s19 + $0x108] sm:$0xff]
    %v7094 = vld [vmem:[%s19 + $0x110] sm:$0xff]
    %v7095 = vld [vmem:[%s19 + $0x118] sm:$0xff]
    %v7097 = vsel %vm106, %v7060, 0
    %v7100 = vsel %vm106, %v7061, 0
    %v7103 = vsel %vm106, %v7062, 0
    %v7106 = vsel %vm106, %v7063, 0
    %v7109 = vsel %vm106, %v7064, 0
    %v7112 = vsel %vm106, %v7065, 0
    %v7115 = vsel %vm106, %v7066, 0
    %v7118 = vsel %vm106, %v7067, 0
    %v7121 = vsel %vm106, %v7068, 0
    %v7124 = vsel %vm106, %v7069, 0
    %v7127 = vsel %vm106, %v7070, 0
    %v7130 = vsel %vm106, %v7071, 0
    %v7133 = vsel %vm106, %v7072, 0
    %v7136 = vsel %vm106, %v7073, 0
    %v7139 = vsel %vm106, %v7074, 0
    %v7142 = vsel %vm106, %v7075, 0
    %v7145 = vsel %vm106, %v7076, 0
    %v7148 = vsel %vm106, %v7077, 0
    %v7151 = vsel %vm106, %v7078, 0
    %v7154 = vsel %vm106, %v7079, 0
    %v7157 = vsel %vm106, %v7080, 0
    %v7160 = vsel %vm106, %v7081, 0
    %v7163 = vsel %vm106, %v7082, 0
    %v7166 = vsel %vm106, %v7083, 0
    %v7169 = vsel %vm106, %v7084, 0
    %v7172 = vsel %vm106, %v7085, 0
    %v7175 = vsel %vm106, %v7086, 0
    %v7178 = vsel %vm106, %v7087, 0
    %v7181 = vsel %vm106, %v7088, 0
    %v7184 = vsel %vm106, %v7089, 0
    %v7187 = vsel %vm106, %v7090, 0
    %v7190 = vsel %vm106, %v7091, 0
    %v7193 = vsel %vm106, %v7092, 0
    %v7196 = vsel %vm106, %v7093, 0
    %v7199 = vsel %vm106, %v7094, 0
    %v7202 = vsel %vm106, %v7095, 0
    %7204 = vmatprep.subr.mxu0 0.0
    %7205 = vmatpush1.msra.mxu0 0.0
    %7206 = vmatprep.subr.mxu0 0.0
    %7207 = vmatpush1.msra.mxu0 0.0
    %7208 = vmatprep.subr.mxu0 0.0
    %7209 = vmatpush1.msra.mxu0 0.0
    %7210 = vmatprep.subr.mxu0 0.0
    %7211 = vmatpush1.msra.mxu0 0.0
    %7212 = vmatprep.subr.mxu0 0.0
    %7213 = vmatpush1.msra.mxu0 0.0
    %7214 = vmatprep.subr.mxu0 0.0
    %7215 = vmatpush1.msra.mxu0 0.0
    %7216 = vmatprep.subr.mxu0 0.0
    %7217 = vmatpush1.msra.mxu0 0.0
    %7218 = vmatprep.subr.mxu0 0.0
    %7219 = vmatpush1.msra.mxu0 0.0
    %7220 = vmatprep.subr.mxu0 0.0
    %7221 = vmatpush1.msra.mxu0 0.0
    %7222 = vmatprep.subr.mxu0 0.0
    %7223 = vmatpush1.msra.mxu0 0.0
    %7224 = vmatprep.subr.mxu0 0.0
    %7225 = vmatpush1.msra.mxu0 0.0
    %7226 = vmatprep.subr.mxu0 0.0
    %7227 = vmatpush1.msra.mxu0 0.0
    %7228 = vmatprep.subr.mxu0 0.0
    %7229 = vmatpush1.msra.mxu0 %v7059
    %7230 = vmatprep.subr.mxu0 0.0
    %7231 = vmatpush1.msra.mxu0 %v7058
    %7232 = vmatprep.subr.mxu0 0.0
    %7233 = vmatpush1.msra.mxu0 %v7057
    %7234 = vmatprep.subr.mxu0 0.0
    %7235 = vmatpush1.msra.mxu0 %v7056
    %7236 = vmatprep.subr.mxu0 0.0
    %7237 = vmatpush2.msra.mxu0 0.0
    %7238 = vmatprep.subr.mxu0 0.0
    %7239 = vmatpush2.msra.mxu0 0.0
    %7240 = vmatprep.subr.mxu0 0.0
    %7241 = vmatpush2.msra.mxu0 0.0
    %7242 = vmatprep.subr.mxu0 0.0
    %7243 = vmatpush2.msra.mxu0 0.0
    %7244 = vmatprep.subr.mxu0 0.0
    %7245 = vmatpush2.msra.mxu0 0.0
    %7246 = vmatprep.subr.mxu0 0.0
    %7247 = vmatpush2.msra.mxu0 0.0
    %7248 = vmatprep.subr.mxu0 0.0
    %7249 = vmatpush2.msra.mxu0 0.0
    %7250 = vmatprep.subr.mxu0 0.0
    %7251 = vmatpush2.msra.mxu0 0.0
    %7252 = vmatprep.subr.mxu0 0.0
    %7253 = vmatpush2.msra.mxu0 0.0
    %7254 = vmatprep.subr.mxu0 0.0
    %7255 = vmatpush2.msra.mxu0 0.0
    %7256 = vmatprep.subr.mxu0 0.0
    %7257 = vmatpush2.msra.mxu0 0.0
    %7258 = vmatprep.subr.mxu0 0.0
    %7259 = vmatpush2.msra.mxu0 0.0
    %7260 = vmatprep.subr.mxu0 0.0
    %7261 = vmatpush2.msra.mxu0 0.0
    %7262 = vmatprep.subr.mxu0 0.0
    %7263 = vmatpush2.msra.mxu0 0.0
    %7264 = vmatprep.subr.mxu0 0.0
    %7265 = vmatpush2.msra.mxu0 0.0
    %7266 = vmatprep.subr.mxu0 0.0
    %7267 = vmatpush2.msra.mxu0 0.0
    %7268 = vmatprep.mubr.f32.mxu0 0.0
    %7269 = vmatmul.mubr.f32.gmra.mxu0 %v7097
    %v7270 = vpop.f32.mrf.mxu0
    %v7271 = vadd.f32 0.0, %v7270
    %v7272 = vpop.f32.mrf.mxu0
    %7273 = vmatprep.mubr.f32.mxu0 0.0
    %7274 = vmatmul.mubr.f32.gmra.mxu0 %v7100
    %v7275 = vpop.f32.mrf.mxu0
    %v7276 = vadd.f32 0.0, %v7275
    %v7277 = vpop.f32.mrf.mxu0
    %7278 = vmatprep.mubr.f32.mxu0 0.0
    %7279 = vmatmul.mubr.f32.gmra.mxu0 %v7103
    %v7280 = vpop.f32.mrf.mxu0
    %v7281 = vadd.f32 0.0, %v7280
    %v7282 = vpop.f32.mrf.mxu0
    %7283 = vmatprep.mubr.f32.mxu0 0.0
    %7284 = vmatmul.mubr.f32.gmra.mxu0 %v7106
    %v7285 = vpop.f32.mrf.mxu0
    %v7286 = vadd.f32 0.0, %v7285
    %v7287 = vpop.f32.mrf.mxu0
    %7288 = vmatprep.mubr.f32.mxu0 0.0
    %7289 = vmatmul.mubr.f32.gmra.mxu0 %v7109
    %v7290 = vpop.f32.mrf.mxu0
    %v7291 = vadd.f32 0.0, %v7290
    %v7292 = vpop.f32.mrf.mxu0
    %7293 = vmatprep.mubr.f32.mxu0 0.0
    %7294 = vmatmul.mubr.f32.gmra.mxu0 %v7112
    %v7295 = vpop.f32.mrf.mxu0
    %v7296 = vadd.f32 0.0, %v7295
    %v7297 = vpop.f32.mrf.mxu0
    %7298 = vmatprep.mubr.f32.mxu0 0.0
    %7299 = vmatmul.mubr.f32.gmra.mxu0 %v7115
    %v7300 = vpop.f32.mrf.mxu0
    %v7301 = vadd.f32 0.0, %v7300
    %v7302 = vpop.f32.mrf.mxu0
    %7303 = vmatprep.mubr.f32.mxu0 0.0
    %7304 = vmatmul.mubr.f32.gmra.mxu0 %v7118
    %v7305 = vpop.f32.mrf.mxu0
    %v7306 = vadd.f32 0.0, %v7305
    %v7307 = vpop.f32.mrf.mxu0
    %7308 = vmatprep.mubr.f32.mxu0 0.0
    %7309 = vmatmul.mubr.f32.gmra.mxu0 %v7121
    %v7310 = vpop.f32.mrf.mxu0
    %v7311 = vadd.f32 0.0, %v7310
    %v7312 = vpop.f32.mrf.mxu0
    %7313 = vmatprep.mubr.f32.mxu0 0.0
    %7314 = vmatmul.mubr.f32.gmra.mxu0 %v7124
    %v7315 = vpop.f32.mrf.mxu0
    %v7316 = vadd.f32 0.0, %v7315
    %v7317 = vpop.f32.mrf.mxu0
    %7318 = vmatprep.mubr.f32.mxu0 0.0
    %7319 = vmatmul.mubr.f32.gmra.mxu0 %v7127
    %v7320 = vpop.f32.mrf.mxu0
    %v7321 = vadd.f32 0.0, %v7320
    %v7322 = vpop.f32.mrf.mxu0
    %7323 = vmatprep.mubr.f32.mxu0 0.0
    %7324 = vmatmul.mubr.f32.gmra.mxu0 %v7130
    %v7325 = vpop.f32.mrf.mxu0
    %v7326 = vadd.f32 0.0, %v7325
    %v7327 = vpop.f32.mrf.mxu0
    %7328 = vmatprep.mubr.f32.mxu0 0.0
    %7329 = vmatmul.mubr.f32.gmra.mxu0 %v7133
    %v7330 = vpop.f32.mrf.mxu0
    %v7331 = vadd.f32 0.0, %v7330
    %v7332 = vpop.f32.mrf.mxu0
    %7333 = vmatprep.mubr.f32.mxu0 0.0
    %7334 = vmatmul.mubr.f32.gmra.mxu0 %v7136
    %v7335 = vpop.f32.mrf.mxu0
    %v7336 = vadd.f32 0.0, %v7335
    %v7337 = vpop.f32.mrf.mxu0
    %7338 = vmatprep.mubr.f32.mxu0 0.0
    %7339 = vmatmul.mubr.f32.gmra.mxu0 %v7139
    %v7340 = vpop.f32.mrf.mxu0
    %v7341 = vadd.f32 0.0, %v7340
    %v7342 = vpop.f32.mrf.mxu0
    %7343 = vmatprep.mubr.f32.mxu0 0.0
    %7344 = vmatmul.mubr.f32.gmra.mxu0 %v7142
    %v7345 = vpop.f32.mrf.mxu0
    %v7346 = vadd.f32 0.0, %v7345
    %v7347 = vpop.f32.mrf.mxu0
    %7348 = vmatprep.mubr.f32.mxu0 0.0
    %7349 = vmatmul.mubr.f32.gmra.mxu0 %v7145
    %v7350 = vpop.f32.mrf.mxu0
    %v7351 = vadd.f32 0.0, %v7350
    %v7352 = vpop.f32.mrf.mxu0
    %7353 = vmatprep.mubr.f32.mxu0 0.0
    %7354 = vmatmul.mubr.f32.gmra.mxu0 %v7148
    %v7355 = vpop.f32.mrf.mxu0
    %v7356 = vadd.f32 0.0, %v7355
    %v7357 = vpop.f32.mrf.mxu0
    %7358 = vmatprep.mubr.f32.mxu0 0.0
    %7359 = vmatmul.mubr.f32.gmra.mxu0 %v7151
    %v7360 = vpop.f32.mrf.mxu0
    %v7361 = vadd.f32 0.0, %v7360
    %v7362 = vpop.f32.mrf.mxu0
    %7363 = vmatprep.mubr.f32.mxu0 0.0
    %7364 = vmatmul.mubr.f32.gmra.mxu0 %v7154
    %v7365 = vpop.f32.mrf.mxu0
    %v7366 = vadd.f32 0.0, %v7365
    %v7367 = vpop.f32.mrf.mxu0
    %7368 = vmatprep.mubr.f32.mxu0 0.0
    %7369 = vmatmul.mubr.f32.gmra.mxu0 %v7157
    %v7370 = vpop.f32.mrf.mxu0
    %v7371 = vadd.f32 0.0, %v7370
    %v7372 = vpop.f32.mrf.mxu0
    %7373 = vmatprep.mubr.f32.mxu0 0.0
    %7374 = vmatmul.mubr.f32.gmra.mxu0 %v7160
    %v7375 = vpop.f32.mrf.mxu0
    %v7376 = vadd.f32 0.0, %v7375
    %v7377 = vpop.f32.mrf.mxu0
    %7378 = vmatprep.mubr.f32.mxu0 0.0
    %7379 = vmatmul.mubr.f32.gmra.mxu0 %v7163
    %v7380 = vpop.f32.mrf.mxu0
    %v7381 = vadd.f32 0.0, %v7380
    %v7382 = vpop.f32.mrf.mxu0
    %7383 = vmatprep.mubr.f32.mxu0 0.0
    %7384 = vmatmul.mubr.f32.gmra.mxu0 %v7166
    %v7385 = vpop.f32.mrf.mxu0
    %v7386 = vadd.f32 0.0, %v7385
    %v7387 = vpop.f32.mrf.mxu0
    %7388 = vmatprep.mubr.f32.mxu0 0.0
    %7389 = vmatmul.mubr.f32.gmra.mxu0 %v7169
    %v7390 = vpop.f32.mrf.mxu0
    %v7391 = vadd.f32 0.0, %v7390
    %v7392 = vpop.f32.mrf.mxu0
    %7393 = vmatprep.mubr.f32.mxu0 0.0
    %7394 = vmatmul.mubr.f32.gmra.mxu0 %v7172
    %v7395 = vpop.f32.mrf.mxu0
    %v7396 = vadd.f32 0.0, %v7395
    %v7397 = vpop.f32.mrf.mxu0
    %7398 = vmatprep.mubr.f32.mxu0 0.0
    %7399 = vmatmul.mubr.f32.gmra.mxu0 %v7175
    %v7400 = vpop.f32.mrf.mxu0
    %v7401 = vadd.f32 0.0, %v7400
    %v7402 = vpop.f32.mrf.mxu0
    %7403 = vmatprep.mubr.f32.mxu0 0.0
    %7404 = vmatmul.mubr.f32.gmra.mxu0 %v7178
    %v7405 = vpop.f32.mrf.mxu0
    %v7406 = vadd.f32 0.0, %v7405
    %v7407 = vpop.f32.mrf.mxu0
    %7408 = vmatprep.mubr.f32.mxu0 0.0
    %7409 = vmatmul.mubr.f32.gmra.mxu0 %v7181
    %v7410 = vpop.f32.mrf.mxu0
    %v7411 = vadd.f32 0.0, %v7410
    %v7412 = vpop.f32.mrf.mxu0
    %7413 = vmatprep.mubr.f32.mxu0 0.0
    %7414 = vmatmul.mubr.f32.gmra.mxu0 %v7184
    %v7415 = vpop.f32.mrf.mxu0
    %v7416 = vadd.f32 0.0, %v7415
    %v7417 = vpop.f32.mrf.mxu0
    %7418 = vmatprep.mubr.f32.mxu0 0.0
    %7419 = vmatmul.mubr.f32.gmra.mxu0 %v7187
    %v7420 = vpop.f32.mrf.mxu0
    %v7421 = vadd.f32 0.0, %v7420
    %v7422 = vpop.f32.mrf.mxu0
    %7423 = vmatprep.mubr.f32.mxu0 0.0
    %7424 = vmatmul.mubr.f32.gmra.mxu0 %v7190
    %v7425 = vpop.f32.mrf.mxu0
    %v7426 = vadd.f32 0.0, %v7425
    %v7427 = vpop.f32.mrf.mxu0
    %7428 = vmatprep.mubr.f32.mxu0 0.0
    %7429 = vmatmul.mubr.f32.gmra.mxu0 %v7193
    %v7430 = vpop.f32.mrf.mxu0
    %v7431 = vadd.f32 0.0, %v7430
    %v7432 = vpop.f32.mrf.mxu0
    %7433 = vmatprep.mubr.f32.mxu0 0.0
    %7434 = vmatmul.mubr.f32.gmra.mxu0 %v7196
    %v7435 = vpop.f32.mrf.mxu0
    %v7436 = vadd.f32 0.0, %v7435
    %v7437 = vpop.f32.mrf.mxu0
    %7438 = vmatprep.mubr.f32.mxu0 0.0
    %7439 = vmatmul.mubr.f32.gmra.mxu0 %v7199
    %v7440 = vpop.f32.mrf.mxu0
    %v7441 = vadd.f32 0.0, %v7440
    %v7442 = vpop.f32.mrf.mxu0
    %7443 = vmatprep.mubr.f32.mxu0 0.0
    %7444 = vmatmul.mubr.f32.gmra.mxu0 %v7202
    %v7445 = vpop.f32.mrf.mxu0
    %v7446 = vadd.f32 0.0, %v7445
    %v7447 = vpop.f32.mrf.mxu0
    %7448 = vdwg.mxu0
    %v7449 = vld [vmem:[%s20] sm:$0xff]
    %v7450 = vld [vmem:[%s20 + $0x8] sm:$0xff]
    %v7451 = vld [vmem:[%s20 + $0x10] sm:$0xff]
    %v7452 = vld [vmem:[%s20 + $0x18] sm:$0xff]
    %v7453 = vld [vmem:[%s20 + $0x20] sm:$0xff]
    %v7454 = vld [vmem:[%s20 + $0x28] sm:$0xff]
    %v7455 = vld [vmem:[%s20 + $0x30] sm:$0xff]
    %v7456 = vld [vmem:[%s20 + $0x38] sm:$0xff]
    %v7457 = vld [vmem:[%s20 + $0x40] sm:$0xff]
    %v7458 = vld [vmem:[%s20 + $0x48] sm:$0xff]
    %v7459 = vld [vmem:[%s20 + $0x50] sm:$0xff]
    %v7460 = vld [vmem:[%s20 + $0x58] sm:$0xff]
    %v7461 = vld [vmem:[%s20 + $0x60] sm:$0xff]
    %v7462 = vld [vmem:[%s20 + $0x68] sm:$0xff]
    %v7463 = vld [vmem:[%s20 + $0x70] sm:$0xff]
    %v7464 = vld [vmem:[%s20 + $0x78] sm:$0xff]
    %v7465 = vld [vmem:[%s20 + $0x80] sm:$0xff]
    %v7466 = vld [vmem:[%s20 + $0x88] sm:$0xff]
    %v7467 = vld [vmem:[%s20 + $0x90] sm:$0xff]
    %v7468 = vld [vmem:[%s20 + $0x98] sm:$0xff]
    %v7469 = vld [vmem:[%s20 + $0xa0] sm:$0xff]
    %v7470 = vld [vmem:[%s20 + $0xa8] sm:$0xff]
    %v7471 = vld [vmem:[%s20 + $0xb0] sm:$0xff]
    %v7472 = vld [vmem:[%s20 + $0xb8] sm:$0xff]
    %v7473 = vld [vmem:[%s20 + $0xc0] sm:$0xff]
    %v7474 = vld [vmem:[%s20 + $0xc8] sm:$0xff]
    %v7475 = vld [vmem:[%s20 + $0xd0] sm:$0xff]
    %v7476 = vld [vmem:[%s20 + $0xd8] sm:$0xff]
    %v7477 = vld [vmem:[%s20 + $0xe0] sm:$0xff]
    %v7478 = vld [vmem:[%s20 + $0xe8] sm:$0xff]
    %v7479 = vld [vmem:[%s20 + $0xf0] sm:$0xff]
    %v7480 = vld [vmem:[%s20 + $0xf8] sm:$0xff]
    %v7481 = vld [vmem:[%s20 + $0x100] sm:$0xff]
    %v7482 = vld [vmem:[%s20 + $0x108] sm:$0xff]
    %v7483 = vld [vmem:[%s20 + $0x110] sm:$0xff]
    %v7484 = vld [vmem:[%s20 + $0x118] sm:$0xff]
    %v7486 = vsel %vm106, %v7271, 0
    %v7489 = vsel %vm106, %v7276, 0
    %v7492 = vsel %vm106, %v7281, 0
    %v7495 = vsel %vm106, %v7286, 0
    %7497 = vmatprep.subr.mxu0 0.0
    %7498 = vmatpush1.msra.mxu0 0.0
    %7499 = vmatprep.subr.mxu0 0.0
    %7500 = vmatpush1.msra.mxu0 0.0
    %7501 = vmatprep.subr.mxu0 0.0
    %7502 = vmatpush1.msra.mxu0 0.0
    %7503 = vmatprep.subr.mxu0 0.0
    %7504 = vmatpush1.msra.mxu0 0.0
    %7505 = vmatprep.subr.mxu0 0.0
    %7506 = vmatpush1.msra.mxu0 0.0
    %7507 = vmatprep.subr.mxu0 0.0
    %7508 = vmatpush1.msra.mxu0 0.0
    %7509 = vmatprep.subr.mxu0 0.0
    %7510 = vmatpush1.msra.mxu0 0.0
    %7511 = vmatprep.subr.mxu0 0.0
    %7512 = vmatpush1.msra.mxu0 0.0
    %7513 = vmatprep.subr.mxu0 0.0
    %7514 = vmatpush1.msra.mxu0 0.0
    %7515 = vmatprep.subr.mxu0 0.0
    %7516 = vmatpush1.msra.mxu0 0.0
    %7517 = vmatprep.subr.mxu0 0.0
    %7518 = vmatpush1.msra.mxu0 0.0
    %7519 = vmatprep.subr.mxu0 0.0
    %7520 = vmatpush1.msra.mxu0 0.0
    %7521 = vmatprep.subr.mxu0 0.0
    %7522 = vmatpush1.msra.mxu0 %v7452
    %7523 = vmatprep.subr.mxu0 0.0
    %7524 = vmatpush1.msra.mxu0 %v7451
    %7525 = vmatprep.subr.mxu0 0.0
    %7526 = vmatpush1.msra.mxu0 %v7450
    %7527 = vmatprep.subr.mxu0 0.0
    %7528 = vmatpush1.msra.mxu0 %v7449
    %7529 = vmatprep.subr.mxu0 0.0
    %7530 = vmatpush2.msra.mxu0 0.0
    %7531 = vmatprep.subr.mxu0 0.0
    %7532 = vmatpush2.msra.mxu0 0.0
    %7533 = vmatprep.subr.mxu0 0.0
    %7534 = vmatpush2.msra.mxu0 0.0
    %7535 = vmatprep.subr.mxu0 0.0
    %7536 = vmatpush2.msra.mxu0 0.0
    %7537 = vmatprep.subr.mxu0 0.0
    %7538 = vmatpush2.msra.mxu0 0.0
    %7539 = vmatprep.subr.mxu0 0.0
    %7540 = vmatpush2.msra.mxu0 0.0
    %7541 = vmatprep.subr.mxu0 0.0
    %7542 = vmatpush2.msra.mxu0 0.0
    %7543 = vmatprep.subr.mxu0 0.0
    %7544 = vmatpush2.msra.mxu0 0.0
    %7545 = vmatprep.subr.mxu0 0.0
    %7546 = vmatpush2.msra.mxu0 0.0
    %7547 = vmatprep.subr.mxu0 0.0
    %7548 = vmatpush2.msra.mxu0 0.0
    %7549 = vmatprep.subr.mxu0 0.0
    %7550 = vmatpush2.msra.mxu0 0.0
    %7551 = vmatprep.subr.mxu0 0.0
    %7552 = vmatpush2.msra.mxu0 0.0
    %7553 = vmatprep.subr.mxu0 0.0
    %7554 = vmatpush2.msra.mxu0 0.0
    %7555 = vmatprep.subr.mxu0 0.0
    %7556 = vmatpush2.msra.mxu0 0.0
    %7557 = vmatprep.subr.mxu0 0.0
    %7558 = vmatpush2.msra.mxu0 0.0
    %7559 = vmatprep.subr.mxu0 0.0
    %7560 = vmatpush2.msra.mxu0 0.0
    %7561 = vmatprep.mubr.f32.mxu0 0.0
    %7562 = vmatmul.mubr.f32.gmra.mxu0 %v7486
    %v7563 = vpop.f32.mrf.mxu0
    %v7564 = vadd.f32 0.0, %v7563
    %v7565 = vpop.f32.mrf.mxu0
    %7566 = vmatprep.mubr.f32.mxu0 0.0
    %7567 = vmatmul.mubr.f32.gmra.mxu0 %v7489
    %v7568 = vpop.f32.mrf.mxu0
    %v7569 = vadd.f32 0.0, %v7568
    %v7570 = vpop.f32.mrf.mxu0
    %7571 = vmatprep.mubr.f32.mxu0 0.0
    %7572 = vmatmul.mubr.f32.gmra.mxu0 %v7492
    %v7573 = vpop.f32.mrf.mxu0
    %v7574 = vadd.f32 0.0, %v7573
    %v7575 = vpop.f32.mrf.mxu0
    %7576 = vmatprep.mubr.f32.mxu0 0.0
    %7577 = vmatmul.mubr.f32.gmra.mxu0 %v7495
    %v7578 = vpop.f32.mrf.mxu0
    %v7579 = vadd.f32 0.0, %v7578
    %v7580 = vpop.f32.mrf.mxu0
    %7581 = vdwg.mxu0
    %v7583 = vsel %vm106, %v7291, 0
    %v7586 = vsel %vm106, %v7296, 0
    %v7589 = vsel %vm106, %v7301, 0
    %v7592 = vsel %vm106, %v7306, 0
    %7594 = vmatprep.subr.mxu0 0.0
    %7595 = vmatpush1.msra.mxu0 0.0
    %7596 = vmatprep.subr.mxu0 0.0
    %7597 = vmatpush1.msra.mxu0 0.0
    %7598 = vmatprep.subr.mxu0 0.0
    %7599 = vmatpush1.msra.mxu0 0.0
    %7600 = vmatprep.subr.mxu0 0.0
    %7601 = vmatpush1.msra.mxu0 0.0
    %7602 = vmatprep.subr.mxu0 0.0
    %7603 = vmatpush1.msra.mxu0 0.0
    %7604 = vmatprep.subr.mxu0 0.0
    %7605 = vmatpush1.msra.mxu0 0.0
    %7606 = vmatprep.subr.mxu0 0.0
    %7607 = vmatpush1.msra.mxu0 0.0
    %7608 = vmatprep.subr.mxu0 0.0
    %7609 = vmatpush1.msra.mxu0 0.0
    %7610 = vmatprep.subr.mxu0 0.0
    %7611 = vmatpush1.msra.mxu0 0.0
    %7612 = vmatprep.subr.mxu0 0.0
    %7613 = vmatpush1.msra.mxu0 0.0
    %7614 = vmatprep.subr.mxu0 0.0
    %7615 = vmatpush1.msra.mxu0 0.0
    %7616 = vmatprep.subr.mxu0 0.0
    %7617 = vmatpush1.msra.mxu0 0.0
    %7618 = vmatprep.subr.mxu0 0.0
    %7619 = vmatpush1.msra.mxu0 %v7456
    %7620 = vmatprep.subr.mxu0 0.0
    %7621 = vmatpush1.msra.mxu0 %v7455
    %7622 = vmatprep.subr.mxu0 0.0
    %7623 = vmatpush1.msra.mxu0 %v7454
    %7624 = vmatprep.subr.mxu0 0.0
    %7625 = vmatpush1.msra.mxu0 %v7453
    %7626 = vmatprep.subr.mxu0 0.0
    %7627 = vmatpush2.msra.mxu0 0.0
    %7628 = vmatprep.subr.mxu0 0.0
    %7629 = vmatpush2.msra.mxu0 0.0
    %7630 = vmatprep.subr.mxu0 0.0
    %7631 = vmatpush2.msra.mxu0 0.0
    %7632 = vmatprep.subr.mxu0 0.0
    %7633 = vmatpush2.msra.mxu0 0.0
    %7634 = vmatprep.subr.mxu0 0.0
    %7635 = vmatpush2.msra.mxu0 0.0
    %7636 = vmatprep.subr.mxu0 0.0
    %7637 = vmatpush2.msra.mxu0 0.0
    %7638 = vmatprep.subr.mxu0 0.0
    %7639 = vmatpush2.msra.mxu0 0.0
    %7640 = vmatprep.subr.mxu0 0.0
    %7641 = vmatpush2.msra.mxu0 0.0
    %7642 = vmatprep.subr.mxu0 0.0
    %7643 = vmatpush2.msra.mxu0 0.0
    %7644 = vmatprep.subr.mxu0 0.0
    %7645 = vmatpush2.msra.mxu0 0.0
    %7646 = vmatprep.subr.mxu0 0.0
    %7647 = vmatpush2.msra.mxu0 0.0
    %7648 = vmatprep.subr.mxu0 0.0
    %7649 = vmatpush2.msra.mxu0 0.0
    %7650 = vmatprep.subr.mxu0 0.0
    %7651 = vmatpush2.msra.mxu0 0.0
    %7652 = vmatprep.subr.mxu0 0.0
    %7653 = vmatpush2.msra.mxu0 0.0
    %7654 = vmatprep.subr.mxu0 0.0
    %7655 = vmatpush2.msra.mxu0 0.0
    %7656 = vmatprep.subr.mxu0 0.0
    %7657 = vmatpush2.msra.mxu0 0.0
    %7658 = vmatprep.mubr.f32.mxu0 0.0
    %7659 = vmatmul.mubr.f32.gmra.mxu0 %v7583
    %v7660 = vpop.f32.mrf.mxu0
    %v7661 = vadd.f32 0.0, %v7660
    %v7662 = vpop.f32.mrf.mxu0
    %7663 = vmatprep.mubr.f32.mxu0 0.0
    %7664 = vmatmul.mubr.f32.gmra.mxu0 %v7586
    %v7665 = vpop.f32.mrf.mxu0
    %v7666 = vadd.f32 0.0, %v7665
    %v7667 = vpop.f32.mrf.mxu0
    %7668 = vmatprep.mubr.f32.mxu0 0.0
    %7669 = vmatmul.mubr.f32.gmra.mxu0 %v7589
    %v7670 = vpop.f32.mrf.mxu0
    %v7671 = vadd.f32 0.0, %v7670
    %v7672 = vpop.f32.mrf.mxu0
    %7673 = vmatprep.mubr.f32.mxu0 0.0
    %7674 = vmatmul.mubr.f32.gmra.mxu0 %v7592
    %v7675 = vpop.f32.mrf.mxu0
    %v7676 = vadd.f32 0.0, %v7675
    %v7677 = vpop.f32.mrf.mxu0
    %7678 = vdwg.mxu0
    %v7680 = vsel %vm106, %v7311, 0
    %v7683 = vsel %vm106, %v7316, 0
    %v7686 = vsel %vm106, %v7321, 0
    %v7689 = vsel %vm106, %v7326, 0
    %7691 = vmatprep.subr.mxu0 0.0
    %7692 = vmatpush1.msra.mxu0 0.0
    %7693 = vmatprep.subr.mxu0 0.0
    %7694 = vmatpush1.msra.mxu0 0.0
    %7695 = vmatprep.subr.mxu0 0.0
    %7696 = vmatpush1.msra.mxu0 0.0
    %7697 = vmatprep.subr.mxu0 0.0
    %7698 = vmatpush1.msra.mxu0 0.0
    %7699 = vmatprep.subr.mxu0 0.0
    %7700 = vmatpush1.msra.mxu0 0.0
    %7701 = vmatprep.subr.mxu0 0.0
    %7702 = vmatpush1.msra.mxu0 0.0
    %7703 = vmatprep.subr.mxu0 0.0
    %7704 = vmatpush1.msra.mxu0 0.0
    %7705 = vmatprep.subr.mxu0 0.0
    %7706 = vmatpush1.msra.mxu0 0.0
    %7707 = vmatprep.subr.mxu0 0.0
    %7708 = vmatpush1.msra.mxu0 0.0
    %7709 = vmatprep.subr.mxu0 0.0
    %7710 = vmatpush1.msra.mxu0 0.0
    %7711 = vmatprep.subr.mxu0 0.0
    %7712 = vmatpush1.msra.mxu0 0.0
    %7713 = vmatprep.subr.mxu0 0.0
    %7714 = vmatpush1.msra.mxu0 0.0
    %7715 = vmatprep.subr.mxu0 0.0
    %7716 = vmatpush1.msra.mxu0 %v7460
    %7717 = vmatprep.subr.mxu0 0.0
    %7718 = vmatpush1.msra.mxu0 %v7459
    %7719 = vmatprep.subr.mxu0 0.0
    %7720 = vmatpush1.msra.mxu0 %v7458
    %7721 = vmatprep.subr.mxu0 0.0
    %7722 = vmatpush1.msra.mxu0 %v7457
    %7723 = vmatprep.subr.mxu0 0.0
    %7724 = vmatpush2.msra.mxu0 0.0
    %7725 = vmatprep.subr.mxu0 0.0
    %7726 = vmatpush2.msra.mxu0 0.0
    %7727 = vmatprep.subr.mxu0 0.0
    %7728 = vmatpush2.msra.mxu0 0.0
    %7729 = vmatprep.subr.mxu0 0.0
    %7730 = vmatpush2.msra.mxu0 0.0
    %7731 = vmatprep.subr.mxu0 0.0
    %7732 = vmatpush2.msra.mxu0 0.0
    %7733 = vmatprep.subr.mxu0 0.0
    %7734 = vmatpush2.msra.mxu0 0.0
    %7735 = vmatprep.subr.mxu0 0.0
    %7736 = vmatpush2.msra.mxu0 0.0
    %7737 = vmatprep.subr.mxu0 0.0
    %7738 = vmatpush2.msra.mxu0 0.0
    %7739 = vmatprep.subr.mxu0 0.0
    %7740 = vmatpush2.msra.mxu0 0.0
    %7741 = vmatprep.subr.mxu0 0.0
    %7742 = vmatpush2.msra.mxu0 0.0
    %7743 = vmatprep.subr.mxu0 0.0
    %7744 = vmatpush2.msra.mxu0 0.0
    %7745 = vmatprep.subr.mxu0 0.0
    %7746 = vmatpush2.msra.mxu0 0.0
    %7747 = vmatprep.subr.mxu0 0.0
    %7748 = vmatpush2.msra.mxu0 0.0
    %7749 = vmatprep.subr.mxu0 0.0
    %7750 = vmatpush2.msra.mxu0 0.0
    %7751 = vmatprep.subr.mxu0 0.0
    %7752 = vmatpush2.msra.mxu0 0.0
    %7753 = vmatprep.subr.mxu0 0.0
    %7754 = vmatpush2.msra.mxu0 0.0
    %7755 = vmatprep.mubr.f32.mxu0 0.0
    %7756 = vmatmul.mubr.f32.gmra.mxu0 %v7680
    %v7757 = vpop.f32.mrf.mxu0
    %v7758 = vadd.f32 0.0, %v7757
    %v7759 = vpop.f32.mrf.mxu0
    %7760 = vmatprep.mubr.f32.mxu0 0.0
    %7761 = vmatmul.mubr.f32.gmra.mxu0 %v7683
    %v7762 = vpop.f32.mrf.mxu0
    %v7763 = vadd.f32 0.0, %v7762
    %v7764 = vpop.f32.mrf.mxu0
    %7765 = vmatprep.mubr.f32.mxu0 0.0
    %7766 = vmatmul.mubr.f32.gmra.mxu0 %v7686
    %v7767 = vpop.f32.mrf.mxu0
    %v7768 = vadd.f32 0.0, %v7767
    %v7769 = vpop.f32.mrf.mxu0
    %7770 = vmatprep.mubr.f32.mxu0 0.0
    %7771 = vmatmul.mubr.f32.gmra.mxu0 %v7689
    %v7772 = vpop.f32.mrf.mxu0
    %v7773 = vadd.f32 0.0, %v7772
    %v7774 = vpop.f32.mrf.mxu0
    %7775 = vdwg.mxu0
    %v7777 = vsel %vm106, %v7331, 0
    %v7780 = vsel %vm106, %v7336, 0
    %v7783 = vsel %vm106, %v7341, 0
    %v7786 = vsel %vm106, %v7346, 0
    %7788 = vmatprep.subr.mxu0 0.0
    %7789 = vmatpush1.msra.mxu0 0.0
    %7790 = vmatprep.subr.mxu0 0.0
    %7791 = vmatpush1.msra.mxu0 0.0
    %7792 = vmatprep.subr.mxu0 0.0
    %7793 = vmatpush1.msra.mxu0 0.0
    %7794 = vmatprep.subr.mxu0 0.0
    %7795 = vmatpush1.msra.mxu0 0.0
    %7796 = vmatprep.subr.mxu0 0.0
    %7797 = vmatpush1.msra.mxu0 0.0
    %7798 = vmatprep.subr.mxu0 0.0
    %7799 = vmatpush1.msra.mxu0 0.0
    %7800 = vmatprep.subr.mxu0 0.0
    %7801 = vmatpush1.msra.mxu0 0.0
    %7802 = vmatprep.subr.mxu0 0.0
    %7803 = vmatpush1.msra.mxu0 0.0
    %7804 = vmatprep.subr.mxu0 0.0
    %7805 = vmatpush1.msra.mxu0 0.0
    %7806 = vmatprep.subr.mxu0 0.0
    %7807 = vmatpush1.msra.mxu0 0.0
    %7808 = vmatprep.subr.mxu0 0.0
    %7809 = vmatpush1.msra.mxu0 0.0
    %7810 = vmatprep.subr.mxu0 0.0
    %7811 = vmatpush1.msra.mxu0 0.0
    %7812 = vmatprep.subr.mxu0 0.0
    %7813 = vmatpush1.msra.mxu0 %v7464
    %7814 = vmatprep.subr.mxu0 0.0
    %7815 = vmatpush1.msra.mxu0 %v7463
    %7816 = vmatprep.subr.mxu0 0.0
    %7817 = vmatpush1.msra.mxu0 %v7462
    %7818 = vmatprep.subr.mxu0 0.0
    %7819 = vmatpush1.msra.mxu0 %v7461
    %7820 = vmatprep.subr.mxu0 0.0
    %7821 = vmatpush2.msra.mxu0 0.0
    %7822 = vmatprep.subr.mxu0 0.0
    %7823 = vmatpush2.msra.mxu0 0.0
    %7824 = vmatprep.subr.mxu0 0.0
    %7825 = vmatpush2.msra.mxu0 0.0
    %7826 = vmatprep.subr.mxu0 0.0
    %7827 = vmatpush2.msra.mxu0 0.0
    %7828 = vmatprep.subr.mxu0 0.0
    %7829 = vmatpush2.msra.mxu0 0.0
    %7830 = vmatprep.subr.mxu0 0.0
    %7831 = vmatpush2.msra.mxu0 0.0
    %7832 = vmatprep.subr.mxu0 0.0
    %7833 = vmatpush2.msra.mxu0 0.0
    %7834 = vmatprep.subr.mxu0 0.0
    %7835 = vmatpush2.msra.mxu0 0.0
    %7836 = vmatprep.subr.mxu0 0.0
    %7837 = vmatpush2.msra.mxu0 0.0
    %7838 = vmatprep.subr.mxu0 0.0
    %7839 = vmatpush2.msra.mxu0 0.0
    %7840 = vmatprep.subr.mxu0 0.0
    %7841 = vmatpush2.msra.mxu0 0.0
    %7842 = vmatprep.subr.mxu0 0.0
    %7843 = vmatpush2.msra.mxu0 0.0
    %7844 = vmatprep.subr.mxu0 0.0
    %7845 = vmatpush2.msra.mxu0 0.0
    %7846 = vmatprep.subr.mxu0 0.0
    %7847 = vmatpush2.msra.mxu0 0.0
    %7848 = vmatprep.subr.mxu0 0.0
    %7849 = vmatpush2.msra.mxu0 0.0
    %7850 = vmatprep.subr.mxu0 0.0
    %7851 = vmatpush2.msra.mxu0 0.0
    %7852 = vmatprep.mubr.f32.mxu0 0.0
    %7853 = vmatmul.mubr.f32.gmra.mxu0 %v7777
    %v7854 = vpop.f32.mrf.mxu0
    %v7855 = vadd.f32 0.0, %v7854
    %v7856 = vpop.f32.mrf.mxu0
    %7857 = vmatprep.mubr.f32.mxu0 0.0
    %7858 = vmatmul.mubr.f32.gmra.mxu0 %v7780
    %v7859 = vpop.f32.mrf.mxu0
    %v7860 = vadd.f32 0.0, %v7859
    %v7861 = vpop.f32.mrf.mxu0
    %7862 = vmatprep.mubr.f32.mxu0 0.0
    %7863 = vmatmul.mubr.f32.gmra.mxu0 %v7783
    %v7864 = vpop.f32.mrf.mxu0
    %v7865 = vadd.f32 0.0, %v7864
    %v7866 = vpop.f32.mrf.mxu0
    %7867 = vmatprep.mubr.f32.mxu0 0.0
    %7868 = vmatmul.mubr.f32.gmra.mxu0 %v7786
    %v7869 = vpop.f32.mrf.mxu0
    %v7870 = vadd.f32 0.0, %v7869
    %v7871 = vpop.f32.mrf.mxu0
    %7872 = vdwg.mxu0
    %v7874 = vsel %vm106, %v7351, 0
    %v7877 = vsel %vm106, %v7356, 0
    %v7880 = vsel %vm106, %v7361, 0
    %v7883 = vsel %vm106, %v7366, 0
    %7885 = vmatprep.subr.mxu0 0.0
    %7886 = vmatpush1.msra.mxu0 0.0
    %7887 = vmatprep.subr.mxu0 0.0
    %7888 = vmatpush1.msra.mxu0 0.0
    %7889 = vmatprep.subr.mxu0 0.0
    %7890 = vmatpush1.msra.mxu0 0.0
    %7891 = vmatprep.subr.mxu0 0.0
    %7892 = vmatpush1.msra.mxu0 0.0
    %7893 = vmatprep.subr.mxu0 0.0
    %7894 = vmatpush1.msra.mxu0 0.0
    %7895 = vmatprep.subr.mxu0 0.0
    %7896 = vmatpush1.msra.mxu0 0.0
    %7897 = vmatprep.subr.mxu0 0.0
    %7898 = vmatpush1.msra.mxu0 0.0
    %7899 = vmatprep.subr.mxu0 0.0
    %7900 = vmatpush1.msra.mxu0 0.0
    %7901 = vmatprep.subr.mxu0 0.0
    %7902 = vmatpush1.msra.mxu0 0.0
    %7903 = vmatprep.subr.mxu0 0.0
    %7904 = vmatpush1.msra.mxu0 0.0
    %7905 = vmatprep.subr.mxu0 0.0
    %7906 = vmatpush1.msra.mxu0 0.0
    %7907 = vmatprep.subr.mxu0 0.0
    %7908 = vmatpush1.msra.mxu0 0.0
    %7909 = vmatprep.subr.mxu0 0.0
    %7910 = vmatpush1.msra.mxu0 %v7468
    %7911 = vmatprep.subr.mxu0 0.0
    %7912 = vmatpush1.msra.mxu0 %v7467
    %7913 = vmatprep.subr.mxu0 0.0
    %7914 = vmatpush1.msra.mxu0 %v7466
    %7915 = vmatprep.subr.mxu0 0.0
    %7916 = vmatpush1.msra.mxu0 %v7465
    %7917 = vmatprep.subr.mxu0 0.0
    %7918 = vmatpush2.msra.mxu0 0.0
    %7919 = vmatprep.subr.mxu0 0.0
    %7920 = vmatpush2.msra.mxu0 0.0
    %7921 = vmatprep.subr.mxu0 0.0
    %7922 = vmatpush2.msra.mxu0 0.0
    %7923 = vmatprep.subr.mxu0 0.0
    %7924 = vmatpush2.msra.mxu0 0.0
    %7925 = vmatprep.subr.mxu0 0.0
    %7926 = vmatpush2.msra.mxu0 0.0
    %7927 = vmatprep.subr.mxu0 0.0
    %7928 = vmatpush2.msra.mxu0 0.0
    %7929 = vmatprep.subr.mxu0 0.0
    %7930 = vmatpush2.msra.mxu0 0.0
    %7931 = vmatprep.subr.mxu0 0.0
    %7932 = vmatpush2.msra.mxu0 0.0
    %7933 = vmatprep.subr.mxu0 0.0
    %7934 = vmatpush2.msra.mxu0 0.0
    %7935 = vmatprep.subr.mxu0 0.0
    %7936 = vmatpush2.msra.mxu0 0.0
    %7937 = vmatprep.subr.mxu0 0.0
    %7938 = vmatpush2.msra.mxu0 0.0
    %7939 = vmatprep.subr.mxu0 0.0
    %7940 = vmatpush2.msra.mxu0 0.0
    %7941 = vmatprep.subr.mxu0 0.0
    %7942 = vmatpush2.msra.mxu0 0.0
    %7943 = vmatprep.subr.mxu0 0.0
    %7944 = vmatpush2.msra.mxu0 0.0
    %7945 = vmatprep.subr.mxu0 0.0
    %7946 = vmatpush2.msra.mxu0 0.0
    %7947 = vmatprep.subr.mxu0 0.0
    %7948 = vmatpush2.msra.mxu0 0.0
    %7949 = vmatprep.mubr.f32.mxu0 0.0
    %7950 = vmatmul.mubr.f32.gmra.mxu0 %v7874
    %v7951 = vpop.f32.mrf.mxu0
    %v7952 = vadd.f32 0.0, %v7951
    %v7953 = vpop.f32.mrf.mxu0
    %7954 = vmatprep.mubr.f32.mxu0 0.0
    %7955 = vmatmul.mubr.f32.gmra.mxu0 %v7877
    %v7956 = vpop.f32.mrf.mxu0
    %v7957 = vadd.f32 0.0, %v7956
    %v7958 = vpop.f32.mrf.mxu0
    %7959 = vmatprep.mubr.f32.mxu0 0.0
    %7960 = vmatmul.mubr.f32.gmra.mxu0 %v7880
    %v7961 = vpop.f32.mrf.mxu0
    %v7962 = vadd.f32 0.0, %v7961
    %v7963 = vpop.f32.mrf.mxu0
    %7964 = vmatprep.mubr.f32.mxu0 0.0
    %7965 = vmatmul.mubr.f32.gmra.mxu0 %v7883
    %v7966 = vpop.f32.mrf.mxu0
    %v7967 = vadd.f32 0.0, %v7966
    %v7968 = vpop.f32.mrf.mxu0
    %7969 = vdwg.mxu0
    %v7971 = vsel %vm106, %v7371, 0
    %v7974 = vsel %vm106, %v7376, 0
    %v7977 = vsel %vm106, %v7381, 0
    %v7980 = vsel %vm106, %v7386, 0
    %7982 = vmatprep.subr.mxu0 0.0
    %7983 = vmatpush1.msra.mxu0 0.0
    %7984 = vmatprep.subr.mxu0 0.0
    %7985 = vmatpush1.msra.mxu0 0.0
    %7986 = vmatprep.subr.mxu0 0.0
    %7987 = vmatpush1.msra.mxu0 0.0
    %7988 = vmatprep.subr.mxu0 0.0
    %7989 = vmatpush1.msra.mxu0 0.0
    %7990 = vmatprep.subr.mxu0 0.0
    %7991 = vmatpush1.msra.mxu0 0.0
    %7992 = vmatprep.subr.mxu0 0.0
    %7993 = vmatpush1.msra.mxu0 0.0
    %7994 = vmatprep.subr.mxu0 0.0
    %7995 = vmatpush1.msra.mxu0 0.0
    %7996 = vmatprep.subr.mxu0 0.0
    %7997 = vmatpush1.msra.mxu0 0.0
    %7998 = vmatprep.subr.mxu0 0.0
    %7999 = vmatpush1.msra.mxu0 0.0
    %8000 = vmatprep.subr.mxu0 0.0
    %8001 = vmatpush1.msra.mxu0 0.0
    %8002 = vmatprep.subr.mxu0 0.0
    %8003 = vmatpush1.msra.mxu0 0.0
    %8004 = vmatprep.subr.mxu0 0.0
    %8005 = vmatpush1.msra.mxu0 0.0
    %8006 = vmatprep.subr.mxu0 0.0
    %8007 = vmatpush1.msra.mxu0 %v7472
    %8008 = vmatprep.subr.mxu0 0.0
    %8009 = vmatpush1.msra.mxu0 %v7471
    %8010 = vmatprep.subr.mxu0 0.0
    %8011 = vmatpush1.msra.mxu0 %v7470
    %8012 = vmatprep.subr.mxu0 0.0
    %8013 = vmatpush1.msra.mxu0 %v7469
    %8014 = vmatprep.subr.mxu0 0.0
    %8015 = vmatpush2.msra.mxu0 0.0
    %8016 = vmatprep.subr.mxu0 0.0
    %8017 = vmatpush2.msra.mxu0 0.0
    %8018 = vmatprep.subr.mxu0 0.0
    %8019 = vmatpush2.msra.mxu0 0.0
    %8020 = vmatprep.subr.mxu0 0.0
    %8021 = vmatpush2.msra.mxu0 0.0
    %8022 = vmatprep.subr.mxu0 0.0
    %8023 = vmatpush2.msra.mxu0 0.0
    %8024 = vmatprep.subr.mxu0 0.0
    %8025 = vmatpush2.msra.mxu0 0.0
    %8026 = vmatprep.subr.mxu0 0.0
    %8027 = vmatpush2.msra.mxu0 0.0
    %8028 = vmatprep.subr.mxu0 0.0
    %8029 = vmatpush2.msra.mxu0 0.0
    %8030 = vmatprep.subr.mxu0 0.0
    %8031 = vmatpush2.msra.mxu0 0.0
    %8032 = vmatprep.subr.mxu0 0.0
    %8033 = vmatpush2.msra.mxu0 0.0
    %8034 = vmatprep.subr.mxu0 0.0
    %8035 = vmatpush2.msra.mxu0 0.0
    %8036 = vmatprep.subr.mxu0 0.0
    %8037 = vmatpush2.msra.mxu0 0.0
    %8038 = vmatprep.subr.mxu0 0.0
    %8039 = vmatpush2.msra.mxu0 0.0
    %8040 = vmatprep.subr.mxu0 0.0
    %8041 = vmatpush2.msra.mxu0 0.0
    %8042 = vmatprep.subr.mxu0 0.0
    %8043 = vmatpush2.msra.mxu0 0.0
    %8044 = vmatprep.subr.mxu0 0.0
    %8045 = vmatpush2.msra.mxu0 0.0
    %8046 = vmatprep.mubr.f32.mxu0 0.0
    %8047 = vmatmul.mubr.f32.gmra.mxu0 %v7971
    %v8048 = vpop.f32.mrf.mxu0
    %v8049 = vadd.f32 0.0, %v8048
    %v8050 = vpop.f32.mrf.mxu0
    %8051 = vmatprep.mubr.f32.mxu0 0.0
    %8052 = vmatmul.mubr.f32.gmra.mxu0 %v7974
    %v8053 = vpop.f32.mrf.mxu0
    %v8054 = vadd.f32 0.0, %v8053
    %v8055 = vpop.f32.mrf.mxu0
    %8056 = vmatprep.mubr.f32.mxu0 0.0
    %8057 = vmatmul.mubr.f32.gmra.mxu0 %v7977
    %v8058 = vpop.f32.mrf.mxu0
    %v8059 = vadd.f32 0.0, %v8058
    %v8060 = vpop.f32.mrf.mxu0
    %8061 = vmatprep.mubr.f32.mxu0 0.0
    %8062 = vmatmul.mubr.f32.gmra.mxu0 %v7980
    %v8063 = vpop.f32.mrf.mxu0
    %v8064 = vadd.f32 0.0, %v8063
    %v8065 = vpop.f32.mrf.mxu0
    %8066 = vdwg.mxu0
    %v8068 = vsel %vm106, %v7391, 0
    %v8071 = vsel %vm106, %v7396, 0
    %v8074 = vsel %vm106, %v7401, 0
    %v8077 = vsel %vm106, %v7406, 0
    %8079 = vmatprep.subr.mxu0 0.0
    %8080 = vmatpush1.msra.mxu0 0.0
    %8081 = vmatprep.subr.mxu0 0.0
    %8082 = vmatpush1.msra.mxu0 0.0
    %8083 = vmatprep.subr.mxu0 0.0
    %8084 = vmatpush1.msra.mxu0 0.0
    %8085 = vmatprep.subr.mxu0 0.0
    %8086 = vmatpush1.msra.mxu0 0.0
    %8087 = vmatprep.subr.mxu0 0.0
    %8088 = vmatpush1.msra.mxu0 0.0
    %8089 = vmatprep.subr.mxu0 0.0
    %8090 = vmatpush1.msra.mxu0 0.0
    %8091 = vmatprep.subr.mxu0 0.0
    %8092 = vmatpush1.msra.mxu0 0.0
    %8093 = vmatprep.subr.mxu0 0.0
    %8094 = vmatpush1.msra.mxu0 0.0
    %8095 = vmatprep.subr.mxu0 0.0
    %8096 = vmatpush1.msra.mxu0 0.0
    %8097 = vmatprep.subr.mxu0 0.0
    %8098 = vmatpush1.msra.mxu0 0.0
    %8099 = vmatprep.subr.mxu0 0.0
    %8100 = vmatpush1.msra.mxu0 0.0
    %8101 = vmatprep.subr.mxu0 0.0
    %8102 = vmatpush1.msra.mxu0 0.0
    %8103 = vmatprep.subr.mxu0 0.0
    %8104 = vmatpush1.msra.mxu0 %v7476
    %8105 = vmatprep.subr.mxu0 0.0
    %8106 = vmatpush1.msra.mxu0 %v7475
    %8107 = vmatprep.subr.mxu0 0.0
    %8108 = vmatpush1.msra.mxu0 %v7474
    %8109 = vmatprep.subr.mxu0 0.0
    %8110 = vmatpush1.msra.mxu0 %v7473
    %8111 = vmatprep.subr.mxu0 0.0
    %8112 = vmatpush2.msra.mxu0 0.0
    %8113 = vmatprep.subr.mxu0 0.0
    %8114 = vmatpush2.msra.mxu0 0.0
    %8115 = vmatprep.subr.mxu0 0.0
    %8116 = vmatpush2.msra.mxu0 0.0
    %8117 = vmatprep.subr.mxu0 0.0
    %8118 = vmatpush2.msra.mxu0 0.0
    %8119 = vmatprep.subr.mxu0 0.0
    %8120 = vmatpush2.msra.mxu0 0.0
    %8121 = vmatprep.subr.mxu0 0.0
    %8122 = vmatpush2.msra.mxu0 0.0
    %8123 = vmatprep.subr.mxu0 0.0
    %8124 = vmatpush2.msra.mxu0 0.0
    %8125 = vmatprep.subr.mxu0 0.0
    %8126 = vmatpush2.msra.mxu0 0.0
    %8127 = vmatprep.subr.mxu0 0.0
    %8128 = vmatpush2.msra.mxu0 0.0
    %8129 = vmatprep.subr.mxu0 0.0
    %8130 = vmatpush2.msra.mxu0 0.0
    %8131 = vmatprep.subr.mxu0 0.0
    %8132 = vmatpush2.msra.mxu0 0.0
    %8133 = vmatprep.subr.mxu0 0.0
    %8134 = vmatpush2.msra.mxu0 0.0
    %8135 = vmatprep.subr.mxu0 0.0
    %8136 = vmatpush2.msra.mxu0 0.0
    %8137 = vmatprep.subr.mxu0 0.0
    %8138 = vmatpush2.msra.mxu0 0.0
    %8139 = vmatprep.subr.mxu0 0.0
    %8140 = vmatpush2.msra.mxu0 0.0
    %8141 = vmatprep.subr.mxu0 0.0
    %8142 = vmatpush2.msra.mxu0 0.0
    %8143 = vmatprep.mubr.f32.mxu0 0.0
    %8144 = vmatmul.mubr.f32.gmra.mxu0 %v8068
    %v8145 = vpop.f32.mrf.mxu0
    %v8146 = vadd.f32 0.0, %v8145
    %v8147 = vpop.f32.mrf.mxu0
    %8148 = vmatprep.mubr.f32.mxu0 0.0
    %8149 = vmatmul.mubr.f32.gmra.mxu0 %v8071
    %v8150 = vpop.f32.mrf.mxu0
    %v8151 = vadd.f32 0.0, %v8150
    %v8152 = vpop.f32.mrf.mxu0
    %8153 = vmatprep.mubr.f32.mxu0 0.0
    %8154 = vmatmul.mubr.f32.gmra.mxu0 %v8074
    %v8155 = vpop.f32.mrf.mxu0
    %v8156 = vadd.f32 0.0, %v8155
    %v8157 = vpop.f32.mrf.mxu0
    %8158 = vmatprep.mubr.f32.mxu0 0.0
    %8159 = vmatmul.mubr.f32.gmra.mxu0 %v8077
    %v8160 = vpop.f32.mrf.mxu0
    %v8161 = vadd.f32 0.0, %v8160
    %v8162 = vpop.f32.mrf.mxu0
    %8163 = vdwg.mxu0
    %v8165 = vsel %vm106, %v7411, 0
    %v8168 = vsel %vm106, %v7416, 0
    %v8171 = vsel %vm106, %v7421, 0
    %v8174 = vsel %vm106, %v7426, 0
    %8176 = vmatprep.subr.mxu0 0.0
    %8177 = vmatpush1.msra.mxu0 0.0
    %8178 = vmatprep.subr.mxu0 0.0
    %8179 = vmatpush1.msra.mxu0 0.0
    %8180 = vmatprep.subr.mxu0 0.0
    %8181 = vmatpush1.msra.mxu0 0.0
    %8182 = vmatprep.subr.mxu0 0.0
    %8183 = vmatpush1.msra.mxu0 0.0
    %8184 = vmatprep.subr.mxu0 0.0
    %8185 = vmatpush1.msra.mxu0 0.0
    %8186 = vmatprep.subr.mxu0 0.0
    %8187 = vmatpush1.msra.mxu0 0.0
    %8188 = vmatprep.subr.mxu0 0.0
    %8189 = vmatpush1.msra.mxu0 0.0
    %8190 = vmatprep.subr.mxu0 0.0
    %8191 = vmatpush1.msra.mxu0 0.0
    %8192 = vmatprep.subr.mxu0 0.0
    %8193 = vmatpush1.msra.mxu0 0.0
    %8194 = vmatprep.subr.mxu0 0.0
    %8195 = vmatpush1.msra.mxu0 0.0
    %8196 = vmatprep.subr.mxu0 0.0
    %8197 = vmatpush1.msra.mxu0 0.0
    %8198 = vmatprep.subr.mxu0 0.0
    %8199 = vmatpush1.msra.mxu0 0.0
    %8200 = vmatprep.subr.mxu0 0.0
    %8201 = vmatpush1.msra.mxu0 %v7480
    %8202 = vmatprep.subr.mxu0 0.0
    %8203 = vmatpush1.msra.mxu0 %v7479
    %8204 = vmatprep.subr.mxu0 0.0
    %8205 = vmatpush1.msra.mxu0 %v7478
    %8206 = vmatprep.subr.mxu0 0.0
    %8207 = vmatpush1.msra.mxu0 %v7477
    %8208 = vmatprep.subr.mxu0 0.0
    %8209 = vmatpush2.msra.mxu0 0.0
    %8210 = vmatprep.subr.mxu0 0.0
    %8211 = vmatpush2.msra.mxu0 0.0
    %8212 = vmatprep.subr.mxu0 0.0
    %8213 = vmatpush2.msra.mxu0 0.0
    %8214 = vmatprep.subr.mxu0 0.0
    %8215 = vmatpush2.msra.mxu0 0.0
    %8216 = vmatprep.subr.mxu0 0.0
    %8217 = vmatpush2.msra.mxu0 0.0
    %8218 = vmatprep.subr.mxu0 0.0
    %8219 = vmatpush2.msra.mxu0 0.0
    %8220 = vmatprep.subr.mxu0 0.0
    %8221 = vmatpush2.msra.mxu0 0.0
    %8222 = vmatprep.subr.mxu0 0.0
    %8223 = vmatpush2.msra.mxu0 0.0
    %8224 = vmatprep.subr.mxu0 0.0
    %8225 = vmatpush2.msra.mxu0 0.0
    %8226 = vmatprep.subr.mxu0 0.0
    %8227 = vmatpush2.msra.mxu0 0.0
    %8228 = vmatprep.subr.mxu0 0.0
    %8229 = vmatpush2.msra.mxu0 0.0
    %8230 = vmatprep.subr.mxu0 0.0
    %8231 = vmatpush2.msra.mxu0 0.0
    %8232 = vmatprep.subr.mxu0 0.0
    %8233 = vmatpush2.msra.mxu0 0.0
    %8234 = vmatprep.subr.mxu0 0.0
    %8235 = vmatpush2.msra.mxu0 0.0
    %8236 = vmatprep.subr.mxu0 0.0
    %8237 = vmatpush2.msra.mxu0 0.0
    %8238 = vmatprep.subr.mxu0 0.0
    %8239 = vmatpush2.msra.mxu0 0.0
    %8240 = vmatprep.mubr.f32.mxu0 0.0
    %8241 = vmatmul.mubr.f32.gmra.mxu0 %v8165
    %v8242 = vpop.f32.mrf.mxu0
    %v8243 = vadd.f32 0.0, %v8242
    %v8244 = vpop.f32.mrf.mxu0
    %8245 = vmatprep.mubr.f32.mxu0 0.0
    %8246 = vmatmul.mubr.f32.gmra.mxu0 %v8168
    %v8247 = vpop.f32.mrf.mxu0
    %v8248 = vadd.f32 0.0, %v8247
    %v8249 = vpop.f32.mrf.mxu0
    %8250 = vmatprep.mubr.f32.mxu0 0.0
    %8251 = vmatmul.mubr.f32.gmra.mxu0 %v8171
    %v8252 = vpop.f32.mrf.mxu0
    %v8253 = vadd.f32 0.0, %v8252
    %v8254 = vpop.f32.mrf.mxu0
    %8255 = vmatprep.mubr.f32.mxu0 0.0
    %8256 = vmatmul.mubr.f32.gmra.mxu0 %v8174
    %v8257 = vpop.f32.mrf.mxu0
    %v8258 = vadd.f32 0.0, %v8257
    %v8259 = vpop.f32.mrf.mxu0
    %8260 = vdwg.mxu0
    %v8262 = vsel %vm106, %v7431, 0
    %v8265 = vsel %vm106, %v7436, 0
    %v8268 = vsel %vm106, %v7441, 0
    %v8271 = vsel %vm106, %v7446, 0
    %8273 = vmatprep.subr.mxu0 0.0
    %8274 = vmatpush1.msra.mxu0 0.0
    %8275 = vmatprep.subr.mxu0 0.0
    %8276 = vmatpush1.msra.mxu0 0.0
    %8277 = vmatprep.subr.mxu0 0.0
    %8278 = vmatpush1.msra.mxu0 0.0
    %8279 = vmatprep.subr.mxu0 0.0
    %8280 = vmatpush1.msra.mxu0 0.0
    %8281 = vmatprep.subr.mxu0 0.0
    %8282 = vmatpush1.msra.mxu0 0.0
    %8283 = vmatprep.subr.mxu0 0.0
    %8284 = vmatpush1.msra.mxu0 0.0
    %8285 = vmatprep.subr.mxu0 0.0
    %8286 = vmatpush1.msra.mxu0 0.0
    %8287 = vmatprep.subr.mxu0 0.0
    %8288 = vmatpush1.msra.mxu0 0.0
    %8289 = vmatprep.subr.mxu0 0.0
    %8290 = vmatpush1.msra.mxu0 0.0
    %8291 = vmatprep.subr.mxu0 0.0
    %8292 = vmatpush1.msra.mxu0 0.0
    %8293 = vmatprep.subr.mxu0 0.0
    %8294 = vmatpush1.msra.mxu0 0.0
    %8295 = vmatprep.subr.mxu0 0.0
    %8296 = vmatpush1.msra.mxu0 0.0
    %8297 = vmatprep.subr.mxu0 0.0
    %8298 = vmatpush1.msra.mxu0 %v7484
    %8299 = vmatprep.subr.mxu0 0.0
    %8300 = vmatpush1.msra.mxu0 %v7483
    %8301 = vmatprep.subr.mxu0 0.0
    %8302 = vmatpush1.msra.mxu0 %v7482
    %8303 = vmatprep.subr.mxu0 0.0
    %8304 = vmatpush1.msra.mxu0 %v7481
    %8305 = vmatprep.subr.mxu0 0.0
    %8306 = vmatpush2.msra.mxu0 0.0
    %8307 = vmatprep.subr.mxu0 0.0
    %8308 = vmatpush2.msra.mxu0 0.0
    %8309 = vmatprep.subr.mxu0 0.0
    %8310 = vmatpush2.msra.mxu0 0.0
    %8311 = vmatprep.subr.mxu0 0.0
    %8312 = vmatpush2.msra.mxu0 0.0
    %8313 = vmatprep.subr.mxu0 0.0
    %8314 = vmatpush2.msra.mxu0 0.0
    %8315 = vmatprep.subr.mxu0 0.0
    %8316 = vmatpush2.msra.mxu0 0.0
    %8317 = vmatprep.subr.mxu0 0.0
    %8318 = vmatpush2.msra.mxu0 0.0
    %8319 = vmatprep.subr.mxu0 0.0
    %8320 = vmatpush2.msra.mxu0 0.0
    %8321 = vmatprep.subr.mxu0 0.0
    %8322 = vmatpush2.msra.mxu0 0.0
    %8323 = vmatprep.subr.mxu0 0.0
    %8324 = vmatpush2.msra.mxu0 0.0
    %8325 = vmatprep.subr.mxu0 0.0
    %8326 = vmatpush2.msra.mxu0 0.0
    %8327 = vmatprep.subr.mxu0 0.0
    %8328 = vmatpush2.msra.mxu0 0.0
    %8329 = vmatprep.subr.mxu0 0.0
    %8330 = vmatpush2.msra.mxu0 0.0
    %8331 = vmatprep.subr.mxu0 0.0
    %8332 = vmatpush2.msra.mxu0 0.0
    %8333 = vmatprep.subr.mxu0 0.0
    %8334 = vmatpush2.msra.mxu0 0.0
    %8335 = vmatprep.subr.mxu0 0.0
    %8336 = vmatpush2.msra.mxu0 0.0
    %8337 = vmatprep.mubr.f32.mxu0 0.0
    %8338 = vmatmul.mubr.f32.gmra.mxu0 %v8262
    %v8339 = vpop.f32.mrf.mxu0
    %v8340 = vadd.f32 0.0, %v8339
    %v8341 = vpop.f32.mrf.mxu0
    %8342 = vmatprep.mubr.f32.mxu0 0.0
    %8343 = vmatmul.mubr.f32.gmra.mxu0 %v8265
    %v8344 = vpop.f32.mrf.mxu0
    %v8345 = vadd.f32 0.0, %v8344
    %v8346 = vpop.f32.mrf.mxu0
    %8347 = vmatprep.mubr.f32.mxu0 0.0
    %8348 = vmatmul.mubr.f32.gmra.mxu0 %v8268
    %v8349 = vpop.f32.mrf.mxu0
    %v8350 = vadd.f32 0.0, %v8349
    %v8351 = vpop.f32.mrf.mxu0
    %8352 = vmatprep.mubr.f32.mxu0 0.0
    %8353 = vmatmul.mubr.f32.gmra.mxu0 %v8271
    %v8354 = vpop.f32.mrf.mxu0
    %v8355 = vadd.f32 0.0, %v8354
    %v8356 = vpop.f32.mrf.mxu0
    %8357 = vdwg.mxu0
    %v8358 = vsel %vm106, %v7564, 0.0
    %v8359 = vsel %vm106, %v7661, 0.0
    %v8360 = vadd.f32 %v8358, %v8359
    %v8361 = vsel %vm106, %v7758, 0.0
    %v8362 = vadd.f32 %v8360, %v8361
    %v8363 = vsel %vm106, %v7855, 0.0
    %v8364 = vadd.f32 %v8362, %v8363
    %v8365 = vsel %vm106, %v7952, 0.0
    %v8366 = vadd.f32 %v8364, %v8365
    %v8367 = vsel %vm106, %v8049, 0.0
    %v8368 = vadd.f32 %v8366, %v8367
    %v8369 = vsel %vm106, %v8146, 0.0
    %v8370 = vadd.f32 %v8368, %v8369
    %v8371 = vsel %vm106, %v8243, 0.0
    %v8372 = vadd.f32 %v8370, %v8371
    %v8373 = vsel %vm106, %v8340, 0.0
    %v8374 = vadd.f32 %v8372, %v8373
    %v8375 = vsel %vm106, %v7569, 0.0
    %v8376 = vsel %vm106, %v7666, 0.0
    %v8377 = vadd.f32 %v8375, %v8376
    %v8378 = vsel %vm106, %v7763, 0.0
    %v8379 = vadd.f32 %v8377, %v8378
    %v8380 = vsel %vm106, %v7860, 0.0
    %v8381 = vadd.f32 %v8379, %v8380
    %v8382 = vsel %vm106, %v7957, 0.0
    %v8383 = vadd.f32 %v8381, %v8382
    %v8384 = vsel %vm106, %v8054, 0.0
    %v8385 = vadd.f32 %v8383, %v8384
    %v8386 = vsel %vm106, %v8151, 0.0
    %v8387 = vadd.f32 %v8385, %v8386
    %v8388 = vsel %vm106, %v8248, 0.0
    %v8389 = vadd.f32 %v8387, %v8388
    %v8390 = vsel %vm106, %v8345, 0.0
    %v8391 = vadd.f32 %v8389, %v8390
    %v8392 = vsel %vm106, %v7574, 0.0
    %v8393 = vsel %vm106, %v7671, 0.0
    %v8394 = vadd.f32 %v8392, %v8393
    %v8395 = vsel %vm106, %v7768, 0.0
    %v8396 = vadd.f32 %v8394, %v8395
    %v8397 = vsel %vm106, %v7865, 0.0
    %v8398 = vadd.f32 %v8396, %v8397
    %v8399 = vsel %vm106, %v7962, 0.0
    %v8400 = vadd.f32 %v8398, %v8399
    %v8401 = vsel %vm106, %v8059, 0.0
    %v8402 = vadd.f32 %v8400, %v8401
    %v8403 = vsel %vm106, %v8156, 0.0
    %v8404 = vadd.f32 %v8402, %v8403
    %v8405 = vsel %vm106, %v8253, 0.0
    %v8406 = vadd.f32 %v8404, %v8405
    %v8407 = vsel %vm106, %v8350, 0.0
    %v8408 = vadd.f32 %v8406, %v8407
    %v8409 = vsel %vm106, %v7579, 0.0
    %v8410 = vsel %vm106, %v7676, 0.0
    %v8411 = vadd.f32 %v8409, %v8410
    %v8412 = vsel %vm106, %v7773, 0.0
    %v8413 = vadd.f32 %v8411, %v8412
    %v8414 = vsel %vm106, %v7870, 0.0
    %v8415 = vadd.f32 %v8413, %v8414
    %v8416 = vsel %vm106, %v7967, 0.0
    %v8417 = vadd.f32 %v8415, %v8416
    %v8418 = vsel %vm106, %v8064, 0.0
    %v8419 = vadd.f32 %v8417, %v8418
    %v8420 = vsel %vm106, %v8161, 0.0
    %v8421 = vadd.f32 %v8419, %v8420
    %v8422 = vsel %vm106, %v8258, 0.0
    %v8423 = vadd.f32 %v8421, %v8422
    %v8424 = vsel %vm106, %v8355, 0.0
    %v8425 = vadd.f32 %v8423, %v8424
    %v8426 = vld [vmem:[%s21] sm:$0xff]
    %v8427 = vld [vmem:[%s21 + $0x8] sm:$0xff]
    %v8428 = vld [vmem:[%s21 + $0x10] sm:$0xff]
    %v8429 = vld [vmem:[%s21 + $0x18] sm:$0xff]
    %v8430 = vadd.f32 %v8374, %v8426
    %v8431 = vadd.f32 %v8391, %v8427
    %v8432 = vadd.f32 %v8408, %v8428
    %v8433 = vadd.f32 %v8425, %v8429
    %8434 = vst.msk [vmem:[%s24] sm:$0xff] %vm106, %v8430
    %8435 = vst.msk [vmem:[%s24 + $0x8] sm:$0xff] %vm106, %v8431
    %8436 = vst.msk [vmem:[%s24 + $0x10] sm:$0xff] %vm106, %v8432
    %8437 = vst.msk [vmem:[%s24 + $0x18] sm:$0xff] %vm106, %v8433
    %v8438 = vld [vmem:[%s22] sm:$0xff]
    %v8439 = vld [vmem:[%s22 + $0x8] sm:$0xff]
    %v8440 = vld [vmem:[%s22 + $0x10] sm:$0xff]
    %v8441 = vld [vmem:[%s22 + $0x18] sm:$0xff]
    %v8442 = vld [vmem:[%s23] sm:$0x1]
    %v8444 = vlaneseq
    %v8445 = vshrl.u32 %v8444, 7
    %v8446 = vsub.s32 0, %v8445
    %v8447 = vrot.slane %v8442, %v8446
    %8449 = vmatprep.subr.mxu0 0.0
    %8450 = vmatpush1.msra.mxu0 0.0
    %8451 = vmatprep.subr.mxu0 0.0
    %8452 = vmatpush1.msra.mxu0 0.0
    %8453 = vmatprep.subr.mxu0 0.0
    %8454 = vmatpush1.msra.mxu0 0.0
    %8455 = vmatprep.subr.mxu0 0.0
    %8456 = vmatpush1.msra.mxu0 0.0
    %8457 = vmatprep.subr.mxu0 0.0
    %8458 = vmatpush1.msra.mxu0 0.0
    %8459 = vmatprep.subr.mxu0 0.0
    %8460 = vmatpush1.msra.mxu0 0.0
    %8461 = vmatprep.subr.mxu0 0.0
    %8462 = vmatpush1.msra.mxu0 0.0
    %8463 = vmatprep.subr.mxu0 0.0
    %8464 = vmatpush1.msra.mxu0 0.0
    %8465 = vmatprep.subr.mxu0 0.0
    %8466 = vmatpush1.msra.mxu0 0.0
    %8467 = vmatprep.subr.mxu0 0.0
    %8468 = vmatpush1.msra.mxu0 0.0
    %8469 = vmatprep.subr.mxu0 0.0
    %8470 = vmatpush1.msra.mxu0 0.0
    %8471 = vmatprep.subr.mxu0 0.0
    %8472 = vmatpush1.msra.mxu0 0.0
    %8473 = vmatprep.subr.mxu0 0.0
    %8474 = vmatpush1.msra.mxu0 %v8441
    %8475 = vmatprep.subr.mxu0 0.0
    %8476 = vmatpush1.msra.mxu0 %v8440
    %8477 = vmatprep.subr.mxu0 0.0
    %8478 = vmatpush1.msra.mxu0 %v8439
    %8479 = vmatprep.subr.mxu0 0.0
    %8480 = vmatpush1.msra.mxu0 %v8438
    %8481 = vmatprep.subr.mxu0 0.0
    %8482 = vmatpush2.msra.mxu0 0.0
    %8483 = vmatprep.subr.mxu0 0.0
    %8484 = vmatpush2.msra.mxu0 0.0
    %8485 = vmatprep.subr.mxu0 0.0
    %8486 = vmatpush2.msra.mxu0 0.0
    %8487 = vmatprep.subr.mxu0 0.0
    %8488 = vmatpush2.msra.mxu0 0.0
    %8489 = vmatprep.subr.mxu0 0.0
    %8490 = vmatpush2.msra.mxu0 0.0
    %8491 = vmatprep.subr.mxu0 0.0
    %8492 = vmatpush2.msra.mxu0 0.0
    %8493 = vmatprep.subr.mxu0 0.0
    %8494 = vmatpush2.msra.mxu0 0.0
    %8495 = vmatprep.subr.mxu0 0.0
    %8496 = vmatpush2.msra.mxu0 0.0
    %8497 = vmatprep.subr.mxu0 0.0
    %8498 = vmatpush2.msra.mxu0 0.0
    %8499 = vmatprep.subr.mxu0 0.0
    %8500 = vmatpush2.msra.mxu0 0.0
    %8501 = vmatprep.subr.mxu0 0.0
    %8502 = vmatpush2.msra.mxu0 0.0
    %8503 = vmatprep.subr.mxu0 0.0
    %8504 = vmatpush2.msra.mxu0 0.0
    %8505 = vmatprep.subr.mxu0 0.0
    %8506 = vmatpush2.msra.mxu0 0.0
    %8507 = vmatprep.subr.mxu0 0.0
    %8508 = vmatpush2.msra.mxu0 0.0
    %8509 = vmatprep.subr.mxu0 0.0
    %8510 = vmatpush2.msra.mxu0 0.0
    %8511 = vmatprep.subr.mxu0 0.0
    %8512 = vmatpush2.msra.mxu0 0.0
    %8513 = vmatprep.mubr.f32.mxu0 0.0
    %8514 = vmatmul.mubr.f32.gmra.mxu0 %v6490
    %v8515 = vpop.f32.mrf.mxu0
    %v8516 = vadd.f32 %v8447, %v8515
    %v8517 = vpop.f32.mrf.mxu0
    %8518 = vmatprep.mubr.f32.mxu0 0.0
    %8519 = vmatmul.mubr.f32.gmra.mxu0 %v6496
    %v8520 = vpop.f32.mrf.mxu0
    %v8521 = vadd.f32 %v8447, %v8520
    %v8522 = vpop.f32.mrf.mxu0
    %8523 = vdwg.mxu0
    %v8525 = vsel %vm106, %v8516, 0
    %8527 = vmatprep.subr.mxu0 0.0
    %8528 = vmatpush1.xpose.msra.mxu0 0.0
    %8529 = vmatprep.subr.mxu0 0.0
    %8530 = vmatpush1.xpose.msra.mxu0 0.0
    %8531 = vmatprep.subr.mxu0 0.0
    %8532 = vmatpush1.xpose.msra.mxu0 0.0
    %8533 = vmatprep.subr.mxu0 0.0
    %8534 = vmatpush1.xpose.msra.mxu0 0.0
    %8535 = vmatprep.subr.mxu0 0.0
    %8536 = vmatpush1.xpose.msra.mxu0 0.0
    %8537 = vmatprep.subr.mxu0 0.0
    %8538 = vmatpush1.xpose.msra.mxu0 0.0
    %8539 = vmatprep.subr.mxu0 0.0
    %8540 = vmatpush1.xpose.msra.mxu0 0.0
    %8541 = vmatprep.subr.mxu0 0.0
    %8542 = vmatpush1.xpose.msra.mxu0 0.0
    %8543 = vmatprep.subr.mxu0 0.0
    %8544 = vmatpush1.xpose.msra.mxu0 0.0
    %8545 = vmatprep.subr.mxu0 0.0
    %8546 = vmatpush1.xpose.msra.mxu0 0.0
    %8547 = vmatprep.subr.mxu0 0.0
    %8548 = vmatpush1.xpose.msra.mxu0 0.0
    %8549 = vmatprep.subr.mxu0 0.0
    %8550 = vmatpush1.xpose.msra.mxu0 0.0
    %8551 = vmatprep.subr.mxu0 0.0
    %8552 = vmatpush1.xpose.msra.mxu0 0.0
    %8553 = vmatprep.subr.mxu0 0.0
    %8554 = vmatpush1.xpose.msra.mxu0 0.0
    %8555 = vmatprep.subr.mxu0 0.0
    %8556 = vmatpush1.xpose.msra.mxu0 0.0
    %8557 = vmatprep.subr.mxu0 0.0
    %8558 = vmatpush1.xpose.msra.mxu0 %v8525
    %8559 = vmatprep.subr.mxu0 0.0
    %8560 = vmatpush2.xpose.msra.mxu0 0.0
    %8561 = vmatprep.subr.mxu0 0.0
    %8562 = vmatpush2.xpose.msra.mxu0 0.0
    %8563 = vmatprep.subr.mxu0 0.0
    %8564 = vmatpush2.xpose.msra.mxu0 0.0
    %8565 = vmatprep.subr.mxu0 0.0
    %8566 = vmatpush2.xpose.msra.mxu0 0.0
    %8567 = vmatprep.subr.mxu0 0.0
    %8568 = vmatpush2.xpose.msra.mxu0 0.0
    %8569 = vmatprep.subr.mxu0 0.0
    %8570 = vmatpush2.xpose.msra.mxu0 0.0
    %8571 = vmatprep.subr.mxu0 0.0
    %8572 = vmatpush2.xpose.msra.mxu0 0.0
    %8573 = vmatprep.subr.mxu0 0.0
    %8574 = vmatpush2.xpose.msra.mxu0 0.0
    %8575 = vmatprep.subr.mxu0 0.0
    %8576 = vmatpush2.xpose.msra.mxu0 0.0
    %8577 = vmatprep.subr.mxu0 0.0
    %8578 = vmatpush2.xpose.msra.mxu0 0.0
    %8579 = vmatprep.subr.mxu0 0.0
    %8580 = vmatpush2.xpose.msra.mxu0 0.0
    %8581 = vmatprep.subr.mxu0 0.0
    %8582 = vmatpush2.xpose.msra.mxu0 0.0
    %8583 = vmatprep.subr.mxu0 0.0
    %8584 = vmatpush2.xpose.msra.mxu0 0.0
    %8585 = vmatprep.subr.mxu0 0.0
    %8586 = vmatpush2.xpose.msra.mxu0 0.0
    %8587 = vmatprep.subr.mxu0 0.0
    %8588 = vmatpush2.xpose.msra.mxu0 0.0
    %8589 = vmatprep.subr.mxu0 0.0
    %8590 = vmatpush2.xpose.msra.mxu0 0.0
    %8591 = vmatprep.mubr.f32.mxu0 0.0
    %8592 = vmatmul.mubr.f32.gmra.mxu0 %v6490
    %v8593 = vpop.f32.mrf.mxu0
    %v8594 = vadd.f32 0.0, %v8593
    %v8595 = vpop.f32.mrf.mxu0
    %8596 = vdwg.mxu0
    %v8598 = vsel %vm106, %v8521, 0
    %8600 = vmatprep.subr.mxu0 0.0
    %8601 = vmatpush1.xpose.msra.mxu0 0.0
    %8602 = vmatprep.subr.mxu0 0.0
    %8603 = vmatpush1.xpose.msra.mxu0 0.0
    %8604 = vmatprep.subr.mxu0 0.0
    %8605 = vmatpush1.xpose.msra.mxu0 0.0
    %8606 = vmatprep.subr.mxu0 0.0
    %8607 = vmatpush1.xpose.msra.mxu0 0.0
    %8608 = vmatprep.subr.mxu0 0.0
    %8609 = vmatpush1.xpose.msra.mxu0 0.0
    %8610 = vmatprep.subr.mxu0 0.0
    %8611 = vmatpush1.xpose.msra.mxu0 0.0
    %8612 = vmatprep.subr.mxu0 0.0
    %8613 = vmatpush1.xpose.msra.mxu0 0.0
    %8614 = vmatprep.subr.mxu0 0.0
    %8615 = vmatpush1.xpose.msra.mxu0 0.0
    %8616 = vmatprep.subr.mxu0 0.0
    %8617 = vmatpush1.xpose.msra.mxu0 0.0
    %8618 = vmatprep.subr.mxu0 0.0
    %8619 = vmatpush1.xpose.msra.mxu0 0.0
    %8620 = vmatprep.subr.mxu0 0.0
    %8621 = vmatpush1.xpose.msra.mxu0 0.0
    %8622 = vmatprep.subr.mxu0 0.0
    %8623 = vmatpush1.xpose.msra.mxu0 0.0
    %8624 = vmatprep.subr.mxu0 0.0
    %8625 = vmatpush1.xpose.msra.mxu0 0.0
    %8626 = vmatprep.subr.mxu0 0.0
    %8627 = vmatpush1.xpose.msra.mxu0 0.0
    %8628 = vmatprep.subr.mxu0 0.0
    %8629 = vmatpush1.xpose.msra.mxu0 0.0
    %8630 = vmatprep.subr.mxu0 0.0
    %8631 = vmatpush1.xpose.msra.mxu0 %v8598
    %8632 = vmatprep.subr.mxu0 0.0
    %8633 = vmatpush2.xpose.msra.mxu0 0.0
    %8634 = vmatprep.subr.mxu0 0.0
    %8635 = vmatpush2.xpose.msra.mxu0 0.0
    %8636 = vmatprep.subr.mxu0 0.0
    %8637 = vmatpush2.xpose.msra.mxu0 0.0
    %8638 = vmatprep.subr.mxu0 0.0
    %8639 = vmatpush2.xpose.msra.mxu0 0.0
    %8640 = vmatprep.subr.mxu0 0.0
    %8641 = vmatpush2.xpose.msra.mxu0 0.0
    %8642 = vmatprep.subr.mxu0 0.0
    %8643 = vmatpush2.xpose.msra.mxu0 0.0
    %8644 = vmatprep.subr.mxu0 0.0
    %8645 = vmatpush2.xpose.msra.mxu0 0.0
    %8646 = vmatprep.subr.mxu0 0.0
    %8647 = vmatpush2.xpose.msra.mxu0 0.0
    %8648 = vmatprep.subr.mxu0 0.0
    %8649 = vmatpush2.xpose.msra.mxu0 0.0
    %8650 = vmatprep.subr.mxu0 0.0
    %8651 = vmatpush2.xpose.msra.mxu0 0.0
    %8652 = vmatprep.subr.mxu0 0.0
    %8653 = vmatpush2.xpose.msra.mxu0 0.0
    %8654 = vmatprep.subr.mxu0 0.0
    %8655 = vmatpush2.xpose.msra.mxu0 0.0
    %8656 = vmatprep.subr.mxu0 0.0
    %8657 = vmatpush2.xpose.msra.mxu0 0.0
    %8658 = vmatprep.subr.mxu0 0.0
    %8659 = vmatpush2.xpose.msra.mxu0 0.0
    %8660 = vmatprep.subr.mxu0 0.0
    %8661 = vmatpush2.xpose.msra.mxu0 0.0
    %8662 = vmatprep.subr.mxu0 0.0
    %8663 = vmatpush2.xpose.msra.mxu0 0.0
    %8664 = vmatprep.mubr.f32.mxu0 0.0
    %8665 = vmatmul.mubr.f32.gmra.mxu0 %v6496
    %v8666 = vpop.f32.mrf.mxu0
    %v8667 = vadd.f32 0.0, %v8666
    %v8668 = vpop.f32.mrf.mxu0
    %8669 = vdwg.mxu0
    %8670 = vst.msk [vmem:[#allocation2] sm:$0xff] %vm385, %v8594
    %8671 = vst.msk [vmem:[#allocation2 + $0x8] sm:$0xff] %vm385, %v8667
    // Predicated region
    $region98: #{forward.1} parent=1 // pred_check
      _
    $region99: #{forward.1} parent=1 // pred_check_branch
      %8673 = sbr.rel (0) target = $region101
    $region100: #{forward.1} parent=1 // pred_region
      _
    $region101: #{forward.1} parent=1 // pred_fallthru
      _
    // Predicated region
    $region102: #{forward.1} parent=1 // pred_check
      _
    $region103: #{forward.1} parent=1 // pred_check_branch
      %8675 = sbr.rel (0) target = $region105
    $region104: #{forward.1} parent=1 // pred_region
      %s8677 = ssub.s32 256, 256
      %8678 = vsyncadd [#allocation3], %s8677
      %s8679 = sshll.u32 [#allocation2], 4
      %s8680 = int_to_ptr.vmem [resolvable:$true] %s8679
      %8685 = dma.vmem_to_hbm [thread:$0]  %s8680, 256, %s25, [#allocation3], 128, 128, 8
    $region105: #{forward.1} parent=1 // pred_fallthru
      _
    // Predicated region
    $region106: #{forward.1} parent=1 // pred_check
      _
    $region107: #{forward.1} parent=1 // pred_check_branch
      %8687 = sbr.rel (0) target = $region109
    $region108: #{forward.1} parent=1 // pred_region
      _
    $region109: #{forward.1} parent=1 // pred_fallthru
      _
    // Predicated region
    $region110: #{forward.1} parent=1 // pred_check
      _
    $region111: #{forward.1} parent=1 // pred_check_branch
      %8689 = sbr.rel (0) target = $region113
    $region112: #{forward.1} parent=1 // pred_region
      %8690 = dma.done [#allocation3], 256
    $region113: #{forward.1} parent=1 // pred_fallthru
      _
    %8691 = vsyncpa [#allocation3], 1

</llo_original>
